<compile_context>
chip_gen: v5e
topology: v5e:2x2
jax: 0.10.0
libtpu: 0.0.40
codegen_flags: <defaults>
</compile_context>

<pallas_src>
import functools
import math

import jax
import jax.numpy as jnp
from jax import lax
from jax.experimental import pallas as pl
from jax.experimental.pallas import tpu as pltpu


# --------------------------- in-kernel helpers ---------------------------

def _layernorm(x, g, b, eps=1e-5):
    # x: (M, E) f32, g/b: (1, E)
    mu = jnp.mean(x, axis=-1, keepdims=True)
    var = jnp.mean(jnp.square(x - mu), axis=-1, keepdims=True)
    return (x - mu) * lax.rsqrt(var + eps) * g + b


def _mha_core(q, k, v, *, num_heads, causal):
    # q: (Sq, E) f32 (already scaled via folded 1/sqrt(Dh)); k/v: (Sk, E) f32.
    # Heads are handled with static lane slices inside one kernel invocation
    # (no plain-JAX head transposes, no per-head grid steps).
    sq, e = q.shape
    sk = k.shape[0]
    dh = e // num_heads
    if causal:
        row = lax.broadcasted_iota(jnp.int32, (sq, sk), 0)
        col = lax.broadcasted_iota(jnp.int32, (sq, sk), 1)
        keep = col <= row
    heads = []
    for h in range(num_heads):
        lo = h * dh
        qh = q[:, lo:lo + dh]
        kh = k[:, lo:lo + dh]
        vh = v[:, lo:lo + dh]
        s = jnp.dot(qh, kh.T, preferred_element_type=jnp.float32)
        if causal:
            s = jnp.where(keep, s, -1e30)          # f32 scores; safe constant
        s = s - jnp.max(s, axis=-1, keepdims=True)
        p = jnp.exp(s)
        p = p * pl.reciprocal(jnp.sum(p, axis=-1, keepdims=True), approx=True)
        heads.append(jnp.dot(p, vh, preferred_element_type=jnp.float32))
    return jnp.concatenate(heads, axis=-1)          # (Sq, E)


# ----------------------------- Pallas kernels -----------------------------

def _self_attn_block_kernel(x_ref, wqkv_ref, bqkv_ref, wo_ref, bo_ref,
                            g_ref, b_ref, o_ref, *, num_heads, causal):
    # Fused: QKV proj -> MHA -> out proj -> +residual -> LayerNorm.
    x = x_ref[0].astype(jnp.float32)                             # (S, E)
    e = x.shape[-1]
    qkv = jnp.dot(x, wqkv_ref[...],
                  preferred_element_type=jnp.float32) + bqkv_ref[...]
    q = qkv[:, :e]
    k = qkv[:, e:2 * e]
    v = qkv[:, 2 * e:]
    attn = _mha_core(q, k, v, num_heads=num_heads, causal=causal)
    attn = jnp.dot(attn, wo_ref[...],
                   preferred_element_type=jnp.float32) + bo_ref[...]
    y = _layernorm(x + attn, g_ref[...], b_ref[...])
    o_ref[0] = y.astype(o_ref.dtype)


def _cross_attn_block_kernel(xq_ref, xkv_ref, wq_ref, bq_ref, wkv_ref, bkv_ref,
                             wo_ref, bo_ref, g_ref, b_ref, o_ref, *, num_heads):
    # Fused: Q proj + fused KV proj -> MHA -> out proj -> +residual -> LN.
    xq = xq_ref[0].astype(jnp.float32)                           # (Sq, E)
    xkv = xkv_ref[0].astype(jnp.float32)                         # (Sk, E)
    e = xq.shape[-1]
    q = jnp.dot(xq, wq_ref[...],
                preferred_element_type=jnp.float32) + bq_ref[...]
    kv = jnp.dot(xkv, wkv_ref[...],
                 preferred_element_type=jnp.float32) + bkv_ref[...]
    k = kv[:, :e]
    v = kv[:, e:]
    attn = _mha_core(q, k, v, num_heads=num_heads, causal=False)
    attn = jnp.dot(attn, wo_ref[...],
                   preferred_element_type=jnp.float32) + bo_ref[...]
    y = _layernorm(xq + attn, g_ref[...], b_ref[...])
    o_ref[0] = y.astype(o_ref.dtype)


def _ffn_block_kernel(x_ref, w1_ref, b1_ref, w2_ref, b2_ref, g_ref, b_ref, o_ref):
    # Fused: Linear(4E) -> ReLU -> Linear(E) -> +residual -> LayerNorm.
    x = x_ref[...].astype(jnp.float32)                           # (tm, E)
    h = jnp.dot(x, w1_ref[...],
                preferred_element_type=jnp.float32) + b1_ref[...]
    h = jnp.maximum(h, 0.0)
    f = jnp.dot(h, w2_ref[...],
                preferred_element_type=jnp.float32) + b2_ref[...]
    y = _layernorm(x + f, g_ref[...], b_ref[...])
    o_ref[...] = y.astype(o_ref.dtype)


def _linear_kernel(x_ref, w_ref, b_ref, o_ref):
    acc = jnp.dot(x_ref[...], w_ref[...],
                  preferred_element_type=jnp.float32) + b_ref[...]
    o_ref[...] = acc.astype(o_ref.dtype)


# ------------------------------ kernel wrappers ------------------------------

def _row_tile(m):
    # Sublane tile for the row axis (multiple of 8, or full extent).
    for tm in (512, 256, 128):
        if m % tm == 0:
            return tm
    return m


def self_attn_block(x, p, *, num_heads, causal):
    # x: (B, S, E).  Output: LN(x + MHA(x, x, x)).
    B, S, E = x.shape
    kernel = functools.partial(_self_attn_block_kernel,
                               num_heads=num_heads, causal=causal)
    return pl.pallas_call(
        kernel,
        out_shape=jax.ShapeDtypeStruct((B, S, E), x.dtype),
        grid=(B,),
        in_specs=[pl.BlockSpec((1, S, E), lambda b: (b, 0, 0)),
                  pl.BlockSpec((E, 3 * E), lambda b: (0, 0)),
                  pl.BlockSpec((1, 3 * E), lambda b: (0, 0)),
                  pl.BlockSpec((E, E), lambda b: (0, 0)),
                  pl.BlockSpec((1, E), lambda b: (0, 0)),
                  pl.BlockSpec((1, E), lambda b: (0, 0)),
                  pl.BlockSpec((1, E), lambda b: (0, 0))],
        out_specs=pl.BlockSpec((1, S, E), lambda b: (b, 0, 0)),
        compiler_params=pltpu.CompilerParams(dimension_semantics=("parallel",)),
    )(x, p["wqkv"], p["bqkv"], p["wo"], p["bo"], p["ln_g"], p["ln_b"])


def cross_attn_block(xq, xkv, p, *, num_heads):
    # xq: (B, Sq, E) queries + residual;  xkv: (B, Sk, E) keys/values.
    B, Sq, E = xq.shape
    Sk = xkv.shape[1]
    kernel = functools.partial(_cross_attn_block_kernel, num_heads=num_heads)
    return pl.pallas_call(
        kernel,
        out_shape=jax.ShapeDtypeStruct((B, Sq, E), xq.dtype),
        grid=(B,),
        in_specs=[pl.BlockSpec((1, Sq, E), lambda b: (b, 0, 0)),
                  pl.BlockSpec((1, Sk, E), lambda b: (b, 0, 0)),
                  pl.BlockSpec((E, E), lambda b: (0, 0)),
                  pl.BlockSpec((1, E), lambda b: (0, 0)),
                  pl.BlockSpec((E, 2 * E), lambda b: (0, 0)),
                  pl.BlockSpec((1, 2 * E), lambda b: (0, 0)),
                  pl.BlockSpec((E, E), lambda b: (0, 0)),
                  pl.BlockSpec((1, E), lambda b: (0, 0)),
                  pl.BlockSpec((1, E), lambda b: (0, 0)),
                  pl.BlockSpec((1, E), lambda b: (0, 0))],
        out_specs=pl.BlockSpec((1, Sq, E), lambda b: (b, 0, 0)),
        compiler_params=pltpu.CompilerParams(dimension_semantics=("parallel",)),
    )(xq, xkv, p["wq"], p["bq"], p["wkv"], p["bkv"],
      p["wo"], p["bo"], p["ln_g"], p["ln_b"])


def ffn_block(x, p):
    # x: (M, E).  Output: LN(x + W2 relu(W1 x + b1) + b2), tiled over rows.
    M, E = x.shape
    H = p["w1"].shape[1]
    tm = _row_tile(M)
    return pl.pallas_call(
        _ffn_block_kernel,
        out_shape=jax.ShapeDtypeStruct((M, E), x.dtype),
        grid=(M // tm,),
        in_specs=[pl.BlockSpec((tm, E), lambda i: (i, 0)),
                  pl.BlockSpec((E, H), lambda i: (0, 0)),
                  pl.BlockSpec((1, H), lambda i: (0, 0)),
                  pl.BlockSpec((H, E), lambda i: (0, 0)),
                  pl.BlockSpec((1, E), lambda i: (0, 0)),
                  pl.BlockSpec((1, E), lambda i: (0, 0)),
                  pl.BlockSpec((1, E), lambda i: (0, 0))],
        out_specs=pl.BlockSpec((tm, E), lambda i: (i, 0)),
        compiler_params=pltpu.CompilerParams(dimension_semantics=("parallel",)),
    )(x, p["w1"], p["b1"], p["w2"], p["b2"], p["ln2_g"], p["ln2_b"])


def output_linear_padded(x, w, b, vocab_size):
    # x: (M, E); w/b padded on the lane axis to a multiple of 128 so the
    # matmul output and stores are lane-dense; slice back outside the kernel.
    M, E = x.shape
    Np = w.shape[1]
    tm = _row_tile(M)
    out = pl.pallas_call(
        _linear_kernel,
        out_shape=jax.ShapeDtypeStruct((M, Np), x.dtype),
        grid=(M // tm,),
        in_specs=[pl.BlockSpec((tm, E), lambda i: (i, 0)),
                  pl.BlockSpec((E, Np), lambda i: (0, 0)),
                  pl.BlockSpec((1, Np), lambda i: (0, 0))],
        out_specs=pl.BlockSpec((tm, Np), lambda i: (i, 0)),
        compiler_params=pltpu.CompilerParams(dimension_semantics=("parallel",)),
    )(x, w, b)
    return out[:, :vocab_size]


# -------------------------- model building blocks --------------------------

def encoder_layer_self(x, p, num_heads):
    # Self-attention encoder layer: attn-block (fused) then FFN-block (fused).
    B, S, E = x.shape
    h1 = self_attn_block(x, p["attn"], num_heads=num_heads, causal=False)
    out = ffn_block(h1.reshape(B * S, E), p)
    return out.reshape(B, S, E)


def encoder_layer_cross(xq, xkv, p, num_heads):
    # Cross-attention "encoder block" used inside the decoder.
    B, S, E = xq.shape
    h1 = cross_attn_block(xq, xkv, p["attn"], num_heads=num_heads)
    out = ffn_block(h1.reshape(B * S, E), p)
    return out.reshape(B, S, E)


def decoder_layer(tgt, enc_out, p, num_heads):
    q = self_attn_block(tgt, p["self_attn"], num_heads=num_heads, causal=True)
    return encoder_layer_cross(q, enc_out, p["enc_block"], num_heads)


def input_embedding(tokens, tok_emb, pos_emb):
    # Token gather stays in plain JAX (glue); dropout == identity (eval).
    B, S = tokens.shape
    x = jnp.take(tok_emb, tokens, axis=0)                  # (B, S, E)
    pos = jnp.take(pos_emb, jnp.arange(S), axis=0)[None]   # (1, S, E)
    return x + pos


def transformer_forward(params, src, tgt, num_heads, vocab_size):
    src_emb = input_embedding(src, params["tok_emb"], params["pos_emb"])
    tgt_emb = input_embedding(tgt, params["tok_emb"], params["pos_emb"])

    enc_out = src_emb
    for lp in params["encoder_layers"]:
        enc_out = encoder_layer_self(enc_out, lp, num_heads)

    dec_out = tgt_emb
    for lp in params["decoder_layers"]:
        dec_out = decoder_layer(dec_out, enc_out, lp, num_heads)

    B, S, E = dec_out.shape
    logits = output_linear_padded(dec_out.reshape(B * S, E),
                                  params["w_out"], params["b_out"], vocab_size)
    return logits.reshape(B, S, vocab_size)


# ------------------------------ parameter init ------------------------------

def _init_linear(key, in_dim, out_dim):
    k1, k2 = jax.random.split(key)
    bound = 1.0 / math.sqrt(in_dim)
    w = jax.random.uniform(k1, (in_dim, out_dim), jnp.float32, -bound, bound)
    b = jax.random.uniform(k2, (1, out_dim), jnp.float32, -bound, bound)
    return w, b


def _init_attn(key, embed_len, num_heads, fused):
    ks = jax.random.split(key, 4)
    wq, bq = _init_linear(ks[0], embed_len, embed_len)
    wk, bk = _init_linear(ks[1], embed_len, embed_len)
    wv, bv = _init_linear(ks[2], embed_len, embed_len)
    wo, bo = _init_linear(ks[3], embed_len, embed_len)
    scale = 1.0 / math.sqrt(embed_len // num_heads)
    wq = wq * scale                      # fold softmax scale into Q projection
    bq = bq * scale
    ones = jnp.ones((1, embed_len), jnp.float32)
    zeros = jnp.zeros((1, embed_len), jnp.float32)
    if fused:       # self-attention: one (E, 3E) QKV matmul
        return dict(wqkv=jnp.concatenate([wq, wk, wv], axis=1),
                    bqkv=jnp.concatenate([bq, bk, bv], axis=1),
                    wo=wo, bo=bo, ln_g=ones, ln_b=zeros)
    else:           # cross-attention: Q from decoder side, fused KV from encoder side
        return dict(wq=wq, bq=bq,
                    wkv=jnp.concatenate([wk, wv], axis=1),
                    bkv=jnp.concatenate([bk, bv], axis=1),
                    wo=wo, bo=bo, ln_g=ones, ln_b=zeros)


def _init_encoder_layer(key, embed_len, num_heads, cross=False):
    ks = jax.random.split(key, 3)
    w1, b1 = _init_linear(ks[1], embed_len, 4 * embed_len)
    w2, b2 = _init_linear(ks[2], 4 * embed_len, embed_len)
    ones = jnp.ones((1, embed_len), jnp.float32)
    zeros = jnp.zeros((1, embed_len), jnp.float32)
    return dict(attn=_init_attn(ks[0], embed_len, num_heads, fused=not cross),
                w1=w1, b1=b1, w2=w2, b2=b2, ln2_g=ones, ln2_b=zeros)


def _init_decoder_layer(key, embed_len, num_heads):
    ks = jax.random.split(key, 2)
    return dict(self_attn=_init_attn(ks[0], embed_len, num_heads, fused=True),
                enc_block=_init_encoder_layer(ks[1], embed_len, num_heads, cross=True))


def init_transformer(key, num_encoder_layers, num_decoder_layers,
                     embed_len, num_heads, vocab_size, max_seq_len):
    assert embed_len % num_heads == 0
    keys = jax.random.split(key, 3 + num_encoder_layers + num_decoder_layers)
    tok_emb = jax.random.normal(keys[0], (vocab_size, embed_len), jnp.float32)
    pos_emb = jax.random.normal(keys[1], (max_seq_len, embed_len), jnp.float32)
    w_out, b_out = _init_linear(keys[2], embed_len, vocab_size)
    # Pad the vocab projection to a 128-lane multiple for unmasked stores.
    vocab_pad = ((vocab_size + 127) // 128) * 128
    w_out = jnp.pad(w_out, ((0, 0), (0, vocab_pad - vocab_size)))
    b_out = jnp.pad(b_out, ((0, 0), (0, vocab_pad - vocab_size)))
    enc = [_init_encoder_layer(keys[3 + i], embed_len, num_heads)
           for i in range(num_encoder_layers)]
    dec = [_init_decoder_layer(keys[3 + num_encoder_layers + i], embed_len, num_heads)
           for i in range(num_decoder_layers)]
    return dict(tok_emb=tok_emb, pos_emb=pos_emb, w_out=w_out, b_out=b_out,
                encoder_layers=enc, decoder_layers=dec)


# ----------------------------------- main -----------------------------------

if __name__ == "__main__":
    num_encoder_layers = 2
    num_decoder_layers = 2
    embed_len = 32
    num_heads = 4
    batch_size = 2
    vocab_size = 50
    seq_len = 8
    max_seq_len = 16

    key = jax.random.PRNGKey(0)
    k_params, k_src, k_tgt = jax.random.split(key, 3)

    params = init_transformer(k_params, num_encoder_layers, num_decoder_layers,
                              embed_len, num_heads, vocab_size, max_seq_len)
    src = jax.random.randint(k_src, (batch_size, seq_len), 0, vocab_size, dtype=jnp.int32)
    tgt = jax.random.randint(k_tgt, (batch_size, seq_len), 0, vocab_size, dtype=jnp.int32)

    fwd = jax.jit(functools.partial(transformer_forward,
                                    num_heads=num_heads, vocab_size=vocab_size))
    logits = fwd(params, src, tgt)
    jax.block_until_ready(logits)

    assert logits.shape == (batch_size, seq_len, vocab_size)
    assert logits.dtype == jnp.float32
    assert bool(jnp.all(jnp.isfinite(logits)))
    print("KERNEL_OK")
</pallas_src>

<mosaic_0001>
module attributes {stable_mosaic.version = 11 : i64} {
  func.func @_self_attn_block_kernel(%arg0: i32, %arg1: memref<1x8x32xf32, #tpu.memory_space<vmem>>, %arg2: memref<32x96xf32, #tpu.memory_space<vmem>>, %arg3: memref<1x96xf32, #tpu.memory_space<vmem>>, %arg4: memref<32x32xf32, #tpu.memory_space<vmem>>, %arg5: memref<1x32xf32, #tpu.memory_space<vmem>>, %arg6: memref<1x32xf32, #tpu.memory_space<vmem>>, %arg7: memref<1x32xf32, #tpu.memory_space<vmem>>, %arg8: memref<1x8x32xf32, #tpu.memory_space<vmem>>) attributes {dimension_semantics = [#tpu.dimension_semantics<parallel>], iteration_bounds = array<i64: 2>, scalar_prefetch = 0 : i64, scratch_operands = 0 : i64, tpu.core_type = #tpu.core_type<tc>, window_params = [{transform_indices = @transform_0, window_bounds = array<i64: 1, 8, 32>}, {pipeline_mode = #tpu.pipeline_mode<synchronous>, transform_indices = @transform_1, window_bounds = array<i64: 32, 96>}, {pipeline_mode = #tpu.pipeline_mode<synchronous>, transform_indices = @transform_2, window_bounds = array<i64: 1, 96>}, {pipeline_mode = #tpu.pipeline_mode<synchronous>, transform_indices = @transform_3, window_bounds = array<i64: 32, 32>}, {pipeline_mode = #tpu.pipeline_mode<synchronous>, transform_indices = @transform_4, window_bounds = array<i64: 1, 32>}, {pipeline_mode = #tpu.pipeline_mode<synchronous>, transform_indices = @transform_5, window_bounds = array<i64: 1, 32>}, {pipeline_mode = #tpu.pipeline_mode<synchronous>, transform_indices = @transform_6, window_bounds = array<i64: 1, 32>}, {transform_indices = @transform_7, window_bounds = array<i64: 1, 8, 32>}]} {
    %c0 = arith.constant 0 : index
    %c0_0 = arith.constant 0 : index
    %c0_1 = arith.constant 0 : index
    %0 = vector.load %arg1[%c0, %c0_0, %c0_1] : memref<1x8x32xf32, #tpu.memory_space<vmem>>, vector<1x8x32xf32>
    %1 = vector.shape_cast %0 : vector<1x8x32xf32> to vector<8x32xf32>
    %c0_2 = arith.constant 0 : index
    %c0_3 = arith.constant 0 : index
    %2 = vector.load %arg2[%c0_2, %c0_3] : memref<32x96xf32, #tpu.memory_space<vmem>>, vector<32x96xf32>
    %cst = arith.constant dense<0.000000e+00> : vector<8x96xf32>
    %3 = tpu.matmul %1, %2, %cst {dimension_numbers = #tpu.dot_dimension_numbers<[1], [0], [0], [1], [0, 0, 1, 1], [], []>} : vector<8x32xf32>, vector<32x96xf32>, vector<8x96xf32> -> vector<8x96xf32>
    %c0_4 = arith.constant 0 : index
    %c0_5 = arith.constant 0 : index
    %4 = vector.load %arg3[%c0_4, %c0_5] : memref<1x96xf32, #tpu.memory_space<vmem>>, vector<1x96xf32>
    %5 = vector.broadcast %4 : vector<1x96xf32> to vector<8x96xf32>
    %6 = arith.addf %3, %5 : vector<8x96xf32>
    %7 = vector.extract_strided_slice %6 {offsets = [0, 0], sizes = [8, 32], strides = [1, 1]} : vector<8x96xf32> to vector<8x32xf32>
    %8 = vector.extract_strided_slice %6 {offsets = [0, 32], sizes = [8, 32], strides = [1, 1]} : vector<8x96xf32> to vector<8x32xf32>
    %9 = vector.extract_strided_slice %6 {offsets = [0, 64], sizes = [8, 32], strides = [1, 1]} : vector<8x96xf32> to vector<8x32xf32>
    %10 = vector.extract_strided_slice %7 {offsets = [0, 0], sizes = [8, 8], strides = [1, 1]} : vector<8x32xf32> to vector<8x8xf32>
    %11 = vector.extract_strided_slice %8 {offsets = [0, 0], sizes = [8, 8], strides = [1, 1]} : vector<8x32xf32> to vector<8x8xf32>
    %12 = vector.extract_strided_slice %9 {offsets = [0, 0], sizes = [8, 8], strides = [1, 1]} : vector<8x32xf32> to vector<8x8xf32>
    %13 = tpu.transpose %11, [1, 0] : vector<8x8xf32> -> vector<8x8xf32>
    %cst_6 = arith.constant dense<0.000000e+00> : vector<8x8xf32>
    %14 = tpu.matmul %10, %13, %cst_6 {dimension_numbers = #tpu.dot_dimension_numbers<[1], [0], [0], [1], [0, 0, 1, 1], [], []>} : vector<8x8xf32>, vector<8x8xf32>, vector<8x8xf32> -> vector<8x8xf32>
    %cst_7 = arith.constant dense<0xFF800000> : vector<8xf32>
    %15 = vector.multi_reduction <maximumf>, %14, %cst_7 [1] : vector<8x8xf32> to vector<8xf32>
    %16 = vector.shape_cast %15 : vector<8xf32> to vector<8x1xf32>
    %17 = vector.broadcast %16 : vector<8x1xf32> to vector<8x8xf32>
    %18 = arith.subf %14, %17 : vector<8x8xf32>
    %19 = math.exp %18 : vector<8x8xf32>
    %cst_8 = arith.constant dense<0.000000e+00> : vector<8xf32>
    %20 = vector.multi_reduction <add>, %19, %cst_8 [1] : vector<8x8xf32> to vector<8xf32>
    %21 = vector.shape_cast %20 : vector<8xf32> to vector<8x1xf32>
    %22 = tpu.reciprocal %21 {approx = true} : vector<8x1xf32> -> vector<8x1xf32>
    %23 = vector.broadcast %22 : vector<8x1xf32> to vector<8x8xf32>
    %24 = arith.mulf %19, %23 : vector<8x8xf32>
    %cst_9 = arith.constant dense<0.000000e+00> : vector<8x8xf32>
    %25 = tpu.matmul %24, %12, %cst_9 {dimension_numbers = #tpu.dot_dimension_numbers<[1], [0], [0], [1], [0, 0, 1, 1], [], []>} : vector<8x8xf32>, vector<8x8xf32>, vector<8x8xf32> -> vector<8x8xf32>
    %26 = vector.extract_strided_slice %7 {offsets = [0, 8], sizes = [8, 8], strides = [1, 1]} : vector<8x32xf32> to vector<8x8xf32>
    %27 = vector.extract_strided_slice %8 {offsets = [0, 8], sizes = [8, 8], strides = [1, 1]} : vector<8x32xf32> to vector<8x8xf32>
    %28 = vector.extract_strided_slice %9 {offsets = [0, 8], sizes = [8, 8], strides = [1, 1]} : vector<8x32xf32> to vector<8x8xf32>
    %29 = tpu.transpose %27, [1, 0] : vector<8x8xf32> -> vector<8x8xf32>
    %cst_10 = arith.constant dense<0.000000e+00> : vector<8x8xf32>
    %30 = tpu.matmul %26, %29, %cst_10 {dimension_numbers = #tpu.dot_dimension_numbers<[1], [0], [0], [1], [0, 0, 1, 1], [], []>} : vector<8x8xf32>, vector<8x8xf32>, vector<8x8xf32> -> vector<8x8xf32>
    %cst_11 = arith.constant dense<0xFF800000> : vector<8xf32>
    %31 = vector.multi_reduction <maximumf>, %30, %cst_11 [1] : vector<8x8xf32> to vector<8xf32>
    %32 = vector.shape_cast %31 : vector<8xf32> to vector<8x1xf32>
    %33 = vector.broadcast %32 : vector<8x1xf32> to vector<8x8xf32>
    %34 = arith.subf %30, %33 : vector<8x8xf32>
    %35 = math.exp %34 : vector<8x8xf32>
    %cst_12 = arith.constant dense<0.000000e+00> : vector<8xf32>
    %36 = vector.multi_reduction <add>, %35, %cst_12 [1] : vector<8x8xf32> to vector<8xf32>
    %37 = vector.shape_cast %36 : vector<8xf32> to vector<8x1xf32>
    %38 = tpu.reciprocal %37 {approx = true} : vector<8x1xf32> -> vector<8x1xf32>
    %39 = vector.broadcast %38 : vector<8x1xf32> to vector<8x8xf32>
    %40 = arith.mulf %35, %39 : vector<8x8xf32>
    %cst_13 = arith.constant dense<0.000000e+00> : vector<8x8xf32>
    %41 = tpu.matmul %40, %28, %cst_13 {dimension_numbers = #tpu.dot_dimension_numbers<[1], [0], [0], [1], [0, 0, 1, 1], [], []>} : vector<8x8xf32>, vector<8x8xf32>, vector<8x8xf32> -> vector<8x8xf32>
    %42 = vector.extract_strided_slice %7 {offsets = [0, 16], sizes = [8, 8], strides = [1, 1]} : vector<8x32xf32> to vector<8x8xf32>
    %43 = vector.extract_strided_slice %8 {offsets = [0, 16], sizes = [8, 8], strides = [1, 1]} : vector<8x32xf32> to vector<8x8xf32>
    %44 = vector.extract_strided_slice %9 {offsets = [0, 16], sizes = [8, 8], strides = [1, 1]} : vector<8x32xf32> to vector<8x8xf32>
    %45 = tpu.transpose %43, [1, 0] : vector<8x8xf32> -> vector<8x8xf32>
    %cst_14 = arith.constant dense<0.000000e+00> : vector<8x8xf32>
    %46 = tpu.matmul %42, %45, %cst_14 {dimension_numbers = #tpu.dot_dimension_numbers<[1], [0], [0], [1], [0, 0, 1, 1], [], []>} : vector<8x8xf32>, vector<8x8xf32>, vector<8x8xf32> -> vector<8x8xf32>
    %cst_15 = arith.constant dense<0xFF800000> : vector<8xf32>
    %47 = vector.multi_reduction <maximumf>, %46, %cst_15 [1] : vector<8x8xf32> to vector<8xf32>
    %48 = vector.shape_cast %47 : vector<8xf32> to vector<8x1xf32>
    %49 = vector.broadcast %48 : vector<8x1xf32> to vector<8x8xf32>
    %50 = arith.subf %46, %49 : vector<8x8xf32>
    %51 = math.exp %50 : vector<8x8xf32>
    %cst_16 = arith.constant dense<0.000000e+00> : vector<8xf32>
    %52 = vector.multi_reduction <add>, %51, %cst_16 [1] : vector<8x8xf32> to vector<8xf32>
    %53 = vector.shape_cast %52 : vector<8xf32> to vector<8x1xf32>
    %54 = tpu.reciprocal %53 {approx = true} : vector<8x1xf32> -> vector<8x1xf32>
    %55 = vector.broadcast %54 : vector<8x1xf32> to vector<8x8xf32>
    %56 = arith.mulf %51, %55 : vector<8x8xf32>
    %cst_17 = arith.constant dense<0.000000e+00> : vector<8x8xf32>
    %57 = tpu.matmul %56, %44, %cst_17 {dimension_numbers = #tpu.dot_dimension_numbers<[1], [0], [0], [1], [0, 0, 1, 1], [], []>} : vector<8x8xf32>, vector<8x8xf32>, vector<8x8xf32> -> vector<8x8xf32>
    %58 = vector.extract_strided_slice %7 {offsets = [0, 24], sizes = [8, 8], strides = [1, 1]} : vector<8x32xf32> to vector<8x8xf32>
    %59 = vector.extract_strided_slice %8 {offsets = [0, 24], sizes = [8, 8], strides = [1, 1]} : vector<8x32xf32> to vector<8x8xf32>
    %60 = vector.extract_strided_slice %9 {offsets = [0, 24], sizes = [8, 8], strides = [1, 1]} : vector<8x32xf32> to vector<8x8xf32>
    %61 = tpu.transpose %59, [1, 0] : vector<8x8xf32> -> vector<8x8xf32>
    %cst_18 = arith.constant dense<0.000000e+00> : vector<8x8xf32>
    %62 = tpu.matmul %58, %61, %cst_18 {dimension_numbers = #tpu.dot_dimension_numbers<[1], [0], [0], [1], [0, 0, 1, 1], [], []>} : vector<8x8xf32>, vector<8x8xf32>, vector<8x8xf32> -> vector<8x8xf32>
    %cst_19 = arith.constant dense<0xFF800000> : vector<8xf32>
    %63 = vector.multi_reduction <maximumf>, %62, %cst_19 [1] : vector<8x8xf32> to vector<8xf32>
    %64 = vector.shape_cast %63 : vector<8xf32> to vector<8x1xf32>
    %65 = vector.broadcast %64 : vector<8x1xf32> to vector<8x8xf32>
    %66 = arith.subf %62, %65 : vector<8x8xf32>
    %67 = math.exp %66 : vector<8x8xf32>
    %cst_20 = arith.constant dense<0.000000e+00> : vector<8xf32>
    %68 = vector.multi_reduction <add>, %67, %cst_20 [1] : vector<8x8xf32> to vector<8xf32>
    %69 = vector.shape_cast %68 : vector<8xf32> to vector<8x1xf32>
    %70 = tpu.reciprocal %69 {approx = true} : vector<8x1xf32> -> vector<8x1xf32>
    %71 = vector.broadcast %70 : vector<8x1xf32> to vector<8x8xf32>
    %72 = arith.mulf %67, %71 : vector<8x8xf32>
    %cst_21 = arith.constant dense<0.000000e+00> : vector<8x8xf32>
    %73 = tpu.matmul %72, %60, %cst_21 {dimension_numbers = #tpu.dot_dimension_numbers<[1], [0], [0], [1], [0, 0, 1, 1], [], []>} : vector<8x8xf32>, vector<8x8xf32>, vector<8x8xf32> -> vector<8x8xf32>
    %74 = tpu.concatenate %25, %41, %57, %73 in 1 : vector<8x8xf32>, vector<8x8xf32>, vector<8x8xf32>, vector<8x8xf32> -> vector<8x32xf32>
    %c0_22 = arith.constant 0 : index
    %c0_23 = arith.constant 0 : index
    %75 = vector.load %arg4[%c0_22, %c0_23] : memref<32x32xf32, #tpu.memory_space<vmem>>, vector<32x32xf32>
    %cst_24 = arith.constant dense<0.000000e+00> : vector<8x32xf32>
    %76 = tpu.matmul %74, %75, %cst_24 {dimension_numbers = #tpu.dot_dimension_numbers<[1], [0], [0], [1], [0, 0, 1, 1], [], []>} : vector<8x32xf32>, vector<32x32xf32>, vector<8x32xf32> -> vector<8x32xf32>
    %c0_25 = arith.constant 0 : index
    %c0_26 = arith.constant 0 : index
    %77 = vector.load %arg5[%c0_25, %c0_26] : memref<1x32xf32, #tpu.memory_space<vmem>>, vector<1x32xf32>
    %78 = vector.broadcast %77 : vector<1x32xf32> to vector<8x32xf32>
    %79 = arith.addf %76, %78 : vector<8x32xf32>
    %80 = arith.addf %1, %79 : vector<8x32xf32>
    %c0_27 = arith.constant 0 : index
    %c0_28 = arith.constant 0 : index
    %81 = vector.load %arg6[%c0_27, %c0_28] : memref<1x32xf32, #tpu.memory_space<vmem>>, vector<1x32xf32>
    %c0_29 = arith.constant 0 : index
    %c0_30 = arith.constant 0 : index
    %82 = vector.load %arg7[%c0_29, %c0_30] : memref<1x32xf32, #tpu.memory_space<vmem>>, vector<1x32xf32>
    %cst_31 = arith.constant dense<0.000000e+00> : vector<8xf32>
    %83 = vector.multi_reduction <add>, %80, %cst_31 [1] : vector<8x32xf32> to vector<8xf32>
    %84 = vector.shape_cast %83 : vector<8xf32> to vector<8x1xf32>
    %cst_32 = arith.constant 3.200000e+01 : f32
    %85 = vector.broadcast %cst_32 : f32 to vector<8x1xf32>
    %86 = arith.divf %84, %85 : vector<8x1xf32>
    %87 = vector.broadcast %86 : vector<8x1xf32> to vector<8x32xf32>
    %88 = arith.subf %80, %87 : vector<8x32xf32>
    %89 = arith.mulf %88, %88 : vector<8x32xf32>
    %cst_33 = arith.constant dense<0.000000e+00> : vector<8xf32>
    %90 = vector.multi_reduction <add>, %89, %cst_33 [1] : vector<8x32xf32> to vector<8xf32>
    %91 = vector.shape_cast %90 : vector<8xf32> to vector<8x1xf32>
    %cst_34 = arith.constant 3.200000e+01 : f32
    %92 = vector.broadcast %cst_34 : f32 to vector<8x1xf32>
    %93 = arith.divf %91, %92 : vector<8x1xf32>
    %94 = vector.broadcast %86 : vector<8x1xf32> to vector<8x32xf32>
    %95 = arith.subf %80, %94 : vector<8x32xf32>
    %cst_35 = arith.constant 9.99999974E-6 : f32
    %96 = vector.broadcast %cst_35 : f32 to vector<8x1xf32>
    %97 = arith.addf %93, %96 : vector<8x1xf32>
    %98 = math.rsqrt %97 : vector<8x1xf32>
    %99 = vector.broadcast %98 : vector<8x1xf32> to vector<8x32xf32>
    %100 = arith.mulf %95, %99 : vector<8x32xf32>
    %101 = vector.broadcast %81 : vector<1x32xf32> to vector<8x32xf32>
    %102 = arith.mulf %100, %101 : vector<8x32xf32>
    %103 = vector.broadcast %82 : vector<1x32xf32> to vector<8x32xf32>
    %104 = arith.addf %102, %103 : vector<8x32xf32>
    %c0_36 = arith.constant 0 : index
    %c0_37 = arith.constant 0 : index
    %c0_38 = arith.constant 0 : index
    %105 = vector.load %arg8[%c0_36, %c0_37, %c0_38] : memref<1x8x32xf32, #tpu.memory_space<vmem>>, vector<1x8x32xf32>
    %106 = vector.shape_cast %105 : vector<1x8x32xf32> to vector<8x32xf32>
    %107 = vector.shape_cast %104 : vector<8x32xf32> to vector<1x8x32xf32>
    tpu.vector_store %arg8[%c0_36, %c0_37, %c0_38], %107 {strides = array<i32>} : memref<1x8x32xf32, #tpu.memory_space<vmem>>, vector<1x8x32xf32>,
    return
  }
  func.func @transform_0(%arg0: i32) -> (i32, i32, i32) {
    %c0_i32 = arith.constant 0 : i32
    %c0_i32_0 = arith.constant 0 : i32
    %c0_i32_1 = arith.constant 0 : i32
    return %arg0, %c0_i32, %c0_i32_0 : i32, i32, i32
  }
  func.func @transform_1(%arg0: i32) -> (i32, i32) {
    %c0_i32 = arith.constant 0 : i32
    %c0_i32_0 = arith.constant 0 : i32
    %c0_i32_1 = arith.constant 0 : i32
    return %c0_i32, %c0_i32_0 : i32, i32
  }
  func.func @transform_2(%arg0: i32) -> (i32, i32) {
    %c0_i32 = arith.constant 0 : i32
    %c0_i32_0 = arith.constant 0 : i32
    %c0_i32_1 = arith.constant 0 : i32
    return %c0_i32, %c0_i32_0 : i32, i32
  }
  func.func @transform_3(%arg0: i32) -> (i32, i32) {
    %c0_i32 = arith.constant 0 : i32
    %c0_i32_0 = arith.constant 0 : i32
    %c0_i32_1 = arith.constant 0 : i32
    return %c0_i32, %c0_i32_0 : i32, i32
  }
  func.func @transform_4(%arg0: i32) -> (i32, i32) {
    %c0_i32 = arith.constant 0 : i32
    %c0_i32_0 = arith.constant 0 : i32
    %c0_i32_1 = arith.constant 0 : i32
    return %c0_i32, %c0_i32_0 : i32, i32
  }
  func.func @transform_5(%arg0: i32) -> (i32, i32) {
    %c0_i32 = arith.constant 0 : i32
    %c0_i32_0 = arith.constant 0 : i32
    %c0_i32_1 = arith.constant 0 : i32
    return %c0_i32, %c0_i32_0 : i32, i32
  }
  func.func @transform_6(%arg0: i32) -> (i32, i32) {
    %c0_i32 = arith.constant 0 : i32
    %c0_i32_0 = arith.constant 0 : i32
    %c0_i32_1 = arith.constant 0 : i32
    return %c0_i32, %c0_i32_0 : i32, i32
  }
  func.func @transform_7(%arg0: i32) -> (i32, i32, i32) {
    %c0_i32 = arith.constant 0 : i32
    %c0_i32_0 = arith.constant 0 : i32
    %c0_i32_1 = arith.constant 0 : i32
    return %arg0, %c0_i32, %c0_i32_0 : i32, i32, i32
  }
}

module attributes {stable_mosaic.version = 11 : i64} {
  func.func @_ffn_block_kernel(%arg0: i32, %arg1: memref<16x32xf32, #tpu.memory_space<vmem>>, %arg2: memref<32x128xf32, #tpu.memory_space<vmem>>, %arg3: memref<1x128xf32, #tpu.memory_space<vmem>>, %arg4: memref<128x32xf32, #tpu.memory_space<vmem>>, %arg5: memref<1x32xf32, #tpu.memory_space<vmem>>, %arg6: memref<1x32xf32, #tpu.memory_space<vmem>>, %arg7: memref<1x32xf32, #tpu.memory_space<vmem>>, %arg8: memref<16x32xf32, #tpu.memory_space<vmem>>) attributes {dimension_semantics = [#tpu.dimension_semantics<parallel>], iteration_bounds = array<i64: 1>, scalar_prefetch = 0 : i64, scratch_operands = 0 : i64, tpu.core_type = #tpu.core_type<tc>, window_params = [{transform_indices = @transform_0, window_bounds = array<i64: 16, 32>}, {pipeline_mode = #tpu.pipeline_mode<synchronous>, transform_indices = @transform_1, window_bounds = array<i64: 32, 128>}, {pipeline_mode = #tpu.pipeline_mode<synchronous>, transform_indices = @transform_2, window_bounds = array<i64: 1, 128>}, {pipeline_mode = #tpu.pipeline_mode<synchronous>, transform_indices = @transform_3, window_bounds = array<i64: 128, 32>}, {pipeline_mode = #tpu.pipeline_mode<synchronous>, transform_indices = @transform_4, window_bounds = array<i64: 1, 32>}, {pipeline_mode = #tpu.pipeline_mode<synchronous>, transform_indices = @transform_5, window_bounds = array<i64: 1, 32>}, {pipeline_mode = #tpu.pipeline_mode<synchronous>, transform_indices = @transform_6, window_bounds = array<i64: 1, 32>}, {transform_indices = @transform_7, window_bounds = array<i64: 16, 32>}]} {
    %c0 = arith.constant 0 : index
    %c0_0 = arith.constant 0 : index
    %0 = vector.load %arg1[%c0, %c0_0] : memref<16x32xf32, #tpu.memory_space<vmem>>, vector<16x32xf32>
    %c0_1 = arith.constant 0 : index
    %c0_2 = arith.constant 0 : index
    %1 = vector.load %arg2[%c0_1, %c0_2] : memref<32x128xf32, #tpu.memory_space<vmem>>, vector<32x128xf32>
    %cst = arith.constant dense<0.000000e+00> : vector<16x128xf32>
    %2 = tpu.matmul %0, %1, %cst {dimension_numbers = #tpu.dot_dimension_numbers<[1], [0], [0], [1], [0, 0, 1, 1], [], []>} : vector<16x32xf32>, vector<32x128xf32>, vector<16x128xf32> -> vector<16x128xf32>
    %c0_3 = arith.constant 0 : index
    %c0_4 = arith.constant 0 : index
    %3 = vector.load %arg3[%c0_3, %c0_4] : memref<1x128xf32, #tpu.memory_space<vmem>>, vector<1x128xf32>
    %4 = vector.broadcast %3 : vector<1x128xf32> to vector<16x128xf32>
    %5 = arith.addf %2, %4 : vector<16x128xf32>
    %cst_5 = arith.constant 0.000000e+00 : f32
    %6 = vector.broadcast %cst_5 : f32 to vector<16x128xf32>
    %7 = arith.maximumf %5, %6 : vector<16x128xf32>
    %c0_6 = arith.constant 0 : index
    %c0_7 = arith.constant 0 : index
    %8 = vector.load %arg4[%c0_6, %c0_7] : memref<128x32xf32, #tpu.memory_space<vmem>>, vector<128x32xf32>
    %cst_8 = arith.constant dense<0.000000e+00> : vector<16x32xf32>
    %9 = tpu.matmul %7, %8, %cst_8 {dimension_numbers = #tpu.dot_dimension_numbers<[1], [0], [0], [1], [0, 0, 1, 1], [], []>} : vector<16x128xf32>, vector<128x32xf32>, vector<16x32xf32> -> vector<16x32xf32>
    %c0_9 = arith.constant 0 : index
    %c0_10 = arith.constant 0 : index
    %10 = vector.load %arg5[%c0_9, %c0_10] : memref<1x32xf32, #tpu.memory_space<vmem>>, vector<1x32xf32>
    %11 = vector.broadcast %10 : vector<1x32xf32> to vector<16x32xf32>
    %12 = arith.addf %9, %11 : vector<16x32xf32>
    %13 = arith.addf %0, %12 : vector<16x32xf32>
    %c0_11 = arith.constant 0 : index
    %c0_12 = arith.constant 0 : index
    %14 = vector.load %arg6[%c0_11, %c0_12] : memref<1x32xf32, #tpu.memory_space<vmem>>, vector<1x32xf32>
    %c0_13 = arith.constant 0 : index
    %c0_14 = arith.constant 0 : index
    %15 = vector.load %arg7[%c0_13, %c0_14] : memref<1x32xf32, #tpu.memory_space<vmem>>, vector<1x32xf32>
    %cst_15 = arith.constant dense<0.000000e+00> : vector<16xf32>
    %16 = vector.multi_reduction <add>, %13, %cst_15 [1] : vector<16x32xf32> to vector<16xf32>
    %17 = vector.shape_cast %16 : vector<16xf32> to vector<16x1xf32>
    %cst_16 = arith.constant 3.200000e+01 : f32
    %18 = vector.broadcast %cst_16 : f32 to vector<16x1xf32>
    %19 = arith.divf %17, %18 : vector<16x1xf32>
    %20 = vector.broadcast %19 : vector<16x1xf32> to vector<16x32xf32>
    %21 = arith.subf %13, %20 : vector<16x32xf32>
    %22 = arith.mulf %21, %21 : vector<16x32xf32>
    %cst_17 = arith.constant dense<0.000000e+00> : vector<16xf32>
    %23 = vector.multi_reduction <add>, %22, %cst_17 [1] : vector<16x32xf32> to vector<16xf32>
    %24 = vector.shape_cast %23 : vector<16xf32> to vector<16x1xf32>
    %cst_18 = arith.constant 3.200000e+01 : f32
    %25 = vector.broadcast %cst_18 : f32 to vector<16x1xf32>
    %26 = arith.divf %24, %25 : vector<16x1xf32>
    %27 = vector.broadcast %19 : vector<16x1xf32> to vector<16x32xf32>
    %28 = arith.subf %13, %27 : vector<16x32xf32>
    %cst_19 = arith.constant 9.99999974E-6 : f32
    %29 = vector.broadcast %cst_19 : f32 to vector<16x1xf32>
    %30 = arith.addf %26, %29 : vector<16x1xf32>
    %31 = math.rsqrt %30 : vector<16x1xf32>
    %32 = vector.broadcast %31 : vector<16x1xf32> to vector<16x32xf32>
    %33 = arith.mulf %28, %32 : vector<16x32xf32>
    %34 = vector.broadcast %14 : vector<1x32xf32> to vector<16x32xf32>
    %35 = arith.mulf %33, %34 : vector<16x32xf32>
    %36 = vector.broadcast %15 : vector<1x32xf32> to vector<16x32xf32>
    %37 = arith.addf %35, %36 : vector<16x32xf32>
    %c0_20 = arith.constant 0 : index
    %c0_21 = arith.constant 0 : index
    %38 = vector.load %arg8[%c0_20, %c0_21] : memref<16x32xf32, #tpu.memory_space<vmem>>, vector<16x32xf32>
    tpu.vector_store %arg8[%c0_20, %c0_21], %37 {strides = array<i32>} : memref<16x32xf32, #tpu.memory_space<vmem>>, vector<16x32xf32>,
    return
  }
  func.func @transform_0(%arg0: i32) -> (i32, i32) {
    %c0_i32 = arith.constant 0 : i32
    %c0_i32_0 = arith.constant 0 : i32
    return %arg0, %c0_i32 : i32, i32
  }
  func.func @transform_1(%arg0: i32) -> (i32, i32) {
    %c0_i32 = arith.constant 0 : i32
    %c0_i32_0 = arith.constant 0 : i32
    %c0_i32_1 = arith.constant 0 : i32
    return %c0_i32, %c0_i32_0 : i32, i32
  }
  func.func @transform_2(%arg0: i32) -> (i32, i32) {
    %c0_i32 = arith.constant 0 : i32
    %c0_i32_0 = arith.constant 0 : i32
    %c0_i32_1 = arith.constant 0 : i32
    return %c0_i32, %c0_i32_0 : i32, i32
  }
  func.func @transform_3(%arg0: i32) -> (i32, i32) {
    %c0_i32 = arith.constant 0 : i32
    %c0_i32_0 = arith.constant 0 : i32
    %c0_i32_1 = arith.constant 0 : i32
    return %c0_i32, %c0_i32_0 : i32, i32
  }
  func.func @transform_4(%arg0: i32) -> (i32, i32) {
    %c0_i32 = arith.constant 0 : i32
    %c0_i32_0 = arith.constant 0 : i32
    %c0_i32_1 = arith.constant 0 : i32
    return %c0_i32, %c0_i32_0 : i32, i32
  }
  func.func @transform_5(%arg0: i32) -> (i32, i32) {
    %c0_i32 = arith.constant 0 : i32
    %c0_i32_0 = arith.constant 0 : i32
    %c0_i32_1 = arith.constant 0 : i32
    return %c0_i32, %c0_i32_0 : i32, i32
  }
  func.func @transform_6(%arg0: i32) -> (i32, i32) {
    %c0_i32 = arith.constant 0 : i32
    %c0_i32_0 = arith.constant 0 : i32
    %c0_i32_1 = arith.constant 0 : i32
    return %c0_i32, %c0_i32_0 : i32, i32
  }
  func.func @transform_7(%arg0: i32) -> (i32, i32) {
    %c0_i32 = arith.constant 0 : i32
    %c0_i32_0 = arith.constant 0 : i32
    return %arg0, %c0_i32 : i32, i32
  }
}

module attributes {stable_mosaic.version = 11 : i64} {
  func.func @_self_attn_block_kernel(%arg0: i32, %arg1: memref<1x8x32xf32, #tpu.memory_space<vmem>>, %arg2: memref<32x96xf32, #tpu.memory_space<vmem>>, %arg3: memref<1x96xf32, #tpu.memory_space<vmem>>, %arg4: memref<32x32xf32, #tpu.memory_space<vmem>>, %arg5: memref<1x32xf32, #tpu.memory_space<vmem>>, %arg6: memref<1x32xf32, #tpu.memory_space<vmem>>, %arg7: memref<1x32xf32, #tpu.memory_space<vmem>>, %arg8: memref<1x8x32xf32, #tpu.memory_space<vmem>>) attributes {dimension_semantics = [#tpu.dimension_semantics<parallel>], iteration_bounds = array<i64: 2>, scalar_prefetch = 0 : i64, scratch_operands = 0 : i64, tpu.core_type = #tpu.core_type<tc>, window_params = [{transform_indices = @transform_0, window_bounds = array<i64: 1, 8, 32>}, {pipeline_mode = #tpu.pipeline_mode<synchronous>, transform_indices = @transform_1, window_bounds = array<i64: 32, 96>}, {pipeline_mode = #tpu.pipeline_mode<synchronous>, transform_indices = @transform_2, window_bounds = array<i64: 1, 96>}, {pipeline_mode = #tpu.pipeline_mode<synchronous>, transform_indices = @transform_3, window_bounds = array<i64: 32, 32>}, {pipeline_mode = #tpu.pipeline_mode<synchronous>, transform_indices = @transform_4, window_bounds = array<i64: 1, 32>}, {pipeline_mode = #tpu.pipeline_mode<synchronous>, transform_indices = @transform_5, window_bounds = array<i64: 1, 32>}, {pipeline_mode = #tpu.pipeline_mode<synchronous>, transform_indices = @transform_6, window_bounds = array<i64: 1, 32>}, {transform_indices = @transform_7, window_bounds = array<i64: 1, 8, 32>}]} {
    %c0 = arith.constant 0 : index
    %c0_0 = arith.constant 0 : index
    %c0_1 = arith.constant 0 : index
    %0 = vector.load %arg1[%c0, %c0_0, %c0_1] : memref<1x8x32xf32, #tpu.memory_space<vmem>>, vector<1x8x32xf32>
    %1 = vector.shape_cast %0 : vector<1x8x32xf32> to vector<8x32xf32>
    %c0_2 = arith.constant 0 : index
    %c0_3 = arith.constant 0 : index
    %2 = vector.load %arg2[%c0_2, %c0_3] : memref<32x96xf32, #tpu.memory_space<vmem>>, vector<32x96xf32>
    %cst = arith.constant dense<0.000000e+00> : vector<8x96xf32>
    %3 = tpu.matmul %1, %2, %cst {dimension_numbers = #tpu.dot_dimension_numbers<[1], [0], [0], [1], [0, 0, 1, 1], [], []>} : vector<8x32xf32>, vector<32x96xf32>, vector<8x96xf32> -> vector<8x96xf32>
    %c0_4 = arith.constant 0 : index
    %c0_5 = arith.constant 0 : index
    %4 = vector.load %arg3[%c0_4, %c0_5] : memref<1x96xf32, #tpu.memory_space<vmem>>, vector<1x96xf32>
    %5 = vector.broadcast %4 : vector<1x96xf32> to vector<8x96xf32>
    %6 = arith.addf %3, %5 : vector<8x96xf32>
    %7 = vector.extract_strided_slice %6 {offsets = [0, 0], sizes = [8, 32], strides = [1, 1]} : vector<8x96xf32> to vector<8x32xf32>
    %8 = vector.extract_strided_slice %6 {offsets = [0, 32], sizes = [8, 32], strides = [1, 1]} : vector<8x96xf32> to vector<8x32xf32>
    %9 = vector.extract_strided_slice %6 {offsets = [0, 64], sizes = [8, 32], strides = [1, 1]} : vector<8x96xf32> to vector<8x32xf32>
    %10 = tpu.iota {dimensions = array<i32: 0>} : vector<8x8xi32>
    %11 = tpu.iota {dimensions = array<i32: 1>} : vector<8x8xi32>
    %12 = arith.cmpi sle, %11, %10 : vector<8x8xi32>
    %13 = vector.extract_strided_slice %7 {offsets = [0, 0], sizes = [8, 8], strides = [1, 1]} : vector<8x32xf32> to vector<8x8xf32>
    %14 = vector.extract_strided_slice %8 {offsets = [0, 0], sizes = [8, 8], strides = [1, 1]} : vector<8x32xf32> to vector<8x8xf32>
    %15 = vector.extract_strided_slice %9 {offsets = [0, 0], sizes = [8, 8], strides = [1, 1]} : vector<8x32xf32> to vector<8x8xf32>
    %16 = tpu.transpose %14, [1, 0] : vector<8x8xf32> -> vector<8x8xf32>
    %cst_6 = arith.constant dense<0.000000e+00> : vector<8x8xf32>
    %17 = tpu.matmul %13, %16, %cst_6 {dimension_numbers = #tpu.dot_dimension_numbers<[1], [0], [0], [1], [0, 0, 1, 1], [], []>} : vector<8x8xf32>, vector<8x8xf32>, vector<8x8xf32> -> vector<8x8xf32>
    %cst_7 = arith.constant -1.000000e+30 : f32
    %18 = vector.broadcast %cst_7 : f32 to vector<8x8xf32>
    %19 = arith.select %12, %17, %18 : vector<8x8xi1>, vector<8x8xf32>
    %cst_8 = arith.constant dense<0xFF800000> : vector<8xf32>
    %20 = vector.multi_reduction <maximumf>, %19, %cst_8 [1] : vector<8x8xf32> to vector<8xf32>
    %21 = vector.shape_cast %20 : vector<8xf32> to vector<8x1xf32>
    %22 = vector.broadcast %21 : vector<8x1xf32> to vector<8x8xf32>
    %23 = arith.subf %19, %22 : vector<8x8xf32>
    %24 = math.exp %23 : vector<8x8xf32>
    %cst_9 = arith.constant dense<0.000000e+00> : vector<8xf32>
    %25 = vector.multi_reduction <add>, %24, %cst_9 [1] : vector<8x8xf32> to vector<8xf32>
    %26 = vector.shape_cast %25 : vector<8xf32> to vector<8x1xf32>
    %27 = tpu.reciprocal %26 {approx = true} : vector<8x1xf32> -> vector<8x1xf32>
    %28 = vector.broadcast %27 : vector<8x1xf32> to vector<8x8xf32>
    %29 = arith.mulf %24, %28 : vector<8x8xf32>
    %cst_10 = arith.constant dense<0.000000e+00> : vector<8x8xf32>
    %30 = tpu.matmul %29, %15, %cst_10 {dimension_numbers = #tpu.dot_dimension_numbers<[1], [0], [0], [1], [0, 0, 1, 1], [], []>} : vector<8x8xf32>, vector<8x8xf32>, vector<8x8xf32> -> vector<8x8xf32>
    %31 = vector.extract_strided_slice %7 {offsets = [0, 8], sizes = [8, 8], strides = [1, 1]} : vector<8x32xf32> to vector<8x8xf32>
    %32 = vector.extract_strided_slice %8 {offsets = [0, 8], sizes = [8, 8], strides = [1, 1]} : vector<8x32xf32> to vector<8x8xf32>
    %33 = vector.extract_strided_slice %9 {offsets = [0, 8], sizes = [8, 8], strides = [1, 1]} : vector<8x32xf32> to vector<8x8xf32>
    %34 = tpu.transpose %32, [1, 0] : vector<8x8xf32> -> vector<8x8xf32>
    %cst_11 = arith.constant dense<0.000000e+00> : vector<8x8xf32>
    %35 = tpu.matmul %31, %34, %cst_11 {dimension_numbers = #tpu.dot_dimension_numbers<[1], [0], [0], [1], [0, 0, 1, 1], [], []>} : vector<8x8xf32>, vector<8x8xf32>, vector<8x8xf32> -> vector<8x8xf32>
    %cst_12 = arith.constant -1.000000e+30 : f32
    %36 = vector.broadcast %cst_12 : f32 to vector<8x8xf32>
    %37 = arith.select %12, %35, %36 : vector<8x8xi1>, vector<8x8xf32>
    %cst_13 = arith.constant dense<0xFF800000> : vector<8xf32>
    %38 = vector.multi_reduction <maximumf>, %37, %cst_13 [1] : vector<8x8xf32> to vector<8xf32>
    %39 = vector.shape_cast %38 : vector<8xf32> to vector<8x1xf32>
    %40 = vector.broadcast %39 : vector<8x1xf32> to vector<8x8xf32>
    %41 = arith.subf %37, %40 : vector<8x8xf32>
    %42 = math.exp %41 : vector<8x8xf32>
    %cst_14 = arith.constant dense<0.000000e+00> : vector<8xf32>
    %43 = vector.multi_reduction <add>, %42, %cst_14 [1] : vector<8x8xf32> to vector<8xf32>
    %44 = vector.shape_cast %43 : vector<8xf32> to vector<8x1xf32>
    %45 = tpu.reciprocal %44 {approx = true} : vector<8x1xf32> -> vector<8x1xf32>
    %46 = vector.broadcast %45 : vector<8x1xf32> to vector<8x8xf32>
    %47 = arith.mulf %42, %46 : vector<8x8xf32>
    %cst_15 = arith.constant dense<0.000000e+00> : vector<8x8xf32>
    %48 = tpu.matmul %47, %33, %cst_15 {dimension_numbers = #tpu.dot_dimension_numbers<[1], [0], [0], [1], [0, 0, 1, 1], [], []>} : vector<8x8xf32>, vector<8x8xf32>, vector<8x8xf32> -> vector<8x8xf32>
    %49 = vector.extract_strided_slice %7 {offsets = [0, 16], sizes = [8, 8], strides = [1, 1]} : vector<8x32xf32> to vector<8x8xf32>
    %50 = vector.extract_strided_slice %8 {offsets = [0, 16], sizes = [8, 8], strides = [1, 1]} : vector<8x32xf32> to vector<8x8xf32>
    %51 = vector.extract_strided_slice %9 {offsets = [0, 16], sizes = [8, 8], strides = [1, 1]} : vector<8x32xf32> to vector<8x8xf32>
    %52 = tpu.transpose %50, [1, 0] : vector<8x8xf32> -> vector<8x8xf32>
    %cst_16 = arith.constant dense<0.000000e+00> : vector<8x8xf32>
    %53 = tpu.matmul %49, %52, %cst_16 {dimension_numbers = #tpu.dot_dimension_numbers<[1], [0], [0], [1], [0, 0, 1, 1], [], []>} : vector<8x8xf32>, vector<8x8xf32>, vector<8x8xf32> -> vector<8x8xf32>
    %cst_17 = arith.constant -1.000000e+30 : f32
    %54 = vector.broadcast %cst_17 : f32 to vector<8x8xf32>
    %55 = arith.select %12, %53, %54 : vector<8x8xi1>, vector<8x8xf32>
    %cst_18 = arith.constant dense<0xFF800000> : vector<8xf32>
    %56 = vector.multi_reduction <maximumf>, %55, %cst_18 [1] : vector<8x8xf32> to vector<8xf32>
    %57 = vector.shape_cast %56 : vector<8xf32> to vector<8x1xf32>
    %58 = vector.broadcast %57 : vector<8x1xf32> to vector<8x8xf32>
    %59 = arith.subf %55, %58 : vector<8x8xf32>
    %60 = math.exp %59 : vector<8x8xf32>
    %cst_19 = arith.constant dense<0.000000e+00> : vector<8xf32>
    %61 = vector.multi_reduction <add>, %60, %cst_19 [1] : vector<8x8xf32> to vector<8xf32>
    %62 = vector.shape_cast %61 : vector<8xf32> to vector<8x1xf32>
    %63 = tpu.reciprocal %62 {approx = true} : vector<8x1xf32> -> vector<8x1xf32>
    %64 = vector.broadcast %63 : vector<8x1xf32> to vector<8x8xf32>
    %65 = arith.mulf %60, %64 : vector<8x8xf32>
    %cst_20 = arith.constant dense<0.000000e+00> : vector<8x8xf32>
    %66 = tpu.matmul %65, %51, %cst_20 {dimension_numbers = #tpu.dot_dimension_numbers<[1], [0], [0], [1], [0, 0, 1, 1], [], []>} : vector<8x8xf32>, vector<8x8xf32>, vector<8x8xf32> -> vector<8x8xf32>
    %67 = vector.extract_strided_slice %7 {offsets = [0, 24], sizes = [8, 8], strides = [1, 1]} : vector<8x32xf32> to vector<8x8xf32>
    %68 = vector.extract_strided_slice %8 {offsets = [0, 24], sizes = [8, 8], strides = [1, 1]} : vector<8x32xf32> to vector<8x8xf32>
    %69 = vector.extract_strided_slice %9 {offsets = [0, 24], sizes = [8, 8], strides = [1, 1]} : vector<8x32xf32> to vector<8x8xf32>
    %70 = tpu.transpose %68, [1, 0] : vector<8x8xf32> -> vector<8x8xf32>
    %cst_21 = arith.constant dense<0.000000e+00> : vector<8x8xf32>
    %71 = tpu.matmul %67, %70, %cst_21 {dimension_numbers = #tpu.dot_dimension_numbers<[1], [0], [0], [1], [0, 0, 1, 1], [], []>} : vector<8x8xf32>, vector<8x8xf32>, vector<8x8xf32> -> vector<8x8xf32>
    %cst_22 = arith.constant -1.000000e+30 : f32
    %72 = vector.broadcast %cst_22 : f32 to vector<8x8xf32>
    %73 = arith.select %12, %71, %72 : vector<8x8xi1>, vector<8x8xf32>
    %cst_23 = arith.constant dense<0xFF800000> : vector<8xf32>
    %74 = vector.multi_reduction <maximumf>, %73, %cst_23 [1] : vector<8x8xf32> to vector<8xf32>
    %75 = vector.shape_cast %74 : vector<8xf32> to vector<8x1xf32>
    %76 = vector.broadcast %75 : vector<8x1xf32> to vector<8x8xf32>
    %77 = arith.subf %73, %76 : vector<8x8xf32>
    %78 = math.exp %77 : vector<8x8xf32>
    %cst_24 = arith.constant dense<0.000000e+00> : vector<8xf32>
    %79 = vector.multi_reduction <add>, %78, %cst_24 [1] : vector<8x8xf32> to vector<8xf32>
    %80 = vector.shape_cast %79 : vector<8xf32> to vector<8x1xf32>
    %81 = tpu.reciprocal %80 {approx = true} : vector<8x1xf32> -> vector<8x1xf32>
    %82 = vector.broadcast %81 : vector<8x1xf32> to vector<8x8xf32>
    %83 = arith.mulf %78, %82 : vector<8x8xf32>
    %cst_25 = arith.constant dense<0.000000e+00> : vector<8x8xf32>
    %84 = tpu.matmul %83, %69, %cst_25 {dimension_numbers = #tpu.dot_dimension_numbers<[1], [0], [0], [1], [0, 0, 1, 1], [], []>} : vector<8x8xf32>, vector<8x8xf32>, vector<8x8xf32> -> vector<8x8xf32>
    %85 = tpu.concatenate %30, %48, %66, %84 in 1 : vector<8x8xf32>, vector<8x8xf32>, vector<8x8xf32>, vector<8x8xf32> -> vector<8x32xf32>
    %c0_26 = arith.constant 0 : index
    %c0_27 = arith.constant 0 : index
    %86 = vector.load %arg4[%c0_26, %c0_27] : memref<32x32xf32, #tpu.memory_space<vmem>>, vector<32x32xf32>
    %cst_28 = arith.constant dense<0.000000e+00> : vector<8x32xf32>
    %87 = tpu.matmul %85, %86, %cst_28 {dimension_numbers = #tpu.dot_dimension_numbers<[1], [0], [0], [1], [0, 0, 1, 1], [], []>} : vector<8x32xf32>, vector<32x32xf32>, vector<8x32xf32> -> vector<8x32xf32>
    %c0_29 = arith.constant 0 : index
    %c0_30 = arith.constant 0 : index
    %88 = vector.load %arg5[%c0_29, %c0_30] : memref<1x32xf32, #tpu.memory_space<vmem>>, vector<1x32xf32>
    %89 = vector.broadcast %88 : vector<1x32xf32> to vector<8x32xf32>
    %90 = arith.addf %87, %89 : vector<8x32xf32>
    %91 = arith.addf %1, %90 : vector<8x32xf32>
    %c0_31 = arith.constant 0 : index
    %c0_32 = arith.constant 0 : index
    %92 = vector.load %arg6[%c0_31, %c0_32] : memref<1x32xf32, #tpu.memory_space<vmem>>, vector<1x32xf32>
    %c0_33 = arith.constant 0 : index
    %c0_34 = arith.constant 0 : index
    %93 = vector.load %arg7[%c0_33, %c0_34] : memref<1x32xf32, #tpu.memory_space<vmem>>, vector<1x32xf32>
    %cst_35 = arith.constant dense<0.000000e+00> : vector<8xf32>
    %94 = vector.multi_reduction <add>, %91, %cst_35 [1] : vector<8x32xf32> to vector<8xf32>
    %95 = vector.shape_cast %94 : vector<8xf32> to vector<8x1xf32>
    %cst_36 = arith.constant 3.200000e+01 : f32
    %96 = vector.broadcast %cst_36 : f32 to vector<8x1xf32>
    %97 = arith.divf %95, %96 : vector<8x1xf32>
    %98 = vector.broadcast %97 : vector<8x1xf32> to vector<8x32xf32>
    %99 = arith.subf %91, %98 : vector<8x32xf32>
    %100 = arith.mulf %99, %99 : vector<8x32xf32>
    %cst_37 = arith.constant dense<0.000000e+00> : vector<8xf32>
    %101 = vector.multi_reduction <add>, %100, %cst_37 [1] : vector<8x32xf32> to vector<8xf32>
    %102 = vector.shape_cast %101 : vector<8xf32> to vector<8x1xf32>
    %cst_38 = arith.constant 3.200000e+01 : f32
    %103 = vector.broadcast %cst_38 : f32 to vector<8x1xf32>
    %104 = arith.divf %102, %103 : vector<8x1xf32>
    %105 = vector.broadcast %97 : vector<8x1xf32> to vector<8x32xf32>
    %106 = arith.subf %91, %105 : vector<8x32xf32>
    %cst_39 = arith.constant 9.99999974E-6 : f32
    %107 = vector.broadcast %cst_39 : f32 to vector<8x1xf32>
    %108 = arith.addf %104, %107 : vector<8x1xf32>
    %109 = math.rsqrt %108 : vector<8x1xf32>
    %110 = vector.broadcast %109 : vector<8x1xf32> to vector<8x32xf32>
    %111 = arith.mulf %106, %110 : vector<8x32xf32>
    %112 = vector.broadcast %92 : vector<1x32xf32> to vector<8x32xf32>
    %113 = arith.mulf %111, %112 : vector<8x32xf32>
    %114 = vector.broadcast %93 : vector<1x32xf32> to vector<8x32xf32>
    %115 = arith.addf %113, %114 : vector<8x32xf32>
    %c0_40 = arith.constant 0 : index
    %c0_41 = arith.constant 0 : index
    %c0_42 = arith.constant 0 : index
    %116 = vector.load %arg8[%c0_40, %c0_41, %c0_42] : memref<1x8x32xf32, #tpu.memory_space<vmem>>, vector<1x8x32xf32>
    %117 = vector.shape_cast %116 : vector<1x8x32xf32> to vector<8x32xf32>
    %118 = vector.shape_cast %115 : vector<8x32xf32> to vector<1x8x32xf32>
    tpu.vector_store %arg8[%c0_40, %c0_41, %c0_42], %118 {strides = array<i32>} : memref<1x8x32xf32, #tpu.memory_space<vmem>>, vector<1x8x32xf32>,
    return
  }
  func.func @transform_0(%arg0: i32) -> (i32, i32, i32) {
    %c0_i32 = arith.constant 0 : i32
    %c0_i32_0 = arith.constant 0 : i32
    %c0_i32_1 = arith.constant 0 : i32
    return %arg0, %c0_i32, %c0_i32_0 : i32, i32, i32
  }
  func.func @transform_1(%arg0: i32) -> (i32, i32) {
    %c0_i32 = arith.constant 0 : i32
    %c0_i32_0 = arith.constant 0 : i32
    %c0_i32_1 = arith.constant 0 : i32
    return %c0_i32, %c0_i32_0 : i32, i32
  }
  func.func @transform_2(%arg0: i32) -> (i32, i32) {
    %c0_i32 = arith.constant 0 : i32
    %c0_i32_0 = arith.constant 0 : i32
    %c0_i32_1 = arith.constant 0 : i32
    return %c0_i32, %c0_i32_0 : i32, i32
  }
  func.func @transform_3(%arg0: i32) -> (i32, i32) {
    %c0_i32 = arith.constant 0 : i32
    %c0_i32_0 = arith.constant 0 : i32
    %c0_i32_1 = arith.constant 0 : i32
    return %c0_i32, %c0_i32_0 : i32, i32
  }
  func.func @transform_4(%arg0: i32) -> (i32, i32) {
    %c0_i32 = arith.constant 0 : i32
    %c0_i32_0 = arith.constant 0 : i32
    %c0_i32_1 = arith.constant 0 : i32
    return %c0_i32, %c0_i32_0 : i32, i32
  }
  func.func @transform_5(%arg0: i32) -> (i32, i32) {
    %c0_i32 = arith.constant 0 : i32
    %c0_i32_0 = arith.constant 0 : i32
    %c0_i32_1 = arith.constant 0 : i32
    return %c0_i32, %c0_i32_0 : i32, i32
  }
  func.func @transform_6(%arg0: i32) -> (i32, i32) {
    %c0_i32 = arith.constant 0 : i32
    %c0_i32_0 = arith.constant 0 : i32
    %c0_i32_1 = arith.constant 0 : i32
    return %c0_i32, %c0_i32_0 : i32, i32
  }
  func.func @transform_7(%arg0: i32) -> (i32, i32, i32) {
    %c0_i32 = arith.constant 0 : i32
    %c0_i32_0 = arith.constant 0 : i32
    %c0_i32_1 = arith.constant 0 : i32
    return %arg0, %c0_i32, %c0_i32_0 : i32, i32, i32
  }
}

module attributes {stable_mosaic.version = 11 : i64} {
  func.func @_cross_attn_block_kernel(%arg0: i32, %arg1: memref<1x8x32xf32, #tpu.memory_space<vmem>>, %arg2: memref<1x8x32xf32, #tpu.memory_space<vmem>>, %arg3: memref<32x32xf32, #tpu.memory_space<vmem>>, %arg4: memref<1x32xf32, #tpu.memory_space<vmem>>, %arg5: memref<32x64xf32, #tpu.memory_space<vmem>>, %arg6: memref<1x64xf32, #tpu.memory_space<vmem>>, %arg7: memref<32x32xf32, #tpu.memory_space<vmem>>, %arg8: memref<1x32xf32, #tpu.memory_space<vmem>>, %arg9: memref<1x32xf32, #tpu.memory_space<vmem>>, %arg10: memref<1x32xf32, #tpu.memory_space<vmem>>, %arg11: memref<1x8x32xf32, #tpu.memory_space<vmem>>) attributes {dimension_semantics = [#tpu.dimension_semantics<parallel>], iteration_bounds = array<i64: 2>, scalar_prefetch = 0 : i64, scratch_operands = 0 : i64, tpu.core_type = #tpu.core_type<tc>, window_params = [{transform_indices = @transform_0, window_bounds = array<i64: 1, 8, 32>}, {transform_indices = @transform_1, window_bounds = array<i64: 1, 8, 32>}, {pipeline_mode = #tpu.pipeline_mode<synchronous>, transform_indices = @transform_2, window_bounds = array<i64: 32, 32>}, {pipeline_mode = #tpu.pipeline_mode<synchronous>, transform_indices = @transform_3, window_bounds = array<i64: 1, 32>}, {pipeline_mode = #tpu.pipeline_mode<synchronous>, transform_indices = @transform_4, window_bounds = array<i64: 32, 64>}, {pipeline_mode = #tpu.pipeline_mode<synchronous>, transform_indices = @transform_5, window_bounds = array<i64: 1, 64>}, {pipeline_mode = #tpu.pipeline_mode<synchronous>, transform_indices = @transform_6, window_bounds = array<i64: 32, 32>}, {pipeline_mode = #tpu.pipeline_mode<synchronous>, transform_indices = @transform_7, window_bounds = array<i64: 1, 32>}, {pipeline_mode = #tpu.pipeline_mode<synchronous>, transform_indices = @transform_8, window_bounds = array<i64: 1, 32>}, {pipeline_mode = #tpu.pipeline_mode<synchronous>, transform_indices = @transform_9, window_bounds = array<i64: 1, 32>}, {transform_indices = @transform_10, window_bounds = array<i64: 1, 8, 32>}]} {
    %c0 = arith.constant 0 : index
    %c0_0 = arith.constant 0 : index
    %c0_1 = arith.constant 0 : index
    %0 = vector.load %arg1[%c0, %c0_0, %c0_1] : memref<1x8x32xf32, #tpu.memory_space<vmem>>, vector<1x8x32xf32>
    %1 = vector.shape_cast %0 : vector<1x8x32xf32> to vector<8x32xf32>
    %c0_2 = arith.constant 0 : index
    %c0_3 = arith.constant 0 : index
    %c0_4 = arith.constant 0 : index
    %2 = vector.load %arg2[%c0_2, %c0_3, %c0_4] : memref<1x8x32xf32, #tpu.memory_space<vmem>>, vector<1x8x32xf32>
    %3 = vector.shape_cast %2 : vector<1x8x32xf32> to vector<8x32xf32>
    %c0_5 = arith.constant 0 : index
    %c0_6 = arith.constant 0 : index
    %4 = vector.load %arg3[%c0_5, %c0_6] : memref<32x32xf32, #tpu.memory_space<vmem>>, vector<32x32xf32>
    %cst = arith.constant dense<0.000000e+00> : vector<8x32xf32>
    %5 = tpu.matmul %1, %4, %cst {dimension_numbers = #tpu.dot_dimension_numbers<[1], [0], [0], [1], [0, 0, 1, 1], [], []>} : vector<8x32xf32>, vector<32x32xf32>, vector<8x32xf32> -> vector<8x32xf32>
    %c0_7 = arith.constant 0 : index
    %c0_8 = arith.constant 0 : index
    %6 = vector.load %arg4[%c0_7, %c0_8] : memref<1x32xf32, #tpu.memory_space<vmem>>, vector<1x32xf32>
    %7 = vector.broadcast %6 : vector<1x32xf32> to vector<8x32xf32>
    %8 = arith.addf %5, %7 : vector<8x32xf32>
    %c0_9 = arith.constant 0 : index
    %c0_10 = arith.constant 0 : index
    %9 = vector.load %arg5[%c0_9, %c0_10] : memref<32x64xf32, #tpu.memory_space<vmem>>, vector<32x64xf32>
    %cst_11 = arith.constant dense<0.000000e+00> : vector<8x64xf32>
    %10 = tpu.matmul %3, %9, %cst_11 {dimension_numbers = #tpu.dot_dimension_numbers<[1], [0], [0], [1], [0, 0, 1, 1], [], []>} : vector<8x32xf32>, vector<32x64xf32>, vector<8x64xf32> -> vector<8x64xf32>
    %c0_12 = arith.constant 0 : index
    %c0_13 = arith.constant 0 : index
    %11 = vector.load %arg6[%c0_12, %c0_13] : memref<1x64xf32, #tpu.memory_space<vmem>>, vector<1x64xf32>
    %12 = vector.broadcast %11 : vector<1x64xf32> to vector<8x64xf32>
    %13 = arith.addf %10, %12 : vector<8x64xf32>
    %14 = vector.extract_strided_slice %13 {offsets = [0, 0], sizes = [8, 32], strides = [1, 1]} : vector<8x64xf32> to vector<8x32xf32>
    %15 = vector.extract_strided_slice %13 {offsets = [0, 32], sizes = [8, 32], strides = [1, 1]} : vector<8x64xf32> to vector<8x32xf32>
    %16 = vector.extract_strided_slice %8 {offsets = [0, 0], sizes = [8, 8], strides = [1, 1]} : vector<8x32xf32> to vector<8x8xf32>
    %17 = vector.extract_strided_slice %14 {offsets = [0, 0], sizes = [8, 8], strides = [1, 1]} : vector<8x32xf32> to vector<8x8xf32>
    %18 = vector.extract_strided_slice %15 {offsets = [0, 0], sizes = [8, 8], strides = [1, 1]} : vector<8x32xf32> to vector<8x8xf32>
    %19 = tpu.transpose %17, [1, 0] : vector<8x8xf32> -> vector<8x8xf32>
    %cst_14 = arith.constant dense<0.000000e+00> : vector<8x8xf32>
    %20 = tpu.matmul %16, %19, %cst_14 {dimension_numbers = #tpu.dot_dimension_numbers<[1], [0], [0], [1], [0, 0, 1, 1], [], []>} : vector<8x8xf32>, vector<8x8xf32>, vector<8x8xf32> -> vector<8x8xf32>
    %cst_15 = arith.constant dense<0xFF800000> : vector<8xf32>
    %21 = vector.multi_reduction <maximumf>, %20, %cst_15 [1] : vector<8x8xf32> to vector<8xf32>
    %22 = vector.shape_cast %21 : vector<8xf32> to vector<8x1xf32>
    %23 = vector.broadcast %22 : vector<8x1xf32> to vector<8x8xf32>
    %24 = arith.subf %20, %23 : vector<8x8xf32>
    %25 = math.exp %24 : vector<8x8xf32>
    %cst_16 = arith.constant dense<0.000000e+00> : vector<8xf32>
    %26 = vector.multi_reduction <add>, %25, %cst_16 [1] : vector<8x8xf32> to vector<8xf32>
    %27 = vector.shape_cast %26 : vector<8xf32> to vector<8x1xf32>
    %28 = tpu.reciprocal %27 {approx = true} : vector<8x1xf32> -> vector<8x1xf32>
    %29 = vector.broadcast %28 : vector<8x1xf32> to vector<8x8xf32>
    %30 = arith.mulf %25, %29 : vector<8x8xf32>
    %cst_17 = arith.constant dense<0.000000e+00> : vector<8x8xf32>
    %31 = tpu.matmul %30, %18, %cst_17 {dimension_numbers = #tpu.dot_dimension_numbers<[1], [0], [0], [1], [0, 0, 1, 1], [], []>} : vector<8x8xf32>, vector<8x8xf32>, vector<8x8xf32> -> vector<8x8xf32>
    %32 = vector.extract_strided_slice %8 {offsets = [0, 8], sizes = [8, 8], strides = [1, 1]} : vector<8x32xf32> to vector<8x8xf32>
    %33 = vector.extract_strided_slice %14 {offsets = [0, 8], sizes = [8, 8], strides = [1, 1]} : vector<8x32xf32> to vector<8x8xf32>
    %34 = vector.extract_strided_slice %15 {offsets = [0, 8], sizes = [8, 8], strides = [1, 1]} : vector<8x32xf32> to vector<8x8xf32>
    %35 = tpu.transpose %33, [1, 0] : vector<8x8xf32> -> vector<8x8xf32>
    %cst_18 = arith.constant dense<0.000000e+00> : vector<8x8xf32>
    %36 = tpu.matmul %32, %35, %cst_18 {dimension_numbers = #tpu.dot_dimension_numbers<[1], [0], [0], [1], [0, 0, 1, 1], [], []>} : vector<8x8xf32>, vector<8x8xf32>, vector<8x8xf32> -> vector<8x8xf32>
    %cst_19 = arith.constant dense<0xFF800000> : vector<8xf32>
    %37 = vector.multi_reduction <maximumf>, %36, %cst_19 [1] : vector<8x8xf32> to vector<8xf32>
    %38 = vector.shape_cast %37 : vector<8xf32> to vector<8x1xf32>
    %39 = vector.broadcast %38 : vector<8x1xf32> to vector<8x8xf32>
    %40 = arith.subf %36, %39 : vector<8x8xf32>
    %41 = math.exp %40 : vector<8x8xf32>
    %cst_20 = arith.constant dense<0.000000e+00> : vector<8xf32>
    %42 = vector.multi_reduction <add>, %41, %cst_20 [1] : vector<8x8xf32> to vector<8xf32>
    %43 = vector.shape_cast %42 : vector<8xf32> to vector<8x1xf32>
    %44 = tpu.reciprocal %43 {approx = true} : vector<8x1xf32> -> vector<8x1xf32>
    %45 = vector.broadcast %44 : vector<8x1xf32> to vector<8x8xf32>
    %46 = arith.mulf %41, %45 : vector<8x8xf32>
    %cst_21 = arith.constant dense<0.000000e+00> : vector<8x8xf32>
    %47 = tpu.matmul %46, %34, %cst_21 {dimension_numbers = #tpu.dot_dimension_numbers<[1], [0], [0], [1], [0, 0, 1, 1], [], []>} : vector<8x8xf32>, vector<8x8xf32>, vector<8x8xf32> -> vector<8x8xf32>
    %48 = vector.extract_strided_slice %8 {offsets = [0, 16], sizes = [8, 8], strides = [1, 1]} : vector<8x32xf32> to vector<8x8xf32>
    %49 = vector.extract_strided_slice %14 {offsets = [0, 16], sizes = [8, 8], strides = [1, 1]} : vector<8x32xf32> to vector<8x8xf32>
    %50 = vector.extract_strided_slice %15 {offsets = [0, 16], sizes = [8, 8], strides = [1, 1]} : vector<8x32xf32> to vector<8x8xf32>
    %51 = tpu.transpose %49, [1, 0] : vector<8x8xf32> -> vector<8x8xf32>
    %cst_22 = arith.constant dense<0.000000e+00> : vector<8x8xf32>
    %52 = tpu.matmul %48, %51, %cst_22 {dimension_numbers = #tpu.dot_dimension_numbers<[1], [0], [0], [1], [0, 0, 1, 1], [], []>} : vector<8x8xf32>, vector<8x8xf32>, vector<8x8xf32> -> vector<8x8xf32>
    %cst_23 = arith.constant dense<0xFF800000> : vector<8xf32>
    %53 = vector.multi_reduction <maximumf>, %52, %cst_23 [1] : vector<8x8xf32> to vector<8xf32>
    %54 = vector.shape_cast %53 : vector<8xf32> to vector<8x1xf32>
    %55 = vector.broadcast %54 : vector<8x1xf32> to vector<8x8xf32>
    %56 = arith.subf %52, %55 : vector<8x8xf32>
    %57 = math.exp %56 : vector<8x8xf32>
    %cst_24 = arith.constant dense<0.000000e+00> : vector<8xf32>
    %58 = vector.multi_reduction <add>, %57, %cst_24 [1] : vector<8x8xf32> to vector<8xf32>
    %59 = vector.shape_cast %58 : vector<8xf32> to vector<8x1xf32>
    %60 = tpu.reciprocal %59 {approx = true} : vector<8x1xf32> -> vector<8x1xf32>
    %61 = vector.broadcast %60 : vector<8x1xf32> to vector<8x8xf32>
    %62 = arith.mulf %57, %61 : vector<8x8xf32>
    %cst_25 = arith.constant dense<0.000000e+00> : vector<8x8xf32>
    %63 = tpu.matmul %62, %50, %cst_25 {dimension_numbers = #tpu.dot_dimension_numbers<[1], [0], [0], [1], [0, 0, 1, 1], [], []>} : vector<8x8xf32>, vector<8x8xf32>, vector<8x8xf32> -> vector<8x8xf32>
    %64 = vector.extract_strided_slice %8 {offsets = [0, 24], sizes = [8, 8], strides = [1, 1]} : vector<8x32xf32> to vector<8x8xf32>
    %65 = vector.extract_strided_slice %14 {offsets = [0, 24], sizes = [8, 8], strides = [1, 1]} : vector<8x32xf32> to vector<8x8xf32>
    %66 = vector.extract_strided_slice %15 {offsets = [0, 24], sizes = [8, 8], strides = [1, 1]} : vector<8x32xf32> to vector<8x8xf32>
    %67 = tpu.transpose %65, [1, 0] : vector<8x8xf32> -> vector<8x8xf32>
    %cst_26 = arith.constant dense<0.000000e+00> : vector<8x8xf32>
    %68 = tpu.matmul %64, %67, %cst_26 {dimension_numbers = #tpu.dot_dimension_numbers<[1], [0], [0], [1], [0, 0, 1, 1], [], []>} : vector<8x8xf32>, vector<8x8xf32>, vector<8x8xf32> -> vector<8x8xf32>
    %cst_27 = arith.constant dense<0xFF800000> : vector<8xf32>
    %69 = vector.multi_reduction <maximumf>, %68, %cst_27 [1] : vector<8x8xf32> to vector<8xf32>
    %70 = vector.shape_cast %69 : vector<8xf32> to vector<8x1xf32>
    %71 = vector.broadcast %70 : vector<8x1xf32> to vector<8x8xf32>
    %72 = arith.subf %68, %71 : vector<8x8xf32>
    %73 = math.exp %72 : vector<8x8xf32>
    %cst_28 = arith.constant dense<0.000000e+00> : vector<8xf32>
    %74 = vector.multi_reduction <add>, %73, %cst_28 [1] : vector<8x8xf32> to vector<8xf32>
    %75 = vector.shape_cast %74 : vector<8xf32> to vector<8x1xf32>
    %76 = tpu.reciprocal %75 {approx = true} : vector<8x1xf32> -> vector<8x1xf32>
    %77 = vector.broadcast %76 : vector<8x1xf32> to vector<8x8xf32>
    %78 = arith.mulf %73, %77 : vector<8x8xf32>
    %cst_29 = arith.constant dense<0.000000e+00> : vector<8x8xf32>
    %79 = tpu.matmul %78, %66, %cst_29 {dimension_numbers = #tpu.dot_dimension_numbers<[1], [0], [0], [1], [0, 0, 1, 1], [], []>} : vector<8x8xf32>, vector<8x8xf32>, vector<8x8xf32> -> vector<8x8xf32>
    %80 = tpu.concatenate %31, %47, %63, %79 in 1 : vector<8x8xf32>, vector<8x8xf32>, vector<8x8xf32>, vector<8x8xf32> -> vector<8x32xf32>
    %c0_30 = arith.constant 0 : index
    %c0_31 = arith.constant 0 : index
    %81 = vector.load %arg7[%c0_30, %c0_31] : memref<32x32xf32, #tpu.memory_space<vmem>>, vector<32x32xf32>
    %cst_32 = arith.constant dense<0.000000e+00> : vector<8x32xf32>
    %82 = tpu.matmul %80, %81, %cst_32 {dimension_numbers = #tpu.dot_dimension_numbers<[1], [0], [0], [1], [0, 0, 1, 1], [], []>} : vector<8x32xf32>, vector<32x32xf32>, vector<8x32xf32> -> vector<8x32xf32>
    %c0_33 = arith.constant 0 : index
    %c0_34 = arith.constant 0 : index
    %83 = vector.load %arg8[%c0_33, %c0_34] : memref<1x32xf32, #tpu.memory_space<vmem>>, vector<1x32xf32>
    %84 = vector.broadcast %83 : vector<1x32xf32> to vector<8x32xf32>
    %85 = arith.addf %82, %84 : vector<8x32xf32>
    %86 = arith.addf %1, %85 : vector<8x32xf32>
    %c0_35 = arith.constant 0 : index
    %c0_36 = arith.constant 0 : index
    %87 = vector.load %arg9[%c0_35, %c0_36] : memref<1x32xf32, #tpu.memory_space<vmem>>, vector<1x32xf32>
    %c0_37 = arith.constant 0 : index
    %c0_38 = arith.constant 0 : index
    %88 = vector.load %arg10[%c0_37, %c0_38] : memref<1x32xf32, #tpu.memory_space<vmem>>, vector<1x32xf32>
    %cst_39 = arith.constant dense<0.000000e+00> : vector<8xf32>
    %89 = vector.multi_reduction <add>, %86, %cst_39 [1] : vector<8x32xf32> to vector<8xf32>
    %90 = vector.shape_cast %89 : vector<8xf32> to vector<8x1xf32>
    %cst_40 = arith.constant 3.200000e+01 : f32
    %91 = vector.broadcast %cst_40 : f32 to vector<8x1xf32>
    %92 = arith.divf %90, %91 : vector<8x1xf32>
    %93 = vector.broadcast %92 : vector<8x1xf32> to vector<8x32xf32>
    %94 = arith.subf %86, %93 : vector<8x32xf32>
    %95 = arith.mulf %94, %94 : vector<8x32xf32>
    %cst_41 = arith.constant dense<0.000000e+00> : vector<8xf32>
    %96 = vector.multi_reduction <add>, %95, %cst_41 [1] : vector<8x32xf32> to vector<8xf32>
    %97 = vector.shape_cast %96 : vector<8xf32> to vector<8x1xf32>
    %cst_42 = arith.constant 3.200000e+01 : f32
    %98 = vector.broadcast %cst_42 : f32 to vector<8x1xf32>
    %99 = arith.divf %97, %98 : vector<8x1xf32>
    %100 = vector.broadcast %92 : vector<8x1xf32> to vector<8x32xf32>
    %101 = arith.subf %86, %100 : vector<8x32xf32>
    %cst_43 = arith.constant 9.99999974E-6 : f32
    %102 = vector.broadcast %cst_43 : f32 to vector<8x1xf32>
    %103 = arith.addf %99, %102 : vector<8x1xf32>
    %104 = math.rsqrt %103 : vector<8x1xf32>
    %105 = vector.broadcast %104 : vector<8x1xf32> to vector<8x32xf32>
    %106 = arith.mulf %101, %105 : vector<8x32xf32>
    %107 = vector.broadcast %87 : vector<1x32xf32> to vector<8x32xf32>
    %108 = arith.mulf %106, %107 : vector<8x32xf32>
    %109 = vector.broadcast %88 : vector<1x32xf32> to vector<8x32xf32>
    %110 = arith.addf %108, %109 : vector<8x32xf32>
    %c0_44 = arith.constant 0 : index
    %c0_45 = arith.constant 0 : index
    %c0_46 = arith.constant 0 : index
    %111 = vector.load %arg11[%c0_44, %c0_45, %c0_46] : memref<1x8x32xf32, #tpu.memory_space<vmem>>, vector<1x8x32xf32>
    %112 = vector.shape_cast %111 : vector<1x8x32xf32> to vector<8x32xf32>
    %113 = vector.shape_cast %110 : vector<8x32xf32> to vector<1x8x32xf32>
    tpu.vector_store %arg11[%c0_44, %c0_45, %c0_46], %113 {strides = array<i32>} : memref<1x8x32xf32, #tpu.memory_space<vmem>>, vector<1x8x32xf32>,
    return
  }
  func.func @transform_0(%arg0: i32) -> (i32, i32, i32) {
    %c0_i32 = arith.constant 0 : i32
    %c0_i32_0 = arith.constant 0 : i32
    %c0_i32_1 = arith.constant 0 : i32
    return %arg0, %c0_i32, %c0_i32_0 : i32, i32, i32
  }
  func.func @transform_1(%arg0: i32) -> (i32, i32, i32) {
    %c0_i32 = arith.constant 0 : i32
    %c0_i32_0 = arith.constant 0 : i32
    %c0_i32_1 = arith.constant 0 : i32
    return %arg0, %c0_i32, %c0_i32_0 : i32, i32, i32
  }
  func.func @transform_2(%arg0: i32) -> (i32, i32) {
    %c0_i32 = arith.constant 0 : i32
    %c0_i32_0 = arith.constant 0 : i32
    %c0_i32_1 = arith.constant 0 : i32
    return %c0_i32, %c0_i32_0 : i32, i32
  }
  func.func @transform_3(%arg0: i32) -> (i32, i32) {
    %c0_i32 = arith.constant 0 : i32
    %c0_i32_0 = arith.constant 0 : i32
    %c0_i32_1 = arith.constant 0 : i32
    return %c0_i32, %c0_i32_0 : i32, i32
  }
  func.func @transform_4(%arg0: i32) -> (i32, i32) {
    %c0_i32 = arith.constant 0 : i32
    %c0_i32_0 = arith.constant 0 : i32
    %c0_i32_1 = arith.constant 0 : i32
    return %c0_i32, %c0_i32_0 : i32, i32
  }
  func.func @transform_5(%arg0: i32) -> (i32, i32) {
    %c0_i32 = arith.constant 0 : i32
    %c0_i32_0 = arith.constant 0 : i32
    %c0_i32_1 = arith.constant 0 : i32
    return %c0_i32, %c0_i32_0 : i32, i32
  }
  func.func @transform_6(%arg0: i32) -> (i32, i32) {
    %c0_i32 = arith.constant 0 : i32
    %c0_i32_0 = arith.constant 0 : i32
    %c0_i32_1 = arith.constant 0 : i32
    return %c0_i32, %c0_i32_0 : i32, i32
  }
  func.func @transform_7(%arg0: i32) -> (i32, i32) {
    %c0_i32 = arith.constant 0 : i32
    %c0_i32_0 = arith.constant 0 : i32
    %c0_i32_1 = arith.constant 0 : i32
    return %c0_i32, %c0_i32_0 : i32, i32
  }
  func.func @transform_8(%arg0: i32) -> (i32, i32) {
    %c0_i32 = arith.constant 0 : i32
    %c0_i32_0 = arith.constant 0 : i32
    %c0_i32_1 = arith.constant 0 : i32
    return %c0_i32, %c0_i32_0 : i32, i32
  }
  func.func @transform_9(%arg0: i32) -> (i32, i32) {
    %c0_i32 = arith.constant 0 : i32
    %c0_i32_0 = arith.constant 0 : i32
    %c0_i32_1 = arith.constant 0 : i32
    return %c0_i32, %c0_i32_0 : i32, i32
  }
  func.func @transform_10(%arg0: i32) -> (i32, i32, i32) {
    %c0_i32 = arith.constant 0 : i32
    %c0_i32_0 = arith.constant 0 : i32
    %c0_i32_1 = arith.constant 0 : i32
    return %arg0, %c0_i32, %c0_i32_0 : i32, i32, i32
  }
}

module attributes {stable_mosaic.version = 11 : i64} {
  func.func @_ffn_block_kernel(%arg0: i32, %arg1: memref<16x32xf32, #tpu.memory_space<vmem>>, %arg2: memref<32x128xf32, #tpu.memory_space<vmem>>, %arg3: memref<1x128xf32, #tpu.memory_space<vmem>>, %arg4: memref<128x32xf32, #tpu.memory_space<vmem>>, %arg5: memref<1x32xf32, #tpu.memory_space<vmem>>, %arg6: memref<1x32xf32, #tpu.memory_space<vmem>>, %arg7: memref<1x32xf32, #tpu.memory_space<vmem>>, %arg8: memref<16x32xf32, #tpu.memory_space<vmem>>) attributes {dimension_semantics = [#tpu.dimension_semantics<parallel>], iteration_bounds = array<i64: 1>, scalar_prefetch = 0 : i64, scratch_operands = 0 : i64, tpu.core_type = #tpu.core_type<tc>, window_params = [{transform_indices = @transform_0, window_bounds = array<i64: 16, 32>}, {pipeline_mode = #tpu.pipeline_mode<synchronous>, transform_indices = @transform_1, window_bounds = array<i64: 32, 128>}, {pipeline_mode = #tpu.pipeline_mode<synchronous>, transform_indices = @transform_2, window_bounds = array<i64: 1, 128>}, {pipeline_mode = #tpu.pipeline_mode<synchronous>, transform_indices = @transform_3, window_bounds = array<i64: 128, 32>}, {pipeline_mode = #tpu.pipeline_mode<synchronous>, transform_indices = @transform_4, window_bounds = array<i64: 1, 32>}, {pipeline_mode = #tpu.pipeline_mode<synchronous>, transform_indices = @transform_5, window_bounds = array<i64: 1, 32>}, {pipeline_mode = #tpu.pipeline_mode<synchronous>, transform_indices = @transform_6, window_bounds = array<i64: 1, 32>}, {transform_indices = @transform_7, window_bounds = array<i64: 16, 32>}]} {
    %c0 = arith.constant 0 : index
    %c0_0 = arith.constant 0 : index
    %0 = vector.load %arg1[%c0, %c0_0] : memref<16x32xf32, #tpu.memory_space<vmem>>, vector<16x32xf32>
    %c0_1 = arith.constant 0 : index
    %c0_2 = arith.constant 0 : index
    %1 = vector.load %arg2[%c0_1, %c0_2] : memref<32x128xf32, #tpu.memory_space<vmem>>, vector<32x128xf32>
    %cst = arith.constant dense<0.000000e+00> : vector<16x128xf32>
    %2 = tpu.matmul %0, %1, %cst {dimension_numbers = #tpu.dot_dimension_numbers<[1], [0], [0], [1], [0, 0, 1, 1], [], []>} : vector<16x32xf32>, vector<32x128xf32>, vector<16x128xf32> -> vector<16x128xf32>
    %c0_3 = arith.constant 0 : index
    %c0_4 = arith.constant 0 : index
    %3 = vector.load %arg3[%c0_3, %c0_4] : memref<1x128xf32, #tpu.memory_space<vmem>>, vector<1x128xf32>
    %4 = vector.broadcast %3 : vector<1x128xf32> to vector<16x128xf32>
    %5 = arith.addf %2, %4 : vector<16x128xf32>
    %cst_5 = arith.constant 0.000000e+00 : f32
    %6 = vector.broadcast %cst_5 : f32 to vector<16x128xf32>
    %7 = arith.maximumf %5, %6 : vector<16x128xf32>
    %c0_6 = arith.constant 0 : index
    %c0_7 = arith.constant 0 : index
    %8 = vector.load %arg4[%c0_6, %c0_7] : memref<128x32xf32, #tpu.memory_space<vmem>>, vector<128x32xf32>
    %cst_8 = arith.constant dense<0.000000e+00> : vector<16x32xf32>
    %9 = tpu.matmul %7, %8, %cst_8 {dimension_numbers = #tpu.dot_dimension_numbers<[1], [0], [0], [1], [0, 0, 1, 1], [], []>} : vector<16x128xf32>, vector<128x32xf32>, vector<16x32xf32> -> vector<16x32xf32>
    %c0_9 = arith.constant 0 : index
    %c0_10 = arith.constant 0 : index
    %10 = vector.load %arg5[%c0_9, %c0_10] : memref<1x32xf32, #tpu.memory_space<vmem>>, vector<1x32xf32>
    %11 = vector.broadcast %10 : vector<1x32xf32> to vector<16x32xf32>
    %12 = arith.addf %9, %11 : vector<16x32xf32>
    %13 = arith.addf %0, %12 : vector<16x32xf32>
    %c0_11 = arith.constant 0 : index
    %c0_12 = arith.constant 0 : index
    %14 = vector.load %arg6[%c0_11, %c0_12] : memref<1x32xf32, #tpu.memory_space<vmem>>, vector<1x32xf32>
    %c0_13 = arith.constant 0 : index
    %c0_14 = arith.constant 0 : index
    %15 = vector.load %arg7[%c0_13, %c0_14] : memref<1x32xf32, #tpu.memory_space<vmem>>, vector<1x32xf32>
    %cst_15 = arith.constant dense<0.000000e+00> : vector<16xf32>
    %16 = vector.multi_reduction <add>, %13, %cst_15 [1] : vector<16x32xf32> to vector<16xf32>
    %17 = vector.shape_cast %16 : vector<16xf32> to vector<16x1xf32>
    %cst_16 = arith.constant 3.200000e+01 : f32
    %18 = vector.broadcast %cst_16 : f32 to vector<16x1xf32>
    %19 = arith.divf %17, %18 : vector<16x1xf32>
    %20 = vector.broadcast %19 : vector<16x1xf32> to vector<16x32xf32>
    %21 = arith.subf %13, %20 : vector<16x32xf32>
    %22 = arith.mulf %21, %21 : vector<16x32xf32>
    %cst_17 = arith.constant dense<0.000000e+00> : vector<16xf32>
    %23 = vector.multi_reduction <add>, %22, %cst_17 [1] : vector<16x32xf32> to vector<16xf32>
    %24 = vector.shape_cast %23 : vector<16xf32> to vector<16x1xf32>
    %cst_18 = arith.constant 3.200000e+01 : f32
    %25 = vector.broadcast %cst_18 : f32 to vector<16x1xf32>
    %26 = arith.divf %24, %25 : vector<16x1xf32>
    %27 = vector.broadcast %19 : vector<16x1xf32> to vector<16x32xf32>
    %28 = arith.subf %13, %27 : vector<16x32xf32>
    %cst_19 = arith.constant 9.99999974E-6 : f32
    %29 = vector.broadcast %cst_19 : f32 to vector<16x1xf32>
    %30 = arith.addf %26, %29 : vector<16x1xf32>
    %31 = math.rsqrt %30 : vector<16x1xf32>
    %32 = vector.broadcast %31 : vector<16x1xf32> to vector<16x32xf32>
    %33 = arith.mulf %28, %32 : vector<16x32xf32>
    %34 = vector.broadcast %14 : vector<1x32xf32> to vector<16x32xf32>
    %35 = arith.mulf %33, %34 : vector<16x32xf32>
    %36 = vector.broadcast %15 : vector<1x32xf32> to vector<16x32xf32>
    %37 = arith.addf %35, %36 : vector<16x32xf32>
    %c0_20 = arith.constant 0 : index
    %c0_21 = arith.constant 0 : index
    %38 = vector.load %arg8[%c0_20, %c0_21] : memref<16x32xf32, #tpu.memory_space<vmem>>, vector<16x32xf32>
    tpu.vector_store %arg8[%c0_20, %c0_21], %37 {strides = array<i32>} : memref<16x32xf32, #tpu.memory_space<vmem>>, vector<16x32xf32>,
    return
  }
  func.func @transform_0(%arg0: i32) -> (i32, i32) {
    %c0_i32 = arith.constant 0 : i32
    %c0_i32_0 = arith.constant 0 : i32
    return %arg0, %c0_i32 : i32, i32
  }
  func.func @transform_1(%arg0: i32) -> (i32, i32) {
    %c0_i32 = arith.constant 0 : i32
    %c0_i32_0 = arith.constant 0 : i32
    %c0_i32_1 = arith.constant 0 : i32
    return %c0_i32, %c0_i32_0 : i32, i32
  }
  func.func @transform_2(%arg0: i32) -> (i32, i32) {
    %c0_i32 = arith.constant 0 : i32
    %c0_i32_0 = arith.constant 0 : i32
    %c0_i32_1 = arith.constant 0 : i32
    return %c0_i32, %c0_i32_0 : i32, i32
  }
  func.func @transform_3(%arg0: i32) -> (i32, i32) {
    %c0_i32 = arith.constant 0 : i32
    %c0_i32_0 = arith.constant 0 : i32
    %c0_i32_1 = arith.constant 0 : i32
    return %c0_i32, %c0_i32_0 : i32, i32
  }
  func.func @transform_4(%arg0: i32) -> (i32, i32) {
    %c0_i32 = arith.constant 0 : i32
    %c0_i32_0 = arith.constant 0 : i32
    %c0_i32_1 = arith.constant 0 : i32
    return %c0_i32, %c0_i32_0 : i32, i32
  }
  func.func @transform_5(%arg0: i32) -> (i32, i32) {
    %c0_i32 = arith.constant 0 : i32
    %c0_i32_0 = arith.constant 0 : i32
    %c0_i32_1 = arith.constant 0 : i32
    return %c0_i32, %c0_i32_0 : i32, i32
  }
  func.func @transform_6(%arg0: i32) -> (i32, i32) {
    %c0_i32 = arith.constant 0 : i32
    %c0_i32_0 = arith.constant 0 : i32
    %c0_i32_1 = arith.constant 0 : i32
    return %c0_i32, %c0_i32_0 : i32, i32
  }
  func.func @transform_7(%arg0: i32) -> (i32, i32) {
    %c0_i32 = arith.constant 0 : i32
    %c0_i32_0 = arith.constant 0 : i32
    return %arg0, %c0_i32 : i32, i32
  }
}

module attributes {stable_mosaic.version = 11 : i64} {
  func.func @_self_attn_block_kernel(%arg0: i32, %arg1: memref<1x8x32xf32, #tpu.memory_space<vmem>>, %arg2: memref<32x96xf32, #tpu.memory_space<vmem>>, %arg3: memref<1x96xf32, #tpu.memory_space<vmem>>, %arg4: memref<32x32xf32, #tpu.memory_space<vmem>>, %arg5: memref<1x32xf32, #tpu.memory_space<vmem>>, %arg6: memref<1x32xf32, #tpu.memory_space<vmem>>, %arg7: memref<1x32xf32, #tpu.memory_space<vmem>>, %arg8: memref<1x8x32xf32, #tpu.memory_space<vmem>>) attributes {dimension_semantics = [#tpu.dimension_semantics<parallel>], iteration_bounds = array<i64: 2>, scalar_prefetch = 0 : i64, scratch_operands = 0 : i64, tpu.core_type = #tpu.core_type<tc>, window_params = [{transform_indices = @transform_0, window_bounds = array<i64: 1, 8, 32>}, {pipeline_mode = #tpu.pipeline_mode<synchronous>, transform_indices = @transform_1, window_bounds = array<i64: 32, 96>}, {pipeline_mode = #tpu.pipeline_mode<synchronous>, transform_indices = @transform_2, window_bounds = array<i64: 1, 96>}, {pipeline_mode = #tpu.pipeline_mode<synchronous>, transform_indices = @transform_3, window_bounds = array<i64: 32, 32>}, {pipeline_mode = #tpu.pipeline_mode<synchronous>, transform_indices = @transform_4, window_bounds = array<i64: 1, 32>}, {pipeline_mode = #tpu.pipeline_mode<synchronous>, transform_indices = @transform_5, window_bounds = array<i64: 1, 32>}, {pipeline_mode = #tpu.pipeline_mode<synchronous>, transform_indices = @transform_6, window_bounds = array<i64: 1, 32>}, {transform_indices = @transform_7, window_bounds = array<i64: 1, 8, 32>}]} {
    %c0 = arith.constant 0 : index
    %c0_0 = arith.constant 0 : index
    %c0_1 = arith.constant 0 : index
    %0 = vector.load %arg1[%c0, %c0_0, %c0_1] : memref<1x8x32xf32, #tpu.memory_space<vmem>>, vector<1x8x32xf32>
    %1 = vector.shape_cast %0 : vector<1x8x32xf32> to vector<8x32xf32>
    %c0_2 = arith.constant 0 : index
    %c0_3 = arith.constant 0 : index
    %2 = vector.load %arg2[%c0_2, %c0_3] : memref<32x96xf32, #tpu.memory_space<vmem>>, vector<32x96xf32>
    %cst = arith.constant dense<0.000000e+00> : vector<8x96xf32>
    %3 = tpu.matmul %1, %2, %cst {dimension_numbers = #tpu.dot_dimension_numbers<[1], [0], [0], [1], [0, 0, 1, 1], [], []>} : vector<8x32xf32>, vector<32x96xf32>, vector<8x96xf32> -> vector<8x96xf32>
    %c0_4 = arith.constant 0 : index
    %c0_5 = arith.constant 0 : index
    %4 = vector.load %arg3[%c0_4, %c0_5] : memref<1x96xf32, #tpu.memory_space<vmem>>, vector<1x96xf32>
    %5 = vector.broadcast %4 : vector<1x96xf32> to vector<8x96xf32>
    %6 = arith.addf %3, %5 : vector<8x96xf32>
    %7 = vector.extract_strided_slice %6 {offsets = [0, 0], sizes = [8, 32], strides = [1, 1]} : vector<8x96xf32> to vector<8x32xf32>
    %8 = vector.extract_strided_slice %6 {offsets = [0, 32], sizes = [8, 32], strides = [1, 1]} : vector<8x96xf32> to vector<8x32xf32>
    %9 = vector.extract_strided_slice %6 {offsets = [0, 64], sizes = [8, 32], strides = [1, 1]} : vector<8x96xf32> to vector<8x32xf32>
    %10 = tpu.iota {dimensions = array<i32: 0>} : vector<8x8xi32>
    %11 = tpu.iota {dimensions = array<i32: 1>} : vector<8x8xi32>
    %12 = arith.cmpi sle, %11, %10 : vector<8x8xi32>
    %13 = vector.extract_strided_slice %7 {offsets = [0, 0], sizes = [8, 8], strides = [1, 1]} : vector<8x32xf32> to vector<8x8xf32>
    %14 = vector.extract_strided_slice %8 {offsets = [0, 0], sizes = [8, 8], strides = [1, 1]} : vector<8x32xf32> to vector<8x8xf32>
    %15 = vector.extract_strided_slice %9 {offsets = [0, 0], sizes = [8, 8], strides = [1, 1]} : vector<8x32xf32> to vector<8x8xf32>
    %16 = tpu.transpose %14, [1, 0] : vector<8x8xf32> -> vector<8x8xf32>
    %cst_6 = arith.constant dense<0.000000e+00> : vector<8x8xf32>
    %17 = tpu.matmul %13, %16, %cst_6 {dimension_numbers = #tpu.dot_dimension_numbers<[1], [0], [0], [1], [0, 0, 1, 1], [], []>} : vector<8x8xf32>, vector<8x8xf32>, vector<8x8xf32> -> vector<8x8xf32>
    %cst_7 = arith.constant -1.000000e+30 : f32
    %18 = vector.broadcast %cst_7 : f32 to vector<8x8xf32>
    %19 = arith.select %12, %17, %18 : vector<8x8xi1>, vector<8x8xf32>
    %cst_8 = arith.constant dense<0xFF800000> : vector<8xf32>
    %20 = vector.multi_reduction <maximumf>, %19, %cst_8 [1] : vector<8x8xf32> to vector<8xf32>
    %21 = vector.shape_cast %20 : vector<8xf32> to vector<8x1xf32>
    %22 = vector.broadcast %21 : vector<8x1xf32> to vector<8x8xf32>
    %23 = arith.subf %19, %22 : vector<8x8xf32>
    %24 = math.exp %23 : vector<8x8xf32>
    %cst_9 = arith.constant dense<0.000000e+00> : vector<8xf32>
    %25 = vector.multi_reduction <add>, %24, %cst_9 [1] : vector<8x8xf32> to vector<8xf32>
    %26 = vector.shape_cast %25 : vector<8xf32> to vector<8x1xf32>
    %27 = tpu.reciprocal %26 {approx = true} : vector<8x1xf32> -> vector<8x1xf32>
    %28 = vector.broadcast %27 : vector<8x1xf32> to vector<8x8xf32>
    %29 = arith.mulf %24, %28 : vector<8x8xf32>
    %cst_10 = arith.constant dense<0.000000e+00> : vector<8x8xf32>
    %30 = tpu.matmul %29, %15, %cst_10 {dimension_numbers = #tpu.dot_dimension_numbers<[1], [0], [0], [1], [0, 0, 1, 1], [], []>} : vector<8x8xf32>, vector<8x8xf32>, vector<8x8xf32> -> vector<8x8xf32>
    %31 = vector.extract_strided_slice %7 {offsets = [0, 8], sizes = [8, 8], strides = [1, 1]} : vector<8x32xf32> to vector<8x8xf32>
    %32 = vector.extract_strided_slice %8 {offsets = [0, 8], sizes = [8, 8], strides = [1, 1]} : vector<8x32xf32> to vector<8x8xf32>
    %33 = vector.extract_strided_slice %9 {offsets = [0, 8], sizes = [8, 8], strides = [1, 1]} : vector<8x32xf32> to vector<8x8xf32>
    %34 = tpu.transpose %32, [1, 0] : vector<8x8xf32> -> vector<8x8xf32>
    %cst_11 = arith.constant dense<0.000000e+00> : vector<8x8xf32>
    %35 = tpu.matmul %31, %34, %cst_11 {dimension_numbers = #tpu.dot_dimension_numbers<[1], [0], [0], [1], [0, 0, 1, 1], [], []>} : vector<8x8xf32>, vector<8x8xf32>, vector<8x8xf32> -> vector<8x8xf32>
    %cst_12 = arith.constant -1.000000e+30 : f32
    %36 = vector.broadcast %cst_12 : f32 to vector<8x8xf32>
    %37 = arith.select %12, %35, %36 : vector<8x8xi1>, vector<8x8xf32>
    %cst_13 = arith.constant dense<0xFF800000> : vector<8xf32>
    %38 = vector.multi_reduction <maximumf>, %37, %cst_13 [1] : vector<8x8xf32> to vector<8xf32>
    %39 = vector.shape_cast %38 : vector<8xf32> to vector<8x1xf32>
    %40 = vector.broadcast %39 : vector<8x1xf32> to vector<8x8xf32>
    %41 = arith.subf %37, %40 : vector<8x8xf32>
    %42 = math.exp %41 : vector<8x8xf32>
    %cst_14 = arith.constant dense<0.000000e+00> : vector<8xf32>
    %43 = vector.multi_reduction <add>, %42, %cst_14 [1] : vector<8x8xf32> to vector<8xf32>
    %44 = vector.shape_cast %43 : vector<8xf32> to vector<8x1xf32>
    %45 = tpu.reciprocal %44 {approx = true} : vector<8x1xf32> -> vector<8x1xf32>
    %46 = vector.broadcast %45 : vector<8x1xf32> to vector<8x8xf32>
    %47 = arith.mulf %42, %46 : vector<8x8xf32>
    %cst_15 = arith.constant dense<0.000000e+00> : vector<8x8xf32>
    %48 = tpu.matmul %47, %33, %cst_15 {dimension_numbers = #tpu.dot_dimension_numbers<[1], [0], [0], [1], [0, 0, 1, 1], [], []>} : vector<8x8xf32>, vector<8x8xf32>, vector<8x8xf32> -> vector<8x8xf32>
    %49 = vector.extract_strided_slice %7 {offsets = [0, 16], sizes = [8, 8], strides = [1, 1]} : vector<8x32xf32> to vector<8x8xf32>
    %50 = vector.extract_strided_slice %8 {offsets = [0, 16], sizes = [8, 8], strides = [1, 1]} : vector<8x32xf32> to vector<8x8xf32>
    %51 = vector.extract_strided_slice %9 {offsets = [0, 16], sizes = [8, 8], strides = [1, 1]} : vector<8x32xf32> to vector<8x8xf32>
    %52 = tpu.transpose %50, [1, 0] : vector<8x8xf32> -> vector<8x8xf32>
    %cst_16 = arith.constant dense<0.000000e+00> : vector<8x8xf32>
    %53 = tpu.matmul %49, %52, %cst_16 {dimension_numbers = #tpu.dot_dimension_numbers<[1], [0], [0], [1], [0, 0, 1, 1], [], []>} : vector<8x8xf32>, vector<8x8xf32>, vector<8x8xf32> -> vector<8x8xf32>
    %cst_17 = arith.constant -1.000000e+30 : f32
    %54 = vector.broadcast %cst_17 : f32 to vector<8x8xf32>
    %55 = arith.select %12, %53, %54 : vector<8x8xi1>, vector<8x8xf32>
    %cst_18 = arith.constant dense<0xFF800000> : vector<8xf32>
    %56 = vector.multi_reduction <maximumf>, %55, %cst_18 [1] : vector<8x8xf32> to vector<8xf32>
    %57 = vector.shape_cast %56 : vector<8xf32> to vector<8x1xf32>
    %58 = vector.broadcast %57 : vector<8x1xf32> to vector<8x8xf32>
    %59 = arith.subf %55, %58 : vector<8x8xf32>
    %60 = math.exp %59 : vector<8x8xf32>
    %cst_19 = arith.constant dense<0.000000e+00> : vector<8xf32>
    %61 = vector.multi_reduction <add>, %60, %cst_19 [1] : vector<8x8xf32> to vector<8xf32>
    %62 = vector.shape_cast %61 : vector<8xf32> to vector<8x1xf32>
    %63 = tpu.reciprocal %62 {approx = true} : vector<8x1xf32> -> vector<8x1xf32>
    %64 = vector.broadcast %63 : vector<8x1xf32> to vector<8x8xf32>
    %65 = arith.mulf %60, %64 : vector<8x8xf32>
    %cst_20 = arith.constant dense<0.000000e+00> : vector<8x8xf32>
    %66 = tpu.matmul %65, %51, %cst_20 {dimension_numbers = #tpu.dot_dimension_numbers<[1], [0], [0], [1], [0, 0, 1, 1], [], []>} : vector<8x8xf32>, vector<8x8xf32>, vector<8x8xf32> -> vector<8x8xf32>
    %67 = vector.extract_strided_slice %7 {offsets = [0, 24], sizes = [8, 8], strides = [1, 1]} : vector<8x32xf32> to vector<8x8xf32>
    %68 = vector.extract_strided_slice %8 {offsets = [0, 24], sizes = [8, 8], strides = [1, 1]} : vector<8x32xf32> to vector<8x8xf32>
    %69 = vector.extract_strided_slice %9 {offsets = [0, 24], sizes = [8, 8], strides = [1, 1]} : vector<8x32xf32> to vector<8x8xf32>
    %70 = tpu.transpose %68, [1, 0] : vector<8x8xf32> -> vector<8x8xf32>
    %cst_21 = arith.constant dense<0.000000e+00> : vector<8x8xf32>
    %71 = tpu.matmul %67, %70, %cst_21 {dimension_numbers = #tpu.dot_dimension_numbers<[1], [0], [0], [1], [0, 0, 1, 1], [], []>} : vector<8x8xf32>, vector<8x8xf32>, vector<8x8xf32> -> vector<8x8xf32>
    %cst_22 = arith.constant -1.000000e+30 : f32
    %72 = vector.broadcast %cst_22 : f32 to vector<8x8xf32>
    %73 = arith.select %12, %71, %72 : vector<8x8xi1>, vector<8x8xf32>
    %cst_23 = arith.constant dense<0xFF800000> : vector<8xf32>
    %74 = vector.multi_reduction <maximumf>, %73, %cst_23 [1] : vector<8x8xf32> to vector<8xf32>
    %75 = vector.shape_cast %74 : vector<8xf32> to vector<8x1xf32>
    %76 = vector.broadcast %75 : vector<8x1xf32> to vector<8x8xf32>
    %77 = arith.subf %73, %76 : vector<8x8xf32>
    %78 = math.exp %77 : vector<8x8xf32>
    %cst_24 = arith.constant dense<0.000000e+00> : vector<8xf32>
    %79 = vector.multi_reduction <add>, %78, %cst_24 [1] : vector<8x8xf32> to vector<8xf32>
    %80 = vector.shape_cast %79 : vector<8xf32> to vector<8x1xf32>
    %81 = tpu.reciprocal %80 {approx = true} : vector<8x1xf32> -> vector<8x1xf32>
    %82 = vector.broadcast %81 : vector<8x1xf32> to vector<8x8xf32>
    %83 = arith.mulf %78, %82 : vector<8x8xf32>
    %cst_25 = arith.constant dense<0.000000e+00> : vector<8x8xf32>
    %84 = tpu.matmul %83, %69, %cst_25 {dimension_numbers = #tpu.dot_dimension_numbers<[1], [0], [0], [1], [0, 0, 1, 1], [], []>} : vector<8x8xf32>, vector<8x8xf32>, vector<8x8xf32> -> vector<8x8xf32>
    %85 = tpu.concatenate %30, %48, %66, %84 in 1 : vector<8x8xf32>, vector<8x8xf32>, vector<8x8xf32>, vector<8x8xf32> -> vector<8x32xf32>
    %c0_26 = arith.constant 0 : index
    %c0_27 = arith.constant 0 : index
    %86 = vector.load %arg4[%c0_26, %c0_27] : memref<32x32xf32, #tpu.memory_space<vmem>>, vector<32x32xf32>
    %cst_28 = arith.constant dense<0.000000e+00> : vector<8x32xf32>
    %87 = tpu.matmul %85, %86, %cst_28 {dimension_numbers = #tpu.dot_dimension_numbers<[1], [0], [0], [1], [0, 0, 1, 1], [], []>} : vector<8x32xf32>, vector<32x32xf32>, vector<8x32xf32> -> vector<8x32xf32>
    %c0_29 = arith.constant 0 : index
    %c0_30 = arith.constant 0 : index
    %88 = vector.load %arg5[%c0_29, %c0_30] : memref<1x32xf32, #tpu.memory_space<vmem>>, vector<1x32xf32>
    %89 = vector.broadcast %88 : vector<1x32xf32> to vector<8x32xf32>
    %90 = arith.addf %87, %89 : vector<8x32xf32>
    %91 = arith.addf %1, %90 : vector<8x32xf32>
    %c0_31 = arith.constant 0 : index
    %c0_32 = arith.constant 0 : index
    %92 = vector.load %arg6[%c0_31, %c0_32] : memref<1x32xf32, #tpu.memory_space<vmem>>, vector<1x32xf32>
    %c0_33 = arith.constant 0 : index
    %c0_34 = arith.constant 0 : index
    %93 = vector.load %arg7[%c0_33, %c0_34] : memref<1x32xf32, #tpu.memory_space<vmem>>, vector<1x32xf32>
    %cst_35 = arith.constant dense<0.000000e+00> : vector<8xf32>
    %94 = vector.multi_reduction <add>, %91, %cst_35 [1] : vector<8x32xf32> to vector<8xf32>
    %95 = vector.shape_cast %94 : vector<8xf32> to vector<8x1xf32>
    %cst_36 = arith.constant 3.200000e+01 : f32
    %96 = vector.broadcast %cst_36 : f32 to vector<8x1xf32>
    %97 = arith.divf %95, %96 : vector<8x1xf32>
    %98 = vector.broadcast %97 : vector<8x1xf32> to vector<8x32xf32>
    %99 = arith.subf %91, %98 : vector<8x32xf32>
    %100 = arith.mulf %99, %99 : vector<8x32xf32>
    %cst_37 = arith.constant dense<0.000000e+00> : vector<8xf32>
    %101 = vector.multi_reduction <add>, %100, %cst_37 [1] : vector<8x32xf32> to vector<8xf32>
    %102 = vector.shape_cast %101 : vector<8xf32> to vector<8x1xf32>
    %cst_38 = arith.constant 3.200000e+01 : f32
    %103 = vector.broadcast %cst_38 : f32 to vector<8x1xf32>
    %104 = arith.divf %102, %103 : vector<8x1xf32>
    %105 = vector.broadcast %97 : vector<8x1xf32> to vector<8x32xf32>
    %106 = arith.subf %91, %105 : vector<8x32xf32>
    %cst_39 = arith.constant 9.99999974E-6 : f32
    %107 = vector.broadcast %cst_39 : f32 to vector<8x1xf32>
    %108 = arith.addf %104, %107 : vector<8x1xf32>
    %109 = math.rsqrt %108 : vector<8x1xf32>
    %110 = vector.broadcast %109 : vector<8x1xf32> to vector<8x32xf32>
    %111 = arith.mulf %106, %110 : vector<8x32xf32>
    %112 = vector.broadcast %92 : vector<1x32xf32> to vector<8x32xf32>
    %113 = arith.mulf %111, %112 : vector<8x32xf32>
    %114 = vector.broadcast %93 : vector<1x32xf32> to vector<8x32xf32>
    %115 = arith.addf %113, %114 : vector<8x32xf32>
    %c0_40 = arith.constant 0 : index
    %c0_41 = arith.constant 0 : index
    %c0_42 = arith.constant 0 : index
    %116 = vector.load %arg8[%c0_40, %c0_41, %c0_42] : memref<1x8x32xf32, #tpu.memory_space<vmem>>, vector<1x8x32xf32>
    %117 = vector.shape_cast %116 : vector<1x8x32xf32> to vector<8x32xf32>
    %118 = vector.shape_cast %115 : vector<8x32xf32> to vector<1x8x32xf32>
    tpu.vector_store %arg8[%c0_40, %c0_41, %c0_42], %118 {strides = array<i32>} : memref<1x8x32xf32, #tpu.memory_space<vmem>>, vector<1x8x32xf32>,
    return
  }
  func.func @transform_0(%arg0: i32) -> (i32, i32, i32) {
    %c0_i32 = arith.constant 0 : i32
    %c0_i32_0 = arith.constant 0 : i32
    %c0_i32_1 = arith.constant 0 : i32
    return %arg0, %c0_i32, %c0_i32_0 : i32, i32, i32
  }
  func.func @transform_1(%arg0: i32) -> (i32, i32) {
    %c0_i32 = arith.constant 0 : i32
    %c0_i32_0 = arith.constant 0 : i32
    %c0_i32_1 = arith.constant 0 : i32
    return %c0_i32, %c0_i32_0 : i32, i32
  }
  func.func @transform_2(%arg0: i32) -> (i32, i32) {
    %c0_i32 = arith.constant 0 : i32
    %c0_i32_0 = arith.constant 0 : i32
    %c0_i32_1 = arith.constant 0 : i32
    return %c0_i32, %c0_i32_0 : i32, i32
  }
  func.func @transform_3(%arg0: i32) -> (i32, i32) {
    %c0_i32 = arith.constant 0 : i32
    %c0_i32_0 = arith.constant 0 : i32
    %c0_i32_1 = arith.constant 0 : i32
    return %c0_i32, %c0_i32_0 : i32, i32
  }
  func.func @transform_4(%arg0: i32) -> (i32, i32) {
    %c0_i32 = arith.constant 0 : i32
    %c0_i32_0 = arith.constant 0 : i32
    %c0_i32_1 = arith.constant 0 : i32
    return %c0_i32, %c0_i32_0 : i32, i32
  }
  func.func @transform_5(%arg0: i32) -> (i32, i32) {
    %c0_i32 = arith.constant 0 : i32
    %c0_i32_0 = arith.constant 0 : i32
    %c0_i32_1 = arith.constant 0 : i32
    return %c0_i32, %c0_i32_0 : i32, i32
  }
  func.func @transform_6(%arg0: i32) -> (i32, i32) {
    %c0_i32 = arith.constant 0 : i32
    %c0_i32_0 = arith.constant 0 : i32
    %c0_i32_1 = arith.constant 0 : i32
    return %c0_i32, %c0_i32_0 : i32, i32
  }
  func.func @transform_7(%arg0: i32) -> (i32, i32, i32) {
    %c0_i32 = arith.constant 0 : i32
    %c0_i32_0 = arith.constant 0 : i32
    %c0_i32_1 = arith.constant 0 : i32
    return %arg0, %c0_i32, %c0_i32_0 : i32, i32, i32
  }
}

module attributes {stable_mosaic.version = 11 : i64} {
  func.func @_cross_attn_block_kernel(%arg0: i32, %arg1: memref<1x8x32xf32, #tpu.memory_space<vmem>>, %arg2: memref<1x8x32xf32, #tpu.memory_space<vmem>>, %arg3: memref<32x32xf32, #tpu.memory_space<vmem>>, %arg4: memref<1x32xf32, #tpu.memory_space<vmem>>, %arg5: memref<32x64xf32, #tpu.memory_space<vmem>>, %arg6: memref<1x64xf32, #tpu.memory_space<vmem>>, %arg7: memref<32x32xf32, #tpu.memory_space<vmem>>, %arg8: memref<1x32xf32, #tpu.memory_space<vmem>>, %arg9: memref<1x32xf32, #tpu.memory_space<vmem>>, %arg10: memref<1x32xf32, #tpu.memory_space<vmem>>, %arg11: memref<1x8x32xf32, #tpu.memory_space<vmem>>) attributes {dimension_semantics = [#tpu.dimension_semantics<parallel>], iteration_bounds = array<i64: 2>, scalar_prefetch = 0 : i64, scratch_operands = 0 : i64, tpu.core_type = #tpu.core_type<tc>, window_params = [{transform_indices = @transform_0, window_bounds = array<i64: 1, 8, 32>}, {transform_indices = @transform_1, window_bounds = array<i64: 1, 8, 32>}, {pipeline_mode = #tpu.pipeline_mode<synchronous>, transform_indices = @transform_2, window_bounds = array<i64: 32, 32>}, {pipeline_mode = #tpu.pipeline_mode<synchronous>, transform_indices = @transform_3, window_bounds = array<i64: 1, 32>}, {pipeline_mode = #tpu.pipeline_mode<synchronous>, transform_indices = @transform_4, window_bounds = array<i64: 32, 64>}, {pipeline_mode = #tpu.pipeline_mode<synchronous>, transform_indices = @transform_5, window_bounds = array<i64: 1, 64>}, {pipeline_mode = #tpu.pipeline_mode<synchronous>, transform_indices = @transform_6, window_bounds = array<i64: 32, 32>}, {pipeline_mode = #tpu.pipeline_mode<synchronous>, transform_indices = @transform_7, window_bounds = array<i64: 1, 32>}, {pipeline_mode = #tpu.pipeline_mode<synchronous>, transform_indices = @transform_8, window_bounds = array<i64: 1, 32>}, {pipeline_mode = #tpu.pipeline_mode<synchronous>, transform_indices = @transform_9, window_bounds = array<i64: 1, 32>}, {transform_indices = @transform_10, window_bounds = array<i64: 1, 8, 32>}]} {
    %c0 = arith.constant 0 : index
    %c0_0 = arith.constant 0 : index
    %c0_1 = arith.constant 0 : index
    %0 = vector.load %arg1[%c0, %c0_0, %c0_1] : memref<1x8x32xf32, #tpu.memory_space<vmem>>, vector<1x8x32xf32>
    %1 = vector.shape_cast %0 : vector<1x8x32xf32> to vector<8x32xf32>
    %c0_2 = arith.constant 0 : index
    %c0_3 = arith.constant 0 : index
    %c0_4 = arith.constant 0 : index
    %2 = vector.load %arg2[%c0_2, %c0_3, %c0_4] : memref<1x8x32xf32, #tpu.memory_space<vmem>>, vector<1x8x32xf32>
    %3 = vector.shape_cast %2 : vector<1x8x32xf32> to vector<8x32xf32>
    %c0_5 = arith.constant 0 : index
    %c0_6 = arith.constant 0 : index
    %4 = vector.load %arg3[%c0_5, %c0_6] : memref<32x32xf32, #tpu.memory_space<vmem>>, vector<32x32xf32>
    %cst = arith.constant dense<0.000000e+00> : vector<8x32xf32>
    %5 = tpu.matmul %1, %4, %cst {dimension_numbers = #tpu.dot_dimension_numbers<[1], [0], [0], [1], [0, 0, 1, 1], [], []>} : vector<8x32xf32>, vector<32x32xf32>, vector<8x32xf32> -> vector<8x32xf32>
    %c0_7 = arith.constant 0 : index
    %c0_8 = arith.constant 0 : index
    %6 = vector.load %arg4[%c0_7, %c0_8] : memref<1x32xf32, #tpu.memory_space<vmem>>, vector<1x32xf32>
    %7 = vector.broadcast %6 : vector<1x32xf32> to vector<8x32xf32>
    %8 = arith.addf %5, %7 : vector<8x32xf32>
    %c0_9 = arith.constant 0 : index
    %c0_10 = arith.constant 0 : index
    %9 = vector.load %arg5[%c0_9, %c0_10] : memref<32x64xf32, #tpu.memory_space<vmem>>, vector<32x64xf32>
    %cst_11 = arith.constant dense<0.000000e+00> : vector<8x64xf32>
    %10 = tpu.matmul %3, %9, %cst_11 {dimension_numbers = #tpu.dot_dimension_numbers<[1], [0], [0], [1], [0, 0, 1, 1], [], []>} : vector<8x32xf32>, vector<32x64xf32>, vector<8x64xf32> -> vector<8x64xf32>
    %c0_12 = arith.constant 0 : index
    %c0_13 = arith.constant 0 : index
    %11 = vector.load %arg6[%c0_12, %c0_13] : memref<1x64xf32, #tpu.memory_space<vmem>>, vector<1x64xf32>
    %12 = vector.broadcast %11 : vector<1x64xf32> to vector<8x64xf32>
    %13 = arith.addf %10, %12 : vector<8x64xf32>
    %14 = vector.extract_strided_slice %13 {offsets = [0, 0], sizes = [8, 32], strides = [1, 1]} : vector<8x64xf32> to vector<8x32xf32>
    %15 = vector.extract_strided_slice %13 {offsets = [0, 32], sizes = [8, 32], strides = [1, 1]} : vector<8x64xf32> to vector<8x32xf32>
    %16 = vector.extract_strided_slice %8 {offsets = [0, 0], sizes = [8, 8], strides = [1, 1]} : vector<8x32xf32> to vector<8x8xf32>
    %17 = vector.extract_strided_slice %14 {offsets = [0, 0], sizes = [8, 8], strides = [1, 1]} : vector<8x32xf32> to vector<8x8xf32>
    %18 = vector.extract_strided_slice %15 {offsets = [0, 0], sizes = [8, 8], strides = [1, 1]} : vector<8x32xf32> to vector<8x8xf32>
    %19 = tpu.transpose %17, [1, 0] : vector<8x8xf32> -> vector<8x8xf32>
    %cst_14 = arith.constant dense<0.000000e+00> : vector<8x8xf32>
    %20 = tpu.matmul %16, %19, %cst_14 {dimension_numbers = #tpu.dot_dimension_numbers<[1], [0], [0], [1], [0, 0, 1, 1], [], []>} : vector<8x8xf32>, vector<8x8xf32>, vector<8x8xf32> -> vector<8x8xf32>
    %cst_15 = arith.constant dense<0xFF800000> : vector<8xf32>
    %21 = vector.multi_reduction <maximumf>, %20, %cst_15 [1] : vector<8x8xf32> to vector<8xf32>
    %22 = vector.shape_cast %21 : vector<8xf32> to vector<8x1xf32>
    %23 = vector.broadcast %22 : vector<8x1xf32> to vector<8x8xf32>
    %24 = arith.subf %20, %23 : vector<8x8xf32>
    %25 = math.exp %24 : vector<8x8xf32>
    %cst_16 = arith.constant dense<0.000000e+00> : vector<8xf32>
    %26 = vector.multi_reduction <add>, %25, %cst_16 [1] : vector<8x8xf32> to vector<8xf32>
    %27 = vector.shape_cast %26 : vector<8xf32> to vector<8x1xf32>
    %28 = tpu.reciprocal %27 {approx = true} : vector<8x1xf32> -> vector<8x1xf32>
    %29 = vector.broadcast %28 : vector<8x1xf32> to vector<8x8xf32>
    %30 = arith.mulf %25, %29 : vector<8x8xf32>
    %cst_17 = arith.constant dense<0.000000e+00> : vector<8x8xf32>
    %31 = tpu.matmul %30, %18, %cst_17 {dimension_numbers = #tpu.dot_dimension_numbers<[1], [0], [0], [1], [0, 0, 1, 1], [], []>} : vector<8x8xf32>, vector<8x8xf32>, vector<8x8xf32> -> vector<8x8xf32>
    %32 = vector.extract_strided_slice %8 {offsets = [0, 8], sizes = [8, 8], strides = [1, 1]} : vector<8x32xf32> to vector<8x8xf32>
    %33 = vector.extract_strided_slice %14 {offsets = [0, 8], sizes = [8, 8], strides = [1, 1]} : vector<8x32xf32> to vector<8x8xf32>
    %34 = vector.extract_strided_slice %15 {offsets = [0, 8], sizes = [8, 8], strides = [1, 1]} : vector<8x32xf32> to vector<8x8xf32>
    %35 = tpu.transpose %33, [1, 0] : vector<8x8xf32> -> vector<8x8xf32>
    %cst_18 = arith.constant dense<0.000000e+00> : vector<8x8xf32>
    %36 = tpu.matmul %32, %35, %cst_18 {dimension_numbers = #tpu.dot_dimension_numbers<[1], [0], [0], [1], [0, 0, 1, 1], [], []>} : vector<8x8xf32>, vector<8x8xf32>, vector<8x8xf32> -> vector<8x8xf32>
    %cst_19 = arith.constant dense<0xFF800000> : vector<8xf32>
    %37 = vector.multi_reduction <maximumf>, %36, %cst_19 [1] : vector<8x8xf32> to vector<8xf32>
    %38 = vector.shape_cast %37 : vector<8xf32> to vector<8x1xf32>
    %39 = vector.broadcast %38 : vector<8x1xf32> to vector<8x8xf32>
    %40 = arith.subf %36, %39 : vector<8x8xf32>
    %41 = math.exp %40 : vector<8x8xf32>
    %cst_20 = arith.constant dense<0.000000e+00> : vector<8xf32>
    %42 = vector.multi_reduction <add>, %41, %cst_20 [1] : vector<8x8xf32> to vector<8xf32>
    %43 = vector.shape_cast %42 : vector<8xf32> to vector<8x1xf32>
    %44 = tpu.reciprocal %43 {approx = true} : vector<8x1xf32> -> vector<8x1xf32>
    %45 = vector.broadcast %44 : vector<8x1xf32> to vector<8x8xf32>
    %46 = arith.mulf %41, %45 : vector<8x8xf32>
    %cst_21 = arith.constant dense<0.000000e+00> : vector<8x8xf32>
    %47 = tpu.matmul %46, %34, %cst_21 {dimension_numbers = #tpu.dot_dimension_numbers<[1], [0], [0], [1], [0, 0, 1, 1], [], []>} : vector<8x8xf32>, vector<8x8xf32>, vector<8x8xf32> -> vector<8x8xf32>
    %48 = vector.extract_strided_slice %8 {offsets = [0, 16], sizes = [8, 8], strides = [1, 1]} : vector<8x32xf32> to vector<8x8xf32>
    %49 = vector.extract_strided_slice %14 {offsets = [0, 16], sizes = [8, 8], strides = [1, 1]} : vector<8x32xf32> to vector<8x8xf32>
    %50 = vector.extract_strided_slice %15 {offsets = [0, 16], sizes = [8, 8], strides = [1, 1]} : vector<8x32xf32> to vector<8x8xf32>
    %51 = tpu.transpose %49, [1, 0] : vector<8x8xf32> -> vector<8x8xf32>
    %cst_22 = arith.constant dense<0.000000e+00> : vector<8x8xf32>
    %52 = tpu.matmul %48, %51, %cst_22 {dimension_numbers = #tpu.dot_dimension_numbers<[1], [0], [0], [1], [0, 0, 1, 1], [], []>} : vector<8x8xf32>, vector<8x8xf32>, vector<8x8xf32> -> vector<8x8xf32>
    %cst_23 = arith.constant dense<0xFF800000> : vector<8xf32>
    %53 = vector.multi_reduction <maximumf>, %52, %cst_23 [1] : vector<8x8xf32> to vector<8xf32>
    %54 = vector.shape_cast %53 : vector<8xf32> to vector<8x1xf32>
    %55 = vector.broadcast %54 : vector<8x1xf32> to vector<8x8xf32>
    %56 = arith.subf %52, %55 : vector<8x8xf32>
    %57 = math.exp %56 : vector<8x8xf32>
    %cst_24 = arith.constant dense<0.000000e+00> : vector<8xf32>
    %58 = vector.multi_reduction <add>, %57, %cst_24 [1] : vector<8x8xf32> to vector<8xf32>
    %59 = vector.shape_cast %58 : vector<8xf32> to vector<8x1xf32>
    %60 = tpu.reciprocal %59 {approx = true} : vector<8x1xf32> -> vector<8x1xf32>
    %61 = vector.broadcast %60 : vector<8x1xf32> to vector<8x8xf32>
    %62 = arith.mulf %57, %61 : vector<8x8xf32>
    %cst_25 = arith.constant dense<0.000000e+00> : vector<8x8xf32>
    %63 = tpu.matmul %62, %50, %cst_25 {dimension_numbers = #tpu.dot_dimension_numbers<[1], [0], [0], [1], [0, 0, 1, 1], [], []>} : vector<8x8xf32>, vector<8x8xf32>, vector<8x8xf32> -> vector<8x8xf32>
    %64 = vector.extract_strided_slice %8 {offsets = [0, 24], sizes = [8, 8], strides = [1, 1]} : vector<8x32xf32> to vector<8x8xf32>
    %65 = vector.extract_strided_slice %14 {offsets = [0, 24], sizes = [8, 8], strides = [1, 1]} : vector<8x32xf32> to vector<8x8xf32>
    %66 = vector.extract_strided_slice %15 {offsets = [0, 24], sizes = [8, 8], strides = [1, 1]} : vector<8x32xf32> to vector<8x8xf32>
    %67 = tpu.transpose %65, [1, 0] : vector<8x8xf32> -> vector<8x8xf32>
    %cst_26 = arith.constant dense<0.000000e+00> : vector<8x8xf32>
    %68 = tpu.matmul %64, %67, %cst_26 {dimension_numbers = #tpu.dot_dimension_numbers<[1], [0], [0], [1], [0, 0, 1, 1], [], []>} : vector<8x8xf32>, vector<8x8xf32>, vector<8x8xf32> -> vector<8x8xf32>
    %cst_27 = arith.constant dense<0xFF800000> : vector<8xf32>
    %69 = vector.multi_reduction <maximumf>, %68, %cst_27 [1] : vector<8x8xf32> to vector<8xf32>
    %70 = vector.shape_cast %69 : vector<8xf32> to vector<8x1xf32>
    %71 = vector.broadcast %70 : vector<8x1xf32> to vector<8x8xf32>
    %72 = arith.subf %68, %71 : vector<8x8xf32>
    %73 = math.exp %72 : vector<8x8xf32>
    %cst_28 = arith.constant dense<0.000000e+00> : vector<8xf32>
    %74 = vector.multi_reduction <add>, %73, %cst_28 [1] : vector<8x8xf32> to vector<8xf32>
    %75 = vector.shape_cast %74 : vector<8xf32> to vector<8x1xf32>
    %76 = tpu.reciprocal %75 {approx = true} : vector<8x1xf32> -> vector<8x1xf32>
    %77 = vector.broadcast %76 : vector<8x1xf32> to vector<8x8xf32>
    %78 = arith.mulf %73, %77 : vector<8x8xf32>
    %cst_29 = arith.constant dense<0.000000e+00> : vector<8x8xf32>
    %79 = tpu.matmul %78, %66, %cst_29 {dimension_numbers = #tpu.dot_dimension_numbers<[1], [0], [0], [1], [0, 0, 1, 1], [], []>} : vector<8x8xf32>, vector<8x8xf32>, vector<8x8xf32> -> vector<8x8xf32>
    %80 = tpu.concatenate %31, %47, %63, %79 in 1 : vector<8x8xf32>, vector<8x8xf32>, vector<8x8xf32>, vector<8x8xf32> -> vector<8x32xf32>
    %c0_30 = arith.constant 0 : index
    %c0_31 = arith.constant 0 : index
    %81 = vector.load %arg7[%c0_30, %c0_31] : memref<32x32xf32, #tpu.memory_space<vmem>>, vector<32x32xf32>
    %cst_32 = arith.constant dense<0.000000e+00> : vector<8x32xf32>
    %82 = tpu.matmul %80, %81, %cst_32 {dimension_numbers = #tpu.dot_dimension_numbers<[1], [0], [0], [1], [0, 0, 1, 1], [], []>} : vector<8x32xf32>, vector<32x32xf32>, vector<8x32xf32> -> vector<8x32xf32>
    %c0_33 = arith.constant 0 : index
    %c0_34 = arith.constant 0 : index
    %83 = vector.load %arg8[%c0_33, %c0_34] : memref<1x32xf32, #tpu.memory_space<vmem>>, vector<1x32xf32>
    %84 = vector.broadcast %83 : vector<1x32xf32> to vector<8x32xf32>
    %85 = arith.addf %82, %84 : vector<8x32xf32>
    %86 = arith.addf %1, %85 : vector<8x32xf32>
    %c0_35 = arith.constant 0 : index
    %c0_36 = arith.constant 0 : index
    %87 = vector.load %arg9[%c0_35, %c0_36] : memref<1x32xf32, #tpu.memory_space<vmem>>, vector<1x32xf32>
    %c0_37 = arith.constant 0 : index
    %c0_38 = arith.constant 0 : index
    %88 = vector.load %arg10[%c0_37, %c0_38] : memref<1x32xf32, #tpu.memory_space<vmem>>, vector<1x32xf32>
    %cst_39 = arith.constant dense<0.000000e+00> : vector<8xf32>
    %89 = vector.multi_reduction <add>, %86, %cst_39 [1] : vector<8x32xf32> to vector<8xf32>
    %90 = vector.shape_cast %89 : vector<8xf32> to vector<8x1xf32>
    %cst_40 = arith.constant 3.200000e+01 : f32
    %91 = vector.broadcast %cst_40 : f32 to vector<8x1xf32>
    %92 = arith.divf %90, %91 : vector<8x1xf32>
    %93 = vector.broadcast %92 : vector<8x1xf32> to vector<8x32xf32>
    %94 = arith.subf %86, %93 : vector<8x32xf32>
    %95 = arith.mulf %94, %94 : vector<8x32xf32>
    %cst_41 = arith.constant dense<0.000000e+00> : vector<8xf32>
    %96 = vector.multi_reduction <add>, %95, %cst_41 [1] : vector<8x32xf32> to vector<8xf32>
    %97 = vector.shape_cast %96 : vector<8xf32> to vector<8x1xf32>
    %cst_42 = arith.constant 3.200000e+01 : f32
    %98 = vector.broadcast %cst_42 : f32 to vector<8x1xf32>
    %99 = arith.divf %97, %98 : vector<8x1xf32>
    %100 = vector.broadcast %92 : vector<8x1xf32> to vector<8x32xf32>
    %101 = arith.subf %86, %100 : vector<8x32xf32>
    %cst_43 = arith.constant 9.99999974E-6 : f32
    %102 = vector.broadcast %cst_43 : f32 to vector<8x1xf32>
    %103 = arith.addf %99, %102 : vector<8x1xf32>
    %104 = math.rsqrt %103 : vector<8x1xf32>
    %105 = vector.broadcast %104 : vector<8x1xf32> to vector<8x32xf32>
    %106 = arith.mulf %101, %105 : vector<8x32xf32>
    %107 = vector.broadcast %87 : vector<1x32xf32> to vector<8x32xf32>
    %108 = arith.mulf %106, %107 : vector<8x32xf32>
    %109 = vector.broadcast %88 : vector<1x32xf32> to vector<8x32xf32>
    %110 = arith.addf %108, %109 : vector<8x32xf32>
    %c0_44 = arith.constant 0 : index
    %c0_45 = arith.constant 0 : index
    %c0_46 = arith.constant 0 : index
    %111 = vector.load %arg11[%c0_44, %c0_45, %c0_46] : memref<1x8x32xf32, #tpu.memory_space<vmem>>, vector<1x8x32xf32>
    %112 = vector.shape_cast %111 : vector<1x8x32xf32> to vector<8x32xf32>
    %113 = vector.shape_cast %110 : vector<8x32xf32> to vector<1x8x32xf32>
    tpu.vector_store %arg11[%c0_44, %c0_45, %c0_46], %113 {strides = array<i32>} : memref<1x8x32xf32, #tpu.memory_space<vmem>>, vector<1x8x32xf32>,
    return
  }
  func.func @transform_0(%arg0: i32) -> (i32, i32, i32) {
    %c0_i32 = arith.constant 0 : i32
    %c0_i32_0 = arith.constant 0 : i32
    %c0_i32_1 = arith.constant 0 : i32
    return %arg0, %c0_i32, %c0_i32_0 : i32, i32, i32
  }
  func.func @transform_1(%arg0: i32) -> (i32, i32, i32) {
    %c0_i32 = arith.constant 0 : i32
    %c0_i32_0 = arith.constant 0 : i32
    %c0_i32_1 = arith.constant 0 : i32
    return %arg0, %c0_i32, %c0_i32_0 : i32, i32, i32
  }
  func.func @transform_2(%arg0: i32) -> (i32, i32) {
    %c0_i32 = arith.constant 0 : i32
    %c0_i32_0 = arith.constant 0 : i32
    %c0_i32_1 = arith.constant 0 : i32
    return %c0_i32, %c0_i32_0 : i32, i32
  }
  func.func @transform_3(%arg0: i32) -> (i32, i32) {
    %c0_i32 = arith.constant 0 : i32
    %c0_i32_0 = arith.constant 0 : i32
    %c0_i32_1 = arith.constant 0 : i32
    return %c0_i32, %c0_i32_0 : i32, i32
  }
  func.func @transform_4(%arg0: i32) -> (i32, i32) {
    %c0_i32 = arith.constant 0 : i32
    %c0_i32_0 = arith.constant 0 : i32
    %c0_i32_1 = arith.constant 0 : i32
    return %c0_i32, %c0_i32_0 : i32, i32
  }
  func.func @transform_5(%arg0: i32) -> (i32, i32) {
    %c0_i32 = arith.constant 0 : i32
    %c0_i32_0 = arith.constant 0 : i32
    %c0_i32_1 = arith.constant 0 : i32
    return %c0_i32, %c0_i32_0 : i32, i32
  }
  func.func @transform_6(%arg0: i32) -> (i32, i32) {
    %c0_i32 = arith.constant 0 : i32
    %c0_i32_0 = arith.constant 0 : i32
    %c0_i32_1 = arith.constant 0 : i32
    return %c0_i32, %c0_i32_0 : i32, i32
  }
  func.func @transform_7(%arg0: i32) -> (i32, i32) {
    %c0_i32 = arith.constant 0 : i32
    %c0_i32_0 = arith.constant 0 : i32
    %c0_i32_1 = arith.constant 0 : i32
    return %c0_i32, %c0_i32_0 : i32, i32
  }
  func.func @transform_8(%arg0: i32) -> (i32, i32) {
    %c0_i32 = arith.constant 0 : i32
    %c0_i32_0 = arith.constant 0 : i32
    %c0_i32_1 = arith.constant 0 : i32
    return %c0_i32, %c0_i32_0 : i32, i32
  }
  func.func @transform_9(%arg0: i32) -> (i32, i32) {
    %c0_i32 = arith.constant 0 : i32
    %c0_i32_0 = arith.constant 0 : i32
    %c0_i32_1 = arith.constant 0 : i32
    return %c0_i32, %c0_i32_0 : i32, i32
  }
  func.func @transform_10(%arg0: i32) -> (i32, i32, i32) {
    %c0_i32 = arith.constant 0 : i32
    %c0_i32_0 = arith.constant 0 : i32
    %c0_i32_1 = arith.constant 0 : i32
    return %arg0, %c0_i32, %c0_i32_0 : i32, i32, i32
  }
}

module attributes {stable_mosaic.version = 11 : i64} {
  func.func @_linear_kernel(%arg0: i32, %arg1: memref<16x32xf32, #tpu.memory_space<vmem>>, %arg2: memref<32x128xf32, #tpu.memory_space<vmem>>, %arg3: memref<1x128xf32, #tpu.memory_space<vmem>>, %arg4: memref<16x128xf32, #tpu.memory_space<vmem>>) attributes {dimension_semantics = [#tpu.dimension_semantics<parallel>], iteration_bounds = array<i64: 1>, scalar_prefetch = 0 : i64, scratch_operands = 0 : i64, tpu.core_type = #tpu.core_type<tc>, window_params = [{transform_indices = @transform_0, window_bounds = array<i64: 16, 32>}, {pipeline_mode = #tpu.pipeline_mode<synchronous>, transform_indices = @transform_1, window_bounds = array<i64: 32, 128>}, {pipeline_mode = #tpu.pipeline_mode<synchronous>, transform_indices = @transform_2, window_bounds = array<i64: 1, 128>}, {transform_indices = @transform_3, window_bounds = array<i64: 16, 128>}]} {
    %c0 = arith.constant 0 : index
    %c0_0 = arith.constant 0 : index
    %0 = vector.load %arg1[%c0, %c0_0] : memref<16x32xf32, #tpu.memory_space<vmem>>, vector<16x32xf32>
    %c0_1 = arith.constant 0 : index
    %c0_2 = arith.constant 0 : index
    %1 = vector.load %arg2[%c0_1, %c0_2] : memref<32x128xf32, #tpu.memory_space<vmem>>, vector<32x128xf32>
    %cst = arith.constant dense<0.000000e+00> : vector<16x128xf32>
    %2 = tpu.matmul %0, %1, %cst {dimension_numbers = #tpu.dot_dimension_numbers<[1], [0], [0], [1], [0, 0, 1, 1], [], []>} : vector<16x32xf32>, vector<32x128xf32>, vector<16x128xf32> -> vector<16x128xf32>
    %c0_3 = arith.constant 0 : index
    %c0_4 = arith.constant 0 : index
    %3 = vector.load %arg3[%c0_3, %c0_4] : memref<1x128xf32, #tpu.memory_space<vmem>>, vector<1x128xf32>
    %4 = vector.broadcast %3 : vector<1x128xf32> to vector<16x128xf32>
    %5 = arith.addf %2, %4 : vector<16x128xf32>
    %c0_5 = arith.constant 0 : index
    %c0_6 = arith.constant 0 : index
    %6 = vector.load %arg4[%c0_5, %c0_6] : memref<16x128xf32, #tpu.memory_space<vmem>>, vector<16x128xf32>
    tpu.vector_store %arg4[%c0_5, %c0_6], %5 {strides = array<i32>} : memref<16x128xf32, #tpu.memory_space<vmem>>, vector<16x128xf32>,
    return
  }
  func.func @transform_0(%arg0: i32) -> (i32, i32) {
    %c0_i32 = arith.constant 0 : i32
    %c0_i32_0 = arith.constant 0 : i32
    return %arg0, %c0_i32 : i32, i32
  }
  func.func @transform_1(%arg0: i32) -> (i32, i32) {
    %c0_i32 = arith.constant 0 : i32
    %c0_i32_0 = arith.constant 0 : i32
    %c0_i32_1 = arith.constant 0 : i32
    return %c0_i32, %c0_i32_0 : i32, i32
  }
  func.func @transform_2(%arg0: i32) -> (i32, i32) {
    %c0_i32 = arith.constant 0 : i32
    %c0_i32_0 = arith.constant 0 : i32
    %c0_i32_1 = arith.constant 0 : i32
    return %c0_i32, %c0_i32_0 : i32, i32
  }
  func.func @transform_3(%arg0: i32) -> (i32, i32) {
    %c0_i32 = arith.constant 0 : i32
    %c0_i32_0 = arith.constant 0 : i32
    return %arg0, %c0_i32 : i32, i32
  }
}

</mosaic_0001>

<llo_original>
// kernel: transformer_forward.12
$region0: #{transformer_forward.12}
  #allocation0 [shape = 'u32[]', space=smem, size = 0x4, offset = 0x4, fixed_abs, tag = 'smem constant byte address 0x4 - core index']
  #allocation1 [shape = 'u32[72,128]{1,0:T(1,128)}', space=vmem, size = 0x9000, scoped, tag = 'internal scratch']
  %s0 = inlined_call_operand.vmem [shape: f32[16,32], index: 0, kind: input, shape index: {}]
  %s1 = inlined_call_operand.vmem [shape: f32[32,128], index: 1, kind: input, shape index: {}]
  %s2 = inlined_call_operand.vmem [shape: f32[1,128], index: 2, kind: input, shape index: {}]
  %s3 = inlined_call_operand.vmem [shape: f32[128,32], index: 3, kind: input, shape index: {}]
  %s4 = inlined_call_operand.vmem [shape: f32[1,32], index: 4, kind: input, shape index: {}]
  %s5 = inlined_call_operand.vmem [shape: f32[1,32], index: 5, kind: input, shape index: {}]
  %s6 = inlined_call_operand.vmem [shape: f32[1,32], index: 6, kind: input, shape index: {}]
  %s7 = inlined_call_operand.vmem [shape: f32[16,32], index: 7, kind: output, shape index: {}]
  %s8 = sld [smem:[#allocation0]]
  $region38: #{transformer_forward.12} parent=0
    _
  %s10 = ssub.s32 1, %s8
  %s11 = scalar_select 0, %s10, %s8
  // Predicated region
  $region2: #{transformer_forward.12} parent=0 // pred_check
    _
  $region3: #{transformer_forward.12} parent=0 // pred_check_branch
    %13 = sbr.rel (0) target = $region5
  $region4: #{transformer_forward.12} parent=0 // pred_region
    _
  $region5: #{transformer_forward.12} parent=0 // pred_fallthru
    _
  // Predicated region
  $region6: #{transformer_forward.12} parent=0 // pred_check
    _
  $region7: #{transformer_forward.12} parent=0 // pred_check_branch
    %15 = sbr.rel (0) target = $region9
  $region8: #{transformer_forward.12} parent=0 // pred_region
    _
  $region9: #{transformer_forward.12} parent=0 // pred_fallthru
    _
  // Predicated region
  $region10: #{transformer_forward.12} parent=0 // pred_check
    _
  $region11: #{transformer_forward.12} parent=0 // pred_check_branch
    %17 = sbr.rel (0) target = $region13
  $region12: #{transformer_forward.12} parent=0 // pred_region
    _
  $region13: #{transformer_forward.12} parent=0 // pred_fallthru
    _
  // Predicated region
  $region14: #{transformer_forward.12} parent=0 // pred_check
    _
  $region15: #{transformer_forward.12} parent=0 // pred_check_branch
    %19 = sbr.rel (0) target = $region17
  $region16: #{transformer_forward.12} parent=0 // pred_region
    _
  $region17: #{transformer_forward.12} parent=0 // pred_fallthru
    _
  // Predicated region
  $region18: #{transformer_forward.12} parent=0 // pred_check
    _
  $region19: #{transformer_forward.12} parent=0 // pred_check_branch
    %21 = sbr.rel (0) target = $region21
  $region20: #{transformer_forward.12} parent=0 // pred_region
    _
  $region21: #{transformer_forward.12} parent=0 // pred_fallthru
    _
  // Predicated region
  $region22: #{transformer_forward.12} parent=0 // pred_check
    _
  $region23: #{transformer_forward.12} parent=0 // pred_check_branch
    %23 = sbr.rel (0) target = $region25
  $region24: #{transformer_forward.12} parent=0 // pred_region
    _
  $region25: #{transformer_forward.12} parent=0 // pred_fallthru
    _
  // Predicated region
  $region26: #{transformer_forward.12} parent=0 // pred_check
    _
  $region27: #{transformer_forward.12} parent=0 // pred_check_branch
    %25 = sbr.rel (0) target = $region29
  $region28: #{transformer_forward.12} parent=0 // pred_region
    _
  $region29: #{transformer_forward.12} parent=0 // pred_fallthru
    _
  %v26 = vld [vmem:[%s0] sm:$0xff]
  %v27 = vld [vmem:[%s0 + $0x8] sm:$0xff]
  %v28 = vld [vmem:[%s1] sm:$0xff]
  %v29 = vld [vmem:[%s1 + $0x8] sm:$0xff]
  %v30 = vld [vmem:[%s1 + $0x10] sm:$0xff]
  %v31 = vld [vmem:[%s1 + $0x18] sm:$0xff]
  %v32 = vld [vmem:[%s2] sm:$0x1]
  %v34 = vperm.slane %v32, 0
  %vm36 = vcmask 261120
  %v38 = vsel %vm36, %v26, 0
  %v41 = vsel %vm36, %v27, 0
  %43 = vmatpush.msra.mxu0 0.0
  %44 = vmatpush.msra.mxu0 0.0
  %45 = vmatpush.msra.mxu0 0.0
  %46 = vmatpush.msra.mxu0 0.0
  %47 = vmatpush.msra.mxu0 0.0
  %48 = vmatpush.msra.mxu0 0.0
  %49 = vmatpush.msra.mxu0 0.0
  %50 = vmatpush.msra.mxu0 0.0
  %51 = vmatpush.msra.mxu0 0.0
  %52 = vmatpush.msra.mxu0 0.0
  %53 = vmatpush.msra.mxu0 0.0
  %54 = vmatpush.msra.mxu0 0.0
  %55 = vmatpush.msra.mxu0 %v31
  %56 = vmatpush.msra.mxu0 %v30
  %57 = vmatpush.msra.mxu0 %v29
  %58 = vmatpush.msra.mxu0 %v28
  %59 = vmatmul.f32.gmra.mxu0 %v38
  %v60 = vpop.f32.mrf.mxu0
  %v61 = vadd.f32 %v34, %v60
  %62 = vmatmul.f32.gmra.mxu0 %v41
  %v63 = vpop.f32.mrf.mxu0
  %v64 = vadd.f32 %v34, %v63
  %65 = vdwg.mxu0
  %v66 = vmax.f32 %v61, 0.0
  %v67 = vmax.f32 %v64, 0.0
  %v68 = vld [vmem:[%s3] sm:$0xff]
  %v69 = vld [vmem:[%s3 + $0x8] sm:$0xff]
  %v70 = vld [vmem:[%s3 + $0x10] sm:$0xff]
  %v71 = vld [vmem:[%s3 + $0x18] sm:$0xff]
  %v72 = vld [vmem:[%s3 + $0x20] sm:$0xff]
  %v73 = vld [vmem:[%s3 + $0x28] sm:$0xff]
  %v74 = vld [vmem:[%s3 + $0x30] sm:$0xff]
  %v75 = vld [vmem:[%s3 + $0x38] sm:$0xff]
  %v76 = vld [vmem:[%s3 + $0x40] sm:$0xff]
  %v77 = vld [vmem:[%s3 + $0x48] sm:$0xff]
  %v78 = vld [vmem:[%s3 + $0x50] sm:$0xff]
  %v79 = vld [vmem:[%s3 + $0x58] sm:$0xff]
  %v80 = vld [vmem:[%s3 + $0x60] sm:$0xff]
  %v81 = vld [vmem:[%s3 + $0x68] sm:$0xff]
  %v82 = vld [vmem:[%s3 + $0x70] sm:$0xff]
  %v83 = vld [vmem:[%s3 + $0x78] sm:$0xff]
  %v84 = vld [vmem:[%s4] sm:$0x1]
  %v86 = vperm.slane %v84, 0
  %88 = vmatpush.msra.mxu0 %v83
  %89 = vmatpush.msra.mxu0 %v82
  %90 = vmatpush.msra.mxu0 %v81
  %91 = vmatpush.msra.mxu0 %v80
  %92 = vmatpush.msra.mxu0 %v79
  %93 = vmatpush.msra.mxu0 %v78
  %94 = vmatpush.msra.mxu0 %v77
  %95 = vmatpush.msra.mxu0 %v76
  %96 = vmatpush.msra.mxu0 %v75
  %97 = vmatpush.msra.mxu0 %v74
  %98 = vmatpush.msra.mxu0 %v73
  %99 = vmatpush.msra.mxu0 %v72
  %100 = vmatpush.msra.mxu0 %v71
  %101 = vmatpush.msra.mxu0 %v70
  %102 = vmatpush.msra.mxu0 %v69
  %103 = vmatpush.msra.mxu0 %v68
  %104 = vmatmul.f32.gmra.mxu0 %v66
  %v105 = vpop.f32.mrf.mxu0
  %v106 = vadd.f32 %v86, %v105
  %107 = vmatmul.f32.gmra.mxu0 %v67
  %v108 = vpop.f32.mrf.mxu0
  %v109 = vadd.f32 %v86, %v108
  %110 = vdwg.mxu0
  %v111 = vadd.f32 %v26, %v106
  %v112 = vadd.f32 %v27, %v109
  %v113 = vld [vmem:[%s5] sm:$0x1]
  %v114 = vld [vmem:[%s6] sm:$0x1]
  %v115 = vsel %vm36, %v111, 0.0
  %116 = vadd.xlane.f32.xlu0 %v115
  %v117 = vpop.xlane.xlu0 %116
  %v118 = vsel %vm36, %v112, 0.0
  %119 = vadd.xlane.f32.xlu0 %v118
  %v120 = vpop.xlane.xlu0 %119
  %v121 = vrcp.pop 32.0
  %v122 = vmul.f32 32.0, %v121
  %v123 = vsub.f32 1.0, %v122
  %v124 = vmul.f32 %v121, %v123
  %v125 = vadd.f32 %v121, %v124
  %vm126 = vweird.f32 %v121
  %v127 = vsel %vm126, %v121, %v125
  %v128 = vmul.f32 %v117, %v127
  %v129 = vmul.f32 %v120, %v127
  %v130 = vsub.f32 %v111, %v128
  %v131 = vsub.f32 %v112, %v129
  %v132 = vmul.f32 %v130, %v130
  %v133 = vmul.f32 %v131, %v131
  %v134 = vsel %vm36, %v132, 0.0
  %135 = vadd.xlane.f32.xlu0 %v134
  %v136 = vpop.xlane.xlu0 %135
  %v137 = vsel %vm36, %v133, 0.0
  %138 = vadd.xlane.f32.xlu0 %v137
  %v139 = vpop.xlane.xlu0 %138
  %v140 = vmul.f32 %v136, %v127
  %v141 = vmul.f32 %v139, %v127
  %v142 = vadd.f32 %v140, 1e-05
  %v143 = vadd.f32 %v141, 1e-05
  %v144 = vrsqrt.pop %v142
  %v145 = vmul.f32 %v144, %v142
  %v146 = vmul.f32 %v145, %v144
  %v147 = vmul.f32 0.5, %v146
  %v148 = vsub.f32 1.5, %v147
  %v149 = vmul.f32 %v144, %v148
  %vm150 = vweird.f32 %v142
  %vm151 = vweird.f32 %v144
  %vm152 = vmor %vm150, %vm151
  %v153 = vsel %vm152, %v144, %v149
  %v154 = vrsqrt.pop %v143
  %v155 = vmul.f32 %v154, %v143
  %v156 = vmul.f32 %v155, %v154
  %v157 = vmul.f32 0.5, %v156
  %v158 = vsub.f32 1.5, %v157
  %v159 = vmul.f32 %v154, %v158
  %vm160 = vweird.f32 %v143
  %vm161 = vweird.f32 %v154
  %vm162 = vmor %vm160, %vm161
  %v163 = vsel %vm162, %v154, %v159
  %v164 = vmul.f32 %v130, %v153
  %v165 = vmul.f32 %v131, %v163
  %v167 = vperm.slane %v113, 0
  %v169 = vmul.f32 %v164, %v167
  %v170 = vmul.f32 %v165, %v167
  %v172 = vperm.slane %v114, 0
  %v174 = vadd.f32 %v169, %v172
  %v175 = vadd.f32 %v170, %v172
  %176 = vst.msk [vmem:[%s7] sm:$0xff] %vm36, %v174
  %177 = vst.msk [vmem:[%s7 + $0x8] sm:$0xff] %vm36, %v175
  // Predicated region
  $region30: #{transformer_forward.12} parent=0 // pred_check
    _
  $region31: #{transformer_forward.12} parent=0 // pred_check_branch
    %179 = sbr.rel (0) target = $region33
  $region32: #{transformer_forward.12} parent=0 // pred_region
    _
  $region33: #{transformer_forward.12} parent=0 // pred_fallthru
    _
  // Predicated region
  $region34: #{transformer_forward.12} parent=0 // pred_check
    _
  $region35: #{transformer_forward.12} parent=0 // pred_check_branch
    %181 = sbr.rel (0) target = $region37
  $region36: #{transformer_forward.12} parent=0 // pred_region
    _
  $region37: #{transformer_forward.12} parent=0 // pred_fallthru
    _

// kernel: transformer_forward.15
$region0: #{transformer_forward.15}
  #allocation0 [shape = 'u32[]', space=smem, size = 0x4, offset = 0x4, fixed_abs, tag = 'smem constant byte address 0x4 - core index']
  #allocation1 [shape = 'u32[72,128]{1,0:T(1,128)}', space=vmem, size = 0x9000, scoped, tag = 'internal scratch']
  %s0 = inlined_call_operand.vmem [shape: f32[2,8,32], index: 0, kind: input, shape index: {}]
  %s1 = inlined_call_operand.vmem [shape: f32[32,96], index: 1, kind: input, shape index: {}]
  %s2 = inlined_call_operand.vmem [shape: f32[1,96], index: 2, kind: input, shape index: {}]
  %s3 = inlined_call_operand.vmem [shape: f32[32,32], index: 3, kind: input, shape index: {}]
  %s4 = inlined_call_operand.vmem [shape: f32[1,32], index: 4, kind: input, shape index: {}]
  %s5 = inlined_call_operand.vmem [shape: f32[1,32], index: 5, kind: input, shape index: {}]
  %s6 = inlined_call_operand.vmem [shape: f32[1,32], index: 6, kind: input, shape index: {}]
  %s7 = inlined_call_operand.vmem [shape: f32[2,8,32], index: 7, kind: output, shape index: {}]
  %s8 = sld [smem:[#allocation0]]
  $region61: #{transformer_forward.15} parent=0
    _
  %s10 = ssub.s32 1, %s8
  %s11 = scalar_select 0, %s10, %s8
  loop: start=0, step=1, limit=4
  $region2: #{transformer_forward.15} parent=0 // loop_pre_header
    _
  $region3: #{transformer_forward.15} parent=0 // loop_header
    %s13 = sphi 0, %s17
    %p14 = scmp.ge.s32.totalorder %s13, 4
    %s23 = sphi 0, %s25
    %s26 = sphi 0, %s23
    %s27 = sphi 0, %s26
    %s43 = sphi 0, %s27
    %s47 = sphi 0, %s47
    %s49 = sphi 0, %s47
    %s50 = sphi 0, %s49
    %s64 = sphi 0, %s50
    %s68 = sphi 0, %s68
    %s70 = sphi 0, %s68
    %s71 = sphi 0, %s70
    %s85 = sphi 0, %s71
    %s89 = sphi 0, %s89
    %s91 = sphi 0, %s89
    %s92 = sphi 0, %s91
    %s106 = sphi 0, %s92
    %s110 = sphi 0, %s110
    %s112 = sphi 0, %s110
    %s113 = sphi 0, %s112
    %s127 = sphi 0, %s113
    %s131 = sphi 0, %s131
    %s133 = sphi 0, %s131
    %s134 = sphi 0, %s133
    %s148 = sphi 0, %s134
    %s152 = sphi 0, %s152
    %s154 = sphi 0, %s152
    %s155 = sphi 0, %s154
    %s169 = sphi 0, %s155
    %s175 = sphi 0, %s177
    %s178 = sphi 0, %s175
    %s179 = sphi 0, %s178
    %s195 = sphi 0, %s179
  $region4: #{transformer_forward.15} parent=0 // loop_header_branch
    %16 = sbr.rel (%p14) target = $region8
  $region5: #{transformer_forward.15} parent=0 // loop_body
    %s18 = ssub.s32 %s13, 1
    %s19 = ssub.s32 %s13, 2
    %s20 = sadd.s32 %s13, 1
    %s21 = ssub.s32 %s13, %s20
    %p22 = scmp.eq.s32.totalorder %s21, 0
    %s24 = sadd.s32 %s23, 1
    %s25 = scalar_select %p22, %s23, %s24
    %p28 = pneg %p22
    %p29 = scmp.eq.s32.totalorder %s13, 1
    %p30 = por %p28, %p29
    %p31 = scmp.ne.s32.totalorder %s23, %s26
    %p32 = scmp.eq.s32.totalorder %s13, 0
    %p33 = por %p31, %p32
    %p34 = scmp.ne.s32.totalorder %s23, %s26
    %p35 = scmp.eq.s32.totalorder %s18, 1
    %p36 = por %p34, %p35
    %p37 = scmp.ne.s32.totalorder %s26, %s27
    %p38 = scmp.eq.s32.totalorder %s18, 0
    %p39 = por %p37, %p38
    %p40 = scmp.ne.s32.totalorder %s26, %s27
    %p41 = scmp.eq.s32.totalorder %s19, 1
    %p42 = por %p40, %p41
    %p44 = scmp.ne.s32.totalorder %s27, %s43
    %p45 = scmp.eq.s32.totalorder %s19, 0
    %p46 = por %p44, %p45
    %s48 = sadd.s32 %s47, 1
    %p51 = scmp.eq.s32.totalorder %s13, 1
    %p52 = scmp.ne.s32.totalorder %s47, %s49
    %p53 = scmp.eq.s32.totalorder %s13, 0
    %p54 = por %p52, %p53
    %p55 = scmp.ne.s32.totalorder %s47, %s49
    %p56 = scmp.eq.s32.totalorder %s18, 1
    %p57 = por %p55, %p56
    %p58 = scmp.ne.s32.totalorder %s49, %s50
    %p59 = scmp.eq.s32.totalorder %s18, 0
    %p60 = por %p58, %p59
    %p61 = scmp.ne.s32.totalorder %s49, %s50
    %p62 = scmp.eq.s32.totalorder %s19, 1
    %p63 = por %p61, %p62
    %p65 = scmp.ne.s32.totalorder %s50, %s64
    %p66 = scmp.eq.s32.totalorder %s19, 0
    %p67 = por %p65, %p66
    %s69 = sadd.s32 %s68, 1
    %p72 = scmp.eq.s32.totalorder %s13, 1
    %p73 = scmp.ne.s32.totalorder %s68, %s70
    %p74 = scmp.eq.s32.totalorder %s13, 0
    %p75 = por %p73, %p74
    %p76 = scmp.ne.s32.totalorder %s68, %s70
    %p77 = scmp.eq.s32.totalorder %s18, 1
    %p78 = por %p76, %p77
    %p79 = scmp.ne.s32.totalorder %s70, %s71
    %p80 = scmp.eq.s32.totalorder %s18, 0
    %p81 = por %p79, %p80
    %p82 = scmp.ne.s32.totalorder %s70, %s71
    %p83 = scmp.eq.s32.totalorder %s19, 1
    %p84 = por %p82, %p83
    %p86 = scmp.ne.s32.totalorder %s71, %s85
    %p87 = scmp.eq.s32.totalorder %s19, 0
    %p88 = por %p86, %p87
    %s90 = sadd.s32 %s89, 1
    %p93 = scmp.eq.s32.totalorder %s13, 1
    %p94 = scmp.ne.s32.totalorder %s89, %s91
    %p95 = scmp.eq.s32.totalorder %s13, 0
    %p96 = por %p94, %p95
    %p97 = scmp.ne.s32.totalorder %s89, %s91
    %p98 = scmp.eq.s32.totalorder %s18, 1
    %p99 = por %p97, %p98
    %p100 = scmp.ne.s32.totalorder %s91, %s92
    %p101 = scmp.eq.s32.totalorder %s18, 0
    %p102 = por %p100, %p101
    %p103 = scmp.ne.s32.totalorder %s91, %s92
    %p104 = scmp.eq.s32.totalorder %s19, 1
    %p105 = por %p103, %p104
    %p107 = scmp.ne.s32.totalorder %s92, %s106
    %p108 = scmp.eq.s32.totalorder %s19, 0
    %p109 = por %p107, %p108
    %s111 = sadd.s32 %s110, 1
    %p114 = scmp.eq.s32.totalorder %s13, 1
    %p115 = scmp.ne.s32.totalorder %s110, %s112
    %p116 = scmp.eq.s32.totalorder %s13, 0
    %p117 = por %p115, %p116
    %p118 = scmp.ne.s32.totalorder %s110, %s112
    %p119 = scmp.eq.s32.totalorder %s18, 1
    %p120 = por %p118, %p119
    %p121 = scmp.ne.s32.totalorder %s112, %s113
    %p122 = scmp.eq.s32.totalorder %s18, 0
    %p123 = por %p121, %p122
    %p124 = scmp.ne.s32.totalorder %s112, %s113
    %p125 = scmp.eq.s32.totalorder %s19, 1
    %p126 = por %p124, %p125
    %p128 = scmp.ne.s32.totalorder %s113, %s127
    %p129 = scmp.eq.s32.totalorder %s19, 0
    %p130 = por %p128, %p129
    %s132 = sadd.s32 %s131, 1
    %p135 = scmp.eq.s32.totalorder %s13, 1
    %p136 = scmp.ne.s32.totalorder %s131, %s133
    %p137 = scmp.eq.s32.totalorder %s13, 0
    %p138 = por %p136, %p137
    %p139 = scmp.ne.s32.totalorder %s131, %s133
    %p140 = scmp.eq.s32.totalorder %s18, 1
    %p141 = por %p139, %p140
    %p142 = scmp.ne.s32.totalorder %s133, %s134
    %p143 = scmp.eq.s32.totalorder %s18, 0
    %p144 = por %p142, %p143
    %p145 = scmp.ne.s32.totalorder %s133, %s134
    %p146 = scmp.eq.s32.totalorder %s19, 1
    %p147 = por %p145, %p146
    %p149 = scmp.ne.s32.totalorder %s134, %s148
    %p150 = scmp.eq.s32.totalorder %s19, 0
    %p151 = por %p149, %p150
    %s153 = sadd.s32 %s152, 1
    %p156 = scmp.eq.s32.totalorder %s13, 1
    %p157 = scmp.ne.s32.totalorder %s152, %s154
    %p158 = scmp.eq.s32.totalorder %s13, 0
    %p159 = por %p157, %p158
    %p160 = scmp.ne.s32.totalorder %s152, %s154
    %p161 = scmp.eq.s32.totalorder %s18, 1
    %p162 = por %p160, %p161
    %p163 = scmp.ne.s32.totalorder %s154, %s155
    %p164 = scmp.eq.s32.totalorder %s18, 0
    %p165 = por %p163, %p164
    %p166 = scmp.ne.s32.totalorder %s154, %s155
    %p167 = scmp.eq.s32.totalorder %s19, 1
    %p168 = por %p166, %p167
    %p170 = scmp.ne.s32.totalorder %s155, %s169
    %p171 = scmp.eq.s32.totalorder %s19, 0
    %p172 = por %p170, %p171
    %s173 = ssub.s32 %s13, %s20
    %p174 = scmp.eq.s32.totalorder %s173, 0
    %s176 = sadd.s32 %s175, 1
    %s177 = scalar_select %p174, %s175, %s176
    %p180 = pneg %p174
    %p181 = scmp.eq.s32.totalorder %s13, 1
    %p182 = por %p180, %p181
    %p183 = scmp.ne.s32.totalorder %s175, %s178
    %p184 = scmp.eq.s32.totalorder %s13, 0
    %p185 = por %p183, %p184
    %p186 = scmp.ne.s32.totalorder %s175, %s178
    %p187 = scmp.eq.s32.totalorder %s18, 1
    %p188 = por %p186, %p187
    %p189 = scmp.ne.s32.totalorder %s178, %s179
    %p190 = scmp.eq.s32.totalorder %s18, 0
    %p191 = por %p189, %p190
    %p192 = scmp.ne.s32.totalorder %s178, %s179
    %p193 = scmp.eq.s32.totalorder %s19, 1
    %p194 = por %p192, %p193
    %p196 = scmp.ne.s32.totalorder %s179, %s195
    %p197 = scmp.eq.s32.totalorder %s19, 0
    %p198 = por %p196, %p197
    %p199 = scmp.le.s32.totalorder 1, %s13
    %p200 = scmp.lt.s32.totalorder %s13, 3
    %p201 = pnand %p199, %p200
    %p202 = pneg %p201
    // Predicated region
    $region9: #{transformer_forward.15} parent=5 // pred_check
      _
    $region10: #{transformer_forward.15} parent=5 // pred_check_branch
      %204 = sbr.rel (%p201) target = $region12
    $region11: #{transformer_forward.15} parent=5 // pred_region
      %s205 = ssub.s32 %s13, 1
      // Predicated region
      $region13: #{transformer_forward.15} parent=11 // pred_check
        %p206 = pneg %p60
      $region14: #{transformer_forward.15} parent=11 // pred_check_branch
        %208 = sbr.rel (%p206) target = $region16
      $region15: #{transformer_forward.15} parent=11 // pred_region
        _
      $region16: #{transformer_forward.15} parent=11 // pred_fallthru
        _
      // Predicated region
      $region17: #{transformer_forward.15} parent=11 // pred_check
        %p209 = pneg %p81
      $region18: #{transformer_forward.15} parent=11 // pred_check_branch
        %211 = sbr.rel (%p209) target = $region20
      $region19: #{transformer_forward.15} parent=11 // pred_region
        _
      $region20: #{transformer_forward.15} parent=11 // pred_fallthru
        _
      // Predicated region
      $region21: #{transformer_forward.15} parent=11 // pred_check
        %p212 = pneg %p102
      $region22: #{transformer_forward.15} parent=11 // pred_check_branch
        %214 = sbr.rel (%p212) target = $region24
      $region23: #{transformer_forward.15} parent=11 // pred_region
        _
      $region24: #{transformer_forward.15} parent=11 // pred_fallthru
        _
      // Predicated region
      $region25: #{transformer_forward.15} parent=11 // pred_check
        %p215 = pneg %p123
      $region26: #{transformer_forward.15} parent=11 // pred_check_branch
        %217 = sbr.rel (%p215) target = $region28
      $region27: #{transformer_forward.15} parent=11 // pred_region
        _
      $region28: #{transformer_forward.15} parent=11 // pred_fallthru
        _
      // Predicated region
      $region29: #{transformer_forward.15} parent=11 // pred_check
        %p218 = pneg %p144
      $region30: #{transformer_forward.15} parent=11 // pred_check_branch
        %220 = sbr.rel (%p218) target = $region32
      $region31: #{transformer_forward.15} parent=11 // pred_region
        _
      $region32: #{transformer_forward.15} parent=11 // pred_fallthru
        _
      // Predicated region
      $region33: #{transformer_forward.15} parent=11 // pred_check
        %p221 = pneg %p165
      $region34: #{transformer_forward.15} parent=11 // pred_check_branch
        %223 = sbr.rel (%p221) target = $region36
      $region35: #{transformer_forward.15} parent=11 // pred_region
        _
      $region36: #{transformer_forward.15} parent=11 // pred_fallthru
        _
    $region12: #{transformer_forward.15} parent=5 // pred_fallthru
      _
    %p224 = scmp.lt.s32.totalorder %s13, 2
    // Predicated region
    $region37: #{transformer_forward.15} parent=5 // pred_check
      %p225 = pneg %p224
    $region38: #{transformer_forward.15} parent=5 // pred_check_branch
      %227 = sbr.rel (%p225) target = $region40
    $region39: #{transformer_forward.15} parent=5 // pred_region
      // Predicated region
      $region41: #{transformer_forward.15} parent=39 // pred_check
        %p228 = pneg %p33
      $region42: #{transformer_forward.15} parent=39 // pred_check_branch
        %230 = sbr.rel (%p228) target = $region44
      $region43: #{transformer_forward.15} parent=39 // pred_region
        %p231 = scmp.lt.s32.totalorder %s13, 1
        %s232 = scalar_select %p231, %s13, 1
        %s233 = smul.addr %s232, 8
        %s234 = scalar_lea.vmem %s0, %s233
      $region44: #{transformer_forward.15} parent=39 // pred_fallthru
        _
    $region40: #{transformer_forward.15} parent=5 // pred_fallthru
      _
    %p235 = scmp.le.s32.totalorder 1, %s13
    %p236 = scmp.lt.s32.totalorder %s13, 3
    %p237 = pnand %p235, %p236
    %p238 = pneg %p237
    // Predicated region
    $region45: #{transformer_forward.15} parent=5 // pred_check
      _
    $region46: #{transformer_forward.15} parent=5 // pred_check_branch
      %240 = sbr.rel (%p237) target = $region48
    $region47: #{transformer_forward.15} parent=5 // pred_region
      %s241 = ssub.s32 %s13, 1
      %p242 = scmp.lt.s32.totalorder %s18, 1
      %s243 = scalar_select %p242, %s18, 1
      %s244 = smul.addr %s243, 8
      %s245 = scalar_lea.vmem %s0, %s244
      %p246 = pneg %p39
      %p247 = pneg %p36
      %p248 = pneg %p60
      %p249 = pneg %p57
      %p250 = pneg %p81
      %p251 = pneg %p78
      %p252 = pneg %p102
      %p253 = pneg %p99
      %p254 = pneg %p123
      %p255 = pneg %p120
      %p256 = pneg %p144
      %p257 = pneg %p141
      %p258 = pneg %p165
      %p259 = pneg %p162
      %p260 = pneg %p191
      %p261 = pneg %p188
      %p262 = scmp.lt.s32.totalorder %s18, 1
      %s263 = scalar_select %p262, %s18, 1
      %s264 = smul.addr %s263, 8
      %s265 = scalar_lea.vmem %s7, %s264
      %p266 = scmp.lt.s32.totalorder %s18, 1
      %s267 = scalar_select %p266, %s18, 1
      %s268 = smul.addr %s267, 8
      %s269 = scalar_lea.vmem %s0, %s268
      %p270 = scmp.lt.s32.totalorder %s18, 1
      %s271 = scalar_select %p270, %s18, 1
      %s272 = smul.addr %s271, 8
      %s273 = scalar_lea.vmem %s7, %s272
      %v274 = vld [vmem:[%s269] sm:$0xff]
      %v275 = vld [vmem:[%s1] sm:$0xff]
      %v276 = vld [vmem:[%s1 + $0x8] sm:$0xff]
      %v277 = vld [vmem:[%s1 + $0x10] sm:$0xff]
      %v278 = vld [vmem:[%s1 + $0x18] sm:$0xff]
      %v279 = vld [vmem:[%s2] sm:$0x1]
      %v281 = vperm.slane %v279, 0
      %vm283 = vcmask 261120
      %v285 = vsel %vm283, %v274, 0
      %287 = vmatpush.msra.mxu0 0.0
      %288 = vmatpush.msra.mxu0 0.0
      %289 = vmatpush.msra.mxu0 0.0
      %290 = vmatpush.msra.mxu0 0.0
      %291 = vmatpush.msra.mxu0 0.0
      %292 = vmatpush.msra.mxu0 0.0
      %293 = vmatpush.msra.mxu0 0.0
      %294 = vmatpush.msra.mxu0 0.0
      %295 = vmatpush.msra.mxu0 0.0
      %296 = vmatpush.msra.mxu0 0.0
      %297 = vmatpush.msra.mxu0 0.0
      %298 = vmatpush.msra.mxu0 0.0
      %299 = vmatpush.msra.mxu0 %v278
      %300 = vmatpush.msra.mxu0 %v277
      %301 = vmatpush.msra.mxu0 %v276
      %302 = vmatpush.msra.mxu0 %v275
      %303 = vmatmul.f32.gmra.mxu0 %v285
      %v304 = vpop.f32.mrf.mxu0
      %v305 = vadd.f32 %v281, %v304
      %306 = vdwg.mxu0
      %v307 = vlaneseq
      %v308 = vshrl.u32 %v307, 7
      %v309 = vlaneseq
      %v310 = vand.u32 %v309, 127
      %vm311 = vcmp.le.s32.totalorder %v310, %v308
      %313 = vrot.lane.b32.xlu0 %v305, 96
      %v314 = vpop.permute.xlu0 %313
      %vm315 = vcmask 64512
      %v316 = vsel %vm315, %v305, 0
      %v318 = vsel %vm315, %v314, 0
      %320 = vmatpush.xpose.msra.mxu0 0.0
      %321 = vmatpush.xpose.msra.mxu0 0.0
      %322 = vmatpush.xpose.msra.mxu0 0.0
      %323 = vmatpush.xpose.msra.mxu0 0.0
      %324 = vmatpush.xpose.msra.mxu0 0.0
      %325 = vmatpush.xpose.msra.mxu0 0.0
      %326 = vmatpush.xpose.msra.mxu0 0.0
      %327 = vmatpush.xpose.msra.mxu0 0.0
      %328 = vmatpush.xpose.msra.mxu0 0.0
      %329 = vmatpush.xpose.msra.mxu0 0.0
      %330 = vmatpush.xpose.msra.mxu0 0.0
      %331 = vmatpush.xpose.msra.mxu0 0.0
      %332 = vmatpush.xpose.msra.mxu0 0.0
      %333 = vmatpush.xpose.msra.mxu0 0.0
      %334 = vmatpush.xpose.msra.mxu0 0.0
      %335 = vmatpush.xpose.msra.mxu0 %v318
      %336 = vmatmul.f32.gmra.mxu0 %v316
      %v337 = vpop.f32.mrf.mxu0
      %v338 = vadd.f32 0.0, %v337
      %339 = vdwg.mxu0
      %v340 = vsel %vm311, %v338, -1e+30
      %v341 = vsel %vm315, %v340, -inf
      %342 = vmax.xlane.f32.xlu0 %v341
      %v343 = vpop.xlane.xlu0 %342
      %v344 = vsub.f32 %v340, %v343
      %v345 = vmul.f32 %v344, 1.442695
      %v346 = vpow.pop %v345
      %v347 = vsel %vm315, %v346, 0.0
      %348 = vadd.xlane.f32.xlu0 %v347
      %v349 = vpop.xlane.xlu0 %348
      %v350 = vrcp.pop %v349
      %v351 = vmul.f32 %v346, %v350
      %352 = vrot.lane.b32.xlu0 %v305, 64
      %v353 = vpop.permute.xlu0 %352
      %v356 = vsel %vm315, %v351, 0
      %358 = vmatpush.msra.mxu0 0.0
      %359 = vmatpush.msra.mxu0 0.0
      %360 = vmatpush.msra.mxu0 0.0
      %361 = vmatpush.msra.mxu0 0.0
      %362 = vmatpush.msra.mxu0 0.0
      %363 = vmatpush.msra.mxu0 0.0
      %364 = vmatpush.msra.mxu0 0.0
      %365 = vmatpush.msra.mxu0 0.0
      %366 = vmatpush.msra.mxu0 0.0
      %367 = vmatpush.msra.mxu0 0.0
      %368 = vmatpush.msra.mxu0 0.0
      %369 = vmatpush.msra.mxu0 0.0
      %370 = vmatpush.msra.mxu0 0.0
      %371 = vmatpush.msra.mxu0 0.0
      %372 = vmatpush.msra.mxu0 0.0
      %373 = vmatpush.msra.mxu0 %v353
      %374 = vmatmul.f32.gmra.mxu0 %v356
      %v375 = vpop.f32.mrf.mxu0
      %v376 = vadd.f32 0.0, %v375
      %377 = vdwg.mxu0
      %378 = vrot.lane.b32.xlu0 %v305, 120
      %v379 = vpop.permute.xlu0 %378
      %380 = vrot.lane.b32.xlu0 %v305, 88
      %v381 = vpop.permute.xlu0 %380
      %v382 = vsel %vm315, %v379, 0
      %v384 = vsel %vm315, %v381, 0
      %386 = vmatpush.xpose.msra.mxu0 0.0
      %387 = vmatpush.xpose.msra.mxu0 0.0
      %388 = vmatpush.xpose.msra.mxu0 0.0
      %389 = vmatpush.xpose.msra.mxu0 0.0
      %390 = vmatpush.xpose.msra.mxu0 0.0
      %391 = vmatpush.xpose.msra.mxu0 0.0
      %392 = vmatpush.xpose.msra.mxu0 0.0
      %393 = vmatpush.xpose.msra.mxu0 0.0
      %394 = vmatpush.xpose.msra.mxu0 0.0
      %395 = vmatpush.xpose.msra.mxu0 0.0
      %396 = vmatpush.xpose.msra.mxu0 0.0
      %397 = vmatpush.xpose.msra.mxu0 0.0
      %398 = vmatpush.xpose.msra.mxu0 0.0
      %399 = vmatpush.xpose.msra.mxu0 0.0
      %400 = vmatpush.xpose.msra.mxu0 0.0
      %401 = vmatpush.xpose.msra.mxu0 %v384
      %402 = vmatmul.f32.gmra.mxu0 %v382
      %v403 = vpop.f32.mrf.mxu0
      %v404 = vadd.f32 0.0, %v403
      %405 = vdwg.mxu0
      %v406 = vsel %vm311, %v404, -1e+30
      %v407 = vsel %vm315, %v406, -inf
      %408 = vmax.xlane.f32.xlu0 %v407
      %v409 = vpop.xlane.xlu0 %408
      %v410 = vsub.f32 %v406, %v409
      %v411 = vmul.f32 %v410, 1.442695
      %v412 = vpow.pop %v411
      %v413 = vsel %vm315, %v412, 0.0
      %414 = vadd.xlane.f32.xlu0 %v413
      %v415 = vpop.xlane.xlu0 %414
      %v416 = vrcp.pop %v415
      %v417 = vmul.f32 %v412, %v416
      %418 = vrot.lane.b32.xlu0 %v305, 56
      %v419 = vpop.permute.xlu0 %418
      %v422 = vsel %vm315, %v417, 0
      %424 = vmatpush.msra.mxu0 0.0
      %425 = vmatpush.msra.mxu0 0.0
      %426 = vmatpush.msra.mxu0 0.0
      %427 = vmatpush.msra.mxu0 0.0
      %428 = vmatpush.msra.mxu0 0.0
      %429 = vmatpush.msra.mxu0 0.0
      %430 = vmatpush.msra.mxu0 0.0
      %431 = vmatpush.msra.mxu0 0.0
      %432 = vmatpush.msra.mxu0 0.0
      %433 = vmatpush.msra.mxu0 0.0
      %434 = vmatpush.msra.mxu0 0.0
      %435 = vmatpush.msra.mxu0 0.0
      %436 = vmatpush.msra.mxu0 0.0
      %437 = vmatpush.msra.mxu0 0.0
      %438 = vmatpush.msra.mxu0 0.0
      %439 = vmatpush.msra.mxu0 %v419
      %440 = vmatmul.f32.gmra.mxu0 %v422
      %v441 = vpop.f32.mrf.mxu0
      %v442 = vadd.f32 0.0, %v441
      %443 = vdwg.mxu0
      %444 = vrot.lane.b32.xlu0 %v305, 112
      %v445 = vpop.permute.xlu0 %444
      %446 = vrot.lane.b32.xlu0 %v305, 80
      %v447 = vpop.permute.xlu0 %446
      %v448 = vsel %vm315, %v445, 0
      %v450 = vsel %vm315, %v447, 0
      %452 = vmatpush.xpose.msra.mxu0 0.0
      %453 = vmatpush.xpose.msra.mxu0 0.0
      %454 = vmatpush.xpose.msra.mxu0 0.0
      %455 = vmatpush.xpose.msra.mxu0 0.0
      %456 = vmatpush.xpose.msra.mxu0 0.0
      %457 = vmatpush.xpose.msra.mxu0 0.0
      %458 = vmatpush.xpose.msra.mxu0 0.0
      %459 = vmatpush.xpose.msra.mxu0 0.0
      %460 = vmatpush.xpose.msra.mxu0 0.0
      %461 = vmatpush.xpose.msra.mxu0 0.0
      %462 = vmatpush.xpose.msra.mxu0 0.0
      %463 = vmatpush.xpose.msra.mxu0 0.0
      %464 = vmatpush.xpose.msra.mxu0 0.0
      %465 = vmatpush.xpose.msra.mxu0 0.0
      %466 = vmatpush.xpose.msra.mxu0 0.0
      %467 = vmatpush.xpose.msra.mxu0 %v450
      %468 = vmatmul.f32.gmra.mxu0 %v448
      %v469 = vpop.f32.mrf.mxu0
      %v470 = vadd.f32 0.0, %v469
      %471 = vdwg.mxu0
      %v472 = vsel %vm311, %v470, -1e+30
      %v473 = vsel %vm315, %v472, -inf
      %474 = vmax.xlane.f32.xlu0 %v473
      %v475 = vpop.xlane.xlu0 %474
      %v476 = vsub.f32 %v472, %v475
      %v477 = vmul.f32 %v476, 1.442695
      %v478 = vpow.pop %v477
      %v479 = vsel %vm315, %v478, 0.0
      %480 = vadd.xlane.f32.xlu0 %v479
      %v481 = vpop.xlane.xlu0 %480
      %v482 = vrcp.pop %v481
      %v483 = vmul.f32 %v478, %v482
      %484 = vrot.lane.b32.xlu0 %v305, 48
      %v485 = vpop.permute.xlu0 %484
      %v488 = vsel %vm315, %v483, 0
      %490 = vmatpush.msra.mxu0 0.0
      %491 = vmatpush.msra.mxu0 0.0
      %492 = vmatpush.msra.mxu0 0.0
      %493 = vmatpush.msra.mxu0 0.0
      %494 = vmatpush.msra.mxu0 0.0
      %495 = vmatpush.msra.mxu0 0.0
      %496 = vmatpush.msra.mxu0 0.0
      %497 = vmatpush.msra.mxu0 0.0
      %498 = vmatpush.msra.mxu0 0.0
      %499 = vmatpush.msra.mxu0 0.0
      %500 = vmatpush.msra.mxu0 0.0
      %501 = vmatpush.msra.mxu0 0.0
      %502 = vmatpush.msra.mxu0 0.0
      %503 = vmatpush.msra.mxu0 0.0
      %504 = vmatpush.msra.mxu0 0.0
      %505 = vmatpush.msra.mxu0 %v485
      %506 = vmatmul.f32.gmra.mxu0 %v488
      %v507 = vpop.f32.mrf.mxu0
      %v508 = vadd.f32 0.0, %v507
      %509 = vdwg.mxu0
      %510 = vrot.lane.b32.xlu0 %v305, 104
      %v511 = vpop.permute.xlu0 %510
      %512 = vrot.lane.b32.xlu0 %v305, 72
      %v513 = vpop.permute.xlu0 %512
      %v514 = vsel %vm315, %v511, 0
      %v516 = vsel %vm315, %v513, 0
      %518 = vmatpush.xpose.msra.mxu0 0.0
      %519 = vmatpush.xpose.msra.mxu0 0.0
      %520 = vmatpush.xpose.msra.mxu0 0.0
      %521 = vmatpush.xpose.msra.mxu0 0.0
      %522 = vmatpush.xpose.msra.mxu0 0.0
      %523 = vmatpush.xpose.msra.mxu0 0.0
      %524 = vmatpush.xpose.msra.mxu0 0.0
      %525 = vmatpush.xpose.msra.mxu0 0.0
      %526 = vmatpush.xpose.msra.mxu0 0.0
      %527 = vmatpush.xpose.msra.mxu0 0.0
      %528 = vmatpush.xpose.msra.mxu0 0.0
      %529 = vmatpush.xpose.msra.mxu0 0.0
      %530 = vmatpush.xpose.msra.mxu0 0.0
      %531 = vmatpush.xpose.msra.mxu0 0.0
      %532 = vmatpush.xpose.msra.mxu0 0.0
      %533 = vmatpush.xpose.msra.mxu0 %v516
      %534 = vmatmul.f32.gmra.mxu0 %v514
      %v535 = vpop.f32.mrf.mxu0
      %v536 = vadd.f32 0.0, %v535
      %537 = vdwg.mxu0
      %v538 = vsel %vm311, %v536, -1e+30
      %v539 = vsel %vm315, %v538, -inf
      %540 = vmax.xlane.f32.xlu0 %v539
      %v541 = vpop.xlane.xlu0 %540
      %v542 = vsub.f32 %v538, %v541
      %v543 = vmul.f32 %v542, 1.442695
      %v544 = vpow.pop %v543
      %v545 = vsel %vm315, %v544, 0.0
      %546 = vadd.xlane.f32.xlu0 %v545
      %v547 = vpop.xlane.xlu0 %546
      %v548 = vrcp.pop %v547
      %v549 = vmul.f32 %v544, %v548
      %550 = vrot.lane.b32.xlu0 %v305, 40
      %v551 = vpop.permute.xlu0 %550
      %v554 = vsel %vm315, %v549, 0
      %556 = vmatpush.msra.mxu0 0.0
      %557 = vmatpush.msra.mxu0 0.0
      %558 = vmatpush.msra.mxu0 0.0
      %559 = vmatpush.msra.mxu0 0.0
      %560 = vmatpush.msra.mxu0 0.0
      %561 = vmatpush.msra.mxu0 0.0
      %562 = vmatpush.msra.mxu0 0.0
      %563 = vmatpush.msra.mxu0 0.0
      %564 = vmatpush.msra.mxu0 0.0
      %565 = vmatpush.msra.mxu0 0.0
      %566 = vmatpush.msra.mxu0 0.0
      %567 = vmatpush.msra.mxu0 0.0
      %568 = vmatpush.msra.mxu0 0.0
      %569 = vmatpush.msra.mxu0 0.0
      %570 = vmatpush.msra.mxu0 0.0
      %571 = vmatpush.msra.mxu0 %v551
      %572 = vmatmul.f32.gmra.mxu0 %v554
      %v573 = vpop.f32.mrf.mxu0
      %v574 = vadd.f32 0.0, %v573
      %575 = vdwg.mxu0
      %577 = vrot.lane.b32.xlu0 %v442, 8
      %v578 = vpop.permute.xlu0 %577
      %581 = vrot.lane.b32.xlu0 %v508, 16
      %v582 = vpop.permute.xlu0 %581
      %585 = vrot.lane.b32.xlu0 %v574, 24
      %v586 = vpop.permute.xlu0 %585
      %v588 = vsel %vm315, %v376, %v578
      %vm589 = vcmask 130048
      %v590 = vsel %vm589, %v588, %v582
      %vm591 = vcmask 195584
      %v592 = vsel %vm591, %v590, %v586
      %v593 = vld [vmem:[%s3] sm:$0xff]
      %v594 = vld [vmem:[%s3 + $0x8] sm:$0xff]
      %v595 = vld [vmem:[%s3 + $0x10] sm:$0xff]
      %v596 = vld [vmem:[%s3 + $0x18] sm:$0xff]
      %v597 = vld [vmem:[%s4] sm:$0x1]
      %v599 = vperm.slane %v597, 0
      %v602 = vsel %vm283, %v592, 0
      %604 = vmatpush.msra.mxu0 0.0
      %605 = vmatpush.msra.mxu0 0.0
      %606 = vmatpush.msra.mxu0 0.0
      %607 = vmatpush.msra.mxu0 0.0
      %608 = vmatpush.msra.mxu0 0.0
      %609 = vmatpush.msra.mxu0 0.0
      %610 = vmatpush.msra.mxu0 0.0
      %611 = vmatpush.msra.mxu0 0.0
      %612 = vmatpush.msra.mxu0 0.0
      %613 = vmatpush.msra.mxu0 0.0
      %614 = vmatpush.msra.mxu0 0.0
      %615 = vmatpush.msra.mxu0 0.0
      %616 = vmatpush.msra.mxu0 %v596
      %617 = vmatpush.msra.mxu0 %v595
      %618 = vmatpush.msra.mxu0 %v594
      %619 = vmatpush.msra.mxu0 %v593
      %620 = vmatmul.f32.gmra.mxu0 %v602
      %v621 = vpop.f32.mrf.mxu0
      %v622 = vadd.f32 %v599, %v621
      %623 = vdwg.mxu0
      %v624 = vadd.f32 %v274, %v622
      %v625 = vld [vmem:[%s5] sm:$0x1]
      %v626 = vld [vmem:[%s6] sm:$0x1]
      %v627 = vsel %vm283, %v624, 0.0
      %628 = vadd.xlane.f32.xlu0 %v627
      %v629 = vpop.xlane.xlu0 %628
      %v630 = vrcp.pop 32.0
      %v631 = vmul.f32 32.0, %v630
      %v632 = vsub.f32 1.0, %v631
      %v633 = vmul.f32 %v630, %v632
      %v634 = vadd.f32 %v630, %v633
      %vm635 = vweird.f32 %v630
      %v636 = vsel %vm635, %v630, %v634
      %v637 = vmul.f32 %v629, %v636
      %v638 = vsub.f32 %v624, %v637
      %v639 = vmul.f32 %v638, %v638
      %v640 = vsel %vm283, %v639, 0.0
      %641 = vadd.xlane.f32.xlu0 %v640
      %v642 = vpop.xlane.xlu0 %641
      %v643 = vmul.f32 %v642, %v636
      %v644 = vadd.f32 %v643, 1e-05
      %v645 = vrsqrt.pop %v644
      %v646 = vmul.f32 %v645, %v644
      %v647 = vmul.f32 %v646, %v645
      %v648 = vmul.f32 0.5, %v647
      %v649 = vsub.f32 1.5, %v648
      %v650 = vmul.f32 %v645, %v649
      %vm651 = vweird.f32 %v644
      %vm652 = vweird.f32 %v645
      %vm653 = vmor %vm651, %vm652
      %v654 = vsel %vm653, %v645, %v650
      %v655 = vmul.f32 %v638, %v654
      %v657 = vperm.slane %v625, 0
      %v659 = vmul.f32 %v655, %v657
      %v661 = vperm.slane %v626, 0
      %v663 = vadd.f32 %v659, %v661
      %664 = vst.msk [vmem:[%s273] sm:$0xff] %vm283, %v663
      %p665 = scmp.lt.s32.totalorder %s18, 1
      %s666 = scalar_select %p665, %s18, 1
      %s667 = smul.addr %s666, 8
      %s668 = scalar_lea.vmem %s7, %s667
      // Predicated region
      $region49: #{transformer_forward.15} parent=47 // pred_check
        %p669 = pneg %p188
      $region50: #{transformer_forward.15} parent=47 // pred_check_branch
        %671 = sbr.rel (%p669) target = $region52
      $region51: #{transformer_forward.15} parent=47 // pred_region
        _
      $region52: #{transformer_forward.15} parent=47 // pred_fallthru
        _
    $region48: #{transformer_forward.15} parent=5 // pred_fallthru
      _
    %p672 = scmp.le.s32.totalorder 2, %s13
    // Predicated region
    $region53: #{transformer_forward.15} parent=5 // pred_check
      %p673 = pneg %p672
    $region54: #{transformer_forward.15} parent=5 // pred_check_branch
      %675 = sbr.rel (%p673) target = $region56
    $region55: #{transformer_forward.15} parent=5 // pred_region
      %s676 = ssub.s32 %s13, 2
      // Predicated region
      $region57: #{transformer_forward.15} parent=55 // pred_check
        %p677 = pneg %p194
      $region58: #{transformer_forward.15} parent=55 // pred_check_branch
        %679 = sbr.rel (%p677) target = $region60
      $region59: #{transformer_forward.15} parent=55 // pred_region
        %p680 = scmp.lt.s32.totalorder %s19, 1
        %s681 = scalar_select %p680, %s19, 1
        %s682 = smul.addr %s681, 8
        %s683 = scalar_lea.vmem %s7, %s682
      $region60: #{transformer_forward.15} parent=55 // pred_fallthru
        _
    $region56: #{transformer_forward.15} parent=5 // pred_fallthru
      _
  $region6: #{transformer_forward.15} parent=0 // loop_footer
    %s17 = sadd.s32 1, %s13
  $region7: #{transformer_forward.15} parent=0 // loop_footer_branch
    %12 = sbr.rel target = $region3
  $region8: #{transformer_forward.15} parent=0 // loop_exit
    _

// kernel: transformer_forward.16
$region0: #{transformer_forward.16}
  #allocation0 [shape = 'u32[]', space=smem, size = 0x4, offset = 0x4, fixed_abs, tag = 'smem constant byte address 0x4 - core index']
  #allocation1 [shape = 'u32[72,128]{1,0:T(1,128)}', space=vmem, size = 0x9000, scoped, tag = 'internal scratch']
  %s0 = inlined_call_operand.vmem [shape: f32[2,8,32], index: 0, kind: input, shape index: {}]
  %s1 = inlined_call_operand.vmem [shape: f32[2,8,32], index: 1, kind: input, shape index: {}]
  %s2 = inlined_call_operand.vmem [shape: f32[32,32], index: 2, kind: input, shape index: {}]
  %s3 = inlined_call_operand.vmem [shape: f32[1,32], index: 3, kind: input, shape index: {}]
  %s4 = inlined_call_operand.vmem [shape: f32[32,64], index: 4, kind: input, shape index: {}]
  %s5 = inlined_call_operand.vmem [shape: f32[1,64], index: 5, kind: input, shape index: {}]
  %s6 = inlined_call_operand.vmem [shape: f32[32,32], index: 6, kind: input, shape index: {}]
  %s7 = inlined_call_operand.vmem [shape: f32[1,32], index: 7, kind: input, shape index: {}]
  %s8 = inlined_call_operand.vmem [shape: f32[1,32], index: 8, kind: input, shape index: {}]
  %s9 = inlined_call_operand.hbm [shape: f32[1,32], index: 9, kind: input, shape index: {}]
  %s10 = inlined_call_operand.vmem [shape: f32[2,8,32], index: 10, kind: output, shape index: {}]
  %s11 = sld [smem:[#allocation0]]
  $region77: #{transformer_forward.16} parent=0
    _
  %s13 = ssub.s32 1, %s11
  %s14 = scalar_select 0, %s13, %s11
  $region1: #{transformer_forward.16} parent=0
    #allocation2 [shape = 'u8[512]{0}', space=vmem, size = 0x400, scoped, tag = 'input window, operand 9, single buffered']
    #allocation3 [shape = 's32[2]{0}', space=sflag, size = 0x8, scoped, tag = 'scoped memory for transformer_forward.16']
    %15 = vsyncpa [#allocation3], 0
    loop: start=0, step=1, limit=4
    $region2: #{transformer_forward.16} parent=1 // loop_pre_header
      _
    $region3: #{transformer_forward.16} parent=1 // loop_header
      %s17 = sphi 0, %s21
      %p18 = scmp.ge.s32.totalorder %s17, 4
      %s27 = sphi 0, %s29
      %s30 = sphi 0, %s27
      %s31 = sphi 0, %s30
      %s47 = sphi 0, %s31
      %s53 = sphi 0, %s55
      %s56 = sphi 0, %s53
      %s57 = sphi 0, %s56
      %s73 = sphi 0, %s57
      %s77 = sphi 0, %s77
      %s79 = sphi 0, %s77
      %s80 = sphi 0, %s79
      %s94 = sphi 0, %s80
      %s98 = sphi 0, %s98
      %s100 = sphi 0, %s98
      %s101 = sphi 0, %s100
      %s115 = sphi 0, %s101
      %s119 = sphi 0, %s119
      %s121 = sphi 0, %s119
      %s122 = sphi 0, %s121
      %s136 = sphi 0, %s122
      %s140 = sphi 0, %s140
      %s142 = sphi 0, %s140
      %s143 = sphi 0, %s142
      %s157 = sphi 0, %s143
      %s161 = sphi 0, %s161
      %s163 = sphi 0, %s161
      %s164 = sphi 0, %s163
      %s178 = sphi 0, %s164
      %s182 = sphi 0, %s182
      %s184 = sphi 0, %s182
      %s185 = sphi 0, %s184
      %s199 = sphi 0, %s185
      %s203 = sphi 0, %s203
      %s205 = sphi 0, %s203
      %s206 = sphi 0, %s205
      %s220 = sphi 0, %s206
      %s224 = sphi 0, %s224
      %s226 = sphi 0, %s224
      %s227 = sphi 0, %s226
      %s241 = sphi 0, %s227
      %s247 = sphi 0, %s249
      %s250 = sphi 0, %s247
      %s251 = sphi 0, %s250
      %s267 = sphi 0, %s251
    $region4: #{transformer_forward.16} parent=1 // loop_header_branch
      %20 = sbr.rel (%p18) target = $region8
    $region5: #{transformer_forward.16} parent=1 // loop_body
      %s22 = ssub.s32 %s17, 1
      %s23 = ssub.s32 %s17, 2
      %s24 = sadd.s32 %s17, 1
      %s25 = ssub.s32 %s17, %s24
      %p26 = scmp.eq.s32.totalorder %s25, 0
      %s28 = sadd.s32 %s27, 1
      %s29 = scalar_select %p26, %s27, %s28
      %p32 = pneg %p26
      %p33 = scmp.eq.s32.totalorder %s17, 1
      %p34 = por %p32, %p33
      %p35 = scmp.ne.s32.totalorder %s27, %s30
      %p36 = scmp.eq.s32.totalorder %s17, 0
      %p37 = por %p35, %p36
      %p38 = scmp.ne.s32.totalorder %s27, %s30
      %p39 = scmp.eq.s32.totalorder %s22, 1
      %p40 = por %p38, %p39
      %p41 = scmp.ne.s32.totalorder %s30, %s31
      %p42 = scmp.eq.s32.totalorder %s22, 0
      %p43 = por %p41, %p42
      %p44 = scmp.ne.s32.totalorder %s30, %s31
      %p45 = scmp.eq.s32.totalorder %s23, 1
      %p46 = por %p44, %p45
      %p48 = scmp.ne.s32.totalorder %s31, %s47
      %p49 = scmp.eq.s32.totalorder %s23, 0
      %p50 = por %p48, %p49
      %s51 = ssub.s32 %s17, %s24
      %p52 = scmp.eq.s32.totalorder %s51, 0
      %s54 = sadd.s32 %s53, 1
      %s55 = scalar_select %p52, %s53, %s54
      %p58 = pneg %p52
      %p59 = scmp.eq.s32.totalorder %s17, 1
      %p60 = por %p58, %p59
      %p61 = scmp.ne.s32.totalorder %s53, %s56
      %p62 = scmp.eq.s32.totalorder %s17, 0
      %p63 = por %p61, %p62
      %p64 = scmp.ne.s32.totalorder %s53, %s56
      %p65 = scmp.eq.s32.totalorder %s22, 1
      %p66 = por %p64, %p65
      %p67 = scmp.ne.s32.totalorder %s56, %s57
      %p68 = scmp.eq.s32.totalorder %s22, 0
      %p69 = por %p67, %p68
      %p70 = scmp.ne.s32.totalorder %s56, %s57
      %p71 = scmp.eq.s32.totalorder %s23, 1
      %p72 = por %p70, %p71
      %p74 = scmp.ne.s32.totalorder %s57, %s73
      %p75 = scmp.eq.s32.totalorder %s23, 0
      %p76 = por %p74, %p75
      %s78 = sadd.s32 %s77, 1
      %p81 = scmp.eq.s32.totalorder %s17, 1
      %p82 = scmp.ne.s32.totalorder %s77, %s79
      %p83 = scmp.eq.s32.totalorder %s17, 0
      %p84 = por %p82, %p83
      %p85 = scmp.ne.s32.totalorder %s77, %s79
      %p86 = scmp.eq.s32.totalorder %s22, 1
      %p87 = por %p85, %p86
      %p88 = scmp.ne.s32.totalorder %s79, %s80
      %p89 = scmp.eq.s32.totalorder %s22, 0
      %p90 = por %p88, %p89
      %p91 = scmp.ne.s32.totalorder %s79, %s80
      %p92 = scmp.eq.s32.totalorder %s23, 1
      %p93 = por %p91, %p92
      %p95 = scmp.ne.s32.totalorder %s80, %s94
      %p96 = scmp.eq.s32.totalorder %s23, 0
      %p97 = por %p95, %p96
      %s99 = sadd.s32 %s98, 1
      %p102 = scmp.eq.s32.totalorder %s17, 1
      %p103 = scmp.ne.s32.totalorder %s98, %s100
      %p104 = scmp.eq.s32.totalorder %s17, 0
      %p105 = por %p103, %p104
      %p106 = scmp.ne.s32.totalorder %s98, %s100
      %p107 = scmp.eq.s32.totalorder %s22, 1
      %p108 = por %p106, %p107
      %p109 = scmp.ne.s32.totalorder %s100, %s101
      %p110 = scmp.eq.s32.totalorder %s22, 0
      %p111 = por %p109, %p110
      %p112 = scmp.ne.s32.totalorder %s100, %s101
      %p113 = scmp.eq.s32.totalorder %s23, 1
      %p114 = por %p112, %p113
      %p116 = scmp.ne.s32.totalorder %s101, %s115
      %p117 = scmp.eq.s32.totalorder %s23, 0
      %p118 = por %p116, %p117
      %s120 = sadd.s32 %s119, 1
      %p123 = scmp.eq.s32.totalorder %s17, 1
      %p124 = scmp.ne.s32.totalorder %s119, %s121
      %p125 = scmp.eq.s32.totalorder %s17, 0
      %p126 = por %p124, %p125
      %p127 = scmp.ne.s32.totalorder %s119, %s121
      %p128 = scmp.eq.s32.totalorder %s22, 1
      %p129 = por %p127, %p128
      %p130 = scmp.ne.s32.totalorder %s121, %s122
      %p131 = scmp.eq.s32.totalorder %s22, 0
      %p132 = por %p130, %p131
      %p133 = scmp.ne.s32.totalorder %s121, %s122
      %p134 = scmp.eq.s32.totalorder %s23, 1
      %p135 = por %p133, %p134
      %p137 = scmp.ne.s32.totalorder %s122, %s136
      %p138 = scmp.eq.s32.totalorder %s23, 0
      %p139 = por %p137, %p138
      %s141 = sadd.s32 %s140, 1
      %p144 = scmp.eq.s32.totalorder %s17, 1
      %p145 = scmp.ne.s32.totalorder %s140, %s142
      %p146 = scmp.eq.s32.totalorder %s17, 0
      %p147 = por %p145, %p146
      %p148 = scmp.ne.s32.totalorder %s140, %s142
      %p149 = scmp.eq.s32.totalorder %s22, 1
      %p150 = por %p148, %p149
      %p151 = scmp.ne.s32.totalorder %s142, %s143
      %p152 = scmp.eq.s32.totalorder %s22, 0
      %p153 = por %p151, %p152
      %p154 = scmp.ne.s32.totalorder %s142, %s143
      %p155 = scmp.eq.s32.totalorder %s23, 1
      %p156 = por %p154, %p155
      %p158 = scmp.ne.s32.totalorder %s143, %s157
      %p159 = scmp.eq.s32.totalorder %s23, 0
      %p160 = por %p158, %p159
      %s162 = sadd.s32 %s161, 1
      %p165 = scmp.eq.s32.totalorder %s17, 1
      %p166 = scmp.ne.s32.totalorder %s161, %s163
      %p167 = scmp.eq.s32.totalorder %s17, 0
      %p168 = por %p166, %p167
      %p169 = scmp.ne.s32.totalorder %s161, %s163
      %p170 = scmp.eq.s32.totalorder %s22, 1
      %p171 = por %p169, %p170
      %p172 = scmp.ne.s32.totalorder %s163, %s164
      %p173 = scmp.eq.s32.totalorder %s22, 0
      %p174 = por %p172, %p173
      %p175 = scmp.ne.s32.totalorder %s163, %s164
      %p176 = scmp.eq.s32.totalorder %s23, 1
      %p177 = por %p175, %p176
      %p179 = scmp.ne.s32.totalorder %s164, %s178
      %p180 = scmp.eq.s32.totalorder %s23, 0
      %p181 = por %p179, %p180
      %s183 = sadd.s32 %s182, 1
      %p186 = scmp.eq.s32.totalorder %s17, 1
      %p187 = scmp.ne.s32.totalorder %s182, %s184
      %p188 = scmp.eq.s32.totalorder %s17, 0
      %p189 = por %p187, %p188
      %p190 = scmp.ne.s32.totalorder %s182, %s184
      %p191 = scmp.eq.s32.totalorder %s22, 1
      %p192 = por %p190, %p191
      %p193 = scmp.ne.s32.totalorder %s184, %s185
      %p194 = scmp.eq.s32.totalorder %s22, 0
      %p195 = por %p193, %p194
      %p196 = scmp.ne.s32.totalorder %s184, %s185
      %p197 = scmp.eq.s32.totalorder %s23, 1
      %p198 = por %p196, %p197
      %p200 = scmp.ne.s32.totalorder %s185, %s199
      %p201 = scmp.eq.s32.totalorder %s23, 0
      %p202 = por %p200, %p201
      %s204 = sadd.s32 %s203, 1
      %p207 = scmp.eq.s32.totalorder %s17, 1
      %p208 = scmp.ne.s32.totalorder %s203, %s205
      %p209 = scmp.eq.s32.totalorder %s17, 0
      %p210 = por %p208, %p209
      %p211 = scmp.ne.s32.totalorder %s203, %s205
      %p212 = scmp.eq.s32.totalorder %s22, 1
      %p213 = por %p211, %p212
      %p214 = scmp.ne.s32.totalorder %s205, %s206
      %p215 = scmp.eq.s32.totalorder %s22, 0
      %p216 = por %p214, %p215
      %p217 = scmp.ne.s32.totalorder %s205, %s206
      %p218 = scmp.eq.s32.totalorder %s23, 1
      %p219 = por %p217, %p218
      %p221 = scmp.ne.s32.totalorder %s206, %s220
      %p222 = scmp.eq.s32.totalorder %s23, 0
      %p223 = por %p221, %p222
      %s225 = sadd.s32 %s224, 1
      %p228 = scmp.eq.s32.totalorder %s17, 1
      %p229 = scmp.ne.s32.totalorder %s224, %s226
      %p230 = scmp.eq.s32.totalorder %s17, 0
      %p231 = por %p229, %p230
      %p232 = scmp.ne.s32.totalorder %s224, %s226
      %p233 = scmp.eq.s32.totalorder %s22, 1
      %p234 = por %p232, %p233
      %p235 = scmp.ne.s32.totalorder %s226, %s227
      %p236 = scmp.eq.s32.totalorder %s22, 0
      %p237 = por %p235, %p236
      %p238 = scmp.ne.s32.totalorder %s226, %s227
      %p239 = scmp.eq.s32.totalorder %s23, 1
      %p240 = por %p238, %p239
      %p242 = scmp.ne.s32.totalorder %s227, %s241
      %p243 = scmp.eq.s32.totalorder %s23, 0
      %p244 = por %p242, %p243
      %s245 = ssub.s32 %s17, %s24
      %p246 = scmp.eq.s32.totalorder %s245, 0
      %s248 = sadd.s32 %s247, 1
      %s249 = scalar_select %p246, %s247, %s248
      %p252 = pneg %p246
      %p253 = scmp.eq.s32.totalorder %s17, 1
      %p254 = por %p252, %p253
      %p255 = scmp.ne.s32.totalorder %s247, %s250
      %p256 = scmp.eq.s32.totalorder %s17, 0
      %p257 = por %p255, %p256
      %p258 = scmp.ne.s32.totalorder %s247, %s250
      %p259 = scmp.eq.s32.totalorder %s22, 1
      %p260 = por %p258, %p259
      %p261 = scmp.ne.s32.totalorder %s250, %s251
      %p262 = scmp.eq.s32.totalorder %s22, 0
      %p263 = por %p261, %p262
      %p264 = scmp.ne.s32.totalorder %s250, %s251
      %p265 = scmp.eq.s32.totalorder %s23, 1
      %p266 = por %p264, %p265
      %p268 = scmp.ne.s32.totalorder %s251, %s267
      %p269 = scmp.eq.s32.totalorder %s23, 0
      %p270 = por %p268, %p269
      %p271 = scmp.le.s32.totalorder 1, %s17
      %p272 = scmp.lt.s32.totalorder %s17, 3
      %p273 = pnand %p271, %p272
      %p274 = pneg %p273
      // Predicated region
      $region9: #{transformer_forward.16} parent=5 // pred_check
        _
      $region10: #{transformer_forward.16} parent=5 // pred_check_branch
        %276 = sbr.rel (%p273) target = $region12
      $region11: #{transformer_forward.16} parent=5 // pred_region
        %s277 = ssub.s32 %s17, 1
        // Predicated region
        $region13: #{transformer_forward.16} parent=11 // pred_check
          %p278 = pneg %p90
        $region14: #{transformer_forward.16} parent=11 // pred_check_branch
          %280 = sbr.rel (%p278) target = $region16
        $region15: #{transformer_forward.16} parent=11 // pred_region
          _
        $region16: #{transformer_forward.16} parent=11 // pred_fallthru
          _
        // Predicated region
        $region17: #{transformer_forward.16} parent=11 // pred_check
          %p281 = pneg %p111
        $region18: #{transformer_forward.16} parent=11 // pred_check_branch
          %283 = sbr.rel (%p281) target = $region20
        $region19: #{transformer_forward.16} parent=11 // pred_region
          _
        $region20: #{transformer_forward.16} parent=11 // pred_fallthru
          _
        // Predicated region
        $region21: #{transformer_forward.16} parent=11 // pred_check
          %p284 = pneg %p132
        $region22: #{transformer_forward.16} parent=11 // pred_check_branch
          %286 = sbr.rel (%p284) target = $region24
        $region23: #{transformer_forward.16} parent=11 // pred_region
          _
        $region24: #{transformer_forward.16} parent=11 // pred_fallthru
          _
        // Predicated region
        $region25: #{transformer_forward.16} parent=11 // pred_check
          %p287 = pneg %p153
        $region26: #{transformer_forward.16} parent=11 // pred_check_branch
          %289 = sbr.rel (%p287) target = $region28
        $region27: #{transformer_forward.16} parent=11 // pred_region
          _
        $region28: #{transformer_forward.16} parent=11 // pred_fallthru
          _
        // Predicated region
        $region29: #{transformer_forward.16} parent=11 // pred_check
          %p290 = pneg %p174
        $region30: #{transformer_forward.16} parent=11 // pred_check_branch
          %292 = sbr.rel (%p290) target = $region32
        $region31: #{transformer_forward.16} parent=11 // pred_region
          _
        $region32: #{transformer_forward.16} parent=11 // pred_fallthru
          _
        // Predicated region
        $region33: #{transformer_forward.16} parent=11 // pred_check
          %p293 = pneg %p195
        $region34: #{transformer_forward.16} parent=11 // pred_check_branch
          %295 = sbr.rel (%p293) target = $region36
        $region35: #{transformer_forward.16} parent=11 // pred_region
          _
        $region36: #{transformer_forward.16} parent=11 // pred_fallthru
          _
        // Predicated region
        $region37: #{transformer_forward.16} parent=11 // pred_check
          %p296 = pneg %p216
        $region38: #{transformer_forward.16} parent=11 // pred_check_branch
          %298 = sbr.rel (%p296) target = $region40
        $region39: #{transformer_forward.16} parent=11 // pred_region
          _
        $region40: #{transformer_forward.16} parent=11 // pred_fallthru
          _
        // Predicated region
        $region41: #{transformer_forward.16} parent=11 // pred_check
          %p299 = pneg %p237
        $region42: #{transformer_forward.16} parent=11 // pred_check_branch
          %301 = sbr.rel (%p299) target = $region44
        $region43: #{transformer_forward.16} parent=11 // pred_region
          %303 = vsyncadd [#allocation3], 0
          %s305 = sshll.u32 %s9, 4
          %s306 = int_to_ptr.hbm [resolvable:$true] %s305
          %s307 = sshll.u32 [#allocation2], 4
          %s308 = int_to_ptr.vmem [resolvable:$true] %s307
          %310 = dma.hbm_to_vmem [thread:$0]  %s306, 16, %s308, [#allocation3]
        $region44: #{transformer_forward.16} parent=11 // pred_fallthru
          _
      $region12: #{transformer_forward.16} parent=5 // pred_fallthru
        _
      %p311 = scmp.lt.s32.totalorder %s17, 2
      // Predicated region
      $region45: #{transformer_forward.16} parent=5 // pred_check
        %p312 = pneg %p311
      $region46: #{transformer_forward.16} parent=5 // pred_check_branch
        %314 = sbr.rel (%p312) target = $region48
      $region47: #{transformer_forward.16} parent=5 // pred_region
        // Predicated region
        $region49: #{transformer_forward.16} parent=47 // pred_check
          %p315 = pneg %p37
        $region50: #{transformer_forward.16} parent=47 // pred_check_branch
          %317 = sbr.rel (%p315) target = $region52
        $region51: #{transformer_forward.16} parent=47 // pred_region
          %p318 = scmp.lt.s32.totalorder %s17, 1
          %s319 = scalar_select %p318, %s17, 1
          %s320 = smul.addr %s319, 8
          %s321 = scalar_lea.vmem %s0, %s320
        $region52: #{transformer_forward.16} parent=47 // pred_fallthru
          _
        // Predicated region
        $region53: #{transformer_forward.16} parent=47 // pred_check
          %p322 = pneg %p63
        $region54: #{transformer_forward.16} parent=47 // pred_check_branch
          %324 = sbr.rel (%p322) target = $region56
        $region55: #{transformer_forward.16} parent=47 // pred_region
          %p325 = scmp.lt.s32.totalorder %s17, 1
          %s326 = scalar_select %p325, %s17, 1
          %s327 = smul.addr %s326, 8
          %s328 = scalar_lea.vmem %s1, %s327
        $region56: #{transformer_forward.16} parent=47 // pred_fallthru
          _
      $region48: #{transformer_forward.16} parent=5 // pred_fallthru
        _
      %p329 = scmp.le.s32.totalorder 1, %s17
      %p330 = scmp.lt.s32.totalorder %s17, 3
      %p331 = pnand %p329, %p330
      %p332 = pneg %p331
      // Predicated region
      $region57: #{transformer_forward.16} parent=5 // pred_check
        _
      $region58: #{transformer_forward.16} parent=5 // pred_check_branch
        %334 = sbr.rel (%p331) target = $region60
      $region59: #{transformer_forward.16} parent=5 // pred_region
        %s335 = ssub.s32 %s17, 1
        // Predicated region
        $region61: #{transformer_forward.16} parent=59 // pred_check
          %p336 = pneg %p237
        $region62: #{transformer_forward.16} parent=59 // pred_check_branch
          %338 = sbr.rel (%p336) target = $region64
        $region63: #{transformer_forward.16} parent=59 // pred_region
          %340 = dma.done [#allocation3], 16
        $region64: #{transformer_forward.16} parent=59 // pred_fallthru
          _
        %p341 = scmp.lt.s32.totalorder %s22, 1
        %s342 = scalar_select %p341, %s22, 1
        %s343 = smul.addr %s342, 8
        %s344 = scalar_lea.vmem %s0, %s343
        %p345 = pneg %p43
        %p346 = pneg %p40
        %p347 = scmp.lt.s32.totalorder %s22, 1
        %s348 = scalar_select %p347, %s22, 1
        %s349 = smul.addr %s348, 8
        %s350 = scalar_lea.vmem %s1, %s349
        %p351 = pneg %p69
        %p352 = pneg %p66
        %p353 = pneg %p90
        %p354 = pneg %p87
        %p355 = pneg %p111
        %p356 = pneg %p108
        %p357 = pneg %p132
        %p358 = pneg %p129
        %p359 = pneg %p153
        %p360 = pneg %p150
        %p361 = pneg %p174
        %p362 = pneg %p171
        %p363 = pneg %p195
        %p364 = pneg %p192
        %p365 = pneg %p216
        %p366 = pneg %p213
        %p367 = pneg %p237
        %p368 = pneg %p234
        %p369 = pneg %p263
        %p370 = pneg %p260
        %p371 = scmp.lt.s32.totalorder %s22, 1
        %s372 = scalar_select %p371, %s22, 1
        %s373 = smul.addr %s372, 8
        %s374 = scalar_lea.vmem %s10, %s373
        %p375 = scmp.lt.s32.totalorder %s22, 1
        %s376 = scalar_select %p375, %s22, 1
        %s377 = smul.addr %s376, 8
        %s378 = scalar_lea.vmem %s0, %s377
        %p379 = scmp.lt.s32.totalorder %s22, 1
        %s380 = scalar_select %p379, %s22, 1
        %s381 = smul.addr %s380, 8
        %s382 = scalar_lea.vmem %s1, %s381
        %p383 = scmp.lt.s32.totalorder %s22, 1
        %s384 = scalar_select %p383, %s22, 1
        %s385 = smul.addr %s384, 8
        %s386 = scalar_lea.vmem %s10, %s385
        %v387 = vld [vmem:[%s378] sm:$0xff]
        %v388 = vld [vmem:[%s382] sm:$0xff]
        %v389 = vld [vmem:[%s2] sm:$0xff]
        %v390 = vld [vmem:[%s2 + $0x8] sm:$0xff]
        %v391 = vld [vmem:[%s2 + $0x10] sm:$0xff]
        %v392 = vld [vmem:[%s2 + $0x18] sm:$0xff]
        %v393 = vld [vmem:[%s3] sm:$0x1]
        %v395 = vperm.slane %v393, 0
        %vm397 = vcmask 261120
        %v399 = vsel %vm397, %v387, 0
        %401 = vmatpush.msra.mxu0 0.0
        %402 = vmatpush.msra.mxu0 0.0
        %403 = vmatpush.msra.mxu0 0.0
        %404 = vmatpush.msra.mxu0 0.0
        %405 = vmatpush.msra.mxu0 0.0
        %406 = vmatpush.msra.mxu0 0.0
        %407 = vmatpush.msra.mxu0 0.0
        %408 = vmatpush.msra.mxu0 0.0
        %409 = vmatpush.msra.mxu0 0.0
        %410 = vmatpush.msra.mxu0 0.0
        %411 = vmatpush.msra.mxu0 0.0
        %412 = vmatpush.msra.mxu0 0.0
        %413 = vmatpush.msra.mxu0 %v392
        %414 = vmatpush.msra.mxu0 %v391
        %415 = vmatpush.msra.mxu0 %v390
        %416 = vmatpush.msra.mxu0 %v389
        %417 = vmatmul.f32.gmra.mxu0 %v399
        %v418 = vpop.f32.mrf.mxu0
        %v419 = vadd.f32 %v395, %v418
        %420 = vdwg.mxu0
        %v421 = vld [vmem:[%s4] sm:$0xff]
        %v422 = vld [vmem:[%s4 + $0x8] sm:$0xff]
        %v423 = vld [vmem:[%s4 + $0x10] sm:$0xff]
        %v424 = vld [vmem:[%s4 + $0x18] sm:$0xff]
        %v425 = vld [vmem:[%s5] sm:$0x1]
        %v427 = vperm.slane %v425, 0
        %v430 = vsel %vm397, %v388, 0
        %432 = vmatpush.msra.mxu0 0.0
        %433 = vmatpush.msra.mxu0 0.0
        %434 = vmatpush.msra.mxu0 0.0
        %435 = vmatpush.msra.mxu0 0.0
        %436 = vmatpush.msra.mxu0 0.0
        %437 = vmatpush.msra.mxu0 0.0
        %438 = vmatpush.msra.mxu0 0.0
        %439 = vmatpush.msra.mxu0 0.0
        %440 = vmatpush.msra.mxu0 0.0
        %441 = vmatpush.msra.mxu0 0.0
        %442 = vmatpush.msra.mxu0 0.0
        %443 = vmatpush.msra.mxu0 0.0
        %444 = vmatpush.msra.mxu0 %v424
        %445 = vmatpush.msra.mxu0 %v423
        %446 = vmatpush.msra.mxu0 %v422
        %447 = vmatpush.msra.mxu0 %v421
        %448 = vmatmul.f32.gmra.mxu0 %v430
        %v449 = vpop.f32.mrf.mxu0
        %v450 = vadd.f32 %v427, %v449
        %451 = vdwg.mxu0
        %vm452 = vcmask 64512
        %v454 = vsel %vm452, %v419, 0
        %v457 = vsel %vm452, %v450, 0
        %459 = vmatpush.xpose.msra.mxu0 0.0
        %460 = vmatpush.xpose.msra.mxu0 0.0
        %461 = vmatpush.xpose.msra.mxu0 0.0
        %462 = vmatpush.xpose.msra.mxu0 0.0
        %463 = vmatpush.xpose.msra.mxu0 0.0
        %464 = vmatpush.xpose.msra.mxu0 0.0
        %465 = vmatpush.xpose.msra.mxu0 0.0
        %466 = vmatpush.xpose.msra.mxu0 0.0
        %467 = vmatpush.xpose.msra.mxu0 0.0
        %468 = vmatpush.xpose.msra.mxu0 0.0
        %469 = vmatpush.xpose.msra.mxu0 0.0
        %470 = vmatpush.xpose.msra.mxu0 0.0
        %471 = vmatpush.xpose.msra.mxu0 0.0
        %472 = vmatpush.xpose.msra.mxu0 0.0
        %473 = vmatpush.xpose.msra.mxu0 0.0
        %474 = vmatpush.xpose.msra.mxu0 %v457
        %475 = vmatmul.f32.gmra.mxu0 %v454
        %v476 = vpop.f32.mrf.mxu0
        %v477 = vadd.f32 0.0, %v476
        %478 = vdwg.mxu0
        %v479 = vsel %vm452, %v477, -inf
        %480 = vmax.xlane.f32.xlu0 %v479
        %v481 = vpop.xlane.xlu0 %480
        %v482 = vsub.f32 %v477, %v481
        %v483 = vmul.f32 %v482, 1.442695
        %v484 = vpow.pop %v483
        %v485 = vsel %vm452, %v484, 0.0
        %486 = vadd.xlane.f32.xlu0 %v485
        %v487 = vpop.xlane.xlu0 %486
        %v488 = vrcp.pop %v487
        %v489 = vmul.f32 %v484, %v488
        %490 = vrot.lane.b32.xlu0 %v450, 96
        %v491 = vpop.permute.xlu0 %490
        %v494 = vsel %vm452, %v489, 0
        %496 = vmatpush.msra.mxu0 0.0
        %497 = vmatpush.msra.mxu0 0.0
        %498 = vmatpush.msra.mxu0 0.0
        %499 = vmatpush.msra.mxu0 0.0
        %500 = vmatpush.msra.mxu0 0.0
        %501 = vmatpush.msra.mxu0 0.0
        %502 = vmatpush.msra.mxu0 0.0
        %503 = vmatpush.msra.mxu0 0.0
        %504 = vmatpush.msra.mxu0 0.0
        %505 = vmatpush.msra.mxu0 0.0
        %506 = vmatpush.msra.mxu0 0.0
        %507 = vmatpush.msra.mxu0 0.0
        %508 = vmatpush.msra.mxu0 0.0
        %509 = vmatpush.msra.mxu0 0.0
        %510 = vmatpush.msra.mxu0 0.0
        %511 = vmatpush.msra.mxu0 %v491
        %512 = vmatmul.f32.gmra.mxu0 %v494
        %v513 = vpop.f32.mrf.mxu0
        %v514 = vadd.f32 0.0, %v513
        %515 = vdwg.mxu0
        %516 = vrot.lane.b32.xlu0 %v419, 120
        %v517 = vpop.permute.xlu0 %516
        %518 = vrot.lane.b32.xlu0 %v450, 120
        %v519 = vpop.permute.xlu0 %518
        %v520 = vsel %vm452, %v517, 0
        %v522 = vsel %vm452, %v519, 0
        %524 = vmatpush.xpose.msra.mxu0 0.0
        %525 = vmatpush.xpose.msra.mxu0 0.0
        %526 = vmatpush.xpose.msra.mxu0 0.0
        %527 = vmatpush.xpose.msra.mxu0 0.0
        %528 = vmatpush.xpose.msra.mxu0 0.0
        %529 = vmatpush.xpose.msra.mxu0 0.0
        %530 = vmatpush.xpose.msra.mxu0 0.0
        %531 = vmatpush.xpose.msra.mxu0 0.0
        %532 = vmatpush.xpose.msra.mxu0 0.0
        %533 = vmatpush.xpose.msra.mxu0 0.0
        %534 = vmatpush.xpose.msra.mxu0 0.0
        %535 = vmatpush.xpose.msra.mxu0 0.0
        %536 = vmatpush.xpose.msra.mxu0 0.0
        %537 = vmatpush.xpose.msra.mxu0 0.0
        %538 = vmatpush.xpose.msra.mxu0 0.0
        %539 = vmatpush.xpose.msra.mxu0 %v522
        %540 = vmatmul.f32.gmra.mxu0 %v520
        %v541 = vpop.f32.mrf.mxu0
        %v542 = vadd.f32 0.0, %v541
        %543 = vdwg.mxu0
        %v544 = vsel %vm452, %v542, -inf
        %545 = vmax.xlane.f32.xlu0 %v544
        %v546 = vpop.xlane.xlu0 %545
        %v547 = vsub.f32 %v542, %v546
        %v548 = vmul.f32 %v547, 1.442695
        %v549 = vpow.pop %v548
        %v550 = vsel %vm452, %v549, 0.0
        %551 = vadd.xlane.f32.xlu0 %v550
        %v552 = vpop.xlane.xlu0 %551
        %v553 = vrcp.pop %v552
        %v554 = vmul.f32 %v549, %v553
        %555 = vrot.lane.b32.xlu0 %v450, 88
        %v556 = vpop.permute.xlu0 %555
        %v559 = vsel %vm452, %v554, 0
        %561 = vmatpush.msra.mxu0 0.0
        %562 = vmatpush.msra.mxu0 0.0
        %563 = vmatpush.msra.mxu0 0.0
        %564 = vmatpush.msra.mxu0 0.0
        %565 = vmatpush.msra.mxu0 0.0
        %566 = vmatpush.msra.mxu0 0.0
        %567 = vmatpush.msra.mxu0 0.0
        %568 = vmatpush.msra.mxu0 0.0
        %569 = vmatpush.msra.mxu0 0.0
        %570 = vmatpush.msra.mxu0 0.0
        %571 = vmatpush.msra.mxu0 0.0
        %572 = vmatpush.msra.mxu0 0.0
        %573 = vmatpush.msra.mxu0 0.0
        %574 = vmatpush.msra.mxu0 0.0
        %575 = vmatpush.msra.mxu0 0.0
        %576 = vmatpush.msra.mxu0 %v556
        %577 = vmatmul.f32.gmra.mxu0 %v559
        %v578 = vpop.f32.mrf.mxu0
        %v579 = vadd.f32 0.0, %v578
        %580 = vdwg.mxu0
        %581 = vrot.lane.b32.xlu0 %v419, 112
        %v582 = vpop.permute.xlu0 %581
        %583 = vrot.lane.b32.xlu0 %v450, 112
        %v584 = vpop.permute.xlu0 %583
        %v585 = vsel %vm452, %v582, 0
        %v587 = vsel %vm452, %v584, 0
        %589 = vmatpush.xpose.msra.mxu0 0.0
        %590 = vmatpush.xpose.msra.mxu0 0.0
        %591 = vmatpush.xpose.msra.mxu0 0.0
        %592 = vmatpush.xpose.msra.mxu0 0.0
        %593 = vmatpush.xpose.msra.mxu0 0.0
        %594 = vmatpush.xpose.msra.mxu0 0.0
        %595 = vmatpush.xpose.msra.mxu0 0.0
        %596 = vmatpush.xpose.msra.mxu0 0.0
        %597 = vmatpush.xpose.msra.mxu0 0.0
        %598 = vmatpush.xpose.msra.mxu0 0.0
        %599 = vmatpush.xpose.msra.mxu0 0.0
        %600 = vmatpush.xpose.msra.mxu0 0.0
        %601 = vmatpush.xpose.msra.mxu0 0.0
        %602 = vmatpush.xpose.msra.mxu0 0.0
        %603 = vmatpush.xpose.msra.mxu0 0.0
        %604 = vmatpush.xpose.msra.mxu0 %v587
        %605 = vmatmul.f32.gmra.mxu0 %v585
        %v606 = vpop.f32.mrf.mxu0
        %v607 = vadd.f32 0.0, %v606
        %608 = vdwg.mxu0
        %v609 = vsel %vm452, %v607, -inf
        %610 = vmax.xlane.f32.xlu0 %v609
        %v611 = vpop.xlane.xlu0 %610
        %v612 = vsub.f32 %v607, %v611
        %v613 = vmul.f32 %v612, 1.442695
        %v614 = vpow.pop %v613
        %v615 = vsel %vm452, %v614, 0.0
        %616 = vadd.xlane.f32.xlu0 %v615
        %v617 = vpop.xlane.xlu0 %616
        %v618 = vrcp.pop %v617
        %v619 = vmul.f32 %v614, %v618
        %620 = vrot.lane.b32.xlu0 %v450, 80
        %v621 = vpop.permute.xlu0 %620
        %v624 = vsel %vm452, %v619, 0
        %626 = vmatpush.msra.mxu0 0.0
        %627 = vmatpush.msra.mxu0 0.0
        %628 = vmatpush.msra.mxu0 0.0
        %629 = vmatpush.msra.mxu0 0.0
        %630 = vmatpush.msra.mxu0 0.0
        %631 = vmatpush.msra.mxu0 0.0
        %632 = vmatpush.msra.mxu0 0.0
        %633 = vmatpush.msra.mxu0 0.0
        %634 = vmatpush.msra.mxu0 0.0
        %635 = vmatpush.msra.mxu0 0.0
        %636 = vmatpush.msra.mxu0 0.0
        %637 = vmatpush.msra.mxu0 0.0
        %638 = vmatpush.msra.mxu0 0.0
        %639 = vmatpush.msra.mxu0 0.0
        %640 = vmatpush.msra.mxu0 0.0
        %641 = vmatpush.msra.mxu0 %v621
        %642 = vmatmul.f32.gmra.mxu0 %v624
        %v643 = vpop.f32.mrf.mxu0
        %v644 = vadd.f32 0.0, %v643
        %645 = vdwg.mxu0
        %646 = vrot.lane.b32.xlu0 %v419, 104
        %v647 = vpop.permute.xlu0 %646
        %648 = vrot.lane.b32.xlu0 %v450, 104
        %v649 = vpop.permute.xlu0 %648
        %v650 = vsel %vm452, %v647, 0
        %v652 = vsel %vm452, %v649, 0
        %654 = vmatpush.xpose.msra.mxu0 0.0
        %655 = vmatpush.xpose.msra.mxu0 0.0
        %656 = vmatpush.xpose.msra.mxu0 0.0
        %657 = vmatpush.xpose.msra.mxu0 0.0
        %658 = vmatpush.xpose.msra.mxu0 0.0
        %659 = vmatpush.xpose.msra.mxu0 0.0
        %660 = vmatpush.xpose.msra.mxu0 0.0
        %661 = vmatpush.xpose.msra.mxu0 0.0
        %662 = vmatpush.xpose.msra.mxu0 0.0
        %663 = vmatpush.xpose.msra.mxu0 0.0
        %664 = vmatpush.xpose.msra.mxu0 0.0
        %665 = vmatpush.xpose.msra.mxu0 0.0
        %666 = vmatpush.xpose.msra.mxu0 0.0
        %667 = vmatpush.xpose.msra.mxu0 0.0
        %668 = vmatpush.xpose.msra.mxu0 0.0
        %669 = vmatpush.xpose.msra.mxu0 %v652
        %670 = vmatmul.f32.gmra.mxu0 %v650
        %v671 = vpop.f32.mrf.mxu0
        %v672 = vadd.f32 0.0, %v671
        %673 = vdwg.mxu0
        %v674 = vsel %vm452, %v672, -inf
        %675 = vmax.xlane.f32.xlu0 %v674
        %v676 = vpop.xlane.xlu0 %675
        %v677 = vsub.f32 %v672, %v676
        %v678 = vmul.f32 %v677, 1.442695
        %v679 = vpow.pop %v678
        %v680 = vsel %vm452, %v679, 0.0
        %681 = vadd.xlane.f32.xlu0 %v680
        %v682 = vpop.xlane.xlu0 %681
        %v683 = vrcp.pop %v682
        %v684 = vmul.f32 %v679, %v683
        %685 = vrot.lane.b32.xlu0 %v450, 72
        %v686 = vpop.permute.xlu0 %685
        %v689 = vsel %vm452, %v684, 0
        %691 = vmatpush.msra.mxu0 0.0
        %692 = vmatpush.msra.mxu0 0.0
        %693 = vmatpush.msra.mxu0 0.0
        %694 = vmatpush.msra.mxu0 0.0
        %695 = vmatpush.msra.mxu0 0.0
        %696 = vmatpush.msra.mxu0 0.0
        %697 = vmatpush.msra.mxu0 0.0
        %698 = vmatpush.msra.mxu0 0.0
        %699 = vmatpush.msra.mxu0 0.0
        %700 = vmatpush.msra.mxu0 0.0
        %701 = vmatpush.msra.mxu0 0.0
        %702 = vmatpush.msra.mxu0 0.0
        %703 = vmatpush.msra.mxu0 0.0
        %704 = vmatpush.msra.mxu0 0.0
        %705 = vmatpush.msra.mxu0 0.0
        %706 = vmatpush.msra.mxu0 %v686
        %707 = vmatmul.f32.gmra.mxu0 %v689
        %v708 = vpop.f32.mrf.mxu0
        %v709 = vadd.f32 0.0, %v708
        %710 = vdwg.mxu0
        %712 = vrot.lane.b32.xlu0 %v579, 8
        %v713 = vpop.permute.xlu0 %712
        %716 = vrot.lane.b32.xlu0 %v644, 16
        %v717 = vpop.permute.xlu0 %716
        %720 = vrot.lane.b32.xlu0 %v709, 24
        %v721 = vpop.permute.xlu0 %720
        %v723 = vsel %vm452, %v514, %v713
        %vm724 = vcmask 130048
        %v725 = vsel %vm724, %v723, %v717
        %vm726 = vcmask 195584
        %v727 = vsel %vm726, %v725, %v721
        %v728 = vld [vmem:[%s6] sm:$0xff]
        %v729 = vld [vmem:[%s6 + $0x8] sm:$0xff]
        %v730 = vld [vmem:[%s6 + $0x10] sm:$0xff]
        %v731 = vld [vmem:[%s6 + $0x18] sm:$0xff]
        %v732 = vld [vmem:[%s7] sm:$0x1]
        %v734 = vperm.slane %v732, 0
        %v737 = vsel %vm397, %v727, 0
        %739 = vmatpush.msra.mxu0 0.0
        %740 = vmatpush.msra.mxu0 0.0
        %741 = vmatpush.msra.mxu0 0.0
        %742 = vmatpush.msra.mxu0 0.0
        %743 = vmatpush.msra.mxu0 0.0
        %744 = vmatpush.msra.mxu0 0.0
        %745 = vmatpush.msra.mxu0 0.0
        %746 = vmatpush.msra.mxu0 0.0
        %747 = vmatpush.msra.mxu0 0.0
        %748 = vmatpush.msra.mxu0 0.0
        %749 = vmatpush.msra.mxu0 0.0
        %750 = vmatpush.msra.mxu0 0.0
        %751 = vmatpush.msra.mxu0 %v731
        %752 = vmatpush.msra.mxu0 %v730
        %753 = vmatpush.msra.mxu0 %v729
        %754 = vmatpush.msra.mxu0 %v728
        %755 = vmatmul.f32.gmra.mxu0 %v737
        %v756 = vpop.f32.mrf.mxu0
        %v757 = vadd.f32 %v734, %v756
        %758 = vdwg.mxu0
        %v759 = vadd.f32 %v387, %v757
        %v760 = vld [vmem:[%s8] sm:$0x1]
        %v761 = vld [vmem:[#allocation2] sm:$0x1]
        %v762 = vsel %vm397, %v759, 0.0
        %763 = vadd.xlane.f32.xlu0 %v762
        %v764 = vpop.xlane.xlu0 %763
        %v765 = vrcp.pop 32.0
        %v766 = vmul.f32 32.0, %v765
        %v767 = vsub.f32 1.0, %v766
        %v768 = vmul.f32 %v765, %v767
        %v769 = vadd.f32 %v765, %v768
        %vm770 = vweird.f32 %v765
        %v771 = vsel %vm770, %v765, %v769
        %v772 = vmul.f32 %v764, %v771
        %v773 = vsub.f32 %v759, %v772
        %v774 = vmul.f32 %v773, %v773
        %v775 = vsel %vm397, %v774, 0.0
        %776 = vadd.xlane.f32.xlu0 %v775
        %v777 = vpop.xlane.xlu0 %776
        %v778 = vmul.f32 %v777, %v771
        %v779 = vadd.f32 %v778, 1e-05
        %v780 = vrsqrt.pop %v779
        %v781 = vmul.f32 %v780, %v779
        %v782 = vmul.f32 %v781, %v780
        %v783 = vmul.f32 0.5, %v782
        %v784 = vsub.f32 1.5, %v783
        %v785 = vmul.f32 %v780, %v784
        %vm786 = vweird.f32 %v779
        %vm787 = vweird.f32 %v780
        %vm788 = vmor %vm786, %vm787
        %v789 = vsel %vm788, %v780, %v785
        %v790 = vmul.f32 %v773, %v789
        %v792 = vperm.slane %v760, 0
        %v794 = vmul.f32 %v790, %v792
        %v796 = vperm.slane %v761, 0
        %v798 = vadd.f32 %v794, %v796
        %799 = vst.msk [vmem:[%s386] sm:$0xff] %vm397, %v798
        %p800 = scmp.lt.s32.totalorder %s22, 1
        %s801 = scalar_select %p800, %s22, 1
        %s802 = smul.addr %s801, 8
        %s803 = scalar_lea.vmem %s10, %s802
        // Predicated region
        $region65: #{transformer_forward.16} parent=59 // pred_check
          %p804 = pneg %p260
        $region66: #{transformer_forward.16} parent=59 // pred_check_branch
          %806 = sbr.rel (%p804) target = $region68
        $region67: #{transformer_forward.16} parent=59 // pred_region
          _
        $region68: #{transformer_forward.16} parent=59 // pred_fallthru
          _
      $region60: #{transformer_forward.16} parent=5 // pred_fallthru
        _
      %p807 = scmp.le.s32.totalorder 2, %s17
      // Predicated region
      $region69: #{transformer_forward.16} parent=5 // pred_check
        %p808 = pneg %p807
      $region70: #{transformer_forward.16} parent=5 // pred_check_branch
        %810 = sbr.rel (%p808) target = $region72
      $region71: #{transformer_forward.16} parent=5 // pred_region
        %s811 = ssub.s32 %s17, 2
        // Predicated region
        $region73: #{transformer_forward.16} parent=71 // pred_check
          %p812 = pneg %p266
        $region74: #{transformer_forward.16} parent=71 // pred_check_branch
          %814 = sbr.rel (%p812) target = $region76
        $region75: #{transformer_forward.16} parent=71 // pred_region
          %p815 = scmp.lt.s32.totalorder %s23, 1
          %s816 = scalar_select %p815, %s23, 1
          %s817 = smul.addr %s816, 8
          %s818 = scalar_lea.vmem %s10, %s817
        $region76: #{transformer_forward.16} parent=71 // pred_fallthru
          _
      $region72: #{transformer_forward.16} parent=5 // pred_fallthru
        _
    $region6: #{transformer_forward.16} parent=1 // loop_footer
      %s21 = sadd.s32 1, %s17
    $region7: #{transformer_forward.16} parent=1 // loop_footer_branch
      %16 = sbr.rel target = $region3
    $region8: #{transformer_forward.16} parent=1 // loop_exit
      _
    %819 = vsyncpa [#allocation3], 1
    %s820 = scalar_lea.sflag [#allocation3], 1
    %821 = vsyncpa %s820, 1

// kernel: transformer_forward.11
$region0: #{transformer_forward.11}
  #allocation0 [shape = 'u32[]', space=smem, size = 0x4, offset = 0x4, fixed_abs, tag = 'smem constant byte address 0x4 - core index']
  #allocation1 [shape = 'u32[72,128]{1,0:T(1,128)}', space=vmem, size = 0x9000, scoped, tag = 'internal scratch']
  %s0 = inlined_call_operand.vmem [shape: f32[2,8,32], index: 0, kind: input, shape index: {}]
  %s1 = inlined_call_operand.vmem [shape: f32[32,96], index: 1, kind: input, shape index: {}]
  %s2 = inlined_call_operand.vmem [shape: f32[1,96], index: 2, kind: input, shape index: {}]
  %s3 = inlined_call_operand.vmem [shape: f32[32,32], index: 3, kind: input, shape index: {}]
  %s4 = inlined_call_operand.vmem [shape: f32[1,32], index: 4, kind: input, shape index: {}]
  %s5 = inlined_call_operand.vmem [shape: f32[1,32], index: 5, kind: input, shape index: {}]
  %s6 = inlined_call_operand.vmem [shape: f32[1,32], index: 6, kind: input, shape index: {}]
  %s7 = inlined_call_operand.vmem [shape: f32[2,8,32], index: 7, kind: output, shape index: {}]
  %s8 = sld [smem:[#allocation0]]
  $region61: #{transformer_forward.11} parent=0
    _
  %s10 = ssub.s32 1, %s8
  %s11 = scalar_select 0, %s10, %s8
  loop: start=0, step=1, limit=4
  $region2: #{transformer_forward.11} parent=0 // loop_pre_header
    _
  $region3: #{transformer_forward.11} parent=0 // loop_header
    %s13 = sphi 0, %s17
    %p14 = scmp.ge.s32.totalorder %s13, 4
    %s23 = sphi 0, %s25
    %s26 = sphi 0, %s23
    %s27 = sphi 0, %s26
    %s43 = sphi 0, %s27
    %s47 = sphi 0, %s47
    %s49 = sphi 0, %s47
    %s50 = sphi 0, %s49
    %s64 = sphi 0, %s50
    %s68 = sphi 0, %s68
    %s70 = sphi 0, %s68
    %s71 = sphi 0, %s70
    %s85 = sphi 0, %s71
    %s89 = sphi 0, %s89
    %s91 = sphi 0, %s89
    %s92 = sphi 0, %s91
    %s106 = sphi 0, %s92
    %s110 = sphi 0, %s110
    %s112 = sphi 0, %s110
    %s113 = sphi 0, %s112
    %s127 = sphi 0, %s113
    %s131 = sphi 0, %s131
    %s133 = sphi 0, %s131
    %s134 = sphi 0, %s133
    %s148 = sphi 0, %s134
    %s152 = sphi 0, %s152
    %s154 = sphi 0, %s152
    %s155 = sphi 0, %s154
    %s169 = sphi 0, %s155
    %s175 = sphi 0, %s177
    %s178 = sphi 0, %s175
    %s179 = sphi 0, %s178
    %s195 = sphi 0, %s179
  $region4: #{transformer_forward.11} parent=0 // loop_header_branch
    %16 = sbr.rel (%p14) target = $region8
  $region5: #{transformer_forward.11} parent=0 // loop_body
    %s18 = ssub.s32 %s13, 1
    %s19 = ssub.s32 %s13, 2
    %s20 = sadd.s32 %s13, 1
    %s21 = ssub.s32 %s13, %s20
    %p22 = scmp.eq.s32.totalorder %s21, 0
    %s24 = sadd.s32 %s23, 1
    %s25 = scalar_select %p22, %s23, %s24
    %p28 = pneg %p22
    %p29 = scmp.eq.s32.totalorder %s13, 1
    %p30 = por %p28, %p29
    %p31 = scmp.ne.s32.totalorder %s23, %s26
    %p32 = scmp.eq.s32.totalorder %s13, 0
    %p33 = por %p31, %p32
    %p34 = scmp.ne.s32.totalorder %s23, %s26
    %p35 = scmp.eq.s32.totalorder %s18, 1
    %p36 = por %p34, %p35
    %p37 = scmp.ne.s32.totalorder %s26, %s27
    %p38 = scmp.eq.s32.totalorder %s18, 0
    %p39 = por %p37, %p38
    %p40 = scmp.ne.s32.totalorder %s26, %s27
    %p41 = scmp.eq.s32.totalorder %s19, 1
    %p42 = por %p40, %p41
    %p44 = scmp.ne.s32.totalorder %s27, %s43
    %p45 = scmp.eq.s32.totalorder %s19, 0
    %p46 = por %p44, %p45
    %s48 = sadd.s32 %s47, 1
    %p51 = scmp.eq.s32.totalorder %s13, 1
    %p52 = scmp.ne.s32.totalorder %s47, %s49
    %p53 = scmp.eq.s32.totalorder %s13, 0
    %p54 = por %p52, %p53
    %p55 = scmp.ne.s32.totalorder %s47, %s49
    %p56 = scmp.eq.s32.totalorder %s18, 1
    %p57 = por %p55, %p56
    %p58 = scmp.ne.s32.totalorder %s49, %s50
    %p59 = scmp.eq.s32.totalorder %s18, 0
    %p60 = por %p58, %p59
    %p61 = scmp.ne.s32.totalorder %s49, %s50
    %p62 = scmp.eq.s32.totalorder %s19, 1
    %p63 = por %p61, %p62
    %p65 = scmp.ne.s32.totalorder %s50, %s64
    %p66 = scmp.eq.s32.totalorder %s19, 0
    %p67 = por %p65, %p66
    %s69 = sadd.s32 %s68, 1
    %p72 = scmp.eq.s32.totalorder %s13, 1
    %p73 = scmp.ne.s32.totalorder %s68, %s70
    %p74 = scmp.eq.s32.totalorder %s13, 0
    %p75 = por %p73, %p74
    %p76 = scmp.ne.s32.totalorder %s68, %s70
    %p77 = scmp.eq.s32.totalorder %s18, 1
    %p78 = por %p76, %p77
    %p79 = scmp.ne.s32.totalorder %s70, %s71
    %p80 = scmp.eq.s32.totalorder %s18, 0
    %p81 = por %p79, %p80
    %p82 = scmp.ne.s32.totalorder %s70, %s71
    %p83 = scmp.eq.s32.totalorder %s19, 1
    %p84 = por %p82, %p83
    %p86 = scmp.ne.s32.totalorder %s71, %s85
    %p87 = scmp.eq.s32.totalorder %s19, 0
    %p88 = por %p86, %p87
    %s90 = sadd.s32 %s89, 1
    %p93 = scmp.eq.s32.totalorder %s13, 1
    %p94 = scmp.ne.s32.totalorder %s89, %s91
    %p95 = scmp.eq.s32.totalorder %s13, 0
    %p96 = por %p94, %p95
    %p97 = scmp.ne.s32.totalorder %s89, %s91
    %p98 = scmp.eq.s32.totalorder %s18, 1
    %p99 = por %p97, %p98
    %p100 = scmp.ne.s32.totalorder %s91, %s92
    %p101 = scmp.eq.s32.totalorder %s18, 0
    %p102 = por %p100, %p101
    %p103 = scmp.ne.s32.totalorder %s91, %s92
    %p104 = scmp.eq.s32.totalorder %s19, 1
    %p105 = por %p103, %p104
    %p107 = scmp.ne.s32.totalorder %s92, %s106
    %p108 = scmp.eq.s32.totalorder %s19, 0
    %p109 = por %p107, %p108
    %s111 = sadd.s32 %s110, 1
    %p114 = scmp.eq.s32.totalorder %s13, 1
    %p115 = scmp.ne.s32.totalorder %s110, %s112
    %p116 = scmp.eq.s32.totalorder %s13, 0
    %p117 = por %p115, %p116
    %p118 = scmp.ne.s32.totalorder %s110, %s112
    %p119 = scmp.eq.s32.totalorder %s18, 1
    %p120 = por %p118, %p119
    %p121 = scmp.ne.s32.totalorder %s112, %s113
    %p122 = scmp.eq.s32.totalorder %s18, 0
    %p123 = por %p121, %p122
    %p124 = scmp.ne.s32.totalorder %s112, %s113
    %p125 = scmp.eq.s32.totalorder %s19, 1
    %p126 = por %p124, %p125
    %p128 = scmp.ne.s32.totalorder %s113, %s127
    %p129 = scmp.eq.s32.totalorder %s19, 0
    %p130 = por %p128, %p129
    %s132 = sadd.s32 %s131, 1
    %p135 = scmp.eq.s32.totalorder %s13, 1
    %p136 = scmp.ne.s32.totalorder %s131, %s133
    %p137 = scmp.eq.s32.totalorder %s13, 0
    %p138 = por %p136, %p137
    %p139 = scmp.ne.s32.totalorder %s131, %s133
    %p140 = scmp.eq.s32.totalorder %s18, 1
    %p141 = por %p139, %p140
    %p142 = scmp.ne.s32.totalorder %s133, %s134
    %p143 = scmp.eq.s32.totalorder %s18, 0
    %p144 = por %p142, %p143
    %p145 = scmp.ne.s32.totalorder %s133, %s134
    %p146 = scmp.eq.s32.totalorder %s19, 1
    %p147 = por %p145, %p146
    %p149 = scmp.ne.s32.totalorder %s134, %s148
    %p150 = scmp.eq.s32.totalorder %s19, 0
    %p151 = por %p149, %p150
    %s153 = sadd.s32 %s152, 1
    %p156 = scmp.eq.s32.totalorder %s13, 1
    %p157 = scmp.ne.s32.totalorder %s152, %s154
    %p158 = scmp.eq.s32.totalorder %s13, 0
    %p159 = por %p157, %p158
    %p160 = scmp.ne.s32.totalorder %s152, %s154
    %p161 = scmp.eq.s32.totalorder %s18, 1
    %p162 = por %p160, %p161
    %p163 = scmp.ne.s32.totalorder %s154, %s155
    %p164 = scmp.eq.s32.totalorder %s18, 0
    %p165 = por %p163, %p164
    %p166 = scmp.ne.s32.totalorder %s154, %s155
    %p167 = scmp.eq.s32.totalorder %s19, 1
    %p168 = por %p166, %p167
    %p170 = scmp.ne.s32.totalorder %s155, %s169
    %p171 = scmp.eq.s32.totalorder %s19, 0
    %p172 = por %p170, %p171
    %s173 = ssub.s32 %s13, %s20
    %p174 = scmp.eq.s32.totalorder %s173, 0
    %s176 = sadd.s32 %s175, 1
    %s177 = scalar_select %p174, %s175, %s176
    %p180 = pneg %p174
    %p181 = scmp.eq.s32.totalorder %s13, 1
    %p182 = por %p180, %p181
    %p183 = scmp.ne.s32.totalorder %s175, %s178
    %p184 = scmp.eq.s32.totalorder %s13, 0
    %p185 = por %p183, %p184
    %p186 = scmp.ne.s32.totalorder %s175, %s178
    %p187 = scmp.eq.s32.totalorder %s18, 1
    %p188 = por %p186, %p187
    %p189 = scmp.ne.s32.totalorder %s178, %s179
    %p190 = scmp.eq.s32.totalorder %s18, 0
    %p191 = por %p189, %p190
    %p192 = scmp.ne.s32.totalorder %s178, %s179
    %p193 = scmp.eq.s32.totalorder %s19, 1
    %p194 = por %p192, %p193
    %p196 = scmp.ne.s32.totalorder %s179, %s195
    %p197 = scmp.eq.s32.totalorder %s19, 0
    %p198 = por %p196, %p197
    %p199 = scmp.le.s32.totalorder 1, %s13
    %p200 = scmp.lt.s32.totalorder %s13, 3
    %p201 = pnand %p199, %p200
    %p202 = pneg %p201
    // Predicated region
    $region9: #{transformer_forward.11} parent=5 // pred_check
      _
    $region10: #{transformer_forward.11} parent=5 // pred_check_branch
      %204 = sbr.rel (%p201) target = $region12
    $region11: #{transformer_forward.11} parent=5 // pred_region
      %s205 = ssub.s32 %s13, 1
      // Predicated region
      $region13: #{transformer_forward.11} parent=11 // pred_check
        %p206 = pneg %p60
      $region14: #{transformer_forward.11} parent=11 // pred_check_branch
        %208 = sbr.rel (%p206) target = $region16
      $region15: #{transformer_forward.11} parent=11 // pred_region
        _
      $region16: #{transformer_forward.11} parent=11 // pred_fallthru
        _
      // Predicated region
      $region17: #{transformer_forward.11} parent=11 // pred_check
        %p209 = pneg %p81
      $region18: #{transformer_forward.11} parent=11 // pred_check_branch
        %211 = sbr.rel (%p209) target = $region20
      $region19: #{transformer_forward.11} parent=11 // pred_region
        _
      $region20: #{transformer_forward.11} parent=11 // pred_fallthru
        _
      // Predicated region
      $region21: #{transformer_forward.11} parent=11 // pred_check
        %p212 = pneg %p102
      $region22: #{transformer_forward.11} parent=11 // pred_check_branch
        %214 = sbr.rel (%p212) target = $region24
      $region23: #{transformer_forward.11} parent=11 // pred_region
        _
      $region24: #{transformer_forward.11} parent=11 // pred_fallthru
        _
      // Predicated region
      $region25: #{transformer_forward.11} parent=11 // pred_check
        %p215 = pneg %p123
      $region26: #{transformer_forward.11} parent=11 // pred_check_branch
        %217 = sbr.rel (%p215) target = $region28
      $region27: #{transformer_forward.11} parent=11 // pred_region
        _
      $region28: #{transformer_forward.11} parent=11 // pred_fallthru
        _
      // Predicated region
      $region29: #{transformer_forward.11} parent=11 // pred_check
        %p218 = pneg %p144
      $region30: #{transformer_forward.11} parent=11 // pred_check_branch
        %220 = sbr.rel (%p218) target = $region32
      $region31: #{transformer_forward.11} parent=11 // pred_region
        _
      $region32: #{transformer_forward.11} parent=11 // pred_fallthru
        _
      // Predicated region
      $region33: #{transformer_forward.11} parent=11 // pred_check
        %p221 = pneg %p165
      $region34: #{transformer_forward.11} parent=11 // pred_check_branch
        %223 = sbr.rel (%p221) target = $region36
      $region35: #{transformer_forward.11} parent=11 // pred_region
        _
      $region36: #{transformer_forward.11} parent=11 // pred_fallthru
        _
    $region12: #{transformer_forward.11} parent=5 // pred_fallthru
      _
    %p224 = scmp.lt.s32.totalorder %s13, 2
    // Predicated region
    $region37: #{transformer_forward.11} parent=5 // pred_check
      %p225 = pneg %p224
    $region38: #{transformer_forward.11} parent=5 // pred_check_branch
      %227 = sbr.rel (%p225) target = $region40
    $region39: #{transformer_forward.11} parent=5 // pred_region
      // Predicated region
      $region41: #{transformer_forward.11} parent=39 // pred_check
        %p228 = pneg %p33
      $region42: #{transformer_forward.11} parent=39 // pred_check_branch
        %230 = sbr.rel (%p228) target = $region44
      $region43: #{transformer_forward.11} parent=39 // pred_region
        %p231 = scmp.lt.s32.totalorder %s13, 1
        %s232 = scalar_select %p231, %s13, 1
        %s233 = smul.addr %s232, 8
        %s234 = scalar_lea.vmem %s0, %s233
      $region44: #{transformer_forward.11} parent=39 // pred_fallthru
        _
    $region40: #{transformer_forward.11} parent=5 // pred_fallthru
      _
    %p235 = scmp.le.s32.totalorder 1, %s13
    %p236 = scmp.lt.s32.totalorder %s13, 3
    %p237 = pnand %p235, %p236
    %p238 = pneg %p237
    // Predicated region
    $region45: #{transformer_forward.11} parent=5 // pred_check
      _
    $region46: #{transformer_forward.11} parent=5 // pred_check_branch
      %240 = sbr.rel (%p237) target = $region48
    $region47: #{transformer_forward.11} parent=5 // pred_region
      %s241 = ssub.s32 %s13, 1
      %p242 = scmp.lt.s32.totalorder %s18, 1
      %s243 = scalar_select %p242, %s18, 1
      %s244 = smul.addr %s243, 8
      %s245 = scalar_lea.vmem %s0, %s244
      %p246 = pneg %p39
      %p247 = pneg %p36
      %p248 = pneg %p60
      %p249 = pneg %p57
      %p250 = pneg %p81
      %p251 = pneg %p78
      %p252 = pneg %p102
      %p253 = pneg %p99
      %p254 = pneg %p123
      %p255 = pneg %p120
      %p256 = pneg %p144
      %p257 = pneg %p141
      %p258 = pneg %p165
      %p259 = pneg %p162
      %p260 = pneg %p191
      %p261 = pneg %p188
      %p262 = scmp.lt.s32.totalorder %s18, 1
      %s263 = scalar_select %p262, %s18, 1
      %s264 = smul.addr %s263, 8
      %s265 = scalar_lea.vmem %s7, %s264
      %p266 = scmp.lt.s32.totalorder %s18, 1
      %s267 = scalar_select %p266, %s18, 1
      %s268 = smul.addr %s267, 8
      %s269 = scalar_lea.vmem %s0, %s268
      %p270 = scmp.lt.s32.totalorder %s18, 1
      %s271 = scalar_select %p270, %s18, 1
      %s272 = smul.addr %s271, 8
      %s273 = scalar_lea.vmem %s7, %s272
      %v274 = vld [vmem:[%s269] sm:$0xff]
      %v275 = vld [vmem:[%s1] sm:$0xff]
      %v276 = vld [vmem:[%s1 + $0x8] sm:$0xff]
      %v277 = vld [vmem:[%s1 + $0x10] sm:$0xff]
      %v278 = vld [vmem:[%s1 + $0x18] sm:$0xff]
      %v279 = vld [vmem:[%s2] sm:$0x1]
      %v281 = vperm.slane %v279, 0
      %vm283 = vcmask 261120
      %v285 = vsel %vm283, %v274, 0
      %287 = vmatpush.msra.mxu0 0.0
      %288 = vmatpush.msra.mxu0 0.0
      %289 = vmatpush.msra.mxu0 0.0
      %290 = vmatpush.msra.mxu0 0.0
      %291 = vmatpush.msra.mxu0 0.0
      %292 = vmatpush.msra.mxu0 0.0
      %293 = vmatpush.msra.mxu0 0.0
      %294 = vmatpush.msra.mxu0 0.0
      %295 = vmatpush.msra.mxu0 0.0
      %296 = vmatpush.msra.mxu0 0.0
      %297 = vmatpush.msra.mxu0 0.0
      %298 = vmatpush.msra.mxu0 0.0
      %299 = vmatpush.msra.mxu0 %v278
      %300 = vmatpush.msra.mxu0 %v277
      %301 = vmatpush.msra.mxu0 %v276
      %302 = vmatpush.msra.mxu0 %v275
      %303 = vmatmul.f32.gmra.mxu0 %v285
      %v304 = vpop.f32.mrf.mxu0
      %v305 = vadd.f32 %v281, %v304
      %306 = vdwg.mxu0
      %308 = vrot.lane.b32.xlu0 %v305, 96
      %v309 = vpop.permute.xlu0 %308
      %vm310 = vcmask 64512
      %v311 = vsel %vm310, %v305, 0
      %v313 = vsel %vm310, %v309, 0
      %315 = vmatpush.xpose.msra.mxu0 0.0
      %316 = vmatpush.xpose.msra.mxu0 0.0
      %317 = vmatpush.xpose.msra.mxu0 0.0
      %318 = vmatpush.xpose.msra.mxu0 0.0
      %319 = vmatpush.xpose.msra.mxu0 0.0
      %320 = vmatpush.xpose.msra.mxu0 0.0
      %321 = vmatpush.xpose.msra.mxu0 0.0
      %322 = vmatpush.xpose.msra.mxu0 0.0
      %323 = vmatpush.xpose.msra.mxu0 0.0
      %324 = vmatpush.xpose.msra.mxu0 0.0
      %325 = vmatpush.xpose.msra.mxu0 0.0
      %326 = vmatpush.xpose.msra.mxu0 0.0
      %327 = vmatpush.xpose.msra.mxu0 0.0
      %328 = vmatpush.xpose.msra.mxu0 0.0
      %329 = vmatpush.xpose.msra.mxu0 0.0
      %330 = vmatpush.xpose.msra.mxu0 %v313
      %331 = vmatmul.f32.gmra.mxu0 %v311
      %v332 = vpop.f32.mrf.mxu0
      %v333 = vadd.f32 0.0, %v332
      %334 = vdwg.mxu0
      %v335 = vsel %vm310, %v333, -inf
      %336 = vmax.xlane.f32.xlu0 %v335
      %v337 = vpop.xlane.xlu0 %336
      %v338 = vsub.f32 %v333, %v337
      %v339 = vmul.f32 %v338, 1.442695
      %v340 = vpow.pop %v339
      %v341 = vsel %vm310, %v340, 0.0
      %342 = vadd.xlane.f32.xlu0 %v341
      %v343 = vpop.xlane.xlu0 %342
      %v344 = vrcp.pop %v343
      %v345 = vmul.f32 %v340, %v344
      %346 = vrot.lane.b32.xlu0 %v305, 64
      %v347 = vpop.permute.xlu0 %346
      %v350 = vsel %vm310, %v345, 0
      %352 = vmatpush.msra.mxu0 0.0
      %353 = vmatpush.msra.mxu0 0.0
      %354 = vmatpush.msra.mxu0 0.0
      %355 = vmatpush.msra.mxu0 0.0
      %356 = vmatpush.msra.mxu0 0.0
      %357 = vmatpush.msra.mxu0 0.0
      %358 = vmatpush.msra.mxu0 0.0
      %359 = vmatpush.msra.mxu0 0.0
      %360 = vmatpush.msra.mxu0 0.0
      %361 = vmatpush.msra.mxu0 0.0
      %362 = vmatpush.msra.mxu0 0.0
      %363 = vmatpush.msra.mxu0 0.0
      %364 = vmatpush.msra.mxu0 0.0
      %365 = vmatpush.msra.mxu0 0.0
      %366 = vmatpush.msra.mxu0 0.0
      %367 = vmatpush.msra.mxu0 %v347
      %368 = vmatmul.f32.gmra.mxu0 %v350
      %v369 = vpop.f32.mrf.mxu0
      %v370 = vadd.f32 0.0, %v369
      %371 = vdwg.mxu0
      %372 = vrot.lane.b32.xlu0 %v305, 120
      %v373 = vpop.permute.xlu0 %372
      %374 = vrot.lane.b32.xlu0 %v305, 88
      %v375 = vpop.permute.xlu0 %374
      %v376 = vsel %vm310, %v373, 0
      %v378 = vsel %vm310, %v375, 0
      %380 = vmatpush.xpose.msra.mxu0 0.0
      %381 = vmatpush.xpose.msra.mxu0 0.0
      %382 = vmatpush.xpose.msra.mxu0 0.0
      %383 = vmatpush.xpose.msra.mxu0 0.0
      %384 = vmatpush.xpose.msra.mxu0 0.0
      %385 = vmatpush.xpose.msra.mxu0 0.0
      %386 = vmatpush.xpose.msra.mxu0 0.0
      %387 = vmatpush.xpose.msra.mxu0 0.0
      %388 = vmatpush.xpose.msra.mxu0 0.0
      %389 = vmatpush.xpose.msra.mxu0 0.0
      %390 = vmatpush.xpose.msra.mxu0 0.0
      %391 = vmatpush.xpose.msra.mxu0 0.0
      %392 = vmatpush.xpose.msra.mxu0 0.0
      %393 = vmatpush.xpose.msra.mxu0 0.0
      %394 = vmatpush.xpose.msra.mxu0 0.0
      %395 = vmatpush.xpose.msra.mxu0 %v378
      %396 = vmatmul.f32.gmra.mxu0 %v376
      %v397 = vpop.f32.mrf.mxu0
      %v398 = vadd.f32 0.0, %v397
      %399 = vdwg.mxu0
      %v400 = vsel %vm310, %v398, -inf
      %401 = vmax.xlane.f32.xlu0 %v400
      %v402 = vpop.xlane.xlu0 %401
      %v403 = vsub.f32 %v398, %v402
      %v404 = vmul.f32 %v403, 1.442695
      %v405 = vpow.pop %v404
      %v406 = vsel %vm310, %v405, 0.0
      %407 = vadd.xlane.f32.xlu0 %v406
      %v408 = vpop.xlane.xlu0 %407
      %v409 = vrcp.pop %v408
      %v410 = vmul.f32 %v405, %v409
      %411 = vrot.lane.b32.xlu0 %v305, 56
      %v412 = vpop.permute.xlu0 %411
      %v415 = vsel %vm310, %v410, 0
      %417 = vmatpush.msra.mxu0 0.0
      %418 = vmatpush.msra.mxu0 0.0
      %419 = vmatpush.msra.mxu0 0.0
      %420 = vmatpush.msra.mxu0 0.0
      %421 = vmatpush.msra.mxu0 0.0
      %422 = vmatpush.msra.mxu0 0.0
      %423 = vmatpush.msra.mxu0 0.0
      %424 = vmatpush.msra.mxu0 0.0
      %425 = vmatpush.msra.mxu0 0.0
      %426 = vmatpush.msra.mxu0 0.0
      %427 = vmatpush.msra.mxu0 0.0
      %428 = vmatpush.msra.mxu0 0.0
      %429 = vmatpush.msra.mxu0 0.0
      %430 = vmatpush.msra.mxu0 0.0
      %431 = vmatpush.msra.mxu0 0.0
      %432 = vmatpush.msra.mxu0 %v412
      %433 = vmatmul.f32.gmra.mxu0 %v415
      %v434 = vpop.f32.mrf.mxu0
      %v435 = vadd.f32 0.0, %v434
      %436 = vdwg.mxu0
      %437 = vrot.lane.b32.xlu0 %v305, 112
      %v438 = vpop.permute.xlu0 %437
      %439 = vrot.lane.b32.xlu0 %v305, 80
      %v440 = vpop.permute.xlu0 %439
      %v441 = vsel %vm310, %v438, 0
      %v443 = vsel %vm310, %v440, 0
      %445 = vmatpush.xpose.msra.mxu0 0.0
      %446 = vmatpush.xpose.msra.mxu0 0.0
      %447 = vmatpush.xpose.msra.mxu0 0.0
      %448 = vmatpush.xpose.msra.mxu0 0.0
      %449 = vmatpush.xpose.msra.mxu0 0.0
      %450 = vmatpush.xpose.msra.mxu0 0.0
      %451 = vmatpush.xpose.msra.mxu0 0.0
      %452 = vmatpush.xpose.msra.mxu0 0.0
      %453 = vmatpush.xpose.msra.mxu0 0.0
      %454 = vmatpush.xpose.msra.mxu0 0.0
      %455 = vmatpush.xpose.msra.mxu0 0.0
      %456 = vmatpush.xpose.msra.mxu0 0.0
      %457 = vmatpush.xpose.msra.mxu0 0.0
      %458 = vmatpush.xpose.msra.mxu0 0.0
      %459 = vmatpush.xpose.msra.mxu0 0.0
      %460 = vmatpush.xpose.msra.mxu0 %v443
      %461 = vmatmul.f32.gmra.mxu0 %v441
      %v462 = vpop.f32.mrf.mxu0
      %v463 = vadd.f32 0.0, %v462
      %464 = vdwg.mxu0
      %v465 = vsel %vm310, %v463, -inf
      %466 = vmax.xlane.f32.xlu0 %v465
      %v467 = vpop.xlane.xlu0 %466
      %v468 = vsub.f32 %v463, %v467
      %v469 = vmul.f32 %v468, 1.442695
      %v470 = vpow.pop %v469
      %v471 = vsel %vm310, %v470, 0.0
      %472 = vadd.xlane.f32.xlu0 %v471
      %v473 = vpop.xlane.xlu0 %472
      %v474 = vrcp.pop %v473
      %v475 = vmul.f32 %v470, %v474
      %476 = vrot.lane.b32.xlu0 %v305, 48
      %v477 = vpop.permute.xlu0 %476
      %v480 = vsel %vm310, %v475, 0
      %482 = vmatpush.msra.mxu0 0.0
      %483 = vmatpush.msra.mxu0 0.0
      %484 = vmatpush.msra.mxu0 0.0
      %485 = vmatpush.msra.mxu0 0.0
      %486 = vmatpush.msra.mxu0 0.0
      %487 = vmatpush.msra.mxu0 0.0
      %488 = vmatpush.msra.mxu0 0.0
      %489 = vmatpush.msra.mxu0 0.0
      %490 = vmatpush.msra.mxu0 0.0
      %491 = vmatpush.msra.mxu0 0.0
      %492 = vmatpush.msra.mxu0 0.0
      %493 = vmatpush.msra.mxu0 0.0
      %494 = vmatpush.msra.mxu0 0.0
      %495 = vmatpush.msra.mxu0 0.0
      %496 = vmatpush.msra.mxu0 0.0
      %497 = vmatpush.msra.mxu0 %v477
      %498 = vmatmul.f32.gmra.mxu0 %v480
      %v499 = vpop.f32.mrf.mxu0
      %v500 = vadd.f32 0.0, %v499
      %501 = vdwg.mxu0
      %502 = vrot.lane.b32.xlu0 %v305, 104
      %v503 = vpop.permute.xlu0 %502
      %504 = vrot.lane.b32.xlu0 %v305, 72
      %v505 = vpop.permute.xlu0 %504
      %v506 = vsel %vm310, %v503, 0
      %v508 = vsel %vm310, %v505, 0
      %510 = vmatpush.xpose.msra.mxu0 0.0
      %511 = vmatpush.xpose.msra.mxu0 0.0
      %512 = vmatpush.xpose.msra.mxu0 0.0
      %513 = vmatpush.xpose.msra.mxu0 0.0
      %514 = vmatpush.xpose.msra.mxu0 0.0
      %515 = vmatpush.xpose.msra.mxu0 0.0
      %516 = vmatpush.xpose.msra.mxu0 0.0
      %517 = vmatpush.xpose.msra.mxu0 0.0
      %518 = vmatpush.xpose.msra.mxu0 0.0
      %519 = vmatpush.xpose.msra.mxu0 0.0
      %520 = vmatpush.xpose.msra.mxu0 0.0
      %521 = vmatpush.xpose.msra.mxu0 0.0
      %522 = vmatpush.xpose.msra.mxu0 0.0
      %523 = vmatpush.xpose.msra.mxu0 0.0
      %524 = vmatpush.xpose.msra.mxu0 0.0
      %525 = vmatpush.xpose.msra.mxu0 %v508
      %526 = vmatmul.f32.gmra.mxu0 %v506
      %v527 = vpop.f32.mrf.mxu0
      %v528 = vadd.f32 0.0, %v527
      %529 = vdwg.mxu0
      %v530 = vsel %vm310, %v528, -inf
      %531 = vmax.xlane.f32.xlu0 %v530
      %v532 = vpop.xlane.xlu0 %531
      %v533 = vsub.f32 %v528, %v532
      %v534 = vmul.f32 %v533, 1.442695
      %v535 = vpow.pop %v534
      %v536 = vsel %vm310, %v535, 0.0
      %537 = vadd.xlane.f32.xlu0 %v536
      %v538 = vpop.xlane.xlu0 %537
      %v539 = vrcp.pop %v538
      %v540 = vmul.f32 %v535, %v539
      %541 = vrot.lane.b32.xlu0 %v305, 40
      %v542 = vpop.permute.xlu0 %541
      %v545 = vsel %vm310, %v540, 0
      %547 = vmatpush.msra.mxu0 0.0
      %548 = vmatpush.msra.mxu0 0.0
      %549 = vmatpush.msra.mxu0 0.0
      %550 = vmatpush.msra.mxu0 0.0
      %551 = vmatpush.msra.mxu0 0.0
      %552 = vmatpush.msra.mxu0 0.0
      %553 = vmatpush.msra.mxu0 0.0
      %554 = vmatpush.msra.mxu0 0.0
      %555 = vmatpush.msra.mxu0 0.0
      %556 = vmatpush.msra.mxu0 0.0
      %557 = vmatpush.msra.mxu0 0.0
      %558 = vmatpush.msra.mxu0 0.0
      %559 = vmatpush.msra.mxu0 0.0
      %560 = vmatpush.msra.mxu0 0.0
      %561 = vmatpush.msra.mxu0 0.0
      %562 = vmatpush.msra.mxu0 %v542
      %563 = vmatmul.f32.gmra.mxu0 %v545
      %v564 = vpop.f32.mrf.mxu0
      %v565 = vadd.f32 0.0, %v564
      %566 = vdwg.mxu0
      %568 = vrot.lane.b32.xlu0 %v435, 8
      %v569 = vpop.permute.xlu0 %568
      %572 = vrot.lane.b32.xlu0 %v500, 16
      %v573 = vpop.permute.xlu0 %572
      %576 = vrot.lane.b32.xlu0 %v565, 24
      %v577 = vpop.permute.xlu0 %576
      %v579 = vsel %vm310, %v370, %v569
      %vm580 = vcmask 130048
      %v581 = vsel %vm580, %v579, %v573
      %vm582 = vcmask 195584
      %v583 = vsel %vm582, %v581, %v577
      %v584 = vld [vmem:[%s3] sm:$0xff]
      %v585 = vld [vmem:[%s3 + $0x8] sm:$0xff]
      %v586 = vld [vmem:[%s3 + $0x10] sm:$0xff]
      %v587 = vld [vmem:[%s3 + $0x18] sm:$0xff]
      %v588 = vld [vmem:[%s4] sm:$0x1]
      %v590 = vperm.slane %v588, 0
      %v593 = vsel %vm283, %v583, 0
      %595 = vmatpush.msra.mxu0 0.0
      %596 = vmatpush.msra.mxu0 0.0
      %597 = vmatpush.msra.mxu0 0.0
      %598 = vmatpush.msra.mxu0 0.0
      %599 = vmatpush.msra.mxu0 0.0
      %600 = vmatpush.msra.mxu0 0.0
      %601 = vmatpush.msra.mxu0 0.0
      %602 = vmatpush.msra.mxu0 0.0
      %603 = vmatpush.msra.mxu0 0.0
      %604 = vmatpush.msra.mxu0 0.0
      %605 = vmatpush.msra.mxu0 0.0
      %606 = vmatpush.msra.mxu0 0.0
      %607 = vmatpush.msra.mxu0 %v587
      %608 = vmatpush.msra.mxu0 %v586
      %609 = vmatpush.msra.mxu0 %v585
      %610 = vmatpush.msra.mxu0 %v584
      %611 = vmatmul.f32.gmra.mxu0 %v593
      %v612 = vpop.f32.mrf.mxu0
      %v613 = vadd.f32 %v590, %v612
      %614 = vdwg.mxu0
      %v615 = vadd.f32 %v274, %v613
      %v616 = vld [vmem:[%s5] sm:$0x1]
      %v617 = vld [vmem:[%s6] sm:$0x1]
      %v618 = vsel %vm283, %v615, 0.0
      %619 = vadd.xlane.f32.xlu0 %v618
      %v620 = vpop.xlane.xlu0 %619
      %v621 = vrcp.pop 32.0
      %v622 = vmul.f32 32.0, %v621
      %v623 = vsub.f32 1.0, %v622
      %v624 = vmul.f32 %v621, %v623
      %v625 = vadd.f32 %v621, %v624
      %vm626 = vweird.f32 %v621
      %v627 = vsel %vm626, %v621, %v625
      %v628 = vmul.f32 %v620, %v627
      %v629 = vsub.f32 %v615, %v628
      %v630 = vmul.f32 %v629, %v629
      %v631 = vsel %vm283, %v630, 0.0
      %632 = vadd.xlane.f32.xlu0 %v631
      %v633 = vpop.xlane.xlu0 %632
      %v634 = vmul.f32 %v633, %v627
      %v635 = vadd.f32 %v634, 1e-05
      %v636 = vrsqrt.pop %v635
      %v637 = vmul.f32 %v636, %v635
      %v638 = vmul.f32 %v637, %v636
      %v639 = vmul.f32 0.5, %v638
      %v640 = vsub.f32 1.5, %v639
      %v641 = vmul.f32 %v636, %v640
      %vm642 = vweird.f32 %v635
      %vm643 = vweird.f32 %v636
      %vm644 = vmor %vm642, %vm643
      %v645 = vsel %vm644, %v636, %v641
      %v646 = vmul.f32 %v629, %v645
      %v648 = vperm.slane %v616, 0
      %v650 = vmul.f32 %v646, %v648
      %v652 = vperm.slane %v617, 0
      %v654 = vadd.f32 %v650, %v652
      %655 = vst.msk [vmem:[%s273] sm:$0xff] %vm283, %v654
      %p656 = scmp.lt.s32.totalorder %s18, 1
      %s657 = scalar_select %p656, %s18, 1
      %s658 = smul.addr %s657, 8
      %s659 = scalar_lea.vmem %s7, %s658
      // Predicated region
      $region49: #{transformer_forward.11} parent=47 // pred_check
        %p660 = pneg %p188
      $region50: #{transformer_forward.11} parent=47 // pred_check_branch
        %662 = sbr.rel (%p660) target = $region52
      $region51: #{transformer_forward.11} parent=47 // pred_region
        _
      $region52: #{transformer_forward.11} parent=47 // pred_fallthru
        _
    $region48: #{transformer_forward.11} parent=5 // pred_fallthru
      _
    %p663 = scmp.le.s32.totalorder 2, %s13
    // Predicated region
    $region53: #{transformer_forward.11} parent=5 // pred_check
      %p664 = pneg %p663
    $region54: #{transformer_forward.11} parent=5 // pred_check_branch
      %666 = sbr.rel (%p664) target = $region56
    $region55: #{transformer_forward.11} parent=5 // pred_region
      %s667 = ssub.s32 %s13, 2
      // Predicated region
      $region57: #{transformer_forward.11} parent=55 // pred_check
        %p668 = pneg %p194
      $region58: #{transformer_forward.11} parent=55 // pred_check_branch
        %670 = sbr.rel (%p668) target = $region60
      $region59: #{transformer_forward.11} parent=55 // pred_region
        %p671 = scmp.lt.s32.totalorder %s19, 1
        %s672 = scalar_select %p671, %s19, 1
        %s673 = smul.addr %s672, 8
        %s674 = scalar_lea.vmem %s7, %s673
      $region60: #{transformer_forward.11} parent=55 // pred_fallthru
        _
    $region56: #{transformer_forward.11} parent=5 // pred_fallthru
      _
  $region6: #{transformer_forward.11} parent=0 // loop_footer
    %s17 = sadd.s32 1, %s13
  $region7: #{transformer_forward.11} parent=0 // loop_footer_branch
    %12 = sbr.rel target = $region3
  $region8: #{transformer_forward.11} parent=0 // loop_exit
    _

// kernel: transformer_forward.17
$region0: #{transformer_forward.17}
  #allocation0 [shape = 'u32[]', space=smem, size = 0x4, offset = 0x4, fixed_abs, tag = 'smem constant byte address 0x4 - core index']
  #allocation1 [shape = 'u32[72,128]{1,0:T(1,128)}', space=vmem, size = 0x9000, scoped, tag = 'internal scratch']
  %s0 = inlined_call_operand.vmem [shape: f32[16,32], index: 0, kind: input, shape index: {}]
  %s1 = inlined_call_operand.vmem [shape: f32[32,128], index: 1, kind: input, shape index: {}]
  %s2 = inlined_call_operand.hbm [shape: f32[1,128], index: 2, kind: input, shape index: {}]
  %s3 = inlined_call_operand.vmem [shape: f32[128,32], index: 3, kind: input, shape index: {}]
  %s4 = inlined_call_operand.hbm [shape: f32[1,32], index: 4, kind: input, shape index: {}]
  %s5 = inlined_call_operand.hbm [shape: f32[1,32], index: 5, kind: input, shape index: {}]
  %s6 = inlined_call_operand.hbm [shape: f32[1,32], index: 6, kind: input, shape index: {}]
  %s7 = inlined_call_operand.vmem [shape: f32[16,32], index: 7, kind: output, shape index: {}]
  %s8 = sld [smem:[#allocation0]]
  $region54: #{transformer_forward.17} parent=0
    _
  %s10 = ssub.s32 1, %s8
  %s11 = scalar_select 0, %s10, %s8
  $region1: #{transformer_forward.17} parent=0
    #allocation2 [shape = 'u8[512]{0}', space=vmem, size = 0x400, scoped, tag = 'input window, operand 2, single buffered']
    #allocation3 [shape = 's32[1]{0}', space=sflag, size = 0x4, scoped, tag = 'scoped memory for transformer_forward.17']
    #allocation4 [shape = 'u8[512]{0}', space=vmem, size = 0x400, scoped, tag = 'input window, operand 4, single buffered']
    #allocation5 [shape = 's32[1]{0}', space=sflag, size = 0x4, scoped, tag = 'scoped memory for transformer_forward.17']
    #allocation6 [shape = 'u8[512]{0}', space=vmem, size = 0x400, scoped, tag = 'input window, operand 5, single buffered']
    #allocation7 [shape = 'u8[512]{0}', space=vmem, size = 0x400, scoped, tag = 'input window, operand 6, single buffered']
    #allocation8 [shape = 's32[1]{0}', space=sflag, size = 0x4, scoped, tag = 'scoped memory for transformer_forward.17']
    %12 = vsyncpa [#allocation3], 0
    %13 = vsyncpa [#allocation5], 0
    %14 = vsyncpa [#allocation8], 0
    // Predicated region
    $region2: #{transformer_forward.17} parent=1 // pred_check
      _
    $region3: #{transformer_forward.17} parent=1 // pred_check_branch
      %16 = sbr.rel (0) target = $region5
    $region4: #{transformer_forward.17} parent=1 // pred_region
      _
    $region5: #{transformer_forward.17} parent=1 // pred_fallthru
      _
    // Predicated region
    $region6: #{transformer_forward.17} parent=1 // pred_check
      _
    $region7: #{transformer_forward.17} parent=1 // pred_check_branch
      %18 = sbr.rel (0) target = $region9
    $region8: #{transformer_forward.17} parent=1 // pred_region
      _
    $region9: #{transformer_forward.17} parent=1 // pred_fallthru
      _
    // Predicated region
    $region10: #{transformer_forward.17} parent=1 // pred_check
      _
    $region11: #{transformer_forward.17} parent=1 // pred_check_branch
      %20 = sbr.rel (0) target = $region13
    $region12: #{transformer_forward.17} parent=1 // pred_region
      %22 = vsyncadd [#allocation3], 0
      %s24 = sshll.u32 %s2, 4
      %s25 = int_to_ptr.hbm [resolvable:$true] %s24
      %s26 = sshll.u32 [#allocation2], 4
      %s27 = int_to_ptr.vmem [resolvable:$true] %s26
      %29 = dma.hbm_to_vmem [thread:$0]  %s25, 16, %s27, [#allocation3]
    $region13: #{transformer_forward.17} parent=1 // pred_fallthru
      _
    // Predicated region
    $region14: #{transformer_forward.17} parent=1 // pred_check
      _
    $region15: #{transformer_forward.17} parent=1 // pred_check_branch
      %31 = sbr.rel (0) target = $region17
    $region16: #{transformer_forward.17} parent=1 // pred_region
      _
    $region17: #{transformer_forward.17} parent=1 // pred_fallthru
      _
    // Predicated region
    $region18: #{transformer_forward.17} parent=1 // pred_check
      _
    $region19: #{transformer_forward.17} parent=1 // pred_check_branch
      %33 = sbr.rel (0) target = $region21
    $region20: #{transformer_forward.17} parent=1 // pred_region
      %35 = vsyncadd [#allocation5], 0
      %s37 = sshll.u32 %s4, 4
      %s38 = int_to_ptr.hbm [resolvable:$true] %s37
      %s39 = sshll.u32 [#allocation4], 4
      %s40 = int_to_ptr.vmem [resolvable:$true] %s39
      %42 = dma.hbm_to_vmem [thread:$0]  %s38, 16, %s40, [#allocation5]
    $region21: #{transformer_forward.17} parent=1 // pred_fallthru
      _
    // Predicated region
    $region22: #{transformer_forward.17} parent=1 // pred_check
      _
    $region23: #{transformer_forward.17} parent=1 // pred_check_branch
      %44 = sbr.rel (0) target = $region25
    $region24: #{transformer_forward.17} parent=1 // pred_region
      %46 = vsyncadd [#allocation5], 0
      %s48 = sshll.u32 %s5, 4
      %s49 = int_to_ptr.hbm [resolvable:$true] %s48
      %s50 = sshll.u32 [#allocation6], 4
      %s51 = int_to_ptr.vmem [resolvable:$true] %s50
      %53 = dma.hbm_to_vmem [thread:$0]  %s49, 16, %s51, [#allocation5]
    $region25: #{transformer_forward.17} parent=1 // pred_fallthru
      _
    // Predicated region
    $region26: #{transformer_forward.17} parent=1 // pred_check
      _
    $region27: #{transformer_forward.17} parent=1 // pred_check_branch
      %55 = sbr.rel (0) target = $region29
    $region28: #{transformer_forward.17} parent=1 // pred_region
      %57 = vsyncadd [#allocation8], 0
      %s59 = sshll.u32 %s6, 4
      %s60 = int_to_ptr.hbm [resolvable:$true] %s59
      %s61 = sshll.u32 [#allocation7], 4
      %s62 = int_to_ptr.vmem [resolvable:$true] %s61
      %64 = dma.hbm_to_vmem [thread:$0]  %s60, 16, %s62, [#allocation8]
    $region29: #{transformer_forward.17} parent=1 // pred_fallthru
      _
    // Predicated region
    $region30: #{transformer_forward.17} parent=1 // pred_check
      _
    $region31: #{transformer_forward.17} parent=1 // pred_check_branch
      %66 = sbr.rel (0) target = $region33
    $region32: #{transformer_forward.17} parent=1 // pred_region
      %68 = dma.done [#allocation3], 16
    $region33: #{transformer_forward.17} parent=1 // pred_fallthru
      _
    // Predicated region
    $region34: #{transformer_forward.17} parent=1 // pred_check
      _
    $region35: #{transformer_forward.17} parent=1 // pred_check_branch
      %70 = sbr.rel (0) target = $region37
    $region36: #{transformer_forward.17} parent=1 // pred_region
      %72 = dma.done [#allocation5], 16
    $region37: #{transformer_forward.17} parent=1 // pred_fallthru
      _
    // Predicated region
    $region38: #{transformer_forward.17} parent=1 // pred_check
      _
    $region39: #{transformer_forward.17} parent=1 // pred_check_branch
      %74 = sbr.rel (0) target = $region41
    $region40: #{transformer_forward.17} parent=1 // pred_region
      %76 = dma.done [#allocation5], 16
    $region41: #{transformer_forward.17} parent=1 // pred_fallthru
      _
    // Predicated region
    $region42: #{transformer_forward.17} parent=1 // pred_check
      _
    $region43: #{transformer_forward.17} parent=1 // pred_check_branch
      %78 = sbr.rel (0) target = $region45
    $region44: #{transformer_forward.17} parent=1 // pred_region
      %80 = dma.done [#allocation8], 16
    $region45: #{transformer_forward.17} parent=1 // pred_fallthru
      _
    %v81 = vld [vmem:[%s0] sm:$0xff]
    %v82 = vld [vmem:[%s0 + $0x8] sm:$0xff]
    %v83 = vld [vmem:[%s1] sm:$0xff]
    %v84 = vld [vmem:[%s1 + $0x8] sm:$0xff]
    %v85 = vld [vmem:[%s1 + $0x10] sm:$0xff]
    %v86 = vld [vmem:[%s1 + $0x18] sm:$0xff]
    %v87 = vld [vmem:[#allocation2] sm:$0x1]
    %v89 = vperm.slane %v87, 0
    %vm91 = vcmask 261120
    %v93 = vsel %vm91, %v81, 0
    %v96 = vsel %vm91, %v82, 0
    %98 = vmatpush.msra.mxu0 0.0
    %99 = vmatpush.msra.mxu0 0.0
    %100 = vmatpush.msra.mxu0 0.0
    %101 = vmatpush.msra.mxu0 0.0
    %102 = vmatpush.msra.mxu0 0.0
    %103 = vmatpush.msra.mxu0 0.0
    %104 = vmatpush.msra.mxu0 0.0
    %105 = vmatpush.msra.mxu0 0.0
    %106 = vmatpush.msra.mxu0 0.0
    %107 = vmatpush.msra.mxu0 0.0
    %108 = vmatpush.msra.mxu0 0.0
    %109 = vmatpush.msra.mxu0 0.0
    %110 = vmatpush.msra.mxu0 %v86
    %111 = vmatpush.msra.mxu0 %v85
    %112 = vmatpush.msra.mxu0 %v84
    %113 = vmatpush.msra.mxu0 %v83
    %114 = vmatmul.f32.gmra.mxu0 %v93
    %v115 = vpop.f32.mrf.mxu0
    %v116 = vadd.f32 %v89, %v115
    %117 = vmatmul.f32.gmra.mxu0 %v96
    %v118 = vpop.f32.mrf.mxu0
    %v119 = vadd.f32 %v89, %v118
    %120 = vdwg.mxu0
    %v121 = vmax.f32 %v116, 0.0
    %v122 = vmax.f32 %v119, 0.0
    %v123 = vld [vmem:[%s3] sm:$0xff]
    %v124 = vld [vmem:[%s3 + $0x8] sm:$0xff]
    %v125 = vld [vmem:[%s3 + $0x10] sm:$0xff]
    %v126 = vld [vmem:[%s3 + $0x18] sm:$0xff]
    %v127 = vld [vmem:[%s3 + $0x20] sm:$0xff]
    %v128 = vld [vmem:[%s3 + $0x28] sm:$0xff]
    %v129 = vld [vmem:[%s3 + $0x30] sm:$0xff]
    %v130 = vld [vmem:[%s3 + $0x38] sm:$0xff]
    %v131 = vld [vmem:[%s3 + $0x40] sm:$0xff]
    %v132 = vld [vmem:[%s3 + $0x48] sm:$0xff]
    %v133 = vld [vmem:[%s3 + $0x50] sm:$0xff]
    %v134 = vld [vmem:[%s3 + $0x58] sm:$0xff]
    %v135 = vld [vmem:[%s3 + $0x60] sm:$0xff]
    %v136 = vld [vmem:[%s3 + $0x68] sm:$0xff]
    %v137 = vld [vmem:[%s3 + $0x70] sm:$0xff]
    %v138 = vld [vmem:[%s3 + $0x78] sm:$0xff]
    %v139 = vld [vmem:[#allocation4] sm:$0x1]
    %v141 = vperm.slane %v139, 0
    %143 = vmatpush.msra.mxu0 %v138
    %144 = vmatpush.msra.mxu0 %v137
    %145 = vmatpush.msra.mxu0 %v136
    %146 = vmatpush.msra.mxu0 %v135
    %147 = vmatpush.msra.mxu0 %v134
    %148 = vmatpush.msra.mxu0 %v133
    %149 = vmatpush.msra.mxu0 %v132
    %150 = vmatpush.msra.mxu0 %v131
    %151 = vmatpush.msra.mxu0 %v130
    %152 = vmatpush.msra.mxu0 %v129
    %153 = vmatpush.msra.mxu0 %v128
    %154 = vmatpush.msra.mxu0 %v127
    %155 = vmatpush.msra.mxu0 %v126
    %156 = vmatpush.msra.mxu0 %v125
    %157 = vmatpush.msra.mxu0 %v124
    %158 = vmatpush.msra.mxu0 %v123
    %159 = vmatmul.f32.gmra.mxu0 %v121
    %v160 = vpop.f32.mrf.mxu0
    %v161 = vadd.f32 %v141, %v160
    %162 = vmatmul.f32.gmra.mxu0 %v122
    %v163 = vpop.f32.mrf.mxu0
    %v164 = vadd.f32 %v141, %v163
    %165 = vdwg.mxu0
    %v166 = vadd.f32 %v81, %v161
    %v167 = vadd.f32 %v82, %v164
    %v168 = vld [vmem:[#allocation6] sm:$0x1]
    %v169 = vld [vmem:[#allocation7] sm:$0x1]
    %v170 = vsel %vm91, %v166, 0.0
    %171 = vadd.xlane.f32.xlu0 %v170
    %v172 = vpop.xlane.xlu0 %171
    %v173 = vsel %vm91, %v167, 0.0
    %174 = vadd.xlane.f32.xlu0 %v173
    %v175 = vpop.xlane.xlu0 %174
    %v176 = vrcp.pop 32.0
    %v177 = vmul.f32 32.0, %v176
    %v178 = vsub.f32 1.0, %v177
    %v179 = vmul.f32 %v176, %v178
    %v180 = vadd.f32 %v176, %v179
    %vm181 = vweird.f32 %v176
    %v182 = vsel %vm181, %v176, %v180
    %v183 = vmul.f32 %v172, %v182
    %v184 = vmul.f32 %v175, %v182
    %v185 = vsub.f32 %v166, %v183
    %v186 = vsub.f32 %v167, %v184
    %v187 = vmul.f32 %v185, %v185
    %v188 = vmul.f32 %v186, %v186
    %v189 = vsel %vm91, %v187, 0.0
    %190 = vadd.xlane.f32.xlu0 %v189
    %v191 = vpop.xlane.xlu0 %190
    %v192 = vsel %vm91, %v188, 0.0
    %193 = vadd.xlane.f32.xlu0 %v192
    %v194 = vpop.xlane.xlu0 %193
    %v195 = vmul.f32 %v191, %v182
    %v196 = vmul.f32 %v194, %v182
    %v197 = vadd.f32 %v195, 1e-05
    %v198 = vadd.f32 %v196, 1e-05
    %v199 = vrsqrt.pop %v197
    %v200 = vmul.f32 %v199, %v197
    %v201 = vmul.f32 %v200, %v199
    %v202 = vmul.f32 0.5, %v201
    %v203 = vsub.f32 1.5, %v202
    %v204 = vmul.f32 %v199, %v203
    %vm205 = vweird.f32 %v197
    %vm206 = vweird.f32 %v199
    %vm207 = vmor %vm205, %vm206
    %v208 = vsel %vm207, %v199, %v204
    %v209 = vrsqrt.pop %v198
    %v210 = vmul.f32 %v209, %v198
    %v211 = vmul.f32 %v210, %v209
    %v212 = vmul.f32 0.5, %v211
    %v213 = vsub.f32 1.5, %v212
    %v214 = vmul.f32 %v209, %v213
    %vm215 = vweird.f32 %v198
    %vm216 = vweird.f32 %v209
    %vm217 = vmor %vm215, %vm216
    %v218 = vsel %vm217, %v209, %v214
    %v219 = vmul.f32 %v185, %v208
    %v220 = vmul.f32 %v186, %v218
    %v222 = vperm.slane %v168, 0
    %v224 = vmul.f32 %v219, %v222
    %v225 = vmul.f32 %v220, %v222
    %v227 = vperm.slane %v169, 0
    %v229 = vadd.f32 %v224, %v227
    %v230 = vadd.f32 %v225, %v227
    %231 = vst.msk [vmem:[%s7] sm:$0xff] %vm91, %v229
    %232 = vst.msk [vmem:[%s7 + $0x8] sm:$0xff] %vm91, %v230
    // Predicated region
    $region46: #{transformer_forward.17} parent=1 // pred_check
      _
    $region47: #{transformer_forward.17} parent=1 // pred_check_branch
      %234 = sbr.rel (0) target = $region49
    $region48: #{transformer_forward.17} parent=1 // pred_region
      _
    $region49: #{transformer_forward.17} parent=1 // pred_fallthru
      _
    // Predicated region
    $region50: #{transformer_forward.17} parent=1 // pred_check
      _
    $region51: #{transformer_forward.17} parent=1 // pred_check_branch
      %236 = sbr.rel (0) target = $region53
    $region52: #{transformer_forward.17} parent=1 // pred_region
      _
    $region53: #{transformer_forward.17} parent=1 // pred_fallthru
      _
    %237 = vsyncpa [#allocation3], 1
    %238 = vsyncpa [#allocation5], 1
    %239 = vsyncpa [#allocation8], 1

// kernel: transformer_forward.21
$region0: #{transformer_forward.21}
  #allocation0 [shape = 'u32[]', space=smem, size = 0x4, offset = 0x4, fixed_abs, tag = 'smem constant byte address 0x4 - core index']
  #allocation1 [shape = 'u32[72,128]{1,0:T(1,128)}', space=vmem, size = 0x9000, scoped, tag = 'internal scratch']
  %s0 = inlined_call_operand.vmem [shape: f32[16,32], index: 0, kind: input, shape index: {}]
  %s1 = inlined_call_operand.vmem [shape: f32[32,128], index: 1, kind: input, shape index: {}]
  %s2 = inlined_call_operand.vmem [shape: f32[1,128], index: 2, kind: input, shape index: {}]
  %s3 = inlined_call_operand.vmem [shape: f32[16,128], index: 3, kind: output, shape index: {}]
  %s4 = sld [smem:[#allocation0]]
  $region22: #{transformer_forward.21} parent=0
    _
  %s6 = ssub.s32 1, %s4
  %s7 = scalar_select 0, %s6, %s4
  // Predicated region
  $region2: #{transformer_forward.21} parent=0 // pred_check
    _
  $region3: #{transformer_forward.21} parent=0 // pred_check_branch
    %9 = sbr.rel (0) target = $region5
  $region4: #{transformer_forward.21} parent=0 // pred_region
    _
  $region5: #{transformer_forward.21} parent=0 // pred_fallthru
    _
  // Predicated region
  $region6: #{transformer_forward.21} parent=0 // pred_check
    _
  $region7: #{transformer_forward.21} parent=0 // pred_check_branch
    %11 = sbr.rel (0) target = $region9
  $region8: #{transformer_forward.21} parent=0 // pred_region
    _
  $region9: #{transformer_forward.21} parent=0 // pred_fallthru
    _
  // Predicated region
  $region10: #{transformer_forward.21} parent=0 // pred_check
    _
  $region11: #{transformer_forward.21} parent=0 // pred_check_branch
    %13 = sbr.rel (0) target = $region13
  $region12: #{transformer_forward.21} parent=0 // pred_region
    _
  $region13: #{transformer_forward.21} parent=0 // pred_fallthru
    _
  %v14 = vld [vmem:[%s0] sm:$0xff]
  %v15 = vld [vmem:[%s0 + $0x8] sm:$0xff]
  %v16 = vld [vmem:[%s1] sm:$0xff]
  %v17 = vld [vmem:[%s1 + $0x8] sm:$0xff]
  %v18 = vld [vmem:[%s1 + $0x10] sm:$0xff]
  %v19 = vld [vmem:[%s1 + $0x18] sm:$0xff]
  %v20 = vld [vmem:[%s2] sm:$0x1]
  %v22 = vperm.slane %v20, 0
  %vm24 = vcmask 261120
  %v26 = vsel %vm24, %v14, 0
  %v29 = vsel %vm24, %v15, 0
  %31 = vmatpush.msra.mxu0 0.0
  %32 = vmatpush.msra.mxu0 0.0
  %33 = vmatpush.msra.mxu0 0.0
  %34 = vmatpush.msra.mxu0 0.0
  %35 = vmatpush.msra.mxu0 0.0
  %36 = vmatpush.msra.mxu0 0.0
  %37 = vmatpush.msra.mxu0 0.0
  %38 = vmatpush.msra.mxu0 0.0
  %39 = vmatpush.msra.mxu0 0.0
  %40 = vmatpush.msra.mxu0 0.0
  %41 = vmatpush.msra.mxu0 0.0
  %42 = vmatpush.msra.mxu0 0.0
  %43 = vmatpush.msra.mxu0 %v19
  %44 = vmatpush.msra.mxu0 %v18
  %45 = vmatpush.msra.mxu0 %v17
  %46 = vmatpush.msra.mxu0 %v16
  %47 = vmatmul.f32.gmra.mxu0 %v26
  %v48 = vpop.f32.mrf.mxu0
  %v49 = vadd.f32 %v22, %v48
  %50 = vmatmul.f32.gmra.mxu0 %v29
  %v51 = vpop.f32.mrf.mxu0
  %v52 = vadd.f32 %v22, %v51
  %53 = vdwg.mxu0
  %54 = vst [vmem:[%s3] sm:$0xff] %v49
  %55 = vst [vmem:[%s3 + $0x8] sm:$0xff] %v52
  // Predicated region
  $region14: #{transformer_forward.21} parent=0 // pred_check
    _
  $region15: #{transformer_forward.21} parent=0 // pred_check_branch
    %57 = sbr.rel (0) target = $region17
  $region16: #{transformer_forward.21} parent=0 // pred_region
    _
  $region17: #{transformer_forward.21} parent=0 // pred_fallthru
    _
  // Predicated region
  $region18: #{transformer_forward.21} parent=0 // pred_check
    _
  $region19: #{transformer_forward.21} parent=0 // pred_check_branch
    %59 = sbr.rel (0) target = $region21
  $region20: #{transformer_forward.21} parent=0 // pred_region
    _
  $region21: #{transformer_forward.21} parent=0 // pred_fallthru
    _

// kernel: transformer_forward.18
$region0: #{transformer_forward.18}
  #allocation0 [shape = 'u32[]', space=smem, size = 0x4, offset = 0x4, fixed_abs, tag = 'smem constant byte address 0x4 - core index']
  #allocation1 [shape = 'u32[72,128]{1,0:T(1,128)}', space=vmem, size = 0x9000, scoped, tag = 'internal scratch']
  %s0 = inlined_call_operand.vmem [shape: f32[2,8,32], index: 0, kind: input, shape index: {}]
  %s1 = inlined_call_operand.vmem [shape: f32[32,96], index: 1, kind: input, shape index: {}]
  %s2 = inlined_call_operand.vmem [shape: f32[1,96], index: 2, kind: input, shape index: {}]
  %s3 = inlined_call_operand.vmem [shape: f32[32,32], index: 3, kind: input, shape index: {}]
  %s4 = inlined_call_operand.hbm [shape: f32[1,32], index: 4, kind: input, shape index: {}]
  %s5 = inlined_call_operand.hbm [shape: f32[1,32], index: 5, kind: input, shape index: {}]
  %s6 = inlined_call_operand.hbm [shape: f32[1,32], index: 6, kind: input, shape index: {}]
  %s7 = inlined_call_operand.vmem [shape: f32[2,8,32], index: 7, kind: output, shape index: {}]
  %s8 = sld [smem:[#allocation0]]
  $region73: #{transformer_forward.18} parent=0
    _
  %s10 = ssub.s32 1, %s8
  %s11 = scalar_select 0, %s10, %s8
  $region1: #{transformer_forward.18} parent=0
    #allocation2 [shape = 'u8[512]{0}', space=vmem, size = 0x400, scoped, tag = 'input window, operand 4, single buffered']
    #allocation3 [shape = 's32[2]{0}', space=sflag, size = 0x8, scoped, tag = 'scoped memory for transformer_forward.18']
    #allocation4 [shape = 'u8[512]{0}', space=vmem, size = 0x400, scoped, tag = 'input window, operand 5, single buffered']
    #allocation5 [shape = 's32[1]{0}', space=sflag, size = 0x4, scoped, tag = 'scoped memory for transformer_forward.18']
    #allocation6 [shape = 'u8[512]{0}', space=vmem, size = 0x400, scoped, tag = 'input window, operand 6, single buffered']
    %12 = vsyncpa [#allocation3], 0
    %13 = vsyncpa [#allocation5], 0
    loop: start=0, step=1, limit=4
    $region2: #{transformer_forward.18} parent=1 // loop_pre_header
      _
    $region3: #{transformer_forward.18} parent=1 // loop_header
      %s15 = sphi 0, %s19
      %p16 = scmp.ge.s32.totalorder %s15, 4
      %s25 = sphi 0, %s27
      %s28 = sphi 0, %s25
      %s29 = sphi 0, %s28
      %s45 = sphi 0, %s29
      %s49 = sphi 0, %s49
      %s51 = sphi 0, %s49
      %s52 = sphi 0, %s51
      %s66 = sphi 0, %s52
      %s70 = sphi 0, %s70
      %s72 = sphi 0, %s70
      %s73 = sphi 0, %s72
      %s87 = sphi 0, %s73
      %s91 = sphi 0, %s91
      %s93 = sphi 0, %s91
      %s94 = sphi 0, %s93
      %s108 = sphi 0, %s94
      %s112 = sphi 0, %s112
      %s114 = sphi 0, %s112
      %s115 = sphi 0, %s114
      %s129 = sphi 0, %s115
      %s133 = sphi 0, %s133
      %s135 = sphi 0, %s133
      %s136 = sphi 0, %s135
      %s150 = sphi 0, %s136
      %s154 = sphi 0, %s154
      %s156 = sphi 0, %s154
      %s157 = sphi 0, %s156
      %s171 = sphi 0, %s157
      %s177 = sphi 0, %s179
      %s180 = sphi 0, %s177
      %s181 = sphi 0, %s180
      %s197 = sphi 0, %s181
    $region4: #{transformer_forward.18} parent=1 // loop_header_branch
      %18 = sbr.rel (%p16) target = $region8
    $region5: #{transformer_forward.18} parent=1 // loop_body
      %s20 = ssub.s32 %s15, 1
      %s21 = ssub.s32 %s15, 2
      %s22 = sadd.s32 %s15, 1
      %s23 = ssub.s32 %s15, %s22
      %p24 = scmp.eq.s32.totalorder %s23, 0
      %s26 = sadd.s32 %s25, 1
      %s27 = scalar_select %p24, %s25, %s26
      %p30 = pneg %p24
      %p31 = scmp.eq.s32.totalorder %s15, 1
      %p32 = por %p30, %p31
      %p33 = scmp.ne.s32.totalorder %s25, %s28
      %p34 = scmp.eq.s32.totalorder %s15, 0
      %p35 = por %p33, %p34
      %p36 = scmp.ne.s32.totalorder %s25, %s28
      %p37 = scmp.eq.s32.totalorder %s20, 1
      %p38 = por %p36, %p37
      %p39 = scmp.ne.s32.totalorder %s28, %s29
      %p40 = scmp.eq.s32.totalorder %s20, 0
      %p41 = por %p39, %p40
      %p42 = scmp.ne.s32.totalorder %s28, %s29
      %p43 = scmp.eq.s32.totalorder %s21, 1
      %p44 = por %p42, %p43
      %p46 = scmp.ne.s32.totalorder %s29, %s45
      %p47 = scmp.eq.s32.totalorder %s21, 0
      %p48 = por %p46, %p47
      %s50 = sadd.s32 %s49, 1
      %p53 = scmp.eq.s32.totalorder %s15, 1
      %p54 = scmp.ne.s32.totalorder %s49, %s51
      %p55 = scmp.eq.s32.totalorder %s15, 0
      %p56 = por %p54, %p55
      %p57 = scmp.ne.s32.totalorder %s49, %s51
      %p58 = scmp.eq.s32.totalorder %s20, 1
      %p59 = por %p57, %p58
      %p60 = scmp.ne.s32.totalorder %s51, %s52
      %p61 = scmp.eq.s32.totalorder %s20, 0
      %p62 = por %p60, %p61
      %p63 = scmp.ne.s32.totalorder %s51, %s52
      %p64 = scmp.eq.s32.totalorder %s21, 1
      %p65 = por %p63, %p64
      %p67 = scmp.ne.s32.totalorder %s52, %s66
      %p68 = scmp.eq.s32.totalorder %s21, 0
      %p69 = por %p67, %p68
      %s71 = sadd.s32 %s70, 1
      %p74 = scmp.eq.s32.totalorder %s15, 1
      %p75 = scmp.ne.s32.totalorder %s70, %s72
      %p76 = scmp.eq.s32.totalorder %s15, 0
      %p77 = por %p75, %p76
      %p78 = scmp.ne.s32.totalorder %s70, %s72
      %p79 = scmp.eq.s32.totalorder %s20, 1
      %p80 = por %p78, %p79
      %p81 = scmp.ne.s32.totalorder %s72, %s73
      %p82 = scmp.eq.s32.totalorder %s20, 0
      %p83 = por %p81, %p82
      %p84 = scmp.ne.s32.totalorder %s72, %s73
      %p85 = scmp.eq.s32.totalorder %s21, 1
      %p86 = por %p84, %p85
      %p88 = scmp.ne.s32.totalorder %s73, %s87
      %p89 = scmp.eq.s32.totalorder %s21, 0
      %p90 = por %p88, %p89
      %s92 = sadd.s32 %s91, 1
      %p95 = scmp.eq.s32.totalorder %s15, 1
      %p96 = scmp.ne.s32.totalorder %s91, %s93
      %p97 = scmp.eq.s32.totalorder %s15, 0
      %p98 = por %p96, %p97
      %p99 = scmp.ne.s32.totalorder %s91, %s93
      %p100 = scmp.eq.s32.totalorder %s20, 1
      %p101 = por %p99, %p100
      %p102 = scmp.ne.s32.totalorder %s93, %s94
      %p103 = scmp.eq.s32.totalorder %s20, 0
      %p104 = por %p102, %p103
      %p105 = scmp.ne.s32.totalorder %s93, %s94
      %p106 = scmp.eq.s32.totalorder %s21, 1
      %p107 = por %p105, %p106
      %p109 = scmp.ne.s32.totalorder %s94, %s108
      %p110 = scmp.eq.s32.totalorder %s21, 0
      %p111 = por %p109, %p110
      %s113 = sadd.s32 %s112, 1
      %p116 = scmp.eq.s32.totalorder %s15, 1
      %p117 = scmp.ne.s32.totalorder %s112, %s114
      %p118 = scmp.eq.s32.totalorder %s15, 0
      %p119 = por %p117, %p118
      %p120 = scmp.ne.s32.totalorder %s112, %s114
      %p121 = scmp.eq.s32.totalorder %s20, 1
      %p122 = por %p120, %p121
      %p123 = scmp.ne.s32.totalorder %s114, %s115
      %p124 = scmp.eq.s32.totalorder %s20, 0
      %p125 = por %p123, %p124
      %p126 = scmp.ne.s32.totalorder %s114, %s115
      %p127 = scmp.eq.s32.totalorder %s21, 1
      %p128 = por %p126, %p127
      %p130 = scmp.ne.s32.totalorder %s115, %s129
      %p131 = scmp.eq.s32.totalorder %s21, 0
      %p132 = por %p130, %p131
      %s134 = sadd.s32 %s133, 1
      %p137 = scmp.eq.s32.totalorder %s15, 1
      %p138 = scmp.ne.s32.totalorder %s133, %s135
      %p139 = scmp.eq.s32.totalorder %s15, 0
      %p140 = por %p138, %p139
      %p141 = scmp.ne.s32.totalorder %s133, %s135
      %p142 = scmp.eq.s32.totalorder %s20, 1
      %p143 = por %p141, %p142
      %p144 = scmp.ne.s32.totalorder %s135, %s136
      %p145 = scmp.eq.s32.totalorder %s20, 0
      %p146 = por %p144, %p145
      %p147 = scmp.ne.s32.totalorder %s135, %s136
      %p148 = scmp.eq.s32.totalorder %s21, 1
      %p149 = por %p147, %p148
      %p151 = scmp.ne.s32.totalorder %s136, %s150
      %p152 = scmp.eq.s32.totalorder %s21, 0
      %p153 = por %p151, %p152
      %s155 = sadd.s32 %s154, 1
      %p158 = scmp.eq.s32.totalorder %s15, 1
      %p159 = scmp.ne.s32.totalorder %s154, %s156
      %p160 = scmp.eq.s32.totalorder %s15, 0
      %p161 = por %p159, %p160
      %p162 = scmp.ne.s32.totalorder %s154, %s156
      %p163 = scmp.eq.s32.totalorder %s20, 1
      %p164 = por %p162, %p163
      %p165 = scmp.ne.s32.totalorder %s156, %s157
      %p166 = scmp.eq.s32.totalorder %s20, 0
      %p167 = por %p165, %p166
      %p168 = scmp.ne.s32.totalorder %s156, %s157
      %p169 = scmp.eq.s32.totalorder %s21, 1
      %p170 = por %p168, %p169
      %p172 = scmp.ne.s32.totalorder %s157, %s171
      %p173 = scmp.eq.s32.totalorder %s21, 0
      %p174 = por %p172, %p173
      %s175 = ssub.s32 %s15, %s22
      %p176 = scmp.eq.s32.totalorder %s175, 0
      %s178 = sadd.s32 %s177, 1
      %s179 = scalar_select %p176, %s177, %s178
      %p182 = pneg %p176
      %p183 = scmp.eq.s32.totalorder %s15, 1
      %p184 = por %p182, %p183
      %p185 = scmp.ne.s32.totalorder %s177, %s180
      %p186 = scmp.eq.s32.totalorder %s15, 0
      %p187 = por %p185, %p186
      %p188 = scmp.ne.s32.totalorder %s177, %s180
      %p189 = scmp.eq.s32.totalorder %s20, 1
      %p190 = por %p188, %p189
      %p191 = scmp.ne.s32.totalorder %s180, %s181
      %p192 = scmp.eq.s32.totalorder %s20, 0
      %p193 = por %p191, %p192
      %p194 = scmp.ne.s32.totalorder %s180, %s181
      %p195 = scmp.eq.s32.totalorder %s21, 1
      %p196 = por %p194, %p195
      %p198 = scmp.ne.s32.totalorder %s181, %s197
      %p199 = scmp.eq.s32.totalorder %s21, 0
      %p200 = por %p198, %p199
      %p201 = scmp.le.s32.totalorder 1, %s15
      %p202 = scmp.lt.s32.totalorder %s15, 3
      %p203 = pnand %p201, %p202
      %p204 = pneg %p203
      // Predicated region
      $region9: #{transformer_forward.18} parent=5 // pred_check
        _
      $region10: #{transformer_forward.18} parent=5 // pred_check_branch
        %206 = sbr.rel (%p203) target = $region12
      $region11: #{transformer_forward.18} parent=5 // pred_region
        %s207 = ssub.s32 %s15, 1
        // Predicated region
        $region13: #{transformer_forward.18} parent=11 // pred_check
          %p208 = pneg %p62
        $region14: #{transformer_forward.18} parent=11 // pred_check_branch
          %210 = sbr.rel (%p208) target = $region16
        $region15: #{transformer_forward.18} parent=11 // pred_region
          _
        $region16: #{transformer_forward.18} parent=11 // pred_fallthru
          _
        // Predicated region
        $region17: #{transformer_forward.18} parent=11 // pred_check
          %p211 = pneg %p83
        $region18: #{transformer_forward.18} parent=11 // pred_check_branch
          %213 = sbr.rel (%p211) target = $region20
        $region19: #{transformer_forward.18} parent=11 // pred_region
          _
        $region20: #{transformer_forward.18} parent=11 // pred_fallthru
          _
        // Predicated region
        $region21: #{transformer_forward.18} parent=11 // pred_check
          %p214 = pneg %p104
        $region22: #{transformer_forward.18} parent=11 // pred_check_branch
          %216 = sbr.rel (%p214) target = $region24
        $region23: #{transformer_forward.18} parent=11 // pred_region
          _
        $region24: #{transformer_forward.18} parent=11 // pred_fallthru
          _
        // Predicated region
        $region25: #{transformer_forward.18} parent=11 // pred_check
          %p217 = pneg %p125
        $region26: #{transformer_forward.18} parent=11 // pred_check_branch
          %219 = sbr.rel (%p217) target = $region28
        $region27: #{transformer_forward.18} parent=11 // pred_region
          %221 = vsyncadd [#allocation3], 0
          %s223 = sshll.u32 %s4, 4
          %s224 = int_to_ptr.hbm [resolvable:$true] %s223
          %s225 = sshll.u32 [#allocation2], 4
          %s226 = int_to_ptr.vmem [resolvable:$true] %s225
          %228 = dma.hbm_to_vmem [thread:$0]  %s224, 16, %s226, [#allocation3]
        $region28: #{transformer_forward.18} parent=11 // pred_fallthru
          _
        // Predicated region
        $region29: #{transformer_forward.18} parent=11 // pred_check
          %p229 = pneg %p146
        $region30: #{transformer_forward.18} parent=11 // pred_check_branch
          %231 = sbr.rel (%p229) target = $region32
        $region31: #{transformer_forward.18} parent=11 // pred_region
          %233 = vsyncadd [#allocation5], 0
          %s235 = sshll.u32 %s5, 4
          %s236 = int_to_ptr.hbm [resolvable:$true] %s235
          %s237 = sshll.u32 [#allocation4], 4
          %s238 = int_to_ptr.vmem [resolvable:$true] %s237
          %240 = dma.hbm_to_vmem [thread:$0]  %s236, 16, %s238, [#allocation5]
        $region32: #{transformer_forward.18} parent=11 // pred_fallthru
          _
        // Predicated region
        $region33: #{transformer_forward.18} parent=11 // pred_check
          %p241 = pneg %p167
        $region34: #{transformer_forward.18} parent=11 // pred_check_branch
          %243 = sbr.rel (%p241) target = $region36
        $region35: #{transformer_forward.18} parent=11 // pred_region
          %245 = vsyncadd [#allocation5], 0
          %s247 = sshll.u32 %s6, 4
          %s248 = int_to_ptr.hbm [resolvable:$true] %s247
          %s249 = sshll.u32 [#allocation6], 4
          %s250 = int_to_ptr.vmem [resolvable:$true] %s249
          %252 = dma.hbm_to_vmem [thread:$0]  %s248, 16, %s250, [#allocation5]
        $region36: #{transformer_forward.18} parent=11 // pred_fallthru
          _
      $region12: #{transformer_forward.18} parent=5 // pred_fallthru
        _
      %p253 = scmp.lt.s32.totalorder %s15, 2
      // Predicated region
      $region37: #{transformer_forward.18} parent=5 // pred_check
        %p254 = pneg %p253
      $region38: #{transformer_forward.18} parent=5 // pred_check_branch
        %256 = sbr.rel (%p254) target = $region40
      $region39: #{transformer_forward.18} parent=5 // pred_region
        // Predicated region
        $region41: #{transformer_forward.18} parent=39 // pred_check
          %p257 = pneg %p35
        $region42: #{transformer_forward.18} parent=39 // pred_check_branch
          %259 = sbr.rel (%p257) target = $region44
        $region43: #{transformer_forward.18} parent=39 // pred_region
          %p260 = scmp.lt.s32.totalorder %s15, 1
          %s261 = scalar_select %p260, %s15, 1
          %s262 = smul.addr %s261, 8
          %s263 = scalar_lea.vmem %s0, %s262
        $region44: #{transformer_forward.18} parent=39 // pred_fallthru
          _
      $region40: #{transformer_forward.18} parent=5 // pred_fallthru
        _
      %p264 = scmp.le.s32.totalorder 1, %s15
      %p265 = scmp.lt.s32.totalorder %s15, 3
      %p266 = pnand %p264, %p265
      %p267 = pneg %p266
      // Predicated region
      $region45: #{transformer_forward.18} parent=5 // pred_check
        _
      $region46: #{transformer_forward.18} parent=5 // pred_check_branch
        %269 = sbr.rel (%p266) target = $region48
      $region47: #{transformer_forward.18} parent=5 // pred_region
        %s270 = ssub.s32 %s15, 1
        // Predicated region
        $region49: #{transformer_forward.18} parent=47 // pred_check
          %p271 = pneg %p125
        $region50: #{transformer_forward.18} parent=47 // pred_check_branch
          %273 = sbr.rel (%p271) target = $region52
        $region51: #{transformer_forward.18} parent=47 // pred_region
          %275 = dma.done [#allocation3], 16
        $region52: #{transformer_forward.18} parent=47 // pred_fallthru
          _
        // Predicated region
        $region53: #{transformer_forward.18} parent=47 // pred_check
          %p276 = pneg %p146
        $region54: #{transformer_forward.18} parent=47 // pred_check_branch
          %278 = sbr.rel (%p276) target = $region56
        $region55: #{transformer_forward.18} parent=47 // pred_region
          %280 = dma.done [#allocation5], 16
        $region56: #{transformer_forward.18} parent=47 // pred_fallthru
          _
        // Predicated region
        $region57: #{transformer_forward.18} parent=47 // pred_check
          %p281 = pneg %p167
        $region58: #{transformer_forward.18} parent=47 // pred_check_branch
          %283 = sbr.rel (%p281) target = $region60
        $region59: #{transformer_forward.18} parent=47 // pred_region
          %285 = dma.done [#allocation5], 16
        $region60: #{transformer_forward.18} parent=47 // pred_fallthru
          _
        %p286 = scmp.lt.s32.totalorder %s20, 1
        %s287 = scalar_select %p286, %s20, 1
        %s288 = smul.addr %s287, 8
        %s289 = scalar_lea.vmem %s0, %s288
        %p290 = pneg %p41
        %p291 = pneg %p38
        %p292 = pneg %p62
        %p293 = pneg %p59
        %p294 = pneg %p83
        %p295 = pneg %p80
        %p296 = pneg %p104
        %p297 = pneg %p101
        %p298 = pneg %p125
        %p299 = pneg %p122
        %p300 = pneg %p146
        %p301 = pneg %p143
        %p302 = pneg %p167
        %p303 = pneg %p164
        %p304 = pneg %p193
        %p305 = pneg %p190
        %p306 = scmp.lt.s32.totalorder %s20, 1
        %s307 = scalar_select %p306, %s20, 1
        %s308 = smul.addr %s307, 8
        %s309 = scalar_lea.vmem %s7, %s308
        %p310 = scmp.lt.s32.totalorder %s20, 1
        %s311 = scalar_select %p310, %s20, 1
        %s312 = smul.addr %s311, 8
        %s313 = scalar_lea.vmem %s0, %s312
        %p314 = scmp.lt.s32.totalorder %s20, 1
        %s315 = scalar_select %p314, %s20, 1
        %s316 = smul.addr %s315, 8
        %s317 = scalar_lea.vmem %s7, %s316
        %v318 = vld [vmem:[%s313] sm:$0xff]
        %v319 = vld [vmem:[%s1] sm:$0xff]
        %v320 = vld [vmem:[%s1 + $0x8] sm:$0xff]
        %v321 = vld [vmem:[%s1 + $0x10] sm:$0xff]
        %v322 = vld [vmem:[%s1 + $0x18] sm:$0xff]
        %v323 = vld [vmem:[%s2] sm:$0x1]
        %v325 = vperm.slane %v323, 0
        %vm327 = vcmask 261120
        %v329 = vsel %vm327, %v318, 0
        %331 = vmatpush.msra.mxu0 0.0
        %332 = vmatpush.msra.mxu0 0.0
        %333 = vmatpush.msra.mxu0 0.0
        %334 = vmatpush.msra.mxu0 0.0
        %335 = vmatpush.msra.mxu0 0.0
        %336 = vmatpush.msra.mxu0 0.0
        %337 = vmatpush.msra.mxu0 0.0
        %338 = vmatpush.msra.mxu0 0.0
        %339 = vmatpush.msra.mxu0 0.0
        %340 = vmatpush.msra.mxu0 0.0
        %341 = vmatpush.msra.mxu0 0.0
        %342 = vmatpush.msra.mxu0 0.0
        %343 = vmatpush.msra.mxu0 %v322
        %344 = vmatpush.msra.mxu0 %v321
        %345 = vmatpush.msra.mxu0 %v320
        %346 = vmatpush.msra.mxu0 %v319
        %347 = vmatmul.f32.gmra.mxu0 %v329
        %v348 = vpop.f32.mrf.mxu0
        %v349 = vadd.f32 %v325, %v348
        %350 = vdwg.mxu0
        %v351 = vlaneseq
        %v352 = vshrl.u32 %v351, 7
        %v353 = vlaneseq
        %v354 = vand.u32 %v353, 127
        %vm355 = vcmp.le.s32.totalorder %v354, %v352
        %357 = vrot.lane.b32.xlu0 %v349, 96
        %v358 = vpop.permute.xlu0 %357
        %vm359 = vcmask 64512
        %v360 = vsel %vm359, %v349, 0
        %v362 = vsel %vm359, %v358, 0
        %364 = vmatpush.xpose.msra.mxu0 0.0
        %365 = vmatpush.xpose.msra.mxu0 0.0
        %366 = vmatpush.xpose.msra.mxu0 0.0
        %367 = vmatpush.xpose.msra.mxu0 0.0
        %368 = vmatpush.xpose.msra.mxu0 0.0
        %369 = vmatpush.xpose.msra.mxu0 0.0
        %370 = vmatpush.xpose.msra.mxu0 0.0
        %371 = vmatpush.xpose.msra.mxu0 0.0
        %372 = vmatpush.xpose.msra.mxu0 0.0
        %373 = vmatpush.xpose.msra.mxu0 0.0
        %374 = vmatpush.xpose.msra.mxu0 0.0
        %375 = vmatpush.xpose.msra.mxu0 0.0
        %376 = vmatpush.xpose.msra.mxu0 0.0
        %377 = vmatpush.xpose.msra.mxu0 0.0
        %378 = vmatpush.xpose.msra.mxu0 0.0
        %379 = vmatpush.xpose.msra.mxu0 %v362
        %380 = vmatmul.f32.gmra.mxu0 %v360
        %v381 = vpop.f32.mrf.mxu0
        %v382 = vadd.f32 0.0, %v381
        %383 = vdwg.mxu0
        %v384 = vsel %vm355, %v382, -1e+30
        %v385 = vsel %vm359, %v384, -inf
        %386 = vmax.xlane.f32.xlu0 %v385
        %v387 = vpop.xlane.xlu0 %386
        %v388 = vsub.f32 %v384, %v387
        %v389 = vmul.f32 %v388, 1.442695
        %v390 = vpow.pop %v389
        %v391 = vsel %vm359, %v390, 0.0
        %392 = vadd.xlane.f32.xlu0 %v391
        %v393 = vpop.xlane.xlu0 %392
        %v394 = vrcp.pop %v393
        %v395 = vmul.f32 %v390, %v394
        %396 = vrot.lane.b32.xlu0 %v349, 64
        %v397 = vpop.permute.xlu0 %396
        %v400 = vsel %vm359, %v395, 0
        %402 = vmatpush.msra.mxu0 0.0
        %403 = vmatpush.msra.mxu0 0.0
        %404 = vmatpush.msra.mxu0 0.0
        %405 = vmatpush.msra.mxu0 0.0
        %406 = vmatpush.msra.mxu0 0.0
        %407 = vmatpush.msra.mxu0 0.0
        %408 = vmatpush.msra.mxu0 0.0
        %409 = vmatpush.msra.mxu0 0.0
        %410 = vmatpush.msra.mxu0 0.0
        %411 = vmatpush.msra.mxu0 0.0
        %412 = vmatpush.msra.mxu0 0.0
        %413 = vmatpush.msra.mxu0 0.0
        %414 = vmatpush.msra.mxu0 0.0
        %415 = vmatpush.msra.mxu0 0.0
        %416 = vmatpush.msra.mxu0 0.0
        %417 = vmatpush.msra.mxu0 %v397
        %418 = vmatmul.f32.gmra.mxu0 %v400
        %v419 = vpop.f32.mrf.mxu0
        %v420 = vadd.f32 0.0, %v419
        %421 = vdwg.mxu0
        %422 = vrot.lane.b32.xlu0 %v349, 120
        %v423 = vpop.permute.xlu0 %422
        %424 = vrot.lane.b32.xlu0 %v349, 88
        %v425 = vpop.permute.xlu0 %424
        %v426 = vsel %vm359, %v423, 0
        %v428 = vsel %vm359, %v425, 0
        %430 = vmatpush.xpose.msra.mxu0 0.0
        %431 = vmatpush.xpose.msra.mxu0 0.0
        %432 = vmatpush.xpose.msra.mxu0 0.0
        %433 = vmatpush.xpose.msra.mxu0 0.0
        %434 = vmatpush.xpose.msra.mxu0 0.0
        %435 = vmatpush.xpose.msra.mxu0 0.0
        %436 = vmatpush.xpose.msra.mxu0 0.0
        %437 = vmatpush.xpose.msra.mxu0 0.0
        %438 = vmatpush.xpose.msra.mxu0 0.0
        %439 = vmatpush.xpose.msra.mxu0 0.0
        %440 = vmatpush.xpose.msra.mxu0 0.0
        %441 = vmatpush.xpose.msra.mxu0 0.0
        %442 = vmatpush.xpose.msra.mxu0 0.0
        %443 = vmatpush.xpose.msra.mxu0 0.0
        %444 = vmatpush.xpose.msra.mxu0 0.0
        %445 = vmatpush.xpose.msra.mxu0 %v428
        %446 = vmatmul.f32.gmra.mxu0 %v426
        %v447 = vpop.f32.mrf.mxu0
        %v448 = vadd.f32 0.0, %v447
        %449 = vdwg.mxu0
        %v450 = vsel %vm355, %v448, -1e+30
        %v451 = vsel %vm359, %v450, -inf
        %452 = vmax.xlane.f32.xlu0 %v451
        %v453 = vpop.xlane.xlu0 %452
        %v454 = vsub.f32 %v450, %v453
        %v455 = vmul.f32 %v454, 1.442695
        %v456 = vpow.pop %v455
        %v457 = vsel %vm359, %v456, 0.0
        %458 = vadd.xlane.f32.xlu0 %v457
        %v459 = vpop.xlane.xlu0 %458
        %v460 = vrcp.pop %v459
        %v461 = vmul.f32 %v456, %v460
        %462 = vrot.lane.b32.xlu0 %v349, 56
        %v463 = vpop.permute.xlu0 %462
        %v466 = vsel %vm359, %v461, 0
        %468 = vmatpush.msra.mxu0 0.0
        %469 = vmatpush.msra.mxu0 0.0
        %470 = vmatpush.msra.mxu0 0.0
        %471 = vmatpush.msra.mxu0 0.0
        %472 = vmatpush.msra.mxu0 0.0
        %473 = vmatpush.msra.mxu0 0.0
        %474 = vmatpush.msra.mxu0 0.0
        %475 = vmatpush.msra.mxu0 0.0
        %476 = vmatpush.msra.mxu0 0.0
        %477 = vmatpush.msra.mxu0 0.0
        %478 = vmatpush.msra.mxu0 0.0
        %479 = vmatpush.msra.mxu0 0.0
        %480 = vmatpush.msra.mxu0 0.0
        %481 = vmatpush.msra.mxu0 0.0
        %482 = vmatpush.msra.mxu0 0.0
        %483 = vmatpush.msra.mxu0 %v463
        %484 = vmatmul.f32.gmra.mxu0 %v466
        %v485 = vpop.f32.mrf.mxu0
        %v486 = vadd.f32 0.0, %v485
        %487 = vdwg.mxu0
        %488 = vrot.lane.b32.xlu0 %v349, 112
        %v489 = vpop.permute.xlu0 %488
        %490 = vrot.lane.b32.xlu0 %v349, 80
        %v491 = vpop.permute.xlu0 %490
        %v492 = vsel %vm359, %v489, 0
        %v494 = vsel %vm359, %v491, 0
        %496 = vmatpush.xpose.msra.mxu0 0.0
        %497 = vmatpush.xpose.msra.mxu0 0.0
        %498 = vmatpush.xpose.msra.mxu0 0.0
        %499 = vmatpush.xpose.msra.mxu0 0.0
        %500 = vmatpush.xpose.msra.mxu0 0.0
        %501 = vmatpush.xpose.msra.mxu0 0.0
        %502 = vmatpush.xpose.msra.mxu0 0.0
        %503 = vmatpush.xpose.msra.mxu0 0.0
        %504 = vmatpush.xpose.msra.mxu0 0.0
        %505 = vmatpush.xpose.msra.mxu0 0.0
        %506 = vmatpush.xpose.msra.mxu0 0.0
        %507 = vmatpush.xpose.msra.mxu0 0.0
        %508 = vmatpush.xpose.msra.mxu0 0.0
        %509 = vmatpush.xpose.msra.mxu0 0.0
        %510 = vmatpush.xpose.msra.mxu0 0.0
        %511 = vmatpush.xpose.msra.mxu0 %v494
        %512 = vmatmul.f32.gmra.mxu0 %v492
        %v513 = vpop.f32.mrf.mxu0
        %v514 = vadd.f32 0.0, %v513
        %515 = vdwg.mxu0
        %v516 = vsel %vm355, %v514, -1e+30
        %v517 = vsel %vm359, %v516, -inf
        %518 = vmax.xlane.f32.xlu0 %v517
        %v519 = vpop.xlane.xlu0 %518
        %v520 = vsub.f32 %v516, %v519
        %v521 = vmul.f32 %v520, 1.442695
        %v522 = vpow.pop %v521
        %v523 = vsel %vm359, %v522, 0.0
        %524 = vadd.xlane.f32.xlu0 %v523
        %v525 = vpop.xlane.xlu0 %524
        %v526 = vrcp.pop %v525
        %v527 = vmul.f32 %v522, %v526
        %528 = vrot.lane.b32.xlu0 %v349, 48
        %v529 = vpop.permute.xlu0 %528
        %v532 = vsel %vm359, %v527, 0
        %534 = vmatpush.msra.mxu0 0.0
        %535 = vmatpush.msra.mxu0 0.0
        %536 = vmatpush.msra.mxu0 0.0
        %537 = vmatpush.msra.mxu0 0.0
        %538 = vmatpush.msra.mxu0 0.0
        %539 = vmatpush.msra.mxu0 0.0
        %540 = vmatpush.msra.mxu0 0.0
        %541 = vmatpush.msra.mxu0 0.0
        %542 = vmatpush.msra.mxu0 0.0
        %543 = vmatpush.msra.mxu0 0.0
        %544 = vmatpush.msra.mxu0 0.0
        %545 = vmatpush.msra.mxu0 0.0
        %546 = vmatpush.msra.mxu0 0.0
        %547 = vmatpush.msra.mxu0 0.0
        %548 = vmatpush.msra.mxu0 0.0
        %549 = vmatpush.msra.mxu0 %v529
        %550 = vmatmul.f32.gmra.mxu0 %v532
        %v551 = vpop.f32.mrf.mxu0
        %v552 = vadd.f32 0.0, %v551
        %553 = vdwg.mxu0
        %554 = vrot.lane.b32.xlu0 %v349, 104
        %v555 = vpop.permute.xlu0 %554
        %556 = vrot.lane.b32.xlu0 %v349, 72
        %v557 = vpop.permute.xlu0 %556
        %v558 = vsel %vm359, %v555, 0
        %v560 = vsel %vm359, %v557, 0
        %562 = vmatpush.xpose.msra.mxu0 0.0
        %563 = vmatpush.xpose.msra.mxu0 0.0
        %564 = vmatpush.xpose.msra.mxu0 0.0
        %565 = vmatpush.xpose.msra.mxu0 0.0
        %566 = vmatpush.xpose.msra.mxu0 0.0
        %567 = vmatpush.xpose.msra.mxu0 0.0
        %568 = vmatpush.xpose.msra.mxu0 0.0
        %569 = vmatpush.xpose.msra.mxu0 0.0
        %570 = vmatpush.xpose.msra.mxu0 0.0
        %571 = vmatpush.xpose.msra.mxu0 0.0
        %572 = vmatpush.xpose.msra.mxu0 0.0
        %573 = vmatpush.xpose.msra.mxu0 0.0
        %574 = vmatpush.xpose.msra.mxu0 0.0
        %575 = vmatpush.xpose.msra.mxu0 0.0
        %576 = vmatpush.xpose.msra.mxu0 0.0
        %577 = vmatpush.xpose.msra.mxu0 %v560
        %578 = vmatmul.f32.gmra.mxu0 %v558
        %v579 = vpop.f32.mrf.mxu0
        %v580 = vadd.f32 0.0, %v579
        %581 = vdwg.mxu0
        %v582 = vsel %vm355, %v580, -1e+30
        %v583 = vsel %vm359, %v582, -inf
        %584 = vmax.xlane.f32.xlu0 %v583
        %v585 = vpop.xlane.xlu0 %584
        %v586 = vsub.f32 %v582, %v585
        %v587 = vmul.f32 %v586, 1.442695
        %v588 = vpow.pop %v587
        %v589 = vsel %vm359, %v588, 0.0
        %590 = vadd.xlane.f32.xlu0 %v589
        %v591 = vpop.xlane.xlu0 %590
        %v592 = vrcp.pop %v591
        %v593 = vmul.f32 %v588, %v592
        %594 = vrot.lane.b32.xlu0 %v349, 40
        %v595 = vpop.permute.xlu0 %594
        %v598 = vsel %vm359, %v593, 0
        %600 = vmatpush.msra.mxu0 0.0
        %601 = vmatpush.msra.mxu0 0.0
        %602 = vmatpush.msra.mxu0 0.0
        %603 = vmatpush.msra.mxu0 0.0
        %604 = vmatpush.msra.mxu0 0.0
        %605 = vmatpush.msra.mxu0 0.0
        %606 = vmatpush.msra.mxu0 0.0
        %607 = vmatpush.msra.mxu0 0.0
        %608 = vmatpush.msra.mxu0 0.0
        %609 = vmatpush.msra.mxu0 0.0
        %610 = vmatpush.msra.mxu0 0.0
        %611 = vmatpush.msra.mxu0 0.0
        %612 = vmatpush.msra.mxu0 0.0
        %613 = vmatpush.msra.mxu0 0.0
        %614 = vmatpush.msra.mxu0 0.0
        %615 = vmatpush.msra.mxu0 %v595
        %616 = vmatmul.f32.gmra.mxu0 %v598
        %v617 = vpop.f32.mrf.mxu0
        %v618 = vadd.f32 0.0, %v617
        %619 = vdwg.mxu0
        %621 = vrot.lane.b32.xlu0 %v486, 8
        %v622 = vpop.permute.xlu0 %621
        %625 = vrot.lane.b32.xlu0 %v552, 16
        %v626 = vpop.permute.xlu0 %625
        %629 = vrot.lane.b32.xlu0 %v618, 24
        %v630 = vpop.permute.xlu0 %629
        %v632 = vsel %vm359, %v420, %v622
        %vm633 = vcmask 130048
        %v634 = vsel %vm633, %v632, %v626
        %vm635 = vcmask 195584
        %v636 = vsel %vm635, %v634, %v630
        %v637 = vld [vmem:[%s3] sm:$0xff]
        %v638 = vld [vmem:[%s3 + $0x8] sm:$0xff]
        %v639 = vld [vmem:[%s3 + $0x10] sm:$0xff]
        %v640 = vld [vmem:[%s3 + $0x18] sm:$0xff]
        %v641 = vld [vmem:[#allocation2] sm:$0x1]
        %v643 = vperm.slane %v641, 0
        %v646 = vsel %vm327, %v636, 0
        %648 = vmatpush.msra.mxu0 0.0
        %649 = vmatpush.msra.mxu0 0.0
        %650 = vmatpush.msra.mxu0 0.0
        %651 = vmatpush.msra.mxu0 0.0
        %652 = vmatpush.msra.mxu0 0.0
        %653 = vmatpush.msra.mxu0 0.0
        %654 = vmatpush.msra.mxu0 0.0
        %655 = vmatpush.msra.mxu0 0.0
        %656 = vmatpush.msra.mxu0 0.0
        %657 = vmatpush.msra.mxu0 0.0
        %658 = vmatpush.msra.mxu0 0.0
        %659 = vmatpush.msra.mxu0 0.0
        %660 = vmatpush.msra.mxu0 %v640
        %661 = vmatpush.msra.mxu0 %v639
        %662 = vmatpush.msra.mxu0 %v638
        %663 = vmatpush.msra.mxu0 %v637
        %664 = vmatmul.f32.gmra.mxu0 %v646
        %v665 = vpop.f32.mrf.mxu0
        %v666 = vadd.f32 %v643, %v665
        %667 = vdwg.mxu0
        %v668 = vadd.f32 %v318, %v666
        %v669 = vld [vmem:[#allocation4] sm:$0x1]
        %v670 = vld [vmem:[#allocation6] sm:$0x1]
        %v671 = vsel %vm327, %v668, 0.0
        %672 = vadd.xlane.f32.xlu0 %v671
        %v673 = vpop.xlane.xlu0 %672
        %v674 = vrcp.pop 32.0
        %v675 = vmul.f32 32.0, %v674
        %v676 = vsub.f32 1.0, %v675
        %v677 = vmul.f32 %v674, %v676
        %v678 = vadd.f32 %v674, %v677
        %vm679 = vweird.f32 %v674
        %v680 = vsel %vm679, %v674, %v678
        %v681 = vmul.f32 %v673, %v680
        %v682 = vsub.f32 %v668, %v681
        %v683 = vmul.f32 %v682, %v682
        %v684 = vsel %vm327, %v683, 0.0
        %685 = vadd.xlane.f32.xlu0 %v684
        %v686 = vpop.xlane.xlu0 %685
        %v687 = vmul.f32 %v686, %v680
        %v688 = vadd.f32 %v687, 1e-05
        %v689 = vrsqrt.pop %v688
        %v690 = vmul.f32 %v689, %v688
        %v691 = vmul.f32 %v690, %v689
        %v692 = vmul.f32 0.5, %v691
        %v693 = vsub.f32 1.5, %v692
        %v694 = vmul.f32 %v689, %v693
        %vm695 = vweird.f32 %v688
        %vm696 = vweird.f32 %v689
        %vm697 = vmor %vm695, %vm696
        %v698 = vsel %vm697, %v689, %v694
        %v699 = vmul.f32 %v682, %v698
        %v701 = vperm.slane %v669, 0
        %v703 = vmul.f32 %v699, %v701
        %v705 = vperm.slane %v670, 0
        %v707 = vadd.f32 %v703, %v705
        %708 = vst.msk [vmem:[%s317] sm:$0xff] %vm327, %v707
        %p709 = scmp.lt.s32.totalorder %s20, 1
        %s710 = scalar_select %p709, %s20, 1
        %s711 = smul.addr %s710, 8
        %s712 = scalar_lea.vmem %s7, %s711
        // Predicated region
        $region61: #{transformer_forward.18} parent=47 // pred_check
          %p713 = pneg %p190
        $region62: #{transformer_forward.18} parent=47 // pred_check_branch
          %715 = sbr.rel (%p713) target = $region64
        $region63: #{transformer_forward.18} parent=47 // pred_region
          _
        $region64: #{transformer_forward.18} parent=47 // pred_fallthru
          _
      $region48: #{transformer_forward.18} parent=5 // pred_fallthru
        _
      %p716 = scmp.le.s32.totalorder 2, %s15
      // Predicated region
      $region65: #{transformer_forward.18} parent=5 // pred_check
        %p717 = pneg %p716
      $region66: #{transformer_forward.18} parent=5 // pred_check_branch
        %719 = sbr.rel (%p717) target = $region68
      $region67: #{transformer_forward.18} parent=5 // pred_region
        %s720 = ssub.s32 %s15, 2
        // Predicated region
        $region69: #{transformer_forward.18} parent=67 // pred_check
          %p721 = pneg %p196
        $region70: #{transformer_forward.18} parent=67 // pred_check_branch
          %723 = sbr.rel (%p721) target = $region72
        $region71: #{transformer_forward.18} parent=67 // pred_region
          %p724 = scmp.lt.s32.totalorder %s21, 1
          %s725 = scalar_select %p724, %s21, 1
          %s726 = smul.addr %s725, 8
          %s727 = scalar_lea.vmem %s7, %s726
        $region72: #{transformer_forward.18} parent=67 // pred_fallthru
          _
      $region68: #{transformer_forward.18} parent=5 // pred_fallthru
        _
    $region6: #{transformer_forward.18} parent=1 // loop_footer
      %s19 = sadd.s32 1, %s15
    $region7: #{transformer_forward.18} parent=1 // loop_footer_branch
      %14 = sbr.rel target = $region3
    $region8: #{transformer_forward.18} parent=1 // loop_exit
      _
    %728 = vsyncpa [#allocation3], 1
    %s729 = scalar_lea.sflag [#allocation3], 1
    %730 = vsyncpa %s729, 1
    %731 = vsyncpa [#allocation5], 1

// kernel: transformer_forward.19
$region0: #{transformer_forward.19}
  #allocation0 [shape = 'u32[]', space=smem, size = 0x4, offset = 0x4, fixed_abs, tag = 'smem constant byte address 0x4 - core index']
  #allocation1 [shape = 'u32[72,128]{1,0:T(1,128)}', space=vmem, size = 0x9000, scoped, tag = 'internal scratch']
  %s0 = inlined_call_operand.vmem [shape: f32[2,8,32], index: 0, kind: input, shape index: {}]
  %s1 = inlined_call_operand.vmem [shape: f32[2,8,32], index: 1, kind: input, shape index: {}]
  %s2 = inlined_call_operand.vmem [shape: f32[32,32], index: 2, kind: input, shape index: {}]
  %s3 = inlined_call_operand.vmem [shape: f32[1,32], index: 3, kind: input, shape index: {}]
  %s4 = inlined_call_operand.vmem [shape: f32[32,64], index: 4, kind: input, shape index: {}]
  %s5 = inlined_call_operand.hbm [shape: f32[1,64], index: 5, kind: input, shape index: {}]
  %s6 = inlined_call_operand.vmem [shape: f32[32,32], index: 6, kind: input, shape index: {}]
  %s7 = inlined_call_operand.hbm [shape: f32[1,32], index: 7, kind: input, shape index: {}]
  %s8 = inlined_call_operand.hbm [shape: f32[1,32], index: 8, kind: input, shape index: {}]
  %s9 = inlined_call_operand.hbm [shape: f32[1,32], index: 9, kind: input, shape index: {}]
  %s10 = inlined_call_operand.vmem [shape: f32[2,8,32], index: 10, kind: output, shape index: {}]
  %s11 = sld [smem:[#allocation0]]
  $region89: #{transformer_forward.19} parent=0
    _
  %s13 = ssub.s32 1, %s11
  %s14 = scalar_select 0, %s13, %s11
  $region1: #{transformer_forward.19} parent=0
    #allocation2 [shape = 'u8[512]{0}', space=vmem, size = 0x400, scoped, tag = 'input window, operand 5, single buffered']
    #allocation3 [shape = 's32[2]{0}', space=sflag, size = 0x8, scoped, tag = 'scoped memory for transformer_forward.19']
    #allocation4 [shape = 'u8[512]{0}', space=vmem, size = 0x400, scoped, tag = 'input window, operand 7, single buffered']
    #allocation5 [shape = 's32[1]{0}', space=sflag, size = 0x4, scoped, tag = 'scoped memory for transformer_forward.19']
    #allocation6 [shape = 'u8[512]{0}', space=vmem, size = 0x400, scoped, tag = 'input window, operand 8, single buffered']
    #allocation7 [shape = 'u8[512]{0}', space=vmem, size = 0x400, scoped, tag = 'input window, operand 9, single buffered']
    #allocation8 [shape = 's32[1]{0}', space=sflag, size = 0x4, scoped, tag = 'scoped memory for transformer_forward.19']
    %15 = vsyncpa [#allocation3], 0
    %16 = vsyncpa [#allocation5], 0
    %17 = vsyncpa [#allocation8], 0
    loop: start=0, step=1, limit=4
    $region2: #{transformer_forward.19} parent=1 // loop_pre_header
      _
    $region3: #{transformer_forward.19} parent=1 // loop_header
      %s19 = sphi 0, %s23
      %p20 = scmp.ge.s32.totalorder %s19, 4
      %s29 = sphi 0, %s31
      %s32 = sphi 0, %s29
      %s33 = sphi 0, %s32
      %s49 = sphi 0, %s33
      %s55 = sphi 0, %s57
      %s58 = sphi 0, %s55
      %s59 = sphi 0, %s58
      %s75 = sphi 0, %s59
      %s79 = sphi 0, %s79
      %s81 = sphi 0, %s79
      %s82 = sphi 0, %s81
      %s96 = sphi 0, %s82
      %s100 = sphi 0, %s100
      %s102 = sphi 0, %s100
      %s103 = sphi 0, %s102
      %s117 = sphi 0, %s103
      %s121 = sphi 0, %s121
      %s123 = sphi 0, %s121
      %s124 = sphi 0, %s123
      %s138 = sphi 0, %s124
      %s142 = sphi 0, %s142
      %s144 = sphi 0, %s142
      %s145 = sphi 0, %s144
      %s159 = sphi 0, %s145
      %s163 = sphi 0, %s163
      %s165 = sphi 0, %s163
      %s166 = sphi 0, %s165
      %s180 = sphi 0, %s166
      %s184 = sphi 0, %s184
      %s186 = sphi 0, %s184
      %s187 = sphi 0, %s186
      %s201 = sphi 0, %s187
      %s205 = sphi 0, %s205
      %s207 = sphi 0, %s205
      %s208 = sphi 0, %s207
      %s222 = sphi 0, %s208
      %s226 = sphi 0, %s226
      %s228 = sphi 0, %s226
      %s229 = sphi 0, %s228
      %s243 = sphi 0, %s229
      %s249 = sphi 0, %s251
      %s252 = sphi 0, %s249
      %s253 = sphi 0, %s252
      %s269 = sphi 0, %s253
    $region4: #{transformer_forward.19} parent=1 // loop_header_branch
      %22 = sbr.rel (%p20) target = $region8
    $region5: #{transformer_forward.19} parent=1 // loop_body
      %s24 = ssub.s32 %s19, 1
      %s25 = ssub.s32 %s19, 2
      %s26 = sadd.s32 %s19, 1
      %s27 = ssub.s32 %s19, %s26
      %p28 = scmp.eq.s32.totalorder %s27, 0
      %s30 = sadd.s32 %s29, 1
      %s31 = scalar_select %p28, %s29, %s30
      %p34 = pneg %p28
      %p35 = scmp.eq.s32.totalorder %s19, 1
      %p36 = por %p34, %p35
      %p37 = scmp.ne.s32.totalorder %s29, %s32
      %p38 = scmp.eq.s32.totalorder %s19, 0
      %p39 = por %p37, %p38
      %p40 = scmp.ne.s32.totalorder %s29, %s32
      %p41 = scmp.eq.s32.totalorder %s24, 1
      %p42 = por %p40, %p41
      %p43 = scmp.ne.s32.totalorder %s32, %s33
      %p44 = scmp.eq.s32.totalorder %s24, 0
      %p45 = por %p43, %p44
      %p46 = scmp.ne.s32.totalorder %s32, %s33
      %p47 = scmp.eq.s32.totalorder %s25, 1
      %p48 = por %p46, %p47
      %p50 = scmp.ne.s32.totalorder %s33, %s49
      %p51 = scmp.eq.s32.totalorder %s25, 0
      %p52 = por %p50, %p51
      %s53 = ssub.s32 %s19, %s26
      %p54 = scmp.eq.s32.totalorder %s53, 0
      %s56 = sadd.s32 %s55, 1
      %s57 = scalar_select %p54, %s55, %s56
      %p60 = pneg %p54
      %p61 = scmp.eq.s32.totalorder %s19, 1
      %p62 = por %p60, %p61
      %p63 = scmp.ne.s32.totalorder %s55, %s58
      %p64 = scmp.eq.s32.totalorder %s19, 0
      %p65 = por %p63, %p64
      %p66 = scmp.ne.s32.totalorder %s55, %s58
      %p67 = scmp.eq.s32.totalorder %s24, 1
      %p68 = por %p66, %p67
      %p69 = scmp.ne.s32.totalorder %s58, %s59
      %p70 = scmp.eq.s32.totalorder %s24, 0
      %p71 = por %p69, %p70
      %p72 = scmp.ne.s32.totalorder %s58, %s59
      %p73 = scmp.eq.s32.totalorder %s25, 1
      %p74 = por %p72, %p73
      %p76 = scmp.ne.s32.totalorder %s59, %s75
      %p77 = scmp.eq.s32.totalorder %s25, 0
      %p78 = por %p76, %p77
      %s80 = sadd.s32 %s79, 1
      %p83 = scmp.eq.s32.totalorder %s19, 1
      %p84 = scmp.ne.s32.totalorder %s79, %s81
      %p85 = scmp.eq.s32.totalorder %s19, 0
      %p86 = por %p84, %p85
      %p87 = scmp.ne.s32.totalorder %s79, %s81
      %p88 = scmp.eq.s32.totalorder %s24, 1
      %p89 = por %p87, %p88
      %p90 = scmp.ne.s32.totalorder %s81, %s82
      %p91 = scmp.eq.s32.totalorder %s24, 0
      %p92 = por %p90, %p91
      %p93 = scmp.ne.s32.totalorder %s81, %s82
      %p94 = scmp.eq.s32.totalorder %s25, 1
      %p95 = por %p93, %p94
      %p97 = scmp.ne.s32.totalorder %s82, %s96
      %p98 = scmp.eq.s32.totalorder %s25, 0
      %p99 = por %p97, %p98
      %s101 = sadd.s32 %s100, 1
      %p104 = scmp.eq.s32.totalorder %s19, 1
      %p105 = scmp.ne.s32.totalorder %s100, %s102
      %p106 = scmp.eq.s32.totalorder %s19, 0
      %p107 = por %p105, %p106
      %p108 = scmp.ne.s32.totalorder %s100, %s102
      %p109 = scmp.eq.s32.totalorder %s24, 1
      %p110 = por %p108, %p109
      %p111 = scmp.ne.s32.totalorder %s102, %s103
      %p112 = scmp.eq.s32.totalorder %s24, 0
      %p113 = por %p111, %p112
      %p114 = scmp.ne.s32.totalorder %s102, %s103
      %p115 = scmp.eq.s32.totalorder %s25, 1
      %p116 = por %p114, %p115
      %p118 = scmp.ne.s32.totalorder %s103, %s117
      %p119 = scmp.eq.s32.totalorder %s25, 0
      %p120 = por %p118, %p119
      %s122 = sadd.s32 %s121, 1
      %p125 = scmp.eq.s32.totalorder %s19, 1
      %p126 = scmp.ne.s32.totalorder %s121, %s123
      %p127 = scmp.eq.s32.totalorder %s19, 0
      %p128 = por %p126, %p127
      %p129 = scmp.ne.s32.totalorder %s121, %s123
      %p130 = scmp.eq.s32.totalorder %s24, 1
      %p131 = por %p129, %p130
      %p132 = scmp.ne.s32.totalorder %s123, %s124
      %p133 = scmp.eq.s32.totalorder %s24, 0
      %p134 = por %p132, %p133
      %p135 = scmp.ne.s32.totalorder %s123, %s124
      %p136 = scmp.eq.s32.totalorder %s25, 1
      %p137 = por %p135, %p136
      %p139 = scmp.ne.s32.totalorder %s124, %s138
      %p140 = scmp.eq.s32.totalorder %s25, 0
      %p141 = por %p139, %p140
      %s143 = sadd.s32 %s142, 1
      %p146 = scmp.eq.s32.totalorder %s19, 1
      %p147 = scmp.ne.s32.totalorder %s142, %s144
      %p148 = scmp.eq.s32.totalorder %s19, 0
      %p149 = por %p147, %p148
      %p150 = scmp.ne.s32.totalorder %s142, %s144
      %p151 = scmp.eq.s32.totalorder %s24, 1
      %p152 = por %p150, %p151
      %p153 = scmp.ne.s32.totalorder %s144, %s145
      %p154 = scmp.eq.s32.totalorder %s24, 0
      %p155 = por %p153, %p154
      %p156 = scmp.ne.s32.totalorder %s144, %s145
      %p157 = scmp.eq.s32.totalorder %s25, 1
      %p158 = por %p156, %p157
      %p160 = scmp.ne.s32.totalorder %s145, %s159
      %p161 = scmp.eq.s32.totalorder %s25, 0
      %p162 = por %p160, %p161
      %s164 = sadd.s32 %s163, 1
      %p167 = scmp.eq.s32.totalorder %s19, 1
      %p168 = scmp.ne.s32.totalorder %s163, %s165
      %p169 = scmp.eq.s32.totalorder %s19, 0
      %p170 = por %p168, %p169
      %p171 = scmp.ne.s32.totalorder %s163, %s165
      %p172 = scmp.eq.s32.totalorder %s24, 1
      %p173 = por %p171, %p172
      %p174 = scmp.ne.s32.totalorder %s165, %s166
      %p175 = scmp.eq.s32.totalorder %s24, 0
      %p176 = por %p174, %p175
      %p177 = scmp.ne.s32.totalorder %s165, %s166
      %p178 = scmp.eq.s32.totalorder %s25, 1
      %p179 = por %p177, %p178
      %p181 = scmp.ne.s32.totalorder %s166, %s180
      %p182 = scmp.eq.s32.totalorder %s25, 0
      %p183 = por %p181, %p182
      %s185 = sadd.s32 %s184, 1
      %p188 = scmp.eq.s32.totalorder %s19, 1
      %p189 = scmp.ne.s32.totalorder %s184, %s186
      %p190 = scmp.eq.s32.totalorder %s19, 0
      %p191 = por %p189, %p190
      %p192 = scmp.ne.s32.totalorder %s184, %s186
      %p193 = scmp.eq.s32.totalorder %s24, 1
      %p194 = por %p192, %p193
      %p195 = scmp.ne.s32.totalorder %s186, %s187
      %p196 = scmp.eq.s32.totalorder %s24, 0
      %p197 = por %p195, %p196
      %p198 = scmp.ne.s32.totalorder %s186, %s187
      %p199 = scmp.eq.s32.totalorder %s25, 1
      %p200 = por %p198, %p199
      %p202 = scmp.ne.s32.totalorder %s187, %s201
      %p203 = scmp.eq.s32.totalorder %s25, 0
      %p204 = por %p202, %p203
      %s206 = sadd.s32 %s205, 1
      %p209 = scmp.eq.s32.totalorder %s19, 1
      %p210 = scmp.ne.s32.totalorder %s205, %s207
      %p211 = scmp.eq.s32.totalorder %s19, 0
      %p212 = por %p210, %p211
      %p213 = scmp.ne.s32.totalorder %s205, %s207
      %p214 = scmp.eq.s32.totalorder %s24, 1
      %p215 = por %p213, %p214
      %p216 = scmp.ne.s32.totalorder %s207, %s208
      %p217 = scmp.eq.s32.totalorder %s24, 0
      %p218 = por %p216, %p217
      %p219 = scmp.ne.s32.totalorder %s207, %s208
      %p220 = scmp.eq.s32.totalorder %s25, 1
      %p221 = por %p219, %p220
      %p223 = scmp.ne.s32.totalorder %s208, %s222
      %p224 = scmp.eq.s32.totalorder %s25, 0
      %p225 = por %p223, %p224
      %s227 = sadd.s32 %s226, 1
      %p230 = scmp.eq.s32.totalorder %s19, 1
      %p231 = scmp.ne.s32.totalorder %s226, %s228
      %p232 = scmp.eq.s32.totalorder %s19, 0
      %p233 = por %p231, %p232
      %p234 = scmp.ne.s32.totalorder %s226, %s228
      %p235 = scmp.eq.s32.totalorder %s24, 1
      %p236 = por %p234, %p235
      %p237 = scmp.ne.s32.totalorder %s228, %s229
      %p238 = scmp.eq.s32.totalorder %s24, 0
      %p239 = por %p237, %p238
      %p240 = scmp.ne.s32.totalorder %s228, %s229
      %p241 = scmp.eq.s32.totalorder %s25, 1
      %p242 = por %p240, %p241
      %p244 = scmp.ne.s32.totalorder %s229, %s243
      %p245 = scmp.eq.s32.totalorder %s25, 0
      %p246 = por %p244, %p245
      %s247 = ssub.s32 %s19, %s26
      %p248 = scmp.eq.s32.totalorder %s247, 0
      %s250 = sadd.s32 %s249, 1
      %s251 = scalar_select %p248, %s249, %s250
      %p254 = pneg %p248
      %p255 = scmp.eq.s32.totalorder %s19, 1
      %p256 = por %p254, %p255
      %p257 = scmp.ne.s32.totalorder %s249, %s252
      %p258 = scmp.eq.s32.totalorder %s19, 0
      %p259 = por %p257, %p258
      %p260 = scmp.ne.s32.totalorder %s249, %s252
      %p261 = scmp.eq.s32.totalorder %s24, 1
      %p262 = por %p260, %p261
      %p263 = scmp.ne.s32.totalorder %s252, %s253
      %p264 = scmp.eq.s32.totalorder %s24, 0
      %p265 = por %p263, %p264
      %p266 = scmp.ne.s32.totalorder %s252, %s253
      %p267 = scmp.eq.s32.totalorder %s25, 1
      %p268 = por %p266, %p267
      %p270 = scmp.ne.s32.totalorder %s253, %s269
      %p271 = scmp.eq.s32.totalorder %s25, 0
      %p272 = por %p270, %p271
      %p273 = scmp.le.s32.totalorder 1, %s19
      %p274 = scmp.lt.s32.totalorder %s19, 3
      %p275 = pnand %p273, %p274
      %p276 = pneg %p275
      // Predicated region
      $region9: #{transformer_forward.19} parent=5 // pred_check
        _
      $region10: #{transformer_forward.19} parent=5 // pred_check_branch
        %278 = sbr.rel (%p275) target = $region12
      $region11: #{transformer_forward.19} parent=5 // pred_region
        %s279 = ssub.s32 %s19, 1
        // Predicated region
        $region13: #{transformer_forward.19} parent=11 // pred_check
          %p280 = pneg %p92
        $region14: #{transformer_forward.19} parent=11 // pred_check_branch
          %282 = sbr.rel (%p280) target = $region16
        $region15: #{transformer_forward.19} parent=11 // pred_region
          _
        $region16: #{transformer_forward.19} parent=11 // pred_fallthru
          _
        // Predicated region
        $region17: #{transformer_forward.19} parent=11 // pred_check
          %p283 = pneg %p113
        $region18: #{transformer_forward.19} parent=11 // pred_check_branch
          %285 = sbr.rel (%p283) target = $region20
        $region19: #{transformer_forward.19} parent=11 // pred_region
          _
        $region20: #{transformer_forward.19} parent=11 // pred_fallthru
          _
        // Predicated region
        $region21: #{transformer_forward.19} parent=11 // pred_check
          %p286 = pneg %p134
        $region22: #{transformer_forward.19} parent=11 // pred_check_branch
          %288 = sbr.rel (%p286) target = $region24
        $region23: #{transformer_forward.19} parent=11 // pred_region
          _
        $region24: #{transformer_forward.19} parent=11 // pred_fallthru
          _
        // Predicated region
        $region25: #{transformer_forward.19} parent=11 // pred_check
          %p289 = pneg %p155
        $region26: #{transformer_forward.19} parent=11 // pred_check_branch
          %291 = sbr.rel (%p289) target = $region28
        $region27: #{transformer_forward.19} parent=11 // pred_region
          %293 = vsyncadd [#allocation3], 0
          %s295 = sshll.u32 %s5, 4
          %s296 = int_to_ptr.hbm [resolvable:$true] %s295
          %s297 = sshll.u32 [#allocation2], 4
          %s298 = int_to_ptr.vmem [resolvable:$true] %s297
          %300 = dma.hbm_to_vmem [thread:$0]  %s296, 16, %s298, [#allocation3]
        $region28: #{transformer_forward.19} parent=11 // pred_fallthru
          _
        // Predicated region
        $region29: #{transformer_forward.19} parent=11 // pred_check
          %p301 = pneg %p176
        $region30: #{transformer_forward.19} parent=11 // pred_check_branch
          %303 = sbr.rel (%p301) target = $region32
        $region31: #{transformer_forward.19} parent=11 // pred_region
          _
        $region32: #{transformer_forward.19} parent=11 // pred_fallthru
          _
        // Predicated region
        $region33: #{transformer_forward.19} parent=11 // pred_check
          %p304 = pneg %p197
        $region34: #{transformer_forward.19} parent=11 // pred_check_branch
          %306 = sbr.rel (%p304) target = $region36
        $region35: #{transformer_forward.19} parent=11 // pred_region
          %308 = vsyncadd [#allocation5], 0
          %s310 = sshll.u32 %s7, 4
          %s311 = int_to_ptr.hbm [resolvable:$true] %s310
          %s312 = sshll.u32 [#allocation4], 4
          %s313 = int_to_ptr.vmem [resolvable:$true] %s312
          %315 = dma.hbm_to_vmem [thread:$0]  %s311, 16, %s313, [#allocation5]
        $region36: #{transformer_forward.19} parent=11 // pred_fallthru
          _
        // Predicated region
        $region37: #{transformer_forward.19} parent=11 // pred_check
          %p316 = pneg %p218
        $region38: #{transformer_forward.19} parent=11 // pred_check_branch
          %318 = sbr.rel (%p316) target = $region40
        $region39: #{transformer_forward.19} parent=11 // pred_region
          %320 = vsyncadd [#allocation5], 0
          %s322 = sshll.u32 %s8, 4
          %s323 = int_to_ptr.hbm [resolvable:$true] %s322
          %s324 = sshll.u32 [#allocation6], 4
          %s325 = int_to_ptr.vmem [resolvable:$true] %s324
          %327 = dma.hbm_to_vmem [thread:$0]  %s323, 16, %s325, [#allocation5]
        $region40: #{transformer_forward.19} parent=11 // pred_fallthru
          _
        // Predicated region
        $region41: #{transformer_forward.19} parent=11 // pred_check
          %p328 = pneg %p239
        $region42: #{transformer_forward.19} parent=11 // pred_check_branch
          %330 = sbr.rel (%p328) target = $region44
        $region43: #{transformer_forward.19} parent=11 // pred_region
          %332 = vsyncadd [#allocation8], 0
          %s334 = sshll.u32 %s9, 4
          %s335 = int_to_ptr.hbm [resolvable:$true] %s334
          %s336 = sshll.u32 [#allocation7], 4
          %s337 = int_to_ptr.vmem [resolvable:$true] %s336
          %339 = dma.hbm_to_vmem [thread:$0]  %s335, 16, %s337, [#allocation8]
        $region44: #{transformer_forward.19} parent=11 // pred_fallthru
          _
      $region12: #{transformer_forward.19} parent=5 // pred_fallthru
        _
      %p340 = scmp.lt.s32.totalorder %s19, 2
      // Predicated region
      $region45: #{transformer_forward.19} parent=5 // pred_check
        %p341 = pneg %p340
      $region46: #{transformer_forward.19} parent=5 // pred_check_branch
        %343 = sbr.rel (%p341) target = $region48
      $region47: #{transformer_forward.19} parent=5 // pred_region
        // Predicated region
        $region49: #{transformer_forward.19} parent=47 // pred_check
          %p344 = pneg %p39
        $region50: #{transformer_forward.19} parent=47 // pred_check_branch
          %346 = sbr.rel (%p344) target = $region52
        $region51: #{transformer_forward.19} parent=47 // pred_region
          %p347 = scmp.lt.s32.totalorder %s19, 1
          %s348 = scalar_select %p347, %s19, 1
          %s349 = smul.addr %s348, 8
          %s350 = scalar_lea.vmem %s0, %s349
        $region52: #{transformer_forward.19} parent=47 // pred_fallthru
          _
        // Predicated region
        $region53: #{transformer_forward.19} parent=47 // pred_check
          %p351 = pneg %p65
        $region54: #{transformer_forward.19} parent=47 // pred_check_branch
          %353 = sbr.rel (%p351) target = $region56
        $region55: #{transformer_forward.19} parent=47 // pred_region
          %p354 = scmp.lt.s32.totalorder %s19, 1
          %s355 = scalar_select %p354, %s19, 1
          %s356 = smul.addr %s355, 8
          %s357 = scalar_lea.vmem %s1, %s356
        $region56: #{transformer_forward.19} parent=47 // pred_fallthru
          _
      $region48: #{transformer_forward.19} parent=5 // pred_fallthru
        _
      %p358 = scmp.le.s32.totalorder 1, %s19
      %p359 = scmp.lt.s32.totalorder %s19, 3
      %p360 = pnand %p358, %p359
      %p361 = pneg %p360
      // Predicated region
      $region57: #{transformer_forward.19} parent=5 // pred_check
        _
      $region58: #{transformer_forward.19} parent=5 // pred_check_branch
        %363 = sbr.rel (%p360) target = $region60
      $region59: #{transformer_forward.19} parent=5 // pred_region
        %s364 = ssub.s32 %s19, 1
        // Predicated region
        $region61: #{transformer_forward.19} parent=59 // pred_check
          %p365 = pneg %p155
        $region62: #{transformer_forward.19} parent=59 // pred_check_branch
          %367 = sbr.rel (%p365) target = $region64
        $region63: #{transformer_forward.19} parent=59 // pred_region
          %369 = dma.done [#allocation3], 16
        $region64: #{transformer_forward.19} parent=59 // pred_fallthru
          _
        // Predicated region
        $region65: #{transformer_forward.19} parent=59 // pred_check
          %p370 = pneg %p197
        $region66: #{transformer_forward.19} parent=59 // pred_check_branch
          %372 = sbr.rel (%p370) target = $region68
        $region67: #{transformer_forward.19} parent=59 // pred_region
          %374 = dma.done [#allocation5], 16
        $region68: #{transformer_forward.19} parent=59 // pred_fallthru
          _
        // Predicated region
        $region69: #{transformer_forward.19} parent=59 // pred_check
          %p375 = pneg %p218
        $region70: #{transformer_forward.19} parent=59 // pred_check_branch
          %377 = sbr.rel (%p375) target = $region72
        $region71: #{transformer_forward.19} parent=59 // pred_region
          %379 = dma.done [#allocation5], 16
        $region72: #{transformer_forward.19} parent=59 // pred_fallthru
          _
        // Predicated region
        $region73: #{transformer_forward.19} parent=59 // pred_check
          %p380 = pneg %p239
        $region74: #{transformer_forward.19} parent=59 // pred_check_branch
          %382 = sbr.rel (%p380) target = $region76
        $region75: #{transformer_forward.19} parent=59 // pred_region
          %384 = dma.done [#allocation8], 16
        $region76: #{transformer_forward.19} parent=59 // pred_fallthru
          _
        %p385 = scmp.lt.s32.totalorder %s24, 1
        %s386 = scalar_select %p385, %s24, 1
        %s387 = smul.addr %s386, 8
        %s388 = scalar_lea.vmem %s0, %s387
        %p389 = pneg %p45
        %p390 = pneg %p42
        %p391 = scmp.lt.s32.totalorder %s24, 1
        %s392 = scalar_select %p391, %s24, 1
        %s393 = smul.addr %s392, 8
        %s394 = scalar_lea.vmem %s1, %s393
        %p395 = pneg %p71
        %p396 = pneg %p68
        %p397 = pneg %p92
        %p398 = pneg %p89
        %p399 = pneg %p113
        %p400 = pneg %p110
        %p401 = pneg %p134
        %p402 = pneg %p131
        %p403 = pneg %p155
        %p404 = pneg %p152
        %p405 = pneg %p176
        %p406 = pneg %p173
        %p407 = pneg %p197
        %p408 = pneg %p194
        %p409 = pneg %p218
        %p410 = pneg %p215
        %p411 = pneg %p239
        %p412 = pneg %p236
        %p413 = pneg %p265
        %p414 = pneg %p262
        %p415 = scmp.lt.s32.totalorder %s24, 1
        %s416 = scalar_select %p415, %s24, 1
        %s417 = smul.addr %s416, 8
        %s418 = scalar_lea.vmem %s10, %s417
        %p419 = scmp.lt.s32.totalorder %s24, 1
        %s420 = scalar_select %p419, %s24, 1
        %s421 = smul.addr %s420, 8
        %s422 = scalar_lea.vmem %s0, %s421
        %p423 = scmp.lt.s32.totalorder %s24, 1
        %s424 = scalar_select %p423, %s24, 1
        %s425 = smul.addr %s424, 8
        %s426 = scalar_lea.vmem %s1, %s425
        %p427 = scmp.lt.s32.totalorder %s24, 1
        %s428 = scalar_select %p427, %s24, 1
        %s429 = smul.addr %s428, 8
        %s430 = scalar_lea.vmem %s10, %s429
        %v431 = vld [vmem:[%s422] sm:$0xff]
        %v432 = vld [vmem:[%s426] sm:$0xff]
        %v433 = vld [vmem:[%s2] sm:$0xff]
        %v434 = vld [vmem:[%s2 + $0x8] sm:$0xff]
        %v435 = vld [vmem:[%s2 + $0x10] sm:$0xff]
        %v436 = vld [vmem:[%s2 + $0x18] sm:$0xff]
        %v437 = vld [vmem:[%s3] sm:$0x1]
        %v439 = vperm.slane %v437, 0
        %vm441 = vcmask 261120
        %v443 = vsel %vm441, %v431, 0
        %445 = vmatpush.msra.mxu0 0.0
        %446 = vmatpush.msra.mxu0 0.0
        %447 = vmatpush.msra.mxu0 0.0
        %448 = vmatpush.msra.mxu0 0.0
        %449 = vmatpush.msra.mxu0 0.0
        %450 = vmatpush.msra.mxu0 0.0
        %451 = vmatpush.msra.mxu0 0.0
        %452 = vmatpush.msra.mxu0 0.0
        %453 = vmatpush.msra.mxu0 0.0
        %454 = vmatpush.msra.mxu0 0.0
        %455 = vmatpush.msra.mxu0 0.0
        %456 = vmatpush.msra.mxu0 0.0
        %457 = vmatpush.msra.mxu0 %v436
        %458 = vmatpush.msra.mxu0 %v435
        %459 = vmatpush.msra.mxu0 %v434
        %460 = vmatpush.msra.mxu0 %v433
        %461 = vmatmul.f32.gmra.mxu0 %v443
        %v462 = vpop.f32.mrf.mxu0
        %v463 = vadd.f32 %v439, %v462
        %464 = vdwg.mxu0
        %v465 = vld [vmem:[%s4] sm:$0xff]
        %v466 = vld [vmem:[%s4 + $0x8] sm:$0xff]
        %v467 = vld [vmem:[%s4 + $0x10] sm:$0xff]
        %v468 = vld [vmem:[%s4 + $0x18] sm:$0xff]
        %v469 = vld [vmem:[#allocation2] sm:$0x1]
        %v471 = vperm.slane %v469, 0
        %v474 = vsel %vm441, %v432, 0
        %476 = vmatpush.msra.mxu0 0.0
        %477 = vmatpush.msra.mxu0 0.0
        %478 = vmatpush.msra.mxu0 0.0
        %479 = vmatpush.msra.mxu0 0.0
        %480 = vmatpush.msra.mxu0 0.0
        %481 = vmatpush.msra.mxu0 0.0
        %482 = vmatpush.msra.mxu0 0.0
        %483 = vmatpush.msra.mxu0 0.0
        %484 = vmatpush.msra.mxu0 0.0
        %485 = vmatpush.msra.mxu0 0.0
        %486 = vmatpush.msra.mxu0 0.0
        %487 = vmatpush.msra.mxu0 0.0
        %488 = vmatpush.msra.mxu0 %v468
        %489 = vmatpush.msra.mxu0 %v467
        %490 = vmatpush.msra.mxu0 %v466
        %491 = vmatpush.msra.mxu0 %v465
        %492 = vmatmul.f32.gmra.mxu0 %v474
        %v493 = vpop.f32.mrf.mxu0
        %v494 = vadd.f32 %v471, %v493
        %495 = vdwg.mxu0
        %vm496 = vcmask 64512
        %v498 = vsel %vm496, %v463, 0
        %v501 = vsel %vm496, %v494, 0
        %503 = vmatpush.xpose.msra.mxu0 0.0
        %504 = vmatpush.xpose.msra.mxu0 0.0
        %505 = vmatpush.xpose.msra.mxu0 0.0
        %506 = vmatpush.xpose.msra.mxu0 0.0
        %507 = vmatpush.xpose.msra.mxu0 0.0
        %508 = vmatpush.xpose.msra.mxu0 0.0
        %509 = vmatpush.xpose.msra.mxu0 0.0
        %510 = vmatpush.xpose.msra.mxu0 0.0
        %511 = vmatpush.xpose.msra.mxu0 0.0
        %512 = vmatpush.xpose.msra.mxu0 0.0
        %513 = vmatpush.xpose.msra.mxu0 0.0
        %514 = vmatpush.xpose.msra.mxu0 0.0
        %515 = vmatpush.xpose.msra.mxu0 0.0
        %516 = vmatpush.xpose.msra.mxu0 0.0
        %517 = vmatpush.xpose.msra.mxu0 0.0
        %518 = vmatpush.xpose.msra.mxu0 %v501
        %519 = vmatmul.f32.gmra.mxu0 %v498
        %v520 = vpop.f32.mrf.mxu0
        %v521 = vadd.f32 0.0, %v520
        %522 = vdwg.mxu0
        %v523 = vsel %vm496, %v521, -inf
        %524 = vmax.xlane.f32.xlu0 %v523
        %v525 = vpop.xlane.xlu0 %524
        %v526 = vsub.f32 %v521, %v525
        %v527 = vmul.f32 %v526, 1.442695
        %v528 = vpow.pop %v527
        %v529 = vsel %vm496, %v528, 0.0
        %530 = vadd.xlane.f32.xlu0 %v529
        %v531 = vpop.xlane.xlu0 %530
        %v532 = vrcp.pop %v531
        %v533 = vmul.f32 %v528, %v532
        %534 = vrot.lane.b32.xlu0 %v494, 96
        %v535 = vpop.permute.xlu0 %534
        %v538 = vsel %vm496, %v533, 0
        %540 = vmatpush.msra.mxu0 0.0
        %541 = vmatpush.msra.mxu0 0.0
        %542 = vmatpush.msra.mxu0 0.0
        %543 = vmatpush.msra.mxu0 0.0
        %544 = vmatpush.msra.mxu0 0.0
        %545 = vmatpush.msra.mxu0 0.0
        %546 = vmatpush.msra.mxu0 0.0
        %547 = vmatpush.msra.mxu0 0.0
        %548 = vmatpush.msra.mxu0 0.0
        %549 = vmatpush.msra.mxu0 0.0
        %550 = vmatpush.msra.mxu0 0.0
        %551 = vmatpush.msra.mxu0 0.0
        %552 = vmatpush.msra.mxu0 0.0
        %553 = vmatpush.msra.mxu0 0.0
        %554 = vmatpush.msra.mxu0 0.0
        %555 = vmatpush.msra.mxu0 %v535
        %556 = vmatmul.f32.gmra.mxu0 %v538
        %v557 = vpop.f32.mrf.mxu0
        %v558 = vadd.f32 0.0, %v557
        %559 = vdwg.mxu0
        %560 = vrot.lane.b32.xlu0 %v463, 120
        %v561 = vpop.permute.xlu0 %560
        %562 = vrot.lane.b32.xlu0 %v494, 120
        %v563 = vpop.permute.xlu0 %562
        %v564 = vsel %vm496, %v561, 0
        %v566 = vsel %vm496, %v563, 0
        %568 = vmatpush.xpose.msra.mxu0 0.0
        %569 = vmatpush.xpose.msra.mxu0 0.0
        %570 = vmatpush.xpose.msra.mxu0 0.0
        %571 = vmatpush.xpose.msra.mxu0 0.0
        %572 = vmatpush.xpose.msra.mxu0 0.0
        %573 = vmatpush.xpose.msra.mxu0 0.0
        %574 = vmatpush.xpose.msra.mxu0 0.0
        %575 = vmatpush.xpose.msra.mxu0 0.0
        %576 = vmatpush.xpose.msra.mxu0 0.0
        %577 = vmatpush.xpose.msra.mxu0 0.0
        %578 = vmatpush.xpose.msra.mxu0 0.0
        %579 = vmatpush.xpose.msra.mxu0 0.0
        %580 = vmatpush.xpose.msra.mxu0 0.0
        %581 = vmatpush.xpose.msra.mxu0 0.0
        %582 = vmatpush.xpose.msra.mxu0 0.0
        %583 = vmatpush.xpose.msra.mxu0 %v566
        %584 = vmatmul.f32.gmra.mxu0 %v564
        %v585 = vpop.f32.mrf.mxu0
        %v586 = vadd.f32 0.0, %v585
        %587 = vdwg.mxu0
        %v588 = vsel %vm496, %v586, -inf
        %589 = vmax.xlane.f32.xlu0 %v588
        %v590 = vpop.xlane.xlu0 %589
        %v591 = vsub.f32 %v586, %v590
        %v592 = vmul.f32 %v591, 1.442695
        %v593 = vpow.pop %v592
        %v594 = vsel %vm496, %v593, 0.0
        %595 = vadd.xlane.f32.xlu0 %v594
        %v596 = vpop.xlane.xlu0 %595
        %v597 = vrcp.pop %v596
        %v598 = vmul.f32 %v593, %v597
        %599 = vrot.lane.b32.xlu0 %v494, 88
        %v600 = vpop.permute.xlu0 %599
        %v603 = vsel %vm496, %v598, 0
        %605 = vmatpush.msra.mxu0 0.0
        %606 = vmatpush.msra.mxu0 0.0
        %607 = vmatpush.msra.mxu0 0.0
        %608 = vmatpush.msra.mxu0 0.0
        %609 = vmatpush.msra.mxu0 0.0
        %610 = vmatpush.msra.mxu0 0.0
        %611 = vmatpush.msra.mxu0 0.0
        %612 = vmatpush.msra.mxu0 0.0
        %613 = vmatpush.msra.mxu0 0.0
        %614 = vmatpush.msra.mxu0 0.0
        %615 = vmatpush.msra.mxu0 0.0
        %616 = vmatpush.msra.mxu0 0.0
        %617 = vmatpush.msra.mxu0 0.0
        %618 = vmatpush.msra.mxu0 0.0
        %619 = vmatpush.msra.mxu0 0.0
        %620 = vmatpush.msra.mxu0 %v600
        %621 = vmatmul.f32.gmra.mxu0 %v603
        %v622 = vpop.f32.mrf.mxu0
        %v623 = vadd.f32 0.0, %v622
        %624 = vdwg.mxu0
        %625 = vrot.lane.b32.xlu0 %v463, 112
        %v626 = vpop.permute.xlu0 %625
        %627 = vrot.lane.b32.xlu0 %v494, 112
        %v628 = vpop.permute.xlu0 %627
        %v629 = vsel %vm496, %v626, 0
        %v631 = vsel %vm496, %v628, 0
        %633 = vmatpush.xpose.msra.mxu0 0.0
        %634 = vmatpush.xpose.msra.mxu0 0.0
        %635 = vmatpush.xpose.msra.mxu0 0.0
        %636 = vmatpush.xpose.msra.mxu0 0.0
        %637 = vmatpush.xpose.msra.mxu0 0.0
        %638 = vmatpush.xpose.msra.mxu0 0.0
        %639 = vmatpush.xpose.msra.mxu0 0.0
        %640 = vmatpush.xpose.msra.mxu0 0.0
        %641 = vmatpush.xpose.msra.mxu0 0.0
        %642 = vmatpush.xpose.msra.mxu0 0.0
        %643 = vmatpush.xpose.msra.mxu0 0.0
        %644 = vmatpush.xpose.msra.mxu0 0.0
        %645 = vmatpush.xpose.msra.mxu0 0.0
        %646 = vmatpush.xpose.msra.mxu0 0.0
        %647 = vmatpush.xpose.msra.mxu0 0.0
        %648 = vmatpush.xpose.msra.mxu0 %v631
        %649 = vmatmul.f32.gmra.mxu0 %v629
        %v650 = vpop.f32.mrf.mxu0
        %v651 = vadd.f32 0.0, %v650
        %652 = vdwg.mxu0
        %v653 = vsel %vm496, %v651, -inf
        %654 = vmax.xlane.f32.xlu0 %v653
        %v655 = vpop.xlane.xlu0 %654
        %v656 = vsub.f32 %v651, %v655
        %v657 = vmul.f32 %v656, 1.442695
        %v658 = vpow.pop %v657
        %v659 = vsel %vm496, %v658, 0.0
        %660 = vadd.xlane.f32.xlu0 %v659
        %v661 = vpop.xlane.xlu0 %660
        %v662 = vrcp.pop %v661
        %v663 = vmul.f32 %v658, %v662
        %664 = vrot.lane.b32.xlu0 %v494, 80
        %v665 = vpop.permute.xlu0 %664
        %v668 = vsel %vm496, %v663, 0
        %670 = vmatpush.msra.mxu0 0.0
        %671 = vmatpush.msra.mxu0 0.0
        %672 = vmatpush.msra.mxu0 0.0
        %673 = vmatpush.msra.mxu0 0.0
        %674 = vmatpush.msra.mxu0 0.0
        %675 = vmatpush.msra.mxu0 0.0
        %676 = vmatpush.msra.mxu0 0.0
        %677 = vmatpush.msra.mxu0 0.0
        %678 = vmatpush.msra.mxu0 0.0
        %679 = vmatpush.msra.mxu0 0.0
        %680 = vmatpush.msra.mxu0 0.0
        %681 = vmatpush.msra.mxu0 0.0
        %682 = vmatpush.msra.mxu0 0.0
        %683 = vmatpush.msra.mxu0 0.0
        %684 = vmatpush.msra.mxu0 0.0
        %685 = vmatpush.msra.mxu0 %v665
        %686 = vmatmul.f32.gmra.mxu0 %v668
        %v687 = vpop.f32.mrf.mxu0
        %v688 = vadd.f32 0.0, %v687
        %689 = vdwg.mxu0
        %690 = vrot.lane.b32.xlu0 %v463, 104
        %v691 = vpop.permute.xlu0 %690
        %692 = vrot.lane.b32.xlu0 %v494, 104
        %v693 = vpop.permute.xlu0 %692
        %v694 = vsel %vm496, %v691, 0
        %v696 = vsel %vm496, %v693, 0
        %698 = vmatpush.xpose.msra.mxu0 0.0
        %699 = vmatpush.xpose.msra.mxu0 0.0
        %700 = vmatpush.xpose.msra.mxu0 0.0
        %701 = vmatpush.xpose.msra.mxu0 0.0
        %702 = vmatpush.xpose.msra.mxu0 0.0
        %703 = vmatpush.xpose.msra.mxu0 0.0
        %704 = vmatpush.xpose.msra.mxu0 0.0
        %705 = vmatpush.xpose.msra.mxu0 0.0
        %706 = vmatpush.xpose.msra.mxu0 0.0
        %707 = vmatpush.xpose.msra.mxu0 0.0
        %708 = vmatpush.xpose.msra.mxu0 0.0
        %709 = vmatpush.xpose.msra.mxu0 0.0
        %710 = vmatpush.xpose.msra.mxu0 0.0
        %711 = vmatpush.xpose.msra.mxu0 0.0
        %712 = vmatpush.xpose.msra.mxu0 0.0
        %713 = vmatpush.xpose.msra.mxu0 %v696
        %714 = vmatmul.f32.gmra.mxu0 %v694
        %v715 = vpop.f32.mrf.mxu0
        %v716 = vadd.f32 0.0, %v715
        %717 = vdwg.mxu0
        %v718 = vsel %vm496, %v716, -inf
        %719 = vmax.xlane.f32.xlu0 %v718
        %v720 = vpop.xlane.xlu0 %719
        %v721 = vsub.f32 %v716, %v720
        %v722 = vmul.f32 %v721, 1.442695
        %v723 = vpow.pop %v722
        %v724 = vsel %vm496, %v723, 0.0
        %725 = vadd.xlane.f32.xlu0 %v724
        %v726 = vpop.xlane.xlu0 %725
        %v727 = vrcp.pop %v726
        %v728 = vmul.f32 %v723, %v727
        %729 = vrot.lane.b32.xlu0 %v494, 72
        %v730 = vpop.permute.xlu0 %729
        %v733 = vsel %vm496, %v728, 0
        %735 = vmatpush.msra.mxu0 0.0
        %736 = vmatpush.msra.mxu0 0.0
        %737 = vmatpush.msra.mxu0 0.0
        %738 = vmatpush.msra.mxu0 0.0
        %739 = vmatpush.msra.mxu0 0.0
        %740 = vmatpush.msra.mxu0 0.0
        %741 = vmatpush.msra.mxu0 0.0
        %742 = vmatpush.msra.mxu0 0.0
        %743 = vmatpush.msra.mxu0 0.0
        %744 = vmatpush.msra.mxu0 0.0
        %745 = vmatpush.msra.mxu0 0.0
        %746 = vmatpush.msra.mxu0 0.0
        %747 = vmatpush.msra.mxu0 0.0
        %748 = vmatpush.msra.mxu0 0.0
        %749 = vmatpush.msra.mxu0 0.0
        %750 = vmatpush.msra.mxu0 %v730
        %751 = vmatmul.f32.gmra.mxu0 %v733
        %v752 = vpop.f32.mrf.mxu0
        %v753 = vadd.f32 0.0, %v752
        %754 = vdwg.mxu0
        %756 = vrot.lane.b32.xlu0 %v623, 8
        %v757 = vpop.permute.xlu0 %756
        %760 = vrot.lane.b32.xlu0 %v688, 16
        %v761 = vpop.permute.xlu0 %760
        %764 = vrot.lane.b32.xlu0 %v753, 24
        %v765 = vpop.permute.xlu0 %764
        %v767 = vsel %vm496, %v558, %v757
        %vm768 = vcmask 130048
        %v769 = vsel %vm768, %v767, %v761
        %vm770 = vcmask 195584
        %v771 = vsel %vm770, %v769, %v765
        %v772 = vld [vmem:[%s6] sm:$0xff]
        %v773 = vld [vmem:[%s6 + $0x8] sm:$0xff]
        %v774 = vld [vmem:[%s6 + $0x10] sm:$0xff]
        %v775 = vld [vmem:[%s6 + $0x18] sm:$0xff]
        %v776 = vld [vmem:[#allocation4] sm:$0x1]
        %v778 = vperm.slane %v776, 0
        %v781 = vsel %vm441, %v771, 0
        %783 = vmatpush.msra.mxu0 0.0
        %784 = vmatpush.msra.mxu0 0.0
        %785 = vmatpush.msra.mxu0 0.0
        %786 = vmatpush.msra.mxu0 0.0
        %787 = vmatpush.msra.mxu0 0.0
        %788 = vmatpush.msra.mxu0 0.0
        %789 = vmatpush.msra.mxu0 0.0
        %790 = vmatpush.msra.mxu0 0.0
        %791 = vmatpush.msra.mxu0 0.0
        %792 = vmatpush.msra.mxu0 0.0
        %793 = vmatpush.msra.mxu0 0.0
        %794 = vmatpush.msra.mxu0 0.0
        %795 = vmatpush.msra.mxu0 %v775
        %796 = vmatpush.msra.mxu0 %v774
        %797 = vmatpush.msra.mxu0 %v773
        %798 = vmatpush.msra.mxu0 %v772
        %799 = vmatmul.f32.gmra.mxu0 %v781
        %v800 = vpop.f32.mrf.mxu0
        %v801 = vadd.f32 %v778, %v800
        %802 = vdwg.mxu0
        %v803 = vadd.f32 %v431, %v801
        %v804 = vld [vmem:[#allocation6] sm:$0x1]
        %v805 = vld [vmem:[#allocation7] sm:$0x1]
        %v806 = vsel %vm441, %v803, 0.0
        %807 = vadd.xlane.f32.xlu0 %v806
        %v808 = vpop.xlane.xlu0 %807
        %v809 = vrcp.pop 32.0
        %v810 = vmul.f32 32.0, %v809
        %v811 = vsub.f32 1.0, %v810
        %v812 = vmul.f32 %v809, %v811
        %v813 = vadd.f32 %v809, %v812
        %vm814 = vweird.f32 %v809
        %v815 = vsel %vm814, %v809, %v813
        %v816 = vmul.f32 %v808, %v815
        %v817 = vsub.f32 %v803, %v816
        %v818 = vmul.f32 %v817, %v817
        %v819 = vsel %vm441, %v818, 0.0
        %820 = vadd.xlane.f32.xlu0 %v819
        %v821 = vpop.xlane.xlu0 %820
        %v822 = vmul.f32 %v821, %v815
        %v823 = vadd.f32 %v822, 1e-05
        %v824 = vrsqrt.pop %v823
        %v825 = vmul.f32 %v824, %v823
        %v826 = vmul.f32 %v825, %v824
        %v827 = vmul.f32 0.5, %v826
        %v828 = vsub.f32 1.5, %v827
        %v829 = vmul.f32 %v824, %v828
        %vm830 = vweird.f32 %v823
        %vm831 = vweird.f32 %v824
        %vm832 = vmor %vm830, %vm831
        %v833 = vsel %vm832, %v824, %v829
        %v834 = vmul.f32 %v817, %v833
        %v836 = vperm.slane %v804, 0
        %v838 = vmul.f32 %v834, %v836
        %v840 = vperm.slane %v805, 0
        %v842 = vadd.f32 %v838, %v840
        %843 = vst.msk [vmem:[%s430] sm:$0xff] %vm441, %v842
        %p844 = scmp.lt.s32.totalorder %s24, 1
        %s845 = scalar_select %p844, %s24, 1
        %s846 = smul.addr %s845, 8
        %s847 = scalar_lea.vmem %s10, %s846
        // Predicated region
        $region77: #{transformer_forward.19} parent=59 // pred_check
          %p848 = pneg %p262
        $region78: #{transformer_forward.19} parent=59 // pred_check_branch
          %850 = sbr.rel (%p848) target = $region80
        $region79: #{transformer_forward.19} parent=59 // pred_region
          _
        $region80: #{transformer_forward.19} parent=59 // pred_fallthru
          _
      $region60: #{transformer_forward.19} parent=5 // pred_fallthru
        _
      %p851 = scmp.le.s32.totalorder 2, %s19
      // Predicated region
      $region81: #{transformer_forward.19} parent=5 // pred_check
        %p852 = pneg %p851
      $region82: #{transformer_forward.19} parent=5 // pred_check_branch
        %854 = sbr.rel (%p852) target = $region84
      $region83: #{transformer_forward.19} parent=5 // pred_region
        %s855 = ssub.s32 %s19, 2
        // Predicated region
        $region85: #{transformer_forward.19} parent=83 // pred_check
          %p856 = pneg %p268
        $region86: #{transformer_forward.19} parent=83 // pred_check_branch
          %858 = sbr.rel (%p856) target = $region88
        $region87: #{transformer_forward.19} parent=83 // pred_region
          %p859 = scmp.lt.s32.totalorder %s25, 1
          %s860 = scalar_select %p859, %s25, 1
          %s861 = smul.addr %s860, 8
          %s862 = scalar_lea.vmem %s10, %s861
        $region88: #{transformer_forward.19} parent=83 // pred_fallthru
          _
      $region84: #{transformer_forward.19} parent=5 // pred_fallthru
        _
    $region6: #{transformer_forward.19} parent=1 // loop_footer
      %s23 = sadd.s32 1, %s19
    $region7: #{transformer_forward.19} parent=1 // loop_footer_branch
      %18 = sbr.rel target = $region3
    $region8: #{transformer_forward.19} parent=1 // loop_exit
      _
    %863 = vsyncpa [#allocation3], 1
    %s864 = scalar_lea.sflag [#allocation3], 1
    %865 = vsyncpa %s864, 1
    %866 = vsyncpa [#allocation5], 1
    %867 = vsyncpa [#allocation8], 1

</llo_original>
